<compile_context>
chip_gen: v7x
topology: tpu7x:2x2x1
jax: 0.10.0
libtpu: 0.0.40
codegen_flags: <defaults>
</compile_context>

<pallas_src>
import functools

import jax
import jax.numpy as jnp
from jax import lax
from jax.experimental import pallas as pl
from jax.experimental.pallas import tpu as pltpu

NEG_SLOPE = 0.2
BN_EPS = 1e-5


def _lrelu(v):
    return jnp.where(v >= 0.0, v, NEG_SLOPE * v)


# ------------------------------ Pallas kernel ------------------------------ #

def _discriminator_kernel(batch,
                          p1_ref, w1_ref,
                          w2_ref, s2_ref, b2_ref,
                          w3_hbm, s3_ref, b3_ref,
                          w4_hbm, s4_ref, b4_ref,
                          lw_ref, lb_ref,
                          o_ref,
                          a1_ref, a2_ref, a3_ref,
                          w3_vmem, w4_vmem, dma_sem):
    n = batch

    # Kick off the big late-layer weight DMAs immediately so their HBM traffic
    # overlaps conv1/conv2 compute; wait right before first use.
    w3_copy = pltpu.make_async_copy(w3_hbm, w3_vmem, dma_sem.at[0])
    w4_copy = pltpu.make_async_copy(w4_hbm, w4_vmem, dma_sem.at[1])
    w3_copy.start()
    w4_copy.start()

    # ---- conv1 (3x3 s1, 3->64) + LeakyReLU; dropout = identity (eval) ------
    # p1 rows are parity-grouped: row = g*49n + bi*7n + bj*n + sample with
    # g = (i%2)*2 + (j%2), (i, j) = (2*bi + i%2, 2*bj + j%2).
    a1 = _lrelu(jnp.dot(p1_ref[...], w1_ref[...],
                        preferred_element_type=jnp.float32))
    a1_ref[...] = a1.astype(jnp.bfloat16)                       # (196n, 64)

    # ---- conv2 (4x4 s2, 64->128) -> LeakyReLU -> BN2 (dropout = id) ---------
    # Parity grouping makes every (ki,kj) slab a unit-stride static row slice;
    # 16 slabs are lane-concatenated and hit the MXU as ONE K=1024 matmul per
    # output row (6 total).
    for y in range(6):
        pieces = []
        for ki in range(4):
            for kj in range(4):
                g = (ki % 2) * 2 + (kj % 2)
                base = g * (49 * n) + (ki // 2 + y) * (7 * n) + (kj // 2) * n
                pieces.append(a1_ref[base:base + 6 * n, :])      # (6n, 64)
        patch = jnp.concatenate(pieces, axis=-1)                 # (6n, 1024)
        out = jnp.dot(patch, w2_ref[...],
                      preferred_element_type=jnp.float32)        # (6n, 128)
        out = _lrelu(out) * s2_ref[...] + b2_ref[...]
        a2_ref[y * 6 * n:(y + 1) * 6 * n, :] = out.astype(jnp.bfloat16)

    # ---- conv3 (3x3 s1, 128->256) -> LeakyReLU -> BN3 -----------------------
    w3_copy.wait()
    for yy in range(4):
        pieces = []
        for ki in range(3):
            for kj in range(3):
                base = (yy + ki) * (6 * n) + kj * n
                pieces.append(a2_ref[base:base + 4 * n, :])      # (4n, 128)
        patch = jnp.concatenate(pieces, axis=-1)                 # (4n, 1152)
        out = jnp.dot(patch, w3_vmem[...],
                      preferred_element_type=jnp.float32)        # (4n, 256)
        out = _lrelu(out) * s3_ref[...] + b3_ref[...]
        a3_ref[yy * 4 * n:(yy + 1) * 4 * n, :] = out.astype(jnp.bfloat16)

    # ---- conv4 (4x4 s2 on a 4x4 map == Linear over the full patch) ----------
    w4_copy.wait()
    pieces = [a3_ref[q * n:(q + 1) * n, :] for q in range(16)]   # 16 x (n, 256)
    patch = jnp.concatenate(pieces, axis=-1)                     # (n, 4096)
    out = jnp.dot(patch, w4_vmem[...],
                  preferred_element_type=jnp.float32)            # (n, 512)
    a4 = _lrelu(out) * s4_ref[...] + b4_ref[...]

    # ---- Linear (512 -> 1) + sigmoid: M=n, N=1 -> VPU lane-reduce, no MXU ----
    logit = jnp.sum(a4 * lw_ref[...], axis=-1, keepdims=True) + lb_ref[...]
    o_ref[...] = 1.0 / (1.0 + jnp.exp(-logit))


# ------------------------------ host-side prep ----------------------------- #

def _conv1_patches(x):
    """NCHW input -> parity-grouped conv1 im2col patches, (4*49*N, 32) bf16."""
    n, c, h, w = x.shape                      # (N, 3, 16, 16)
    oh, ow = h - 2, w - 2                     # 14, 14
    cols = []
    for ki in range(3):
        for kj in range(3):
            cols.append(x[:, :, ki:ki + oh, kj:kj + ow])         # (N,3,14,14)
    p = jnp.stack(cols, axis=2)                                  # (N,3,9,14,14)
    p = p.reshape(n, c * 9, oh, ow)                              # col=c*9+ki*3+kj
    p = p.transpose(0, 2, 3, 1)                                  # (N,14,14,27)
    p = p.reshape(n, oh // 2, 2, ow // 2, 2, c * 9)              # (N,bi,di,bj,dj,27)
    p = p.transpose(2, 4, 1, 3, 0, 5)                            # (di,dj,bi,bj,N,27)
    p = p.reshape(4 * (oh // 2) * (ow // 2) * n, c * 9)          # (196N, 27)
    p = jnp.pad(p, ((0, 0), (0, 32 - c * 9)))                    # K: 27 -> 32
    return p.astype(jnp.bfloat16)


def _stacked_conv_weight(w):
    """(OC, IC, KH, KW) -> (KH*KW*IC, OC) bf16, matching the in-kernel
    (ki, kj, c) lane-concatenation order of the patch slabs."""
    oc, ic, kh, kw = w.shape
    return jnp.transpose(w, (2, 3, 1, 0)).reshape(kh * kw * ic, oc).astype(
        jnp.bfloat16)


def make_params(input_size, output_size, key):
    ks = jax.random.split(key, 9)
    f32 = jnp.float32

    def conv_w(k, oc, ic, ksz):
        return jax.random.normal(k, (oc, ic, ksz, ksz), f32) * 0.05

    def bn(k, chan):
        k1, k2, k3, k4 = jax.random.split(k, 4)
        gamma = jax.random.uniform(k1, (chan,), f32, 0.5, 1.5)
        beta = jax.random.normal(k2, (chan,), f32) * 0.1
        r_mean = jax.random.normal(k3, (chan,), f32) * 0.1
        r_var = jax.random.uniform(k4, (chan,), f32, 0.5, 1.5)
        scale = gamma / jnp.sqrt(r_var + BN_EPS)
        shift = beta - r_mean * scale
        return scale.reshape(1, -1), shift.reshape(1, -1)

    feat = 512 * (input_size // 4 - 3) ** 2
    return {
        "w1": conv_w(ks[0], 64, 3, 3),
        "w2": conv_w(ks[1], 128, 64, 4),
        "w3": conv_w(ks[2], 256, 128, 3),
        "w4": conv_w(ks[3], 512, 256, 4),
        "bn2": bn(ks[4], 128),
        "bn3": bn(ks[5], 256),
        "bn4": bn(ks[6], 512),
        "ll2_w": jax.random.normal(ks[7], (output_size, feat), f32) * 0.02,
        "ll2_b": jax.random.normal(ks[8], (output_size,), f32) * 0.02,
    }


def prepare_inference(params, *, input_size, output_size):
    """Kernel-ready parameter pytree (bf16 MXU operands, stacked im2col weights)."""
    assert output_size == 1, "TODO(synk): output_size > 1 needs an MXU tail matmul"
    assert input_size // 4 - 3 == 1, \
        "TODO(synk): kernel is specialized to the 16x16, single-logit config"

    w1 = params["w1"].reshape(64, 27).T                          # (27, 64)
    w1 = jnp.pad(w1, ((0, 5), (0, 0))).astype(jnp.bfloat16)      # (32, 64)
    return {
        "w1": w1,
        "w2": _stacked_conv_weight(params["w2"]),                # (1024, 128)
        "s2": params["bn2"][0], "b2": params["bn2"][1],
        "w3": _stacked_conv_weight(params["w3"]),                # (1152, 256)
        "s3": params["bn3"][0], "b3": params["bn3"][1],
        "w4": _stacked_conv_weight(params["w4"]),                # (4096, 512)
        "s4": params["bn4"][0], "b4": params["bn4"][1],
        "lw": params["ll2_w"].astype(jnp.float32),               # (1, 512)
        "lb": params["ll2_b"].reshape(1, -1).astype(jnp.float32),
    }


# ------------------------------ forward pass ------------------------------- #

def discriminator_forward(prep, x):
    n = x.shape[0]
    p1 = _conv1_patches(x)                                       # (196n, 32)

    def vmem_spec(shape):
        nd = len(shape)
        return pl.BlockSpec(shape, lambda i, _nd=nd: (0,) * _nd)

    in_specs = [
        vmem_spec(p1.shape), vmem_spec(prep["w1"].shape),
        vmem_spec(prep["w2"].shape),
        vmem_spec(prep["s2"].shape), vmem_spec(prep["b2"].shape),
        pl.BlockSpec(memory_space=pl.ANY),                       # w3: manual DMA
        vmem_spec(prep["s3"].shape), vmem_spec(prep["b3"].shape),
        pl.BlockSpec(memory_space=pl.ANY),                       # w4: manual DMA
        vmem_spec(prep["s4"].shape), vmem_spec(prep["b4"].shape),
        vmem_spec(prep["lw"].shape), vmem_spec(prep["lb"].shape),
    ]
    scratch_shapes = [
        pltpu.VMEM((196 * n, 64), jnp.bfloat16),                 # a1
        pltpu.VMEM((36 * n, 128), jnp.bfloat16),                 # a2
        pltpu.VMEM((16 * n, 256), jnp.bfloat16),                 # a3
        pltpu.VMEM(prep["w3"].shape, jnp.bfloat16),              # w3 landing buf
        pltpu.VMEM(prep["w4"].shape, jnp.bfloat16),              # w4 landing buf
        pltpu.SemaphoreType.DMA((2,)),
    ]

    # VMEM budget derived from the actual footprint (not a hardcoded 32 MiB):
    # auto-copied inputs (x2 for double buffering) + scratch + compile slack.
    auto_in = [p1, prep["w1"], prep["w2"], prep["s2"], prep["b2"],
               prep["s3"], prep["b3"], prep["s4"], prep["b4"],
               prep["lw"], prep["lb"]]
    auto_bytes = sum(a.size * a.dtype.itemsize for a in auto_in)
    scratch_bytes = 2 * (196 * n * 64 + 36 * n * 128 + 16 * n * 256
                         + prep["w3"].size + prep["w4"].size)
    vmem_limit = int(2 * auto_bytes + scratch_bytes) + (4 << 20)

    fused = pl.pallas_call(
        functools.partial(_discriminator_kernel, n),
        out_shape=jax.ShapeDtypeStruct((n, 1), jnp.float32),
        grid_spec=pltpu.PrefetchScalarGridSpec(
            num_scalar_prefetch=0,
            grid=(1,),
            in_specs=in_specs,
            out_specs=pl.BlockSpec((n, 1), lambda i: (0, 0)),
            scratch_shapes=scratch_shapes),
        compiler_params=pltpu.CompilerParams(
            dimension_semantics=("arbitrary",),
            vmem_limit_bytes=vmem_limit),
    )
    return fused(p1, prep["w1"],
                 prep["w2"], prep["s2"], prep["b2"],
                 prep["w3"], prep["s3"], prep["b3"],
                 prep["w4"], prep["s4"], prep["b4"],
                 prep["lw"], prep["lb"])


# ------------------------------ reference (f32) ---------------------------- #

def _reference(params, x):
    """Pure-XLA f32 reference with identical eval-mode semantics."""
    def conv(v, w, stride):
        return lax.conv_general_dilated(
            v, w, (stride, stride), "VALID",
            dimension_numbers=("NCHW", "OIHW", "NCHW"))

    def bn(v, scale_shift):
        s, b = scale_shift
        return v * s.reshape(1, -1, 1, 1) + b.reshape(1, -1, 1, 1)

    a = _lrelu(conv(x, params["w1"], 1))
    a = bn(_lrelu(conv(a, params["w2"], 2)), params["bn2"])
    a = bn(_lrelu(conv(a, params["w3"], 1)), params["bn3"])
    a = bn(_lrelu(conv(a, params["w4"], 2)), params["bn4"])
    a = a.reshape(a.shape[0], -1)
    logit = a @ params["ll2_w"].T + params["ll2_b"]
    return jax.nn.sigmoid(logit)


# ---------------------------------- main ----------------------------------- #

if __name__ == "__main__":
    INPUT_SIZE = 16     # conv stack: 16 -> 14 -> 6 -> 4 -> 1
    OUTPUT_SIZE = 1
    BATCH = 2

    key = jax.random.PRNGKey(0)
    k_x, k_p = jax.random.split(key)
    x = jax.random.normal(k_x, (BATCH, 3, INPUT_SIZE, INPUT_SIZE), jnp.float32)

    params = make_params(INPUT_SIZE, OUTPUT_SIZE, k_p)
    prep = prepare_inference(params, input_size=INPUT_SIZE,
                             output_size=OUTPUT_SIZE)

    fwd = jax.jit(discriminator_forward)
    out = fwd(prep, x)
    jax.block_until_ready(out)

    ref = _reference(params, x)

    assert out.shape == (BATCH, OUTPUT_SIZE)
    assert bool(jnp.all(jnp.isfinite(out)))
    assert bool(jnp.all((out >= 0.0) & (out <= 1.0)))
    assert float(jnp.max(jnp.abs(out - ref))) < 5e-2
    print("KERNEL_OK")
</pallas_src>

<mosaic_0001>
module attributes {stable_mosaic.version = 11 : i64} {
  func.func @_discriminator_kernel(%arg0: i32, %arg1: memref<392x32xbf16, #tpu.memory_space<vmem>>, %arg2: memref<32x64xbf16, #tpu.memory_space<vmem>>, %arg3: memref<1024x128xbf16, #tpu.memory_space<vmem>>, %arg4: memref<1x128xf32, #tpu.memory_space<vmem>>, %arg5: memref<1x128xf32, #tpu.memory_space<vmem>>, %arg6: memref<1152x256xbf16, #tpu.memory_space<any>>, %arg7: memref<1x256xf32, #tpu.memory_space<vmem>>, %arg8: memref<1x256xf32, #tpu.memory_space<vmem>>, %arg9: memref<4096x512xbf16, #tpu.memory_space<any>>, %arg10: memref<1x512xf32, #tpu.memory_space<vmem>>, %arg11: memref<1x512xf32, #tpu.memory_space<vmem>>, %arg12: memref<1x512xf32, #tpu.memory_space<vmem>>, %arg13: memref<1x1xf32, #tpu.memory_space<vmem>>, %arg14: memref<2x1xf32, #tpu.memory_space<vmem>>, %arg15: memref<392x64xbf16, #tpu.memory_space<vmem>>, %arg16: memref<72x128xbf16, #tpu.memory_space<vmem>>, %arg17: memref<32x256xbf16, #tpu.memory_space<vmem>>, %arg18: memref<1152x256xbf16, #tpu.memory_space<vmem>>, %arg19: memref<4096x512xbf16, #tpu.memory_space<vmem>>, %arg20: memref<2x!tpu.dma_semaphore, #tpu.memory_space<semaphore_mem>>) attributes {dimension_semantics = [#tpu.dimension_semantics<arbitrary>], iteration_bounds = array<i64: 1>, scalar_prefetch = 0 : i64, scratch_operands = 6 : i64, tpu.core_type = #tpu.core_type<tc>, window_params = [{pipeline_mode = #tpu.pipeline_mode<synchronous>, transform_indices = @transform_0, window_bounds = array<i64: 392, 32>}, {pipeline_mode = #tpu.pipeline_mode<synchronous>, transform_indices = @transform_1, window_bounds = array<i64: 32, 64>}, {pipeline_mode = #tpu.pipeline_mode<synchronous>, transform_indices = @transform_2, window_bounds = array<i64: 1024, 128>}, {pipeline_mode = #tpu.pipeline_mode<synchronous>, transform_indices = @transform_3, window_bounds = array<i64: 1, 128>}, {pipeline_mode = #tpu.pipeline_mode<synchronous>, transform_indices = @transform_4, window_bounds = array<i64: 1, 128>}, {}, {pipeline_mode = #tpu.pipeline_mode<synchronous>, transform_indices = @transform_6, window_bounds = array<i64: 1, 256>}, {pipeline_mode = #tpu.pipeline_mode<synchronous>, transform_indices = @transform_7, window_bounds = array<i64: 1, 256>}, {}, {pipeline_mode = #tpu.pipeline_mode<synchronous>, transform_indices = @transform_9, window_bounds = array<i64: 1, 512>}, {pipeline_mode = #tpu.pipeline_mode<synchronous>, transform_indices = @transform_10, window_bounds = array<i64: 1, 512>}, {pipeline_mode = #tpu.pipeline_mode<synchronous>, transform_indices = @transform_11, window_bounds = array<i64: 1, 512>}, {pipeline_mode = #tpu.pipeline_mode<synchronous>, transform_indices = @transform_12, window_bounds = array<i64: 1, 1>}, {pipeline_mode = #tpu.pipeline_mode<synchronous>, transform_indices = @transform_13, window_bounds = array<i64: 2, 1>}]} {
    %c0_i32 = arith.constant 0 : i32
    %0 = tpu.memref_slice %arg20[%c0_i32] : memref<2x!tpu.dma_semaphore, #tpu.memory_space<semaphore_mem>> -> memref<1x!tpu.dma_semaphore, #tpu.memory_space<semaphore_mem>>
    %1 = tpu.memref_squeeze %0 : memref<1x!tpu.dma_semaphore, #tpu.memory_space<semaphore_mem>> -> memref<!tpu.dma_semaphore, #tpu.memory_space<semaphore_mem>>
    tpu.enqueue_dma source(%arg6 : memref<1152x256xbf16, #tpu.memory_space<any>>) target(%arg18 : memref<1152x256xbf16, #tpu.memory_space<vmem>>) target_semaphore(%1 : memref<!tpu.dma_semaphore, #tpu.memory_space<semaphore_mem>>)
    %c1_i32 = arith.constant 1 : i32
    %2 = tpu.memref_slice %arg20[%c1_i32] : memref<2x!tpu.dma_semaphore, #tpu.memory_space<semaphore_mem>> -> memref<1x!tpu.dma_semaphore, #tpu.memory_space<semaphore_mem>>
    %3 = tpu.memref_squeeze %2 : memref<1x!tpu.dma_semaphore, #tpu.memory_space<semaphore_mem>> -> memref<!tpu.dma_semaphore, #tpu.memory_space<semaphore_mem>>
    tpu.enqueue_dma source(%arg9 : memref<4096x512xbf16, #tpu.memory_space<any>>) target(%arg19 : memref<4096x512xbf16, #tpu.memory_space<vmem>>) target_semaphore(%3 : memref<!tpu.dma_semaphore, #tpu.memory_space<semaphore_mem>>)
    %c0 = arith.constant 0 : index
    %c0_0 = arith.constant 0 : index
    %4 = vector.load %arg1[%c0, %c0_0] : memref<392x32xbf16, #tpu.memory_space<vmem>>, vector<392x32xbf16>
    %c0_1 = arith.constant 0 : index
    %c0_2 = arith.constant 0 : index
    %5 = vector.load %arg2[%c0_1, %c0_2] : memref<32x64xbf16, #tpu.memory_space<vmem>>, vector<32x64xbf16>
    %cst = arith.constant dense<0.000000e+00> : vector<392x64xf32>
    %6 = tpu.matmul %4, %5, %cst {dimension_numbers = #tpu.dot_dimension_numbers<[1], [0], [0], [1], [0, 0, 1, 1], [], []>} : vector<392x32xbf16>, vector<32x64xbf16>, vector<392x64xf32> -> vector<392x64xf32>
    %cst_3 = arith.constant 0.000000e+00 : f32
    %7 = vector.broadcast %cst_3 : f32 to vector<392x64xf32>
    %8 = arith.cmpf oge, %6, %7 : vector<392x64xf32>
    %cst_4 = arith.constant 2.000000e-01 : f32
    %9 = vector.broadcast %cst_4 : f32 to vector<392x64xf32>
    %10 = arith.mulf %9, %6 : vector<392x64xf32>
    %11 = arith.select %8, %6, %10 : vector<392x64xi1>, vector<392x64xf32>
    %12 = arith.truncf %11 : vector<392x64xf32> to vector<392x64xbf16>
    %c0_5 = arith.constant 0 : index
    %c0_6 = arith.constant 0 : index
    %13 = vector.load %arg15[%c0_5, %c0_6] : memref<392x64xbf16, #tpu.memory_space<vmem>>, vector<392x64xbf16>
    tpu.vector_store %arg15[%c0_5, %c0_6], %12 {strides = array<i32>} : memref<392x64xbf16, #tpu.memory_space<vmem>>, vector<392x64xbf16>,
    %c0_7 = arith.constant 0 : index
    %c0_8 = arith.constant 0 : index
    %14 = vector.load %arg15[%c0_7, %c0_8] : memref<392x64xbf16, #tpu.memory_space<vmem>>, vector<12x64xbf16>
    %c98 = arith.constant 98 : index
    %c0_9 = arith.constant 0 : index
    %15 = vector.load %arg15[%c98, %c0_9] : memref<392x64xbf16, #tpu.memory_space<vmem>>, vector<12x64xbf16>
    %c2 = arith.constant 2 : index
    %c0_10 = arith.constant 0 : index
    %16 = vector.load %arg15[%c2, %c0_10] : memref<392x64xbf16, #tpu.memory_space<vmem>>, vector<12x64xbf16>
    %c100 = arith.constant 100 : index
    %c0_11 = arith.constant 0 : index
    %17 = vector.load %arg15[%c100, %c0_11] : memref<392x64xbf16, #tpu.memory_space<vmem>>, vector<12x64xbf16>
    %c196 = arith.constant 196 : index
    %c0_12 = arith.constant 0 : index
    %18 = vector.load %arg15[%c196, %c0_12] : memref<392x64xbf16, #tpu.memory_space<vmem>>, vector<12x64xbf16>
    %c294 = arith.constant 294 : index
    %c0_13 = arith.constant 0 : index
    %19 = vector.load %arg15[%c294, %c0_13] : memref<392x64xbf16, #tpu.memory_space<vmem>>, vector<12x64xbf16>
    %c198 = arith.constant 198 : index
    %c0_14 = arith.constant 0 : index
    %20 = vector.load %arg15[%c198, %c0_14] : memref<392x64xbf16, #tpu.memory_space<vmem>>, vector<12x64xbf16>
    %c296 = arith.constant 296 : index
    %c0_15 = arith.constant 0 : index
    %21 = vector.load %arg15[%c296, %c0_15] : memref<392x64xbf16, #tpu.memory_space<vmem>>, vector<12x64xbf16>
    %c14 = arith.constant 14 : index
    %c0_16 = arith.constant 0 : index
    %22 = vector.load %arg15[%c14, %c0_16] : memref<392x64xbf16, #tpu.memory_space<vmem>>, vector<12x64xbf16>
    %c112 = arith.constant 112 : index
    %c0_17 = arith.constant 0 : index
    %23 = vector.load %arg15[%c112, %c0_17] : memref<392x64xbf16, #tpu.memory_space<vmem>>, vector<12x64xbf16>
    %c16 = arith.constant 16 : index
    %c0_18 = arith.constant 0 : index
    %24 = vector.load %arg15[%c16, %c0_18] : memref<392x64xbf16, #tpu.memory_space<vmem>>, vector<12x64xbf16>
    %c114 = arith.constant 114 : index
    %c0_19 = arith.constant 0 : index
    %25 = vector.load %arg15[%c114, %c0_19] : memref<392x64xbf16, #tpu.memory_space<vmem>>, vector<12x64xbf16>
    %c210 = arith.constant 210 : index
    %c0_20 = arith.constant 0 : index
    %26 = vector.load %arg15[%c210, %c0_20] : memref<392x64xbf16, #tpu.memory_space<vmem>>, vector<12x64xbf16>
    %c308 = arith.constant 308 : index
    %c0_21 = arith.constant 0 : index
    %27 = vector.load %arg15[%c308, %c0_21] : memref<392x64xbf16, #tpu.memory_space<vmem>>, vector<12x64xbf16>
    %c212 = arith.constant 212 : index
    %c0_22 = arith.constant 0 : index
    %28 = vector.load %arg15[%c212, %c0_22] : memref<392x64xbf16, #tpu.memory_space<vmem>>, vector<12x64xbf16>
    %c310 = arith.constant 310 : index
    %c0_23 = arith.constant 0 : index
    %29 = vector.load %arg15[%c310, %c0_23] : memref<392x64xbf16, #tpu.memory_space<vmem>>, vector<12x64xbf16>
    %30 = tpu.concatenate %14, %15, %16, %17, %18, %19, %20, %21, %22, %23, %24, %25, %26, %27, %28, %29 in 1 : vector<12x64xbf16>, vector<12x64xbf16>, vector<12x64xbf16>, vector<12x64xbf16>, vector<12x64xbf16>, vector<12x64xbf16>, vector<12x64xbf16>, vector<12x64xbf16>, vector<12x64xbf16>, vector<12x64xbf16>, vector<12x64xbf16>, vector<12x64xbf16>, vector<12x64xbf16>, vector<12x64xbf16>, vector<12x64xbf16>, vector<12x64xbf16> -> vector<12x1024xbf16>
    %c0_24 = arith.constant 0 : index
    %c0_25 = arith.constant 0 : index
    %31 = vector.load %arg3[%c0_24, %c0_25] : memref<1024x128xbf16, #tpu.memory_space<vmem>>, vector<1024x128xbf16>
    %cst_26 = arith.constant dense<0.000000e+00> : vector<12x128xf32>
    %32 = tpu.matmul %30, %31, %cst_26 {dimension_numbers = #tpu.dot_dimension_numbers<[1], [0], [0], [1], [0, 0, 1, 1], [], []>} : vector<12x1024xbf16>, vector<1024x128xbf16>, vector<12x128xf32> -> vector<12x128xf32>
    %cst_27 = arith.constant 0.000000e+00 : f32
    %33 = vector.broadcast %cst_27 : f32 to vector<12x128xf32>
    %34 = arith.cmpf oge, %32, %33 : vector<12x128xf32>
    %cst_28 = arith.constant 2.000000e-01 : f32
    %35 = vector.broadcast %cst_28 : f32 to vector<12x128xf32>
    %36 = arith.mulf %35, %32 : vector<12x128xf32>
    %37 = arith.select %34, %32, %36 : vector<12x128xi1>, vector<12x128xf32>
    %c0_29 = arith.constant 0 : index
    %c0_30 = arith.constant 0 : index
    %38 = vector.load %arg4[%c0_29, %c0_30] : memref<1x128xf32, #tpu.memory_space<vmem>>, vector<1x128xf32>
    %39 = vector.broadcast %38 : vector<1x128xf32> to vector<12x128xf32>
    %40 = arith.mulf %37, %39 : vector<12x128xf32>
    %c0_31 = arith.constant 0 : index
    %c0_32 = arith.constant 0 : index
    %41 = vector.load %arg5[%c0_31, %c0_32] : memref<1x128xf32, #tpu.memory_space<vmem>>, vector<1x128xf32>
    %42 = vector.broadcast %41 : vector<1x128xf32> to vector<12x128xf32>
    %43 = arith.addf %40, %42 : vector<12x128xf32>
    %44 = arith.truncf %43 : vector<12x128xf32> to vector<12x128xbf16>
    %c0_33 = arith.constant 0 : index
    %c0_34 = arith.constant 0 : index
    %45 = vector.load %arg16[%c0_33, %c0_34] : memref<72x128xbf16, #tpu.memory_space<vmem>>, vector<12x128xbf16>
    tpu.vector_store %arg16[%c0_33, %c0_34], %44 {strides = array<i32>} : memref<72x128xbf16, #tpu.memory_space<vmem>>, vector<12x128xbf16>,
    %c14_35 = arith.constant 14 : index
    %c0_36 = arith.constant 0 : index
    %46 = vector.load %arg15[%c14_35, %c0_36] : memref<392x64xbf16, #tpu.memory_space<vmem>>, vector<12x64xbf16>
    %c112_37 = arith.constant 112 : index
    %c0_38 = arith.constant 0 : index
    %47 = vector.load %arg15[%c112_37, %c0_38] : memref<392x64xbf16, #tpu.memory_space<vmem>>, vector<12x64xbf16>
    %c16_39 = arith.constant 16 : index
    %c0_40 = arith.constant 0 : index
    %48 = vector.load %arg15[%c16_39, %c0_40] : memref<392x64xbf16, #tpu.memory_space<vmem>>, vector<12x64xbf16>
    %c114_41 = arith.constant 114 : index
    %c0_42 = arith.constant 0 : index
    %49 = vector.load %arg15[%c114_41, %c0_42] : memref<392x64xbf16, #tpu.memory_space<vmem>>, vector<12x64xbf16>
    %c210_43 = arith.constant 210 : index
    %c0_44 = arith.constant 0 : index
    %50 = vector.load %arg15[%c210_43, %c0_44] : memref<392x64xbf16, #tpu.memory_space<vmem>>, vector<12x64xbf16>
    %c308_45 = arith.constant 308 : index
    %c0_46 = arith.constant 0 : index
    %51 = vector.load %arg15[%c308_45, %c0_46] : memref<392x64xbf16, #tpu.memory_space<vmem>>, vector<12x64xbf16>
    %c212_47 = arith.constant 212 : index
    %c0_48 = arith.constant 0 : index
    %52 = vector.load %arg15[%c212_47, %c0_48] : memref<392x64xbf16, #tpu.memory_space<vmem>>, vector<12x64xbf16>
    %c310_49 = arith.constant 310 : index
    %c0_50 = arith.constant 0 : index
    %53 = vector.load %arg15[%c310_49, %c0_50] : memref<392x64xbf16, #tpu.memory_space<vmem>>, vector<12x64xbf16>
    %c28 = arith.constant 28 : index
    %c0_51 = arith.constant 0 : index
    %54 = vector.load %arg15[%c28, %c0_51] : memref<392x64xbf16, #tpu.memory_space<vmem>>, vector<12x64xbf16>
    %c126 = arith.constant 126 : index
    %c0_52 = arith.constant 0 : index
    %55 = vector.load %arg15[%c126, %c0_52] : memref<392x64xbf16, #tpu.memory_space<vmem>>, vector<12x64xbf16>
    %c30 = arith.constant 30 : index
    %c0_53 = arith.constant 0 : index
    %56 = vector.load %arg15[%c30, %c0_53] : memref<392x64xbf16, #tpu.memory_space<vmem>>, vector<12x64xbf16>
    %c128 = arith.constant 128 : index
    %c0_54 = arith.constant 0 : index
    %57 = vector.load %arg15[%c128, %c0_54] : memref<392x64xbf16, #tpu.memory_space<vmem>>, vector<12x64xbf16>
    %c224 = arith.constant 224 : index
    %c0_55 = arith.constant 0 : index
    %58 = vector.load %arg15[%c224, %c0_55] : memref<392x64xbf16, #tpu.memory_space<vmem>>, vector<12x64xbf16>
    %c322 = arith.constant 322 : index
    %c0_56 = arith.constant 0 : index
    %59 = vector.load %arg15[%c322, %c0_56] : memref<392x64xbf16, #tpu.memory_space<vmem>>, vector<12x64xbf16>
    %c226 = arith.constant 226 : index
    %c0_57 = arith.constant 0 : index
    %60 = vector.load %arg15[%c226, %c0_57] : memref<392x64xbf16, #tpu.memory_space<vmem>>, vector<12x64xbf16>
    %c324 = arith.constant 324 : index
    %c0_58 = arith.constant 0 : index
    %61 = vector.load %arg15[%c324, %c0_58] : memref<392x64xbf16, #tpu.memory_space<vmem>>, vector<12x64xbf16>
    %62 = tpu.concatenate %46, %47, %48, %49, %50, %51, %52, %53, %54, %55, %56, %57, %58, %59, %60, %61 in 1 : vector<12x64xbf16>, vector<12x64xbf16>, vector<12x64xbf16>, vector<12x64xbf16>, vector<12x64xbf16>, vector<12x64xbf16>, vector<12x64xbf16>, vector<12x64xbf16>, vector<12x64xbf16>, vector<12x64xbf16>, vector<12x64xbf16>, vector<12x64xbf16>, vector<12x64xbf16>, vector<12x64xbf16>, vector<12x64xbf16>, vector<12x64xbf16> -> vector<12x1024xbf16>
    %c0_59 = arith.constant 0 : index
    %c0_60 = arith.constant 0 : index
    %63 = vector.load %arg3[%c0_59, %c0_60] : memref<1024x128xbf16, #tpu.memory_space<vmem>>, vector<1024x128xbf16>
    %cst_61 = arith.constant dense<0.000000e+00> : vector<12x128xf32>
    %64 = tpu.matmul %62, %63, %cst_61 {dimension_numbers = #tpu.dot_dimension_numbers<[1], [0], [0], [1], [0, 0, 1, 1], [], []>} : vector<12x1024xbf16>, vector<1024x128xbf16>, vector<12x128xf32> -> vector<12x128xf32>
    %cst_62 = arith.constant 0.000000e+00 : f32
    %65 = vector.broadcast %cst_62 : f32 to vector<12x128xf32>
    %66 = arith.cmpf oge, %64, %65 : vector<12x128xf32>
    %cst_63 = arith.constant 2.000000e-01 : f32
    %67 = vector.broadcast %cst_63 : f32 to vector<12x128xf32>
    %68 = arith.mulf %67, %64 : vector<12x128xf32>
    %69 = arith.select %66, %64, %68 : vector<12x128xi1>, vector<12x128xf32>
    %c0_64 = arith.constant 0 : index
    %c0_65 = arith.constant 0 : index
    %70 = vector.load %arg4[%c0_64, %c0_65] : memref<1x128xf32, #tpu.memory_space<vmem>>, vector<1x128xf32>
    %71 = vector.broadcast %70 : vector<1x128xf32> to vector<12x128xf32>
    %72 = arith.mulf %69, %71 : vector<12x128xf32>
    %c0_66 = arith.constant 0 : index
    %c0_67 = arith.constant 0 : index
    %73 = vector.load %arg5[%c0_66, %c0_67] : memref<1x128xf32, #tpu.memory_space<vmem>>, vector<1x128xf32>
    %74 = vector.broadcast %73 : vector<1x128xf32> to vector<12x128xf32>
    %75 = arith.addf %72, %74 : vector<12x128xf32>
    %76 = arith.truncf %75 : vector<12x128xf32> to vector<12x128xbf16>
    %c12 = arith.constant 12 : index
    %c0_68 = arith.constant 0 : index
    %77 = vector.load %arg16[%c12, %c0_68] : memref<72x128xbf16, #tpu.memory_space<vmem>>, vector<12x128xbf16>
    tpu.vector_store %arg16[%c12, %c0_68], %76 {strides = array<i32>} : memref<72x128xbf16, #tpu.memory_space<vmem>>, vector<12x128xbf16>,
    %c28_69 = arith.constant 28 : index
    %c0_70 = arith.constant 0 : index
    %78 = vector.load %arg15[%c28_69, %c0_70] : memref<392x64xbf16, #tpu.memory_space<vmem>>, vector<12x64xbf16>
    %c126_71 = arith.constant 126 : index
    %c0_72 = arith.constant 0 : index
    %79 = vector.load %arg15[%c126_71, %c0_72] : memref<392x64xbf16, #tpu.memory_space<vmem>>, vector<12x64xbf16>
    %c30_73 = arith.constant 30 : index
    %c0_74 = arith.constant 0 : index
    %80 = vector.load %arg15[%c30_73, %c0_74] : memref<392x64xbf16, #tpu.memory_space<vmem>>, vector<12x64xbf16>
    %c128_75 = arith.constant 128 : index
    %c0_76 = arith.constant 0 : index
    %81 = vector.load %arg15[%c128_75, %c0_76] : memref<392x64xbf16, #tpu.memory_space<vmem>>, vector<12x64xbf16>
    %c224_77 = arith.constant 224 : index
    %c0_78 = arith.constant 0 : index
    %82 = vector.load %arg15[%c224_77, %c0_78] : memref<392x64xbf16, #tpu.memory_space<vmem>>, vector<12x64xbf16>
    %c322_79 = arith.constant 322 : index
    %c0_80 = arith.constant 0 : index
    %83 = vector.load %arg15[%c322_79, %c0_80] : memref<392x64xbf16, #tpu.memory_space<vmem>>, vector<12x64xbf16>
    %c226_81 = arith.constant 226 : index
    %c0_82 = arith.constant 0 : index
    %84 = vector.load %arg15[%c226_81, %c0_82] : memref<392x64xbf16, #tpu.memory_space<vmem>>, vector<12x64xbf16>
    %c324_83 = arith.constant 324 : index
    %c0_84 = arith.constant 0 : index
    %85 = vector.load %arg15[%c324_83, %c0_84] : memref<392x64xbf16, #tpu.memory_space<vmem>>, vector<12x64xbf16>
    %c42 = arith.constant 42 : index
    %c0_85 = arith.constant 0 : index
    %86 = vector.load %arg15[%c42, %c0_85] : memref<392x64xbf16, #tpu.memory_space<vmem>>, vector<12x64xbf16>
    %c140 = arith.constant 140 : index
    %c0_86 = arith.constant 0 : index
    %87 = vector.load %arg15[%c140, %c0_86] : memref<392x64xbf16, #tpu.memory_space<vmem>>, vector<12x64xbf16>
    %c44 = arith.constant 44 : index
    %c0_87 = arith.constant 0 : index
    %88 = vector.load %arg15[%c44, %c0_87] : memref<392x64xbf16, #tpu.memory_space<vmem>>, vector<12x64xbf16>
    %c142 = arith.constant 142 : index
    %c0_88 = arith.constant 0 : index
    %89 = vector.load %arg15[%c142, %c0_88] : memref<392x64xbf16, #tpu.memory_space<vmem>>, vector<12x64xbf16>
    %c238 = arith.constant 238 : index
    %c0_89 = arith.constant 0 : index
    %90 = vector.load %arg15[%c238, %c0_89] : memref<392x64xbf16, #tpu.memory_space<vmem>>, vector<12x64xbf16>
    %c336 = arith.constant 336 : index
    %c0_90 = arith.constant 0 : index
    %91 = vector.load %arg15[%c336, %c0_90] : memref<392x64xbf16, #tpu.memory_space<vmem>>, vector<12x64xbf16>
    %c240 = arith.constant 240 : index
    %c0_91 = arith.constant 0 : index
    %92 = vector.load %arg15[%c240, %c0_91] : memref<392x64xbf16, #tpu.memory_space<vmem>>, vector<12x64xbf16>
    %c338 = arith.constant 338 : index
    %c0_92 = arith.constant 0 : index
    %93 = vector.load %arg15[%c338, %c0_92] : memref<392x64xbf16, #tpu.memory_space<vmem>>, vector<12x64xbf16>
    %94 = tpu.concatenate %78, %79, %80, %81, %82, %83, %84, %85, %86, %87, %88, %89, %90, %91, %92, %93 in 1 : vector<12x64xbf16>, vector<12x64xbf16>, vector<12x64xbf16>, vector<12x64xbf16>, vector<12x64xbf16>, vector<12x64xbf16>, vector<12x64xbf16>, vector<12x64xbf16>, vector<12x64xbf16>, vector<12x64xbf16>, vector<12x64xbf16>, vector<12x64xbf16>, vector<12x64xbf16>, vector<12x64xbf16>, vector<12x64xbf16>, vector<12x64xbf16> -> vector<12x1024xbf16>
    %c0_93 = arith.constant 0 : index
    %c0_94 = arith.constant 0 : index
    %95 = vector.load %arg3[%c0_93, %c0_94] : memref<1024x128xbf16, #tpu.memory_space<vmem>>, vector<1024x128xbf16>
    %cst_95 = arith.constant dense<0.000000e+00> : vector<12x128xf32>
    %96 = tpu.matmul %94, %95, %cst_95 {dimension_numbers = #tpu.dot_dimension_numbers<[1], [0], [0], [1], [0, 0, 1, 1], [], []>} : vector<12x1024xbf16>, vector<1024x128xbf16>, vector<12x128xf32> -> vector<12x128xf32>
    %cst_96 = arith.constant 0.000000e+00 : f32
    %97 = vector.broadcast %cst_96 : f32 to vector<12x128xf32>
    %98 = arith.cmpf oge, %96, %97 : vector<12x128xf32>
    %cst_97 = arith.constant 2.000000e-01 : f32
    %99 = vector.broadcast %cst_97 : f32 to vector<12x128xf32>
    %100 = arith.mulf %99, %96 : vector<12x128xf32>
    %101 = arith.select %98, %96, %100 : vector<12x128xi1>, vector<12x128xf32>
    %c0_98 = arith.constant 0 : index
    %c0_99 = arith.constant 0 : index
    %102 = vector.load %arg4[%c0_98, %c0_99] : memref<1x128xf32, #tpu.memory_space<vmem>>, vector<1x128xf32>
    %103 = vector.broadcast %102 : vector<1x128xf32> to vector<12x128xf32>
    %104 = arith.mulf %101, %103 : vector<12x128xf32>
    %c0_100 = arith.constant 0 : index
    %c0_101 = arith.constant 0 : index
    %105 = vector.load %arg5[%c0_100, %c0_101] : memref<1x128xf32, #tpu.memory_space<vmem>>, vector<1x128xf32>
    %106 = vector.broadcast %105 : vector<1x128xf32> to vector<12x128xf32>
    %107 = arith.addf %104, %106 : vector<12x128xf32>
    %108 = arith.truncf %107 : vector<12x128xf32> to vector<12x128xbf16>
    %c24 = arith.constant 24 : index
    %c0_102 = arith.constant 0 : index
    %109 = vector.load %arg16[%c24, %c0_102] : memref<72x128xbf16, #tpu.memory_space<vmem>>, vector<12x128xbf16>
    tpu.vector_store %arg16[%c24, %c0_102], %108 {strides = array<i32>} : memref<72x128xbf16, #tpu.memory_space<vmem>>, vector<12x128xbf16>,
    %c42_103 = arith.constant 42 : index
    %c0_104 = arith.constant 0 : index
    %110 = vector.load %arg15[%c42_103, %c0_104] : memref<392x64xbf16, #tpu.memory_space<vmem>>, vector<12x64xbf16>
    %c140_105 = arith.constant 140 : index
    %c0_106 = arith.constant 0 : index
    %111 = vector.load %arg15[%c140_105, %c0_106] : memref<392x64xbf16, #tpu.memory_space<vmem>>, vector<12x64xbf16>
    %c44_107 = arith.constant 44 : index
    %c0_108 = arith.constant 0 : index
    %112 = vector.load %arg15[%c44_107, %c0_108] : memref<392x64xbf16, #tpu.memory_space<vmem>>, vector<12x64xbf16>
    %c142_109 = arith.constant 142 : index
    %c0_110 = arith.constant 0 : index
    %113 = vector.load %arg15[%c142_109, %c0_110] : memref<392x64xbf16, #tpu.memory_space<vmem>>, vector<12x64xbf16>
    %c238_111 = arith.constant 238 : index
    %c0_112 = arith.constant 0 : index
    %114 = vector.load %arg15[%c238_111, %c0_112] : memref<392x64xbf16, #tpu.memory_space<vmem>>, vector<12x64xbf16>
    %c336_113 = arith.constant 336 : index
    %c0_114 = arith.constant 0 : index
    %115 = vector.load %arg15[%c336_113, %c0_114] : memref<392x64xbf16, #tpu.memory_space<vmem>>, vector<12x64xbf16>
    %c240_115 = arith.constant 240 : index
    %c0_116 = arith.constant 0 : index
    %116 = vector.load %arg15[%c240_115, %c0_116] : memref<392x64xbf16, #tpu.memory_space<vmem>>, vector<12x64xbf16>
    %c338_117 = arith.constant 338 : index
    %c0_118 = arith.constant 0 : index
    %117 = vector.load %arg15[%c338_117, %c0_118] : memref<392x64xbf16, #tpu.memory_space<vmem>>, vector<12x64xbf16>
    %c56 = arith.constant 56 : index
    %c0_119 = arith.constant 0 : index
    %118 = vector.load %arg15[%c56, %c0_119] : memref<392x64xbf16, #tpu.memory_space<vmem>>, vector<12x64xbf16>
    %c154 = arith.constant 154 : index
    %c0_120 = arith.constant 0 : index
    %119 = vector.load %arg15[%c154, %c0_120] : memref<392x64xbf16, #tpu.memory_space<vmem>>, vector<12x64xbf16>
    %c58 = arith.constant 58 : index
    %c0_121 = arith.constant 0 : index
    %120 = vector.load %arg15[%c58, %c0_121] : memref<392x64xbf16, #tpu.memory_space<vmem>>, vector<12x64xbf16>
    %c156 = arith.constant 156 : index
    %c0_122 = arith.constant 0 : index
    %121 = vector.load %arg15[%c156, %c0_122] : memref<392x64xbf16, #tpu.memory_space<vmem>>, vector<12x64xbf16>
    %c252 = arith.constant 252 : index
    %c0_123 = arith.constant 0 : index
    %122 = vector.load %arg15[%c252, %c0_123] : memref<392x64xbf16, #tpu.memory_space<vmem>>, vector<12x64xbf16>
    %c350 = arith.constant 350 : index
    %c0_124 = arith.constant 0 : index
    %123 = vector.load %arg15[%c350, %c0_124] : memref<392x64xbf16, #tpu.memory_space<vmem>>, vector<12x64xbf16>
    %c254 = arith.constant 254 : index
    %c0_125 = arith.constant 0 : index
    %124 = vector.load %arg15[%c254, %c0_125] : memref<392x64xbf16, #tpu.memory_space<vmem>>, vector<12x64xbf16>
    %c352 = arith.constant 352 : index
    %c0_126 = arith.constant 0 : index
    %125 = vector.load %arg15[%c352, %c0_126] : memref<392x64xbf16, #tpu.memory_space<vmem>>, vector<12x64xbf16>
    %126 = tpu.concatenate %110, %111, %112, %113, %114, %115, %116, %117, %118, %119, %120, %121, %122, %123, %124, %125 in 1 : vector<12x64xbf16>, vector<12x64xbf16>, vector<12x64xbf16>, vector<12x64xbf16>, vector<12x64xbf16>, vector<12x64xbf16>, vector<12x64xbf16>, vector<12x64xbf16>, vector<12x64xbf16>, vector<12x64xbf16>, vector<12x64xbf16>, vector<12x64xbf16>, vector<12x64xbf16>, vector<12x64xbf16>, vector<12x64xbf16>, vector<12x64xbf16> -> vector<12x1024xbf16>
    %c0_127 = arith.constant 0 : index
    %c0_128 = arith.constant 0 : index
    %127 = vector.load %arg3[%c0_127, %c0_128] : memref<1024x128xbf16, #tpu.memory_space<vmem>>, vector<1024x128xbf16>
    %cst_129 = arith.constant dense<0.000000e+00> : vector<12x128xf32>
    %128 = tpu.matmul %126, %127, %cst_129 {dimension_numbers = #tpu.dot_dimension_numbers<[1], [0], [0], [1], [0, 0, 1, 1], [], []>} : vector<12x1024xbf16>, vector<1024x128xbf16>, vector<12x128xf32> -> vector<12x128xf32>
    %cst_130 = arith.constant 0.000000e+00 : f32
    %129 = vector.broadcast %cst_130 : f32 to vector<12x128xf32>
    %130 = arith.cmpf oge, %128, %129 : vector<12x128xf32>
    %cst_131 = arith.constant 2.000000e-01 : f32
    %131 = vector.broadcast %cst_131 : f32 to vector<12x128xf32>
    %132 = arith.mulf %131, %128 : vector<12x128xf32>
    %133 = arith.select %130, %128, %132 : vector<12x128xi1>, vector<12x128xf32>
    %c0_132 = arith.constant 0 : index
    %c0_133 = arith.constant 0 : index
    %134 = vector.load %arg4[%c0_132, %c0_133] : memref<1x128xf32, #tpu.memory_space<vmem>>, vector<1x128xf32>
    %135 = vector.broadcast %134 : vector<1x128xf32> to vector<12x128xf32>
    %136 = arith.mulf %133, %135 : vector<12x128xf32>
    %c0_134 = arith.constant 0 : index
    %c0_135 = arith.constant 0 : index
    %137 = vector.load %arg5[%c0_134, %c0_135] : memref<1x128xf32, #tpu.memory_space<vmem>>, vector<1x128xf32>
    %138 = vector.broadcast %137 : vector<1x128xf32> to vector<12x128xf32>
    %139 = arith.addf %136, %138 : vector<12x128xf32>
    %140 = arith.truncf %139 : vector<12x128xf32> to vector<12x128xbf16>
    %c36 = arith.constant 36 : index
    %c0_136 = arith.constant 0 : index
    %141 = vector.load %arg16[%c36, %c0_136] : memref<72x128xbf16, #tpu.memory_space<vmem>>, vector<12x128xbf16>
    tpu.vector_store %arg16[%c36, %c0_136], %140 {strides = array<i32>} : memref<72x128xbf16, #tpu.memory_space<vmem>>, vector<12x128xbf16>,
    %c56_137 = arith.constant 56 : index
    %c0_138 = arith.constant 0 : index
    %142 = vector.load %arg15[%c56_137, %c0_138] : memref<392x64xbf16, #tpu.memory_space<vmem>>, vector<12x64xbf16>
    %c154_139 = arith.constant 154 : index
    %c0_140 = arith.constant 0 : index
    %143 = vector.load %arg15[%c154_139, %c0_140] : memref<392x64xbf16, #tpu.memory_space<vmem>>, vector<12x64xbf16>
    %c58_141 = arith.constant 58 : index
    %c0_142 = arith.constant 0 : index
    %144 = vector.load %arg15[%c58_141, %c0_142] : memref<392x64xbf16, #tpu.memory_space<vmem>>, vector<12x64xbf16>
    %c156_143 = arith.constant 156 : index
    %c0_144 = arith.constant 0 : index
    %145 = vector.load %arg15[%c156_143, %c0_144] : memref<392x64xbf16, #tpu.memory_space<vmem>>, vector<12x64xbf16>
    %c252_145 = arith.constant 252 : index
    %c0_146 = arith.constant 0 : index
    %146 = vector.load %arg15[%c252_145, %c0_146] : memref<392x64xbf16, #tpu.memory_space<vmem>>, vector<12x64xbf16>
    %c350_147 = arith.constant 350 : index
    %c0_148 = arith.constant 0 : index
    %147 = vector.load %arg15[%c350_147, %c0_148] : memref<392x64xbf16, #tpu.memory_space<vmem>>, vector<12x64xbf16>
    %c254_149 = arith.constant 254 : index
    %c0_150 = arith.constant 0 : index
    %148 = vector.load %arg15[%c254_149, %c0_150] : memref<392x64xbf16, #tpu.memory_space<vmem>>, vector<12x64xbf16>
    %c352_151 = arith.constant 352 : index
    %c0_152 = arith.constant 0 : index
    %149 = vector.load %arg15[%c352_151, %c0_152] : memref<392x64xbf16, #tpu.memory_space<vmem>>, vector<12x64xbf16>
    %c70 = arith.constant 70 : index
    %c0_153 = arith.constant 0 : index
    %150 = vector.load %arg15[%c70, %c0_153] : memref<392x64xbf16, #tpu.memory_space<vmem>>, vector<12x64xbf16>
    %c168 = arith.constant 168 : index
    %c0_154 = arith.constant 0 : index
    %151 = vector.load %arg15[%c168, %c0_154] : memref<392x64xbf16, #tpu.memory_space<vmem>>, vector<12x64xbf16>
    %c72 = arith.constant 72 : index
    %c0_155 = arith.constant 0 : index
    %152 = vector.load %arg15[%c72, %c0_155] : memref<392x64xbf16, #tpu.memory_space<vmem>>, vector<12x64xbf16>
    %c170 = arith.constant 170 : index
    %c0_156 = arith.constant 0 : index
    %153 = vector.load %arg15[%c170, %c0_156] : memref<392x64xbf16, #tpu.memory_space<vmem>>, vector<12x64xbf16>
    %c266 = arith.constant 266 : index
    %c0_157 = arith.constant 0 : index
    %154 = vector.load %arg15[%c266, %c0_157] : memref<392x64xbf16, #tpu.memory_space<vmem>>, vector<12x64xbf16>
    %c364 = arith.constant 364 : index
    %c0_158 = arith.constant 0 : index
    %155 = vector.load %arg15[%c364, %c0_158] : memref<392x64xbf16, #tpu.memory_space<vmem>>, vector<12x64xbf16>
    %c268 = arith.constant 268 : index
    %c0_159 = arith.constant 0 : index
    %156 = vector.load %arg15[%c268, %c0_159] : memref<392x64xbf16, #tpu.memory_space<vmem>>, vector<12x64xbf16>
    %c366 = arith.constant 366 : index
    %c0_160 = arith.constant 0 : index
    %157 = vector.load %arg15[%c366, %c0_160] : memref<392x64xbf16, #tpu.memory_space<vmem>>, vector<12x64xbf16>
    %158 = tpu.concatenate %142, %143, %144, %145, %146, %147, %148, %149, %150, %151, %152, %153, %154, %155, %156, %157 in 1 : vector<12x64xbf16>, vector<12x64xbf16>, vector<12x64xbf16>, vector<12x64xbf16>, vector<12x64xbf16>, vector<12x64xbf16>, vector<12x64xbf16>, vector<12x64xbf16>, vector<12x64xbf16>, vector<12x64xbf16>, vector<12x64xbf16>, vector<12x64xbf16>, vector<12x64xbf16>, vector<12x64xbf16>, vector<12x64xbf16>, vector<12x64xbf16> -> vector<12x1024xbf16>
    %c0_161 = arith.constant 0 : index
    %c0_162 = arith.constant 0 : index
    %159 = vector.load %arg3[%c0_161, %c0_162] : memref<1024x128xbf16, #tpu.memory_space<vmem>>, vector<1024x128xbf16>
    %cst_163 = arith.constant dense<0.000000e+00> : vector<12x128xf32>
    %160 = tpu.matmul %158, %159, %cst_163 {dimension_numbers = #tpu.dot_dimension_numbers<[1], [0], [0], [1], [0, 0, 1, 1], [], []>} : vector<12x1024xbf16>, vector<1024x128xbf16>, vector<12x128xf32> -> vector<12x128xf32>
    %cst_164 = arith.constant 0.000000e+00 : f32
    %161 = vector.broadcast %cst_164 : f32 to vector<12x128xf32>
    %162 = arith.cmpf oge, %160, %161 : vector<12x128xf32>
    %cst_165 = arith.constant 2.000000e-01 : f32
    %163 = vector.broadcast %cst_165 : f32 to vector<12x128xf32>
    %164 = arith.mulf %163, %160 : vector<12x128xf32>
    %165 = arith.select %162, %160, %164 : vector<12x128xi1>, vector<12x128xf32>
    %c0_166 = arith.constant 0 : index
    %c0_167 = arith.constant 0 : index
    %166 = vector.load %arg4[%c0_166, %c0_167] : memref<1x128xf32, #tpu.memory_space<vmem>>, vector<1x128xf32>
    %167 = vector.broadcast %166 : vector<1x128xf32> to vector<12x128xf32>
    %168 = arith.mulf %165, %167 : vector<12x128xf32>
    %c0_168 = arith.constant 0 : index
    %c0_169 = arith.constant 0 : index
    %169 = vector.load %arg5[%c0_168, %c0_169] : memref<1x128xf32, #tpu.memory_space<vmem>>, vector<1x128xf32>
    %170 = vector.broadcast %169 : vector<1x128xf32> to vector<12x128xf32>
    %171 = arith.addf %168, %170 : vector<12x128xf32>
    %172 = arith.truncf %171 : vector<12x128xf32> to vector<12x128xbf16>
    %c48 = arith.constant 48 : index
    %c0_170 = arith.constant 0 : index
    %173 = vector.load %arg16[%c48, %c0_170] : memref<72x128xbf16, #tpu.memory_space<vmem>>, vector<12x128xbf16>
    tpu.vector_store %arg16[%c48, %c0_170], %172 {strides = array<i32>} : memref<72x128xbf16, #tpu.memory_space<vmem>>, vector<12x128xbf16>,
    %c70_171 = arith.constant 70 : index
    %c0_172 = arith.constant 0 : index
    %174 = vector.load %arg15[%c70_171, %c0_172] : memref<392x64xbf16, #tpu.memory_space<vmem>>, vector<12x64xbf16>
    %c168_173 = arith.constant 168 : index
    %c0_174 = arith.constant 0 : index
    %175 = vector.load %arg15[%c168_173, %c0_174] : memref<392x64xbf16, #tpu.memory_space<vmem>>, vector<12x64xbf16>
    %c72_175 = arith.constant 72 : index
    %c0_176 = arith.constant 0 : index
    %176 = vector.load %arg15[%c72_175, %c0_176] : memref<392x64xbf16, #tpu.memory_space<vmem>>, vector<12x64xbf16>
    %c170_177 = arith.constant 170 : index
    %c0_178 = arith.constant 0 : index
    %177 = vector.load %arg15[%c170_177, %c0_178] : memref<392x64xbf16, #tpu.memory_space<vmem>>, vector<12x64xbf16>
    %c266_179 = arith.constant 266 : index
    %c0_180 = arith.constant 0 : index
    %178 = vector.load %arg15[%c266_179, %c0_180] : memref<392x64xbf16, #tpu.memory_space<vmem>>, vector<12x64xbf16>
    %c364_181 = arith.constant 364 : index
    %c0_182 = arith.constant 0 : index
    %179 = vector.load %arg15[%c364_181, %c0_182] : memref<392x64xbf16, #tpu.memory_space<vmem>>, vector<12x64xbf16>
    %c268_183 = arith.constant 268 : index
    %c0_184 = arith.constant 0 : index
    %180 = vector.load %arg15[%c268_183, %c0_184] : memref<392x64xbf16, #tpu.memory_space<vmem>>, vector<12x64xbf16>
    %c366_185 = arith.constant 366 : index
    %c0_186 = arith.constant 0 : index
    %181 = vector.load %arg15[%c366_185, %c0_186] : memref<392x64xbf16, #tpu.memory_space<vmem>>, vector<12x64xbf16>
    %c84 = arith.constant 84 : index
    %c0_187 = arith.constant 0 : index
    %182 = vector.load %arg15[%c84, %c0_187] : memref<392x64xbf16, #tpu.memory_space<vmem>>, vector<12x64xbf16>
    %c182 = arith.constant 182 : index
    %c0_188 = arith.constant 0 : index
    %183 = vector.load %arg15[%c182, %c0_188] : memref<392x64xbf16, #tpu.memory_space<vmem>>, vector<12x64xbf16>
    %c86 = arith.constant 86 : index
    %c0_189 = arith.constant 0 : index
    %184 = vector.load %arg15[%c86, %c0_189] : memref<392x64xbf16, #tpu.memory_space<vmem>>, vector<12x64xbf16>
    %c184 = arith.constant 184 : index
    %c0_190 = arith.constant 0 : index
    %185 = vector.load %arg15[%c184, %c0_190] : memref<392x64xbf16, #tpu.memory_space<vmem>>, vector<12x64xbf16>
    %c280 = arith.constant 280 : index
    %c0_191 = arith.constant 0 : index
    %186 = vector.load %arg15[%c280, %c0_191] : memref<392x64xbf16, #tpu.memory_space<vmem>>, vector<12x64xbf16>
    %c378 = arith.constant 378 : index
    %c0_192 = arith.constant 0 : index
    %187 = vector.load %arg15[%c378, %c0_192] : memref<392x64xbf16, #tpu.memory_space<vmem>>, vector<12x64xbf16>
    %c282 = arith.constant 282 : index
    %c0_193 = arith.constant 0 : index
    %188 = vector.load %arg15[%c282, %c0_193] : memref<392x64xbf16, #tpu.memory_space<vmem>>, vector<12x64xbf16>
    %c380 = arith.constant 380 : index
    %c0_194 = arith.constant 0 : index
    %189 = vector.load %arg15[%c380, %c0_194] : memref<392x64xbf16, #tpu.memory_space<vmem>>, vector<12x64xbf16>
    %190 = tpu.concatenate %174, %175, %176, %177, %178, %179, %180, %181, %182, %183, %184, %185, %186, %187, %188, %189 in 1 : vector<12x64xbf16>, vector<12x64xbf16>, vector<12x64xbf16>, vector<12x64xbf16>, vector<12x64xbf16>, vector<12x64xbf16>, vector<12x64xbf16>, vector<12x64xbf16>, vector<12x64xbf16>, vector<12x64xbf16>, vector<12x64xbf16>, vector<12x64xbf16>, vector<12x64xbf16>, vector<12x64xbf16>, vector<12x64xbf16>, vector<12x64xbf16> -> vector<12x1024xbf16>
    %c0_195 = arith.constant 0 : index
    %c0_196 = arith.constant 0 : index
    %191 = vector.load %arg3[%c0_195, %c0_196] : memref<1024x128xbf16, #tpu.memory_space<vmem>>, vector<1024x128xbf16>
    %cst_197 = arith.constant dense<0.000000e+00> : vector<12x128xf32>
    %192 = tpu.matmul %190, %191, %cst_197 {dimension_numbers = #tpu.dot_dimension_numbers<[1], [0], [0], [1], [0, 0, 1, 1], [], []>} : vector<12x1024xbf16>, vector<1024x128xbf16>, vector<12x128xf32> -> vector<12x128xf32>
    %cst_198 = arith.constant 0.000000e+00 : f32
    %193 = vector.broadcast %cst_198 : f32 to vector<12x128xf32>
    %194 = arith.cmpf oge, %192, %193 : vector<12x128xf32>
    %cst_199 = arith.constant 2.000000e-01 : f32
    %195 = vector.broadcast %cst_199 : f32 to vector<12x128xf32>
    %196 = arith.mulf %195, %192 : vector<12x128xf32>
    %197 = arith.select %194, %192, %196 : vector<12x128xi1>, vector<12x128xf32>
    %c0_200 = arith.constant 0 : index
    %c0_201 = arith.constant 0 : index
    %198 = vector.load %arg4[%c0_200, %c0_201] : memref<1x128xf32, #tpu.memory_space<vmem>>, vector<1x128xf32>
    %199 = vector.broadcast %198 : vector<1x128xf32> to vector<12x128xf32>
    %200 = arith.mulf %197, %199 : vector<12x128xf32>
    %c0_202 = arith.constant 0 : index
    %c0_203 = arith.constant 0 : index
    %201 = vector.load %arg5[%c0_202, %c0_203] : memref<1x128xf32, #tpu.memory_space<vmem>>, vector<1x128xf32>
    %202 = vector.broadcast %201 : vector<1x128xf32> to vector<12x128xf32>
    %203 = arith.addf %200, %202 : vector<12x128xf32>
    %204 = arith.truncf %203 : vector<12x128xf32> to vector<12x128xbf16>
    %c60 = arith.constant 60 : index
    %c0_204 = arith.constant 0 : index
    %205 = vector.load %arg16[%c60, %c0_204] : memref<72x128xbf16, #tpu.memory_space<vmem>>, vector<12x128xbf16>
    tpu.vector_store %arg16[%c60, %c0_204], %204 {strides = array<i32>} : memref<72x128xbf16, #tpu.memory_space<vmem>>, vector<12x128xbf16>,
    %c0_i32_205 = arith.constant 0 : i32
    %206 = tpu.memref_slice %arg20[%c0_i32_205] : memref<2x!tpu.dma_semaphore, #tpu.memory_space<semaphore_mem>> -> memref<1x!tpu.dma_semaphore, #tpu.memory_space<semaphore_mem>>
    %207 = tpu.memref_squeeze %206 : memref<1x!tpu.dma_semaphore, #tpu.memory_space<semaphore_mem>> -> memref<!tpu.dma_semaphore, #tpu.memory_space<semaphore_mem>>
    tpu.wait_dma2 semaphore(%207 : memref<!tpu.dma_semaphore, #tpu.memory_space<semaphore_mem>>) src(%arg6 : memref<1152x256xbf16, #tpu.memory_space<any>>) dst(%arg18 : memref<1152x256xbf16, #tpu.memory_space<vmem>>)
    %c0_206 = arith.constant 0 : index
    %c0_207 = arith.constant 0 : index
    %208 = vector.load %arg16[%c0_206, %c0_207] : memref<72x128xbf16, #tpu.memory_space<vmem>>, vector<8x128xbf16>
    %c2_208 = arith.constant 2 : index
    %c0_209 = arith.constant 0 : index
    %209 = vector.load %arg16[%c2_208, %c0_209] : memref<72x128xbf16, #tpu.memory_space<vmem>>, vector<8x128xbf16>
    %c4 = arith.constant 4 : index
    %c0_210 = arith.constant 0 : index
    %210 = vector.load %arg16[%c4, %c0_210] : memref<72x128xbf16, #tpu.memory_space<vmem>>, vector<8x128xbf16>
    %c12_211 = arith.constant 12 : index
    %c0_212 = arith.constant 0 : index
    %211 = vector.load %arg16[%c12_211, %c0_212] : memref<72x128xbf16, #tpu.memory_space<vmem>>, vector<8x128xbf16>
    %c14_213 = arith.constant 14 : index
    %c0_214 = arith.constant 0 : index
    %212 = vector.load %arg16[%c14_213, %c0_214] : memref<72x128xbf16, #tpu.memory_space<vmem>>, vector<8x128xbf16>
    %c16_215 = arith.constant 16 : index
    %c0_216 = arith.constant 0 : index
    %213 = vector.load %arg16[%c16_215, %c0_216] : memref<72x128xbf16, #tpu.memory_space<vmem>>, vector<8x128xbf16>
    %c24_217 = arith.constant 24 : index
    %c0_218 = arith.constant 0 : index
    %214 = vector.load %arg16[%c24_217, %c0_218] : memref<72x128xbf16, #tpu.memory_space<vmem>>, vector<8x128xbf16>
    %c26 = arith.constant 26 : index
    %c0_219 = arith.constant 0 : index
    %215 = vector.load %arg16[%c26, %c0_219] : memref<72x128xbf16, #tpu.memory_space<vmem>>, vector<8x128xbf16>
    %c28_220 = arith.constant 28 : index
    %c0_221 = arith.constant 0 : index
    %216 = vector.load %arg16[%c28_220, %c0_221] : memref<72x128xbf16, #tpu.memory_space<vmem>>, vector<8x128xbf16>
    %217 = tpu.concatenate %208, %209, %210, %211, %212, %213, %214, %215, %216 in 1 : vector<8x128xbf16>, vector<8x128xbf16>, vector<8x128xbf16>, vector<8x128xbf16>, vector<8x128xbf16>, vector<8x128xbf16>, vector<8x128xbf16>, vector<8x128xbf16>, vector<8x128xbf16> -> vector<8x1152xbf16>
    %c0_222 = arith.constant 0 : index
    %c0_223 = arith.constant 0 : index
    %218 = vector.load %arg18[%c0_222, %c0_223] : memref<1152x256xbf16, #tpu.memory_space<vmem>>, vector<1152x256xbf16>
    %cst_224 = arith.constant dense<0.000000e+00> : vector<8x256xf32>
    %219 = tpu.matmul %217, %218, %cst_224 {dimension_numbers = #tpu.dot_dimension_numbers<[1], [0], [0], [1], [0, 0, 1, 1], [], []>} : vector<8x1152xbf16>, vector<1152x256xbf16>, vector<8x256xf32> -> vector<8x256xf32>
    %cst_225 = arith.constant 0.000000e+00 : f32
    %220 = vector.broadcast %cst_225 : f32 to vector<8x256xf32>
    %221 = arith.cmpf oge, %219, %220 : vector<8x256xf32>
    %cst_226 = arith.constant 2.000000e-01 : f32
    %222 = vector.broadcast %cst_226 : f32 to vector<8x256xf32>
    %223 = arith.mulf %222, %219 : vector<8x256xf32>
    %224 = arith.select %221, %219, %223 : vector<8x256xi1>, vector<8x256xf32>
    %c0_227 = arith.constant 0 : index
    %c0_228 = arith.constant 0 : index
    %225 = vector.load %arg7[%c0_227, %c0_228] : memref<1x256xf32, #tpu.memory_space<vmem>>, vector<1x256xf32>
    %226 = vector.broadcast %225 : vector<1x256xf32> to vector<8x256xf32>
    %227 = arith.mulf %224, %226 : vector<8x256xf32>
    %c0_229 = arith.constant 0 : index
    %c0_230 = arith.constant 0 : index
    %228 = vector.load %arg8[%c0_229, %c0_230] : memref<1x256xf32, #tpu.memory_space<vmem>>, vector<1x256xf32>
    %229 = vector.broadcast %228 : vector<1x256xf32> to vector<8x256xf32>
    %230 = arith.addf %227, %229 : vector<8x256xf32>
    %231 = arith.truncf %230 : vector<8x256xf32> to vector<8x256xbf16>
    %c0_231 = arith.constant 0 : index
    %c0_232 = arith.constant 0 : index
    %232 = vector.load %arg17[%c0_231, %c0_232] : memref<32x256xbf16, #tpu.memory_space<vmem>>, vector<8x256xbf16>
    tpu.vector_store %arg17[%c0_231, %c0_232], %231 {strides = array<i32>} : memref<32x256xbf16, #tpu.memory_space<vmem>>, vector<8x256xbf16>,
    %c12_233 = arith.constant 12 : index
    %c0_234 = arith.constant 0 : index
    %233 = vector.load %arg16[%c12_233, %c0_234] : memref<72x128xbf16, #tpu.memory_space<vmem>>, vector<8x128xbf16>
    %c14_235 = arith.constant 14 : index
    %c0_236 = arith.constant 0 : index
    %234 = vector.load %arg16[%c14_235, %c0_236] : memref<72x128xbf16, #tpu.memory_space<vmem>>, vector<8x128xbf16>
    %c16_237 = arith.constant 16 : index
    %c0_238 = arith.constant 0 : index
    %235 = vector.load %arg16[%c16_237, %c0_238] : memref<72x128xbf16, #tpu.memory_space<vmem>>, vector<8x128xbf16>
    %c24_239 = arith.constant 24 : index
    %c0_240 = arith.constant 0 : index
    %236 = vector.load %arg16[%c24_239, %c0_240] : memref<72x128xbf16, #tpu.memory_space<vmem>>, vector<8x128xbf16>
    %c26_241 = arith.constant 26 : index
    %c0_242 = arith.constant 0 : index
    %237 = vector.load %arg16[%c26_241, %c0_242] : memref<72x128xbf16, #tpu.memory_space<vmem>>, vector<8x128xbf16>
    %c28_243 = arith.constant 28 : index
    %c0_244 = arith.constant 0 : index
    %238 = vector.load %arg16[%c28_243, %c0_244] : memref<72x128xbf16, #tpu.memory_space<vmem>>, vector<8x128xbf16>
    %c36_245 = arith.constant 36 : index
    %c0_246 = arith.constant 0 : index
    %239 = vector.load %arg16[%c36_245, %c0_246] : memref<72x128xbf16, #tpu.memory_space<vmem>>, vector<8x128xbf16>
    %c38 = arith.constant 38 : index
    %c0_247 = arith.constant 0 : index
    %240 = vector.load %arg16[%c38, %c0_247] : memref<72x128xbf16, #tpu.memory_space<vmem>>, vector<8x128xbf16>
    %c40 = arith.constant 40 : index
    %c0_248 = arith.constant 0 : index
    %241 = vector.load %arg16[%c40, %c0_248] : memref<72x128xbf16, #tpu.memory_space<vmem>>, vector<8x128xbf16>
    %242 = tpu.concatenate %233, %234, %235, %236, %237, %238, %239, %240, %241 in 1 : vector<8x128xbf16>, vector<8x128xbf16>, vector<8x128xbf16>, vector<8x128xbf16>, vector<8x128xbf16>, vector<8x128xbf16>, vector<8x128xbf16>, vector<8x128xbf16>, vector<8x128xbf16> -> vector<8x1152xbf16>
    %c0_249 = arith.constant 0 : index
    %c0_250 = arith.constant 0 : index
    %243 = vector.load %arg18[%c0_249, %c0_250] : memref<1152x256xbf16, #tpu.memory_space<vmem>>, vector<1152x256xbf16>
    %cst_251 = arith.constant dense<0.000000e+00> : vector<8x256xf32>
    %244 = tpu.matmul %242, %243, %cst_251 {dimension_numbers = #tpu.dot_dimension_numbers<[1], [0], [0], [1], [0, 0, 1, 1], [], []>} : vector<8x1152xbf16>, vector<1152x256xbf16>, vector<8x256xf32> -> vector<8x256xf32>
    %cst_252 = arith.constant 0.000000e+00 : f32
    %245 = vector.broadcast %cst_252 : f32 to vector<8x256xf32>
    %246 = arith.cmpf oge, %244, %245 : vector<8x256xf32>
    %cst_253 = arith.constant 2.000000e-01 : f32
    %247 = vector.broadcast %cst_253 : f32 to vector<8x256xf32>
    %248 = arith.mulf %247, %244 : vector<8x256xf32>
    %249 = arith.select %246, %244, %248 : vector<8x256xi1>, vector<8x256xf32>
    %c0_254 = arith.constant 0 : index
    %c0_255 = arith.constant 0 : index
    %250 = vector.load %arg7[%c0_254, %c0_255] : memref<1x256xf32, #tpu.memory_space<vmem>>, vector<1x256xf32>
    %251 = vector.broadcast %250 : vector<1x256xf32> to vector<8x256xf32>
    %252 = arith.mulf %249, %251 : vector<8x256xf32>
    %c0_256 = arith.constant 0 : index
    %c0_257 = arith.constant 0 : index
    %253 = vector.load %arg8[%c0_256, %c0_257] : memref<1x256xf32, #tpu.memory_space<vmem>>, vector<1x256xf32>
    %254 = vector.broadcast %253 : vector<1x256xf32> to vector<8x256xf32>
    %255 = arith.addf %252, %254 : vector<8x256xf32>
    %256 = arith.truncf %255 : vector<8x256xf32> to vector<8x256xbf16>
    %c8 = arith.constant 8 : index
    %c0_258 = arith.constant 0 : index
    %257 = vector.load %arg17[%c8, %c0_258] : memref<32x256xbf16, #tpu.memory_space<vmem>>, vector<8x256xbf16>
    tpu.vector_store %arg17[%c8, %c0_258], %256 {strides = array<i32>} : memref<32x256xbf16, #tpu.memory_space<vmem>>, vector<8x256xbf16>,
    %c24_259 = arith.constant 24 : index
    %c0_260 = arith.constant 0 : index
    %258 = vector.load %arg16[%c24_259, %c0_260] : memref<72x128xbf16, #tpu.memory_space<vmem>>, vector<8x128xbf16>
    %c26_261 = arith.constant 26 : index
    %c0_262 = arith.constant 0 : index
    %259 = vector.load %arg16[%c26_261, %c0_262] : memref<72x128xbf16, #tpu.memory_space<vmem>>, vector<8x128xbf16>
    %c28_263 = arith.constant 28 : index
    %c0_264 = arith.constant 0 : index
    %260 = vector.load %arg16[%c28_263, %c0_264] : memref<72x128xbf16, #tpu.memory_space<vmem>>, vector<8x128xbf16>
    %c36_265 = arith.constant 36 : index
    %c0_266 = arith.constant 0 : index
    %261 = vector.load %arg16[%c36_265, %c0_266] : memref<72x128xbf16, #tpu.memory_space<vmem>>, vector<8x128xbf16>
    %c38_267 = arith.constant 38 : index
    %c0_268 = arith.constant 0 : index
    %262 = vector.load %arg16[%c38_267, %c0_268] : memref<72x128xbf16, #tpu.memory_space<vmem>>, vector<8x128xbf16>
    %c40_269 = arith.constant 40 : index
    %c0_270 = arith.constant 0 : index
    %263 = vector.load %arg16[%c40_269, %c0_270] : memref<72x128xbf16, #tpu.memory_space<vmem>>, vector<8x128xbf16>
    %c48_271 = arith.constant 48 : index
    %c0_272 = arith.constant 0 : index
    %264 = vector.load %arg16[%c48_271, %c0_272] : memref<72x128xbf16, #tpu.memory_space<vmem>>, vector<8x128xbf16>
    %c50 = arith.constant 50 : index
    %c0_273 = arith.constant 0 : index
    %265 = vector.load %arg16[%c50, %c0_273] : memref<72x128xbf16, #tpu.memory_space<vmem>>, vector<8x128xbf16>
    %c52 = arith.constant 52 : index
    %c0_274 = arith.constant 0 : index
    %266 = vector.load %arg16[%c52, %c0_274] : memref<72x128xbf16, #tpu.memory_space<vmem>>, vector<8x128xbf16>
    %267 = tpu.concatenate %258, %259, %260, %261, %262, %263, %264, %265, %266 in 1 : vector<8x128xbf16>, vector<8x128xbf16>, vector<8x128xbf16>, vector<8x128xbf16>, vector<8x128xbf16>, vector<8x128xbf16>, vector<8x128xbf16>, vector<8x128xbf16>, vector<8x128xbf16> -> vector<8x1152xbf16>
    %c0_275 = arith.constant 0 : index
    %c0_276 = arith.constant 0 : index
    %268 = vector.load %arg18[%c0_275, %c0_276] : memref<1152x256xbf16, #tpu.memory_space<vmem>>, vector<1152x256xbf16>
    %cst_277 = arith.constant dense<0.000000e+00> : vector<8x256xf32>
    %269 = tpu.matmul %267, %268, %cst_277 {dimension_numbers = #tpu.dot_dimension_numbers<[1], [0], [0], [1], [0, 0, 1, 1], [], []>} : vector<8x1152xbf16>, vector<1152x256xbf16>, vector<8x256xf32> -> vector<8x256xf32>
    %cst_278 = arith.constant 0.000000e+00 : f32
    %270 = vector.broadcast %cst_278 : f32 to vector<8x256xf32>
    %271 = arith.cmpf oge, %269, %270 : vector<8x256xf32>
    %cst_279 = arith.constant 2.000000e-01 : f32
    %272 = vector.broadcast %cst_279 : f32 to vector<8x256xf32>
    %273 = arith.mulf %272, %269 : vector<8x256xf32>
    %274 = arith.select %271, %269, %273 : vector<8x256xi1>, vector<8x256xf32>
    %c0_280 = arith.constant 0 : index
    %c0_281 = arith.constant 0 : index
    %275 = vector.load %arg7[%c0_280, %c0_281] : memref<1x256xf32, #tpu.memory_space<vmem>>, vector<1x256xf32>
    %276 = vector.broadcast %275 : vector<1x256xf32> to vector<8x256xf32>
    %277 = arith.mulf %274, %276 : vector<8x256xf32>
    %c0_282 = arith.constant 0 : index
    %c0_283 = arith.constant 0 : index
    %278 = vector.load %arg8[%c0_282, %c0_283] : memref<1x256xf32, #tpu.memory_space<vmem>>, vector<1x256xf32>
    %279 = vector.broadcast %278 : vector<1x256xf32> to vector<8x256xf32>
    %280 = arith.addf %277, %279 : vector<8x256xf32>
    %281 = arith.truncf %280 : vector<8x256xf32> to vector<8x256xbf16>
    %c16_284 = arith.constant 16 : index
    %c0_285 = arith.constant 0 : index
    %282 = vector.load %arg17[%c16_284, %c0_285] : memref<32x256xbf16, #tpu.memory_space<vmem>>, vector<8x256xbf16>
    tpu.vector_store %arg17[%c16_284, %c0_285], %281 {strides = array<i32>} : memref<32x256xbf16, #tpu.memory_space<vmem>>, vector<8x256xbf16>,
    %c36_286 = arith.constant 36 : index
    %c0_287 = arith.constant 0 : index
    %283 = vector.load %arg16[%c36_286, %c0_287] : memref<72x128xbf16, #tpu.memory_space<vmem>>, vector<8x128xbf16>
    %c38_288 = arith.constant 38 : index
    %c0_289 = arith.constant 0 : index
    %284 = vector.load %arg16[%c38_288, %c0_289] : memref<72x128xbf16, #tpu.memory_space<vmem>>, vector<8x128xbf16>
    %c40_290 = arith.constant 40 : index
    %c0_291 = arith.constant 0 : index
    %285 = vector.load %arg16[%c40_290, %c0_291] : memref<72x128xbf16, #tpu.memory_space<vmem>>, vector<8x128xbf16>
    %c48_292 = arith.constant 48 : index
    %c0_293 = arith.constant 0 : index
    %286 = vector.load %arg16[%c48_292, %c0_293] : memref<72x128xbf16, #tpu.memory_space<vmem>>, vector<8x128xbf16>
    %c50_294 = arith.constant 50 : index
    %c0_295 = arith.constant 0 : index
    %287 = vector.load %arg16[%c50_294, %c0_295] : memref<72x128xbf16, #tpu.memory_space<vmem>>, vector<8x128xbf16>
    %c52_296 = arith.constant 52 : index
    %c0_297 = arith.constant 0 : index
    %288 = vector.load %arg16[%c52_296, %c0_297] : memref<72x128xbf16, #tpu.memory_space<vmem>>, vector<8x128xbf16>
    %c60_298 = arith.constant 60 : index
    %c0_299 = arith.constant 0 : index
    %289 = vector.load %arg16[%c60_298, %c0_299] : memref<72x128xbf16, #tpu.memory_space<vmem>>, vector<8x128xbf16>
    %c62 = arith.constant 62 : index
    %c0_300 = arith.constant 0 : index
    %290 = vector.load %arg16[%c62, %c0_300] : memref<72x128xbf16, #tpu.memory_space<vmem>>, vector<8x128xbf16>
    %c64 = arith.constant 64 : index
    %c0_301 = arith.constant 0 : index
    %291 = vector.load %arg16[%c64, %c0_301] : memref<72x128xbf16, #tpu.memory_space<vmem>>, vector<8x128xbf16>
    %292 = tpu.concatenate %283, %284, %285, %286, %287, %288, %289, %290, %291 in 1 : vector<8x128xbf16>, vector<8x128xbf16>, vector<8x128xbf16>, vector<8x128xbf16>, vector<8x128xbf16>, vector<8x128xbf16>, vector<8x128xbf16>, vector<8x128xbf16>, vector<8x128xbf16> -> vector<8x1152xbf16>
    %c0_302 = arith.constant 0 : index
    %c0_303 = arith.constant 0 : index
    %293 = vector.load %arg18[%c0_302, %c0_303] : memref<1152x256xbf16, #tpu.memory_space<vmem>>, vector<1152x256xbf16>
    %cst_304 = arith.constant dense<0.000000e+00> : vector<8x256xf32>
    %294 = tpu.matmul %292, %293, %cst_304 {dimension_numbers = #tpu.dot_dimension_numbers<[1], [0], [0], [1], [0, 0, 1, 1], [], []>} : vector<8x1152xbf16>, vector<1152x256xbf16>, vector<8x256xf32> -> vector<8x256xf32>
    %cst_305 = arith.constant 0.000000e+00 : f32
    %295 = vector.broadcast %cst_305 : f32 to vector<8x256xf32>
    %296 = arith.cmpf oge, %294, %295 : vector<8x256xf32>
    %cst_306 = arith.constant 2.000000e-01 : f32
    %297 = vector.broadcast %cst_306 : f32 to vector<8x256xf32>
    %298 = arith.mulf %297, %294 : vector<8x256xf32>
    %299 = arith.select %296, %294, %298 : vector<8x256xi1>, vector<8x256xf32>
    %c0_307 = arith.constant 0 : index
    %c0_308 = arith.constant 0 : index
    %300 = vector.load %arg7[%c0_307, %c0_308] : memref<1x256xf32, #tpu.memory_space<vmem>>, vector<1x256xf32>
    %301 = vector.broadcast %300 : vector<1x256xf32> to vector<8x256xf32>
    %302 = arith.mulf %299, %301 : vector<8x256xf32>
    %c0_309 = arith.constant 0 : index
    %c0_310 = arith.constant 0 : index
    %303 = vector.load %arg8[%c0_309, %c0_310] : memref<1x256xf32, #tpu.memory_space<vmem>>, vector<1x256xf32>
    %304 = vector.broadcast %303 : vector<1x256xf32> to vector<8x256xf32>
    %305 = arith.addf %302, %304 : vector<8x256xf32>
    %306 = arith.truncf %305 : vector<8x256xf32> to vector<8x256xbf16>
    %c24_311 = arith.constant 24 : index
    %c0_312 = arith.constant 0 : index
    %307 = vector.load %arg17[%c24_311, %c0_312] : memref<32x256xbf16, #tpu.memory_space<vmem>>, vector<8x256xbf16>
    tpu.vector_store %arg17[%c24_311, %c0_312], %306 {strides = array<i32>} : memref<32x256xbf16, #tpu.memory_space<vmem>>, vector<8x256xbf16>,
    %c1_i32_313 = arith.constant 1 : i32
    %308 = tpu.memref_slice %arg20[%c1_i32_313] : memref<2x!tpu.dma_semaphore, #tpu.memory_space<semaphore_mem>> -> memref<1x!tpu.dma_semaphore, #tpu.memory_space<semaphore_mem>>
    %309 = tpu.memref_squeeze %308 : memref<1x!tpu.dma_semaphore, #tpu.memory_space<semaphore_mem>> -> memref<!tpu.dma_semaphore, #tpu.memory_space<semaphore_mem>>
    tpu.wait_dma2 semaphore(%309 : memref<!tpu.dma_semaphore, #tpu.memory_space<semaphore_mem>>) src(%arg9 : memref<4096x512xbf16, #tpu.memory_space<any>>) dst(%arg19 : memref<4096x512xbf16, #tpu.memory_space<vmem>>)
    %c0_314 = arith.constant 0 : index
    %c0_315 = arith.constant 0 : index
    %310 = vector.load %arg17[%c0_314, %c0_315] : memref<32x256xbf16, #tpu.memory_space<vmem>>, vector<2x256xbf16>
    %c2_316 = arith.constant 2 : index
    %c0_317 = arith.constant 0 : index
    %311 = vector.load %arg17[%c2_316, %c0_317] : memref<32x256xbf16, #tpu.memory_space<vmem>>, vector<2x256xbf16>
    %c4_318 = arith.constant 4 : index
    %c0_319 = arith.constant 0 : index
    %312 = vector.load %arg17[%c4_318, %c0_319] : memref<32x256xbf16, #tpu.memory_space<vmem>>, vector<2x256xbf16>
    %c6 = arith.constant 6 : index
    %c0_320 = arith.constant 0 : index
    %313 = vector.load %arg17[%c6, %c0_320] : memref<32x256xbf16, #tpu.memory_space<vmem>>, vector<2x256xbf16>
    %c8_321 = arith.constant 8 : index
    %c0_322 = arith.constant 0 : index
    %314 = vector.load %arg17[%c8_321, %c0_322] : memref<32x256xbf16, #tpu.memory_space<vmem>>, vector<2x256xbf16>
    %c10 = arith.constant 10 : index
    %c0_323 = arith.constant 0 : index
    %315 = vector.load %arg17[%c10, %c0_323] : memref<32x256xbf16, #tpu.memory_space<vmem>>, vector<2x256xbf16>
    %c12_324 = arith.constant 12 : index
    %c0_325 = arith.constant 0 : index
    %316 = vector.load %arg17[%c12_324, %c0_325] : memref<32x256xbf16, #tpu.memory_space<vmem>>, vector<2x256xbf16>
    %c14_326 = arith.constant 14 : index
    %c0_327 = arith.constant 0 : index
    %317 = vector.load %arg17[%c14_326, %c0_327] : memref<32x256xbf16, #tpu.memory_space<vmem>>, vector<2x256xbf16>
    %c16_328 = arith.constant 16 : index
    %c0_329 = arith.constant 0 : index
    %318 = vector.load %arg17[%c16_328, %c0_329] : memref<32x256xbf16, #tpu.memory_space<vmem>>, vector<2x256xbf16>
    %c18 = arith.constant 18 : index
    %c0_330 = arith.constant 0 : index
    %319 = vector.load %arg17[%c18, %c0_330] : memref<32x256xbf16, #tpu.memory_space<vmem>>, vector<2x256xbf16>
    %c20 = arith.constant 20 : index
    %c0_331 = arith.constant 0 : index
    %320 = vector.load %arg17[%c20, %c0_331] : memref<32x256xbf16, #tpu.memory_space<vmem>>, vector<2x256xbf16>
    %c22 = arith.constant 22 : index
    %c0_332 = arith.constant 0 : index
    %321 = vector.load %arg17[%c22, %c0_332] : memref<32x256xbf16, #tpu.memory_space<vmem>>, vector<2x256xbf16>
    %c24_333 = arith.constant 24 : index
    %c0_334 = arith.constant 0 : index
    %322 = vector.load %arg17[%c24_333, %c0_334] : memref<32x256xbf16, #tpu.memory_space<vmem>>, vector<2x256xbf16>
    %c26_335 = arith.constant 26 : index
    %c0_336 = arith.constant 0 : index
    %323 = vector.load %arg17[%c26_335, %c0_336] : memref<32x256xbf16, #tpu.memory_space<vmem>>, vector<2x256xbf16>
    %c28_337 = arith.constant 28 : index
    %c0_338 = arith.constant 0 : index
    %324 = vector.load %arg17[%c28_337, %c0_338] : memref<32x256xbf16, #tpu.memory_space<vmem>>, vector<2x256xbf16>
    %c30_339 = arith.constant 30 : index
    %c0_340 = arith.constant 0 : index
    %325 = vector.load %arg17[%c30_339, %c0_340] : memref<32x256xbf16, #tpu.memory_space<vmem>>, vector<2x256xbf16>
    %326 = tpu.concatenate %310, %311, %312, %313, %314, %315, %316, %317, %318, %319, %320, %321, %322, %323, %324, %325 in 1 : vector<2x256xbf16>, vector<2x256xbf16>, vector<2x256xbf16>, vector<2x256xbf16>, vector<2x256xbf16>, vector<2x256xbf16>, vector<2x256xbf16>, vector<2x256xbf16>, vector<2x256xbf16>, vector<2x256xbf16>, vector<2x256xbf16>, vector<2x256xbf16>, vector<2x256xbf16>, vector<2x256xbf16>, vector<2x256xbf16>, vector<2x256xbf16> -> vector<2x4096xbf16>
    %c0_341 = arith.constant 0 : index
    %c0_342 = arith.constant 0 : index
    %327 = vector.load %arg19[%c0_341, %c0_342] : memref<4096x512xbf16, #tpu.memory_space<vmem>>, vector<4096x512xbf16>
    %cst_343 = arith.constant dense<0.000000e+00> : vector<2x512xf32>
    %328 = tpu.matmul %326, %327, %cst_343 {dimension_numbers = #tpu.dot_dimension_numbers<[1], [0], [0], [1], [0, 0, 1, 1], [], []>} : vector<2x4096xbf16>, vector<4096x512xbf16>, vector<2x512xf32> -> vector<2x512xf32>
    %cst_344 = arith.constant 0.000000e+00 : f32
    %329 = vector.broadcast %cst_344 : f32 to vector<2x512xf32>
    %330 = arith.cmpf oge, %328, %329 : vector<2x512xf32>
    %cst_345 = arith.constant 2.000000e-01 : f32
    %331 = vector.broadcast %cst_345 : f32 to vector<2x512xf32>
    %332 = arith.mulf %331, %328 : vector<2x512xf32>
    %333 = arith.select %330, %328, %332 : vector<2x512xi1>, vector<2x512xf32>
    %c0_346 = arith.constant 0 : index
    %c0_347 = arith.constant 0 : index
    %334 = vector.load %arg10[%c0_346, %c0_347] : memref<1x512xf32, #tpu.memory_space<vmem>>, vector<1x512xf32>
    %335 = vector.broadcast %334 : vector<1x512xf32> to vector<2x512xf32>
    %336 = arith.mulf %333, %335 : vector<2x512xf32>
    %c0_348 = arith.constant 0 : index
    %c0_349 = arith.constant 0 : index
    %337 = vector.load %arg11[%c0_348, %c0_349] : memref<1x512xf32, #tpu.memory_space<vmem>>, vector<1x512xf32>
    %338 = vector.broadcast %337 : vector<1x512xf32> to vector<2x512xf32>
    %339 = arith.addf %336, %338 : vector<2x512xf32>
    %c0_350 = arith.constant 0 : index
    %c0_351 = arith.constant 0 : index
    %340 = vector.load %arg12[%c0_350, %c0_351] : memref<1x512xf32, #tpu.memory_space<vmem>>, vector<1x512xf32>
    %341 = vector.broadcast %340 : vector<1x512xf32> to vector<2x512xf32>
    %342 = arith.mulf %339, %341 : vector<2x512xf32>
    %cst_352 = arith.constant dense<0.000000e+00> : vector<2xf32>
    %343 = vector.multi_reduction <add>, %342, %cst_352 [1] : vector<2x512xf32> to vector<2xf32>
    %344 = vector.shape_cast %343 : vector<2xf32> to vector<2x1xf32>
    %c0_353 = arith.constant 0 : index
    %c0_354 = arith.constant 0 : index
    %345 = vector.load %arg13[%c0_353, %c0_354] : memref<1x1xf32, #tpu.memory_space<vmem>>, vector<1x1xf32>
    %346 = vector.broadcast %345 : vector<1x1xf32> to vector<2x1xf32>
    %347 = arith.addf %344, %346 : vector<2x1xf32>
    %cst_355 = arith.constant 0.000000e+00 : f32
    %348 = vector.broadcast %cst_355 : f32 to vector<2x1xf32>
    %349 = arith.subf %348, %347 : vector<2x1xf32>
    %350 = math.exp %349 : vector<2x1xf32>
    %cst_356 = arith.constant 1.000000e+00 : f32
    %351 = vector.broadcast %cst_356 : f32 to vector<2x1xf32>
    %352 = arith.addf %351, %350 : vector<2x1xf32>
    %cst_357 = arith.constant 1.000000e+00 : f32
    %353 = vector.broadcast %cst_357 : f32 to vector<2x1xf32>
    %354 = arith.divf %353, %352 : vector<2x1xf32>
    %c0_358 = arith.constant 0 : index
    %c0_359 = arith.constant 0 : index
    %355 = vector.load %arg14[%c0_358, %c0_359] : memref<2x1xf32, #tpu.memory_space<vmem>>, vector<2x1xf32>
    tpu.vector_store %arg14[%c0_358, %c0_359], %354 {strides = array<i32>} : memref<2x1xf32, #tpu.memory_space<vmem>>, vector<2x1xf32>,
    return
  }
  func.func @transform_0(%arg0: i32) -> (i32, i32) {
    %c0_i32 = arith.constant 0 : i32
    %c0_i32_0 = arith.constant 0 : i32
    %c0_i32_1 = arith.constant 0 : i32
    return %c0_i32, %c0_i32_0 : i32, i32
  }
  func.func @transform_1(%arg0: i32) -> (i32, i32) {
    %c0_i32 = arith.constant 0 : i32
    %c0_i32_0 = arith.constant 0 : i32
    %c0_i32_1 = arith.constant 0 : i32
    return %c0_i32, %c0_i32_0 : i32, i32
  }
  func.func @transform_2(%arg0: i32) -> (i32, i32) {
    %c0_i32 = arith.constant 0 : i32
    %c0_i32_0 = arith.constant 0 : i32
    %c0_i32_1 = arith.constant 0 : i32
    return %c0_i32, %c0_i32_0 : i32, i32
  }
  func.func @transform_3(%arg0: i32) -> (i32, i32) {
    %c0_i32 = arith.constant 0 : i32
    %c0_i32_0 = arith.constant 0 : i32
    %c0_i32_1 = arith.constant 0 : i32
    return %c0_i32, %c0_i32_0 : i32, i32
  }
  func.func @transform_4(%arg0: i32) -> (i32, i32) {
    %c0_i32 = arith.constant 0 : i32
    %c0_i32_0 = arith.constant 0 : i32
    %c0_i32_1 = arith.constant 0 : i32
    return %c0_i32, %c0_i32_0 : i32, i32
  }
  func.func @transform_6(%arg0: i32) -> (i32, i32) {
    %c0_i32 = arith.constant 0 : i32
    %c0_i32_0 = arith.constant 0 : i32
    %c0_i32_1 = arith.constant 0 : i32
    return %c0_i32, %c0_i32_0 : i32, i32
  }
  func.func @transform_7(%arg0: i32) -> (i32, i32) {
    %c0_i32 = arith.constant 0 : i32
    %c0_i32_0 = arith.constant 0 : i32
    %c0_i32_1 = arith.constant 0 : i32
    return %c0_i32, %c0_i32_0 : i32, i32
  }
  func.func @transform_9(%arg0: i32) -> (i32, i32) {
    %c0_i32 = arith.constant 0 : i32
    %c0_i32_0 = arith.constant 0 : i32
    %c0_i32_1 = arith.constant 0 : i32
    return %c0_i32, %c0_i32_0 : i32, i32
  }
  func.func @transform_10(%arg0: i32) -> (i32, i32) {
    %c0_i32 = arith.constant 0 : i32
    %c0_i32_0 = arith.constant 0 : i32
    %c0_i32_1 = arith.constant 0 : i32
    return %c0_i32, %c0_i32_0 : i32, i32
  }
  func.func @transform_11(%arg0: i32) -> (i32, i32) {
    %c0_i32 = arith.constant 0 : i32
    %c0_i32_0 = arith.constant 0 : i32
    %c0_i32_1 = arith.constant 0 : i32
    return %c0_i32, %c0_i32_0 : i32, i32
  }
  func.func @transform_12(%arg0: i32) -> (i32, i32) {
    %c0_i32 = arith.constant 0 : i32
    %c0_i32_0 = arith.constant 0 : i32
    %c0_i32_1 = arith.constant 0 : i32
    return %c0_i32, %c0_i32_0 : i32, i32
  }
  func.func @transform_13(%arg0: i32) -> (i32, i32) {
    %c0_i32 = arith.constant 0 : i32
    %c0_i32_0 = arith.constant 0 : i32
    %c0_i32_1 = arith.constant 0 : i32
    return %c0_i32, %c0_i32_0 : i32, i32
  }
}

</mosaic_0001>

<llo_original>
// kernel: discriminator_forward.1
$region0: #{discriminator_forward.1}
  #allocation0 [shape = 'u32[]', space=smem, size = 0x4, offset = 0x4, fixed_abs, tag = 'smem constant byte address 0x4 - core index']
  #allocation1 [shape = 'u32[144,128]{1,0:T(1,128)}', space=vmem, size = 0x12000, scoped, tag = 'internal scratch']
  #allocation2 [shape = 'bf16[392,64]{1,0:T(8,128)(2,1)}', space=vmem, size = 0x18800, scoped, tag = 'scratch operand']
  #allocation3 [shape = 'bf16[72,128]{1,0:T(8,128)(2,1)}', space=vmem, size = 0x4800, scoped, tag = 'scratch operand']
  #allocation4 [shape = 'bf16[32,256]{1,0:T(16,128)(2,1)}', space=vmem, size = 0x4000, scoped, tag = 'scratch operand']
  #allocation5 [shape = 'bf16[1152,256]{1,0:T(16,128)(2,1)}', space=vmem, size = 0x90000, scoped, tag = 'scratch operand']
  #allocation6 [shape = 'bf16[4096,512]{1,0:T(16,128)(2,1)}', space=vmem, size = 0x400000, scoped, tag = 'scratch operand']
  #allocation7 [shape = 's32[2]{0}', space=sflag, size = 0x8, scoped, tag = 'scratch operand']
  #allocation8 [shape = 'f32[1,1]{1,0:T(1,128)S(1)}', space=vmem, size = 0x200, scoped, tag = 'scoped memory for discriminator_forward.1']
  #allocation23 [shape = 's32[]', space=sflag, size = 0x4, offset = 0, fixed_abs, tag = 'sflag constant byte address 0x0 - dummy sync flag']
  #allocation25 [shape = 's32[]', space=sflag, size = 0x4, offset = 0, fixed_abs, tag = 'sflag constant byte address 0x0 - dummy sync flag']
  %s0 = inlined_call_operand.vmem [shape: bf16[392,32], index: 0, kind: input, shape index: {}]
  %s1 = inlined_call_operand.hbm [shape: bf16[32,64], index: 1, kind: input, shape index: {}]
  %s2 = inlined_call_operand.hbm [shape: bf16[1024,128], index: 2, kind: input, shape index: {}]
  %s3 = inlined_call_operand.hbm [shape: f32[1,128], index: 3, kind: input, shape index: {}]
  %s4 = inlined_call_operand.hbm [shape: f32[1,128], index: 4, kind: input, shape index: {}]
  %s5 = inlined_call_operand.hbm [shape: bf16[1152,256], index: 5, kind: input, shape index: {}]
  %s6 = inlined_call_operand.hbm [shape: f32[1,256], index: 6, kind: input, shape index: {}]
  %s7 = inlined_call_operand.hbm [shape: f32[1,256], index: 7, kind: input, shape index: {}]
  %s8 = inlined_call_operand.hbm [shape: bf16[4096,512], index: 8, kind: input, shape index: {}]
  %s9 = inlined_call_operand.hbm [shape: f32[1,512], index: 9, kind: input, shape index: {}]
  %s10 = inlined_call_operand.hbm [shape: f32[1,512], index: 10, kind: input, shape index: {}]
  %s11 = inlined_call_operand.hbm [shape: f32[1,512], index: 11, kind: input, shape index: {}]
  %s12 = inlined_call_operand.<no memory space> [shape: f32[1,1], index: 12, kind: input, shape index: {}]
  %s13 = inlined_call_operand.vmem [shape: f32[2,1], index: 13, kind: output, shape index: {}]
  %s14 = sld [smem:[#allocation0]]
  $region90: #{discriminator_forward.1} parent=0
    _
  %s16 = ssub.s32 1, %s14
  %s17 = scalar_select 0, %s16, %s14
  %v18 = vstv %s12
  %19 = vst [vmem:[#allocation8] sm:$0x1] %v18
  $region1: #{discriminator_forward.1} parent=0
    #allocation9 [shape = 'u8[8192]{0}', space=vmem, size = 0x2000, scoped, tag = 'input window, operand 1, single buffered']
    #allocation10 [shape = 's32[1]{0}', space=sflag, size = 0x4, scoped, tag = 'scoped memory for discriminator_forward.1']
    #allocation11 [shape = 'u8[262144]{0}', space=vmem, size = 0x40000, scoped, tag = 'input window, operand 2, single buffered']
    #allocation12 [shape = 's32[1]{0}', space=sflag, size = 0x4, scoped, tag = 'scoped memory for discriminator_forward.1']
    #allocation13 [shape = 'u8[512]{0}', space=vmem, size = 0x400, scoped, tag = 'input window, operand 3, single buffered']
    #allocation14 [shape = 'u8[512]{0}', space=vmem, size = 0x400, scoped, tag = 'input window, operand 4, single buffered']
    #allocation15 [shape = 's32[1]{0}', space=sflag, size = 0x4, scoped, tag = 'scoped memory for discriminator_forward.1']
    #allocation16 [shape = 'u8[1024]{0}', space=vmem, size = 0x400, scoped, tag = 'input window, operand 6, single buffered']
    #allocation17 [shape = 'u8[1024]{0}', space=vmem, size = 0x400, scoped, tag = 'input window, operand 7, single buffered']
    #allocation18 [shape = 's32[1]{0}', space=sflag, size = 0x4, scoped, tag = 'scoped memory for discriminator_forward.1']
    #allocation19 [shape = 'u8[2048]{0}', space=vmem, size = 0x800, scoped, tag = 'input window, operand 9, single buffered']
    #allocation20 [shape = 'u8[2048]{0}', space=vmem, size = 0x800, scoped, tag = 'input window, operand 10, single buffered']
    #allocation21 [shape = 's32[1]{0}', space=sflag, size = 0x4, scoped, tag = 'scoped memory for discriminator_forward.1']
    #allocation22 [shape = 'u8[2048]{0}', space=vmem, size = 0x800, scoped, tag = 'input window, operand 11, single buffered']
    #allocation24 [shape = 'u32[9]{0}', space=smem, size = 0x24, scoped, tag = 'DMA stride descriptor']
    #allocation26 [shape = 'u32[9]{0}', space=smem, size = 0x24, scoped, tag = 'DMA stride descriptor']
    %20 = vsyncpa [#allocation10], 0
    %21 = vsyncpa [#allocation12], 0
    %22 = vsyncpa [#allocation15], 0
    %23 = vsyncpa [#allocation18], 0
    %24 = vsyncpa [#allocation21], 0
    // Predicated region
    $region2: #{discriminator_forward.1} parent=1 // pred_check
      _
    $region3: #{discriminator_forward.1} parent=1 // pred_check_branch
      %26 = sbr.rel (0) target = $region5
    $region4: #{discriminator_forward.1} parent=1 // pred_region
      _
    $region5: #{discriminator_forward.1} parent=1 // pred_fallthru
      _
    // Predicated region
    $region6: #{discriminator_forward.1} parent=1 // pred_check
      _
    $region7: #{discriminator_forward.1} parent=1 // pred_check_branch
      %28 = sbr.rel (0) target = $region9
    $region8: #{discriminator_forward.1} parent=1 // pred_region
      %s30 = ssub.s32 256, 256
      %31 = vsyncadd [#allocation10], %s30
      %s32 = sshll.u32 [#allocation9], 4
      %s33 = int_to_ptr.vmem [resolvable:$true] %s32
      %38 = dma.hbm_to_vmem [thread:$0]  %s1, 256, %s33, [#allocation10], 64, 64, 4
    $region9: #{discriminator_forward.1} parent=1 // pred_fallthru
      _
    // Predicated region
    $region10: #{discriminator_forward.1} parent=1 // pred_check
      _
    $region11: #{discriminator_forward.1} parent=1 // pred_check_branch
      %40 = sbr.rel (0) target = $region13
    $region12: #{discriminator_forward.1} parent=1 // pred_region
      %s42 = ssub.s32 8192, 8192
      %43 = vsyncadd [#allocation12], %s42
      %s44 = sshll.u32 [#allocation11], 4
      %s45 = int_to_ptr.vmem [resolvable:$true] %s44
      %50 = dma.hbm_to_vmem [thread:$0]  %s2, 8192, %s45, [#allocation12], 64, 64, 4
    $region13: #{discriminator_forward.1} parent=1 // pred_fallthru
      _
    // Predicated region
    $region14: #{discriminator_forward.1} parent=1 // pred_check
      _
    $region15: #{discriminator_forward.1} parent=1 // pred_check_branch
      %52 = sbr.rel (0) target = $region17
    $region16: #{discriminator_forward.1} parent=1 // pred_region
      %s54 = ssub.s32 16, 16
      %55 = vsyncadd [#allocation12], %s54
      %s57 = sshll.u32 [#allocation13], 4
      %s58 = int_to_ptr.vmem [resolvable:$true] %s57
      %60 = dma.hbm_to_vmem [thread:$0]  %s3, 16, %s58, [#allocation12]
    $region17: #{discriminator_forward.1} parent=1 // pred_fallthru
      _
    // Predicated region
    $region18: #{discriminator_forward.1} parent=1 // pred_check
      _
    $region19: #{discriminator_forward.1} parent=1 // pred_check_branch
      %62 = sbr.rel (0) target = $region21
    $region20: #{discriminator_forward.1} parent=1 // pred_region
      %s64 = ssub.s32 16, 16
      %65 = vsyncadd [#allocation15], %s64
      %s67 = sshll.u32 [#allocation14], 4
      %s68 = int_to_ptr.vmem [resolvable:$true] %s67
      %70 = dma.hbm_to_vmem [thread:$0]  %s4, 16, %s68, [#allocation15]
    $region21: #{discriminator_forward.1} parent=1 // pred_fallthru
      _
    // Predicated region
    $region22: #{discriminator_forward.1} parent=1 // pred_check
      _
    $region23: #{discriminator_forward.1} parent=1 // pred_check_branch
      %72 = sbr.rel (0) target = $region25
    $region24: #{discriminator_forward.1} parent=1 // pred_region
      %s74 = ssub.s32 32, 32
      %75 = vsyncadd [#allocation15], %s74
      %s77 = sshll.u32 [#allocation16], 4
      %s78 = int_to_ptr.vmem [resolvable:$true] %s77
      %80 = dma.hbm_to_vmem [thread:$0]  %s6, 32, %s78, [#allocation15]
    $region25: #{discriminator_forward.1} parent=1 // pred_fallthru
      _
    // Predicated region
    $region26: #{discriminator_forward.1} parent=1 // pred_check
      _
    $region27: #{discriminator_forward.1} parent=1 // pred_check_branch
      %82 = sbr.rel (0) target = $region29
    $region28: #{discriminator_forward.1} parent=1 // pred_region
      %s84 = ssub.s32 32, 32
      %85 = vsyncadd [#allocation18], %s84
      %s87 = sshll.u32 [#allocation17], 4
      %s88 = int_to_ptr.vmem [resolvable:$true] %s87
      %90 = dma.hbm_to_vmem [thread:$0]  %s7, 32, %s88, [#allocation18]
    $region29: #{discriminator_forward.1} parent=1 // pred_fallthru
      _
    // Predicated region
    $region30: #{discriminator_forward.1} parent=1 // pred_check
      _
    $region31: #{discriminator_forward.1} parent=1 // pred_check_branch
      %92 = sbr.rel (0) target = $region33
    $region32: #{discriminator_forward.1} parent=1 // pred_region
      %s94 = ssub.s32 64, 64
      %95 = vsyncadd [#allocation18], %s94
      %s97 = sshll.u32 [#allocation19], 4
      %s98 = int_to_ptr.vmem [resolvable:$true] %s97
      %100 = dma.hbm_to_vmem [thread:$0]  %s9, 64, %s98, [#allocation18]
    $region33: #{discriminator_forward.1} parent=1 // pred_fallthru
      _
    // Predicated region
    $region34: #{discriminator_forward.1} parent=1 // pred_check
      _
    $region35: #{discriminator_forward.1} parent=1 // pred_check_branch
      %102 = sbr.rel (0) target = $region37
    $region36: #{discriminator_forward.1} parent=1 // pred_region
      %s104 = ssub.s32 64, 64
      %105 = vsyncadd [#allocation21], %s104
      %s107 = sshll.u32 [#allocation20], 4
      %s108 = int_to_ptr.vmem [resolvable:$true] %s107
      %110 = dma.hbm_to_vmem [thread:$0]  %s10, 64, %s108, [#allocation21]
    $region37: #{discriminator_forward.1} parent=1 // pred_fallthru
      _
    // Predicated region
    $region38: #{discriminator_forward.1} parent=1 // pred_check
      _
    $region39: #{discriminator_forward.1} parent=1 // pred_check_branch
      %112 = sbr.rel (0) target = $region41
    $region40: #{discriminator_forward.1} parent=1 // pred_region
      %s114 = ssub.s32 64, 64
      %115 = vsyncadd [#allocation21], %s114
      %s117 = sshll.u32 [#allocation22], 4
      %s118 = int_to_ptr.vmem [resolvable:$true] %s117
      %120 = dma.hbm_to_vmem [thread:$0]  %s11, 64, %s118, [#allocation21]
    $region41: #{discriminator_forward.1} parent=1 // pred_fallthru
      _
    // Predicated region
    $region42: #{discriminator_forward.1} parent=1 // pred_check
      _
    $region43: #{discriminator_forward.1} parent=1 // pred_check_branch
      %122 = sbr.rel (0) target = $region45
    $region44: #{discriminator_forward.1} parent=1 // pred_region
      _
    $region45: #{discriminator_forward.1} parent=1 // pred_fallthru
      _
    // Predicated region
    $region46: #{discriminator_forward.1} parent=1 // pred_check
      _
    $region47: #{discriminator_forward.1} parent=1 // pred_check_branch
      %124 = sbr.rel (0) target = $region49
    $region48: #{discriminator_forward.1} parent=1 // pred_region
      %125 = dma.done [#allocation10], 256
    $region49: #{discriminator_forward.1} parent=1 // pred_fallthru
      _
    // Predicated region
    $region50: #{discriminator_forward.1} parent=1 // pred_check
      _
    $region51: #{discriminator_forward.1} parent=1 // pred_check_branch
      %127 = sbr.rel (0) target = $region53
    $region52: #{discriminator_forward.1} parent=1 // pred_region
      %128 = dma.done [#allocation12], 8192
    $region53: #{discriminator_forward.1} parent=1 // pred_fallthru
      _
    // Predicated region
    $region54: #{discriminator_forward.1} parent=1 // pred_check
      _
    $region55: #{discriminator_forward.1} parent=1 // pred_check_branch
      %130 = sbr.rel (0) target = $region57
    $region56: #{discriminator_forward.1} parent=1 // pred_region
      %131 = dma.done [#allocation12], 16
    $region57: #{discriminator_forward.1} parent=1 // pred_fallthru
      _
    // Predicated region
    $region58: #{discriminator_forward.1} parent=1 // pred_check
      _
    $region59: #{discriminator_forward.1} parent=1 // pred_check_branch
      %133 = sbr.rel (0) target = $region61
    $region60: #{discriminator_forward.1} parent=1 // pred_region
      %134 = dma.done [#allocation15], 16
    $region61: #{discriminator_forward.1} parent=1 // pred_fallthru
      _
    // Predicated region
    $region62: #{discriminator_forward.1} parent=1 // pred_check
      _
    $region63: #{discriminator_forward.1} parent=1 // pred_check_branch
      %136 = sbr.rel (0) target = $region65
    $region64: #{discriminator_forward.1} parent=1 // pred_region
      %137 = dma.done [#allocation15], 32
    $region65: #{discriminator_forward.1} parent=1 // pred_fallthru
      _
    // Predicated region
    $region66: #{discriminator_forward.1} parent=1 // pred_check
      _
    $region67: #{discriminator_forward.1} parent=1 // pred_check_branch
      %139 = sbr.rel (0) target = $region69
    $region68: #{discriminator_forward.1} parent=1 // pred_region
      %140 = dma.done [#allocation18], 32
    $region69: #{discriminator_forward.1} parent=1 // pred_fallthru
      _
    // Predicated region
    $region70: #{discriminator_forward.1} parent=1 // pred_check
      _
    $region71: #{discriminator_forward.1} parent=1 // pred_check_branch
      %142 = sbr.rel (0) target = $region73
    $region72: #{discriminator_forward.1} parent=1 // pred_region
      %143 = dma.done [#allocation18], 64
    $region73: #{discriminator_forward.1} parent=1 // pred_fallthru
      _
    // Predicated region
    $region74: #{discriminator_forward.1} parent=1 // pred_check
      _
    $region75: #{discriminator_forward.1} parent=1 // pred_check_branch
      %145 = sbr.rel (0) target = $region77
    $region76: #{discriminator_forward.1} parent=1 // pred_region
      %146 = dma.done [#allocation21], 64
    $region77: #{discriminator_forward.1} parent=1 // pred_fallthru
      _
    // Predicated region
    $region78: #{discriminator_forward.1} parent=1 // pred_check
      _
    $region79: #{discriminator_forward.1} parent=1 // pred_check_branch
      %148 = sbr.rel (0) target = $region81
    $region80: #{discriminator_forward.1} parent=1 // pred_region
      %149 = dma.done [#allocation21], 64
    $region81: #{discriminator_forward.1} parent=1 // pred_fallthru
      _
    %s152 = sshll.u32 1, 14
    %s153 = sxor.u32 4294967295, %s152
    %s155 = sld [smem:[#allocation0]]
    %s156 = sadd.s32 2, %s155
    %s158 = sshll.u32 7, 26
    %s159 = sxor.u32 4294967295, %s158
    %s160 = sand.u32 0, %s159
    %s161 = sshll.u32 %s156, 26
    %s162 = sor.u32 %s160, %s161
    %s163 = sshll.u32 [#allocation5], 4
    %s164 = int_to_ptr.vmem [resolvable:$true] %s163
    %167 = sst [smem:[#allocation24]] 256
    %s168 = scalar_lea.smem [#allocation24], 1
    %169 = sst [smem:[%s168]] 256
    %s170 = scalar_lea.smem [#allocation24], 2
    %171 = sst [smem:[%s170]] 2
    %s172 = scalar_lea.smem [#allocation24], 3
    %173 = sst [smem:[%s172]] 64
    %s174 = scalar_lea.smem [#allocation24], 4
    %175 = sst [smem:[%s174]] 128
    %s176 = scalar_lea.smem [#allocation24], 5
    %177 = sst [smem:[%s176]] 2
    %s178 = scalar_lea.smem [#allocation24], 6
    %179 = sst [smem:[%s178]] 128
    %s180 = scalar_lea.smem [#allocation24], 7
    %181 = sst [smem:[%s180]] 64
    %s182 = scalar_lea.smem [#allocation24], 8
    %183 = sst [smem:[%s182]] 4
    %185 = dma.general %s5, 18432, %s164, [#allocation7], [#allocation23], [#allocation24], %s162, 0
    %s186 = scalar_lea.sflag [#allocation7], 1
    %s188 = sshll.u32 1, 14
    %s189 = sxor.u32 4294967295, %s188
    %s191 = sadd.s32 2, %s155
    %s193 = sshll.u32 7, 26
    %s194 = sxor.u32 4294967295, %s193
    %s195 = sand.u32 0, %s194
    %s196 = sshll.u32 %s191, 26
    %s197 = sor.u32 %s195, %s196
    %s198 = sshll.u32 [#allocation6], 4
    %s199 = int_to_ptr.vmem [resolvable:$true] %s198
    %202 = sst [smem:[#allocation26]] 512
    %s203 = scalar_lea.smem [#allocation26], 1
    %204 = sst [smem:[%s203]] 512
    %s205 = scalar_lea.smem [#allocation26], 2
    %206 = sst [smem:[%s205]] 4
    %s207 = scalar_lea.smem [#allocation26], 3
    %208 = sst [smem:[%s207]] 64
    %s209 = scalar_lea.smem [#allocation26], 4
    %210 = sst [smem:[%s209]] 128
    %s211 = scalar_lea.smem [#allocation26], 5
    %212 = sst [smem:[%s211]] 2
    %s213 = scalar_lea.smem [#allocation26], 6
    %214 = sst [smem:[%s213]] 256
    %s215 = scalar_lea.smem [#allocation26], 7
    %216 = sst [smem:[%s215]] 64
    %s217 = scalar_lea.smem [#allocation26], 8
    %218 = sst [smem:[%s217]] 4
    %220 = dma.general %s8, 131072, %s199, %s186, [#allocation25], [#allocation26], %s197, 0
    %v221 = vld [vmem:[%s0] sm:$0xf]
    %v222 = vld [vmem:[%s0 + $0x4] sm:$0xf]
    %v223 = vld [vmem:[%s0 + $0x8] sm:$0xf]
    %v224 = vld [vmem:[%s0 + $0xc] sm:$0xf]
    %v225 = vld [vmem:[%s0 + $0x10] sm:$0xf]
    %v226 = vld [vmem:[%s0 + $0x14] sm:$0xf]
    %v227 = vld [vmem:[%s0 + $0x18] sm:$0xf]
    %v228 = vld [vmem:[%s0 + $0x1c] sm:$0xf]
    %v229 = vld [vmem:[%s0 + $0x20] sm:$0xf]
    %v230 = vld [vmem:[%s0 + $0x24] sm:$0xf]
    %v231 = vld [vmem:[%s0 + $0x28] sm:$0xf]
    %v232 = vld [vmem:[%s0 + $0x2c] sm:$0xf]
    %v233 = vld [vmem:[%s0 + $0x30] sm:$0xf]
    %v234 = vld [vmem:[%s0 + $0x34] sm:$0xf]
    %v235 = vld [vmem:[%s0 + $0x38] sm:$0xf]
    %v236 = vld [vmem:[%s0 + $0x3c] sm:$0xf]
    %v237 = vld [vmem:[%s0 + $0x40] sm:$0xf]
    %v238 = vld [vmem:[%s0 + $0x44] sm:$0xf]
    %v239 = vld [vmem:[%s0 + $0x48] sm:$0xf]
    %v240 = vld [vmem:[%s0 + $0x4c] sm:$0xf]
    %v241 = vld [vmem:[%s0 + $0x50] sm:$0xf]
    %v242 = vld [vmem:[%s0 + $0x54] sm:$0xf]
    %v243 = vld [vmem:[%s0 + $0x58] sm:$0xf]
    %v244 = vld [vmem:[%s0 + $0x5c] sm:$0xf]
    %v245 = vld [vmem:[%s0 + $0x60] sm:$0xf]
    %v246 = vld [vmem:[%s0 + $0x64] sm:$0xf]
    %v247 = vld [vmem:[%s0 + $0x68] sm:$0xf]
    %v248 = vld [vmem:[%s0 + $0x6c] sm:$0xf]
    %v249 = vld [vmem:[%s0 + $0x70] sm:$0xf]
    %v250 = vld [vmem:[%s0 + $0x74] sm:$0xf]
    %v251 = vld [vmem:[%s0 + $0x78] sm:$0xf]
    %v252 = vld [vmem:[%s0 + $0x7c] sm:$0xf]
    %v253 = vld [vmem:[%s0 + $0x80] sm:$0xf]
    %v254 = vld [vmem:[%s0 + $0x84] sm:$0xf]
    %v255 = vld [vmem:[%s0 + $0x88] sm:$0xf]
    %v256 = vld [vmem:[%s0 + $0x8c] sm:$0xf]
    %v257 = vld [vmem:[%s0 + $0x90] sm:$0xf]
    %v258 = vld [vmem:[%s0 + $0x94] sm:$0xf]
    %v259 = vld [vmem:[%s0 + $0x98] sm:$0xf]
    %v260 = vld [vmem:[%s0 + $0x9c] sm:$0xf]
    %v261 = vld [vmem:[%s0 + $0xa0] sm:$0xf]
    %v262 = vld [vmem:[%s0 + $0xa4] sm:$0xf]
    %v263 = vld [vmem:[%s0 + $0xa8] sm:$0xf]
    %v264 = vld [vmem:[%s0 + $0xac] sm:$0xf]
    %v265 = vld [vmem:[%s0 + $0xb0] sm:$0xf]
    %v266 = vld [vmem:[%s0 + $0xb4] sm:$0xf]
    %v267 = vld [vmem:[%s0 + $0xb8] sm:$0xf]
    %v268 = vld [vmem:[%s0 + $0xbc] sm:$0xf]
    %v269 = vld [vmem:[%s0 + $0xc0] sm:$0xf]
    %v270 = vld [vmem:[#allocation9] sm:$0xf]
    %v271 = vld [vmem:[#allocation9 + $0x4] sm:$0xf]
    %v272 = vld [vmem:[#allocation9 + $0x8] sm:$0xf]
    %v273 = vld [vmem:[#allocation9 + $0xc] sm:$0xf]
    %v323 = vunpack.c.l.b16 %v221
    %v324 = vunpack.c.l.b16 %v222
    %v325 = vunpack.c.l.b16 %v223
    %v326 = vunpack.c.l.b16 %v224
    %v327 = vunpack.c.l.b16 %v225
    %v328 = vunpack.c.l.b16 %v226
    %v329 = vunpack.c.l.b16 %v227
    %v330 = vunpack.c.l.b16 %v228
    %v331 = vunpack.c.l.b16 %v229
    %v332 = vunpack.c.l.b16 %v230
    %v333 = vunpack.c.l.b16 %v231
    %v334 = vunpack.c.l.b16 %v232
    %v335 = vunpack.c.l.b16 %v233
    %v336 = vunpack.c.l.b16 %v234
    %v337 = vunpack.c.l.b16 %v235
    %v338 = vunpack.c.l.b16 %v236
    %v339 = vunpack.c.l.b16 %v237
    %v340 = vunpack.c.l.b16 %v238
    %v341 = vunpack.c.l.b16 %v239
    %v342 = vunpack.c.l.b16 %v240
    %v343 = vunpack.c.l.b16 %v241
    %v344 = vunpack.c.l.b16 %v242
    %v345 = vunpack.c.l.b16 %v243
    %v346 = vunpack.c.l.b16 %v244
    %v347 = vunpack.c.l.b16 %v245
    %v348 = vunpack.c.l.b16 %v246
    %v349 = vunpack.c.l.b16 %v247
    %v350 = vunpack.c.l.b16 %v248
    %v351 = vunpack.c.l.b16 %v249
    %v352 = vunpack.c.l.b16 %v250
    %v353 = vunpack.c.l.b16 %v251
    %v354 = vunpack.c.l.b16 %v252
    %v355 = vunpack.c.l.b16 %v253
    %v356 = vunpack.c.l.b16 %v254
    %v357 = vunpack.c.l.b16 %v255
    %v358 = vunpack.c.l.b16 %v256
    %v359 = vunpack.c.l.b16 %v257
    %v360 = vunpack.c.l.b16 %v258
    %v361 = vunpack.c.l.b16 %v259
    %v362 = vunpack.c.l.b16 %v260
    %v363 = vunpack.c.l.b16 %v261
    %v364 = vunpack.c.l.b16 %v262
    %v365 = vunpack.c.l.b16 %v263
    %v366 = vunpack.c.l.b16 %v264
    %v367 = vunpack.c.l.b16 %v265
    %v368 = vunpack.c.l.b16 %v266
    %v369 = vunpack.c.l.b16 %v267
    %v370 = vunpack.c.l.b16 %v268
    %v371 = vunpack.c.l.b16 %v269
    %v372 = vpack.c.b16 %v324, %v323
    %v373 = vpack.c.b16 %v326, %v325
    %v374 = vpack.c.b16 %v328, %v327
    %v375 = vpack.c.b16 %v330, %v329
    %v376 = vpack.c.b16 %v332, %v331
    %v377 = vpack.c.b16 %v334, %v333
    %v378 = vpack.c.b16 %v336, %v335
    %v379 = vpack.c.b16 %v338, %v337
    %v380 = vpack.c.b16 %v340, %v339
    %v381 = vpack.c.b16 %v342, %v341
    %v382 = vpack.c.b16 %v344, %v343
    %v383 = vpack.c.b16 %v346, %v345
    %v384 = vpack.c.b16 %v348, %v347
    %v385 = vpack.c.b16 %v350, %v349
    %v386 = vpack.c.b16 %v352, %v351
    %v387 = vpack.c.b16 %v354, %v353
    %v388 = vpack.c.b16 %v356, %v355
    %v389 = vpack.c.b16 %v358, %v357
    %v390 = vpack.c.b16 %v360, %v359
    %v391 = vpack.c.b16 %v362, %v361
    %v392 = vpack.c.b16 %v364, %v363
    %v393 = vpack.c.b16 %v366, %v365
    %v394 = vpack.c.b16 %v368, %v367
    %v395 = vpack.c.b16 %v370, %v369
    %v396 = vpack.c.b16 %v371, %v371
    %v401 = vunpack.c.l.b16 %v270
    %v402 = vunpack.c.l.b16 %v271
    %v403 = vunpack.c.l.b16 %v272
    %v404 = vunpack.c.l.b16 %v273
    %v405 = vpack.c.b16 %v402, %v401
    %v406 = vpack.c.b16 %v404, %v403
    %vm409 = vcmask 261120
    %v411 = vsel %vm409, %v372, 0
    %v414 = vsel %vm409, %v373, 0
    %v417 = vsel %vm409, %v374, 0
    %v420 = vsel %vm409, %v375, 0
    %v423 = vsel %vm409, %v376, 0
    %v426 = vsel %vm409, %v377, 0
    %v429 = vsel %vm409, %v378, 0
    %v432 = vsel %vm409, %v379, 0
    %v435 = vsel %vm409, %v380, 0
    %v438 = vsel %vm409, %v381, 0
    %v441 = vsel %vm409, %v382, 0
    %v444 = vsel %vm409, %v383, 0
    %v447 = vsel %vm409, %v384, 0
    %v450 = vsel %vm409, %v385, 0
    %v453 = vsel %vm409, %v386, 0
    %v456 = vsel %vm409, %v387, 0
    %v459 = vsel %vm409, %v388, 0
    %v462 = vsel %vm409, %v389, 0
    %v465 = vsel %vm409, %v390, 0
    %v468 = vsel %vm409, %v391, 0
    %v471 = vsel %vm409, %v392, 0
    %v474 = vsel %vm409, %v393, 0
    %v477 = vsel %vm409, %v394, 0
    %v480 = vsel %vm409, %v395, 0
    %v483 = vsel %vm409, %v396, 0
    %485 = vmatprep.subr.bf16.mxu0 0
    %486 = vmatpush1.bf16.msra.mxu0 %v405
    %487 = vmatprep.subr.bf16.mxu0 0
    %488 = vmatpush1.bf16.msra.mxu0 %v406
    %489 = vmatprep.subr.bf16.mxu0 0
    %490 = vmatpush1.bf16.msra.mxu0 0
    %491 = vmatprep.subr.bf16.mxu0 0
    %492 = vmatpush1.bf16.msra.mxu0 0
    %493 = vmatprep.subr.bf16.mxu0 0
    %494 = vmatpush1.bf16.msra.mxu0 0
    %495 = vmatprep.subr.bf16.mxu0 0
    %496 = vmatpush1.bf16.msra.mxu0 0
    %497 = vmatprep.subr.bf16.mxu0 0
    %498 = vmatpush1.bf16.msra.mxu0 0
    %499 = vmatprep.subr.bf16.mxu0 0
    %500 = vmatpush1.bf16.msra.mxu0 0
    %501 = vmatprep.subr.bf16.mxu0 0
    %502 = vmatpush1.bf16.msra.mxu0 0
    %503 = vmatprep.subr.bf16.mxu0 0
    %504 = vmatpush1.bf16.msra.mxu0 0
    %505 = vmatprep.subr.bf16.mxu0 0
    %506 = vmatpush1.bf16.msra.mxu0 0
    %507 = vmatprep.subr.bf16.mxu0 0
    %508 = vmatpush1.bf16.msra.mxu0 0
    %509 = vmatprep.subr.bf16.mxu0 0
    %510 = vmatpush1.bf16.msra.mxu0 0
    %511 = vmatprep.subr.bf16.mxu0 0
    %512 = vmatpush1.bf16.msra.mxu0 0
    %513 = vmatprep.subr.bf16.mxu0 0
    %514 = vmatpush1.bf16.msra.mxu0 0
    %515 = vmatprep.subr.bf16.mxu0 0
    %516 = vmatpush1.bf16.msra.mxu0 0
    %517 = vmatprep.mubr.bf16.mxu0 0
    %518 = vmatmul.mubr.bf16.gmra.mrb[0].mxu0 %v411
    %v519 = vpop.f32.mrb[0].mxu0
    %v520 = vadd.f32 0.0, %v519
    %v521 = vpop.f32.mrb[0].mxu0
    %v522 = vpop.f32.mrb[0].mxu0
    %v523 = vadd.f32 0.0, %v522
    %v524 = vpop.f32.mrb[0].mxu0
    %525 = vmatprep.mubr.bf16.mxu0 0
    %526 = vmatmul.mubr.bf16.gmra.mrb[0].mxu0 %v414
    %v527 = vpop.f32.mrb[0].mxu0
    %v528 = vadd.f32 0.0, %v527
    %v529 = vpop.f32.mrb[0].mxu0
    %v530 = vpop.f32.mrb[0].mxu0
    %v531 = vadd.f32 0.0, %v530
    %v532 = vpop.f32.mrb[0].mxu0
    %533 = vmatprep.mubr.bf16.mxu0 0
    %534 = vmatmul.mubr.bf16.gmra.mrb[0].mxu0 %v417
    %v535 = vpop.f32.mrb[0].mxu0
    %v536 = vadd.f32 0.0, %v535
    %v537 = vpop.f32.mrb[0].mxu0
    %v538 = vpop.f32.mrb[0].mxu0
    %v539 = vadd.f32 0.0, %v538
    %v540 = vpop.f32.mrb[0].mxu0
    %541 = vmatprep.mubr.bf16.mxu0 0
    %542 = vmatmul.mubr.bf16.gmra.mrb[0].mxu0 %v420
    %v543 = vpop.f32.mrb[0].mxu0
    %v544 = vadd.f32 0.0, %v543
    %v545 = vpop.f32.mrb[0].mxu0
    %v546 = vpop.f32.mrb[0].mxu0
    %v547 = vadd.f32 0.0, %v546
    %v548 = vpop.f32.mrb[0].mxu0
    %549 = vmatprep.mubr.bf16.mxu0 0
    %550 = vmatmul.mubr.bf16.gmra.mrb[0].mxu0 %v423
    %v551 = vpop.f32.mrb[0].mxu0
    %v552 = vadd.f32 0.0, %v551
    %v553 = vpop.f32.mrb[0].mxu0
    %v554 = vpop.f32.mrb[0].mxu0
    %v555 = vadd.f32 0.0, %v554
    %v556 = vpop.f32.mrb[0].mxu0
    %557 = vmatprep.mubr.bf16.mxu0 0
    %558 = vmatmul.mubr.bf16.gmra.mrb[0].mxu0 %v426
    %v559 = vpop.f32.mrb[0].mxu0
    %v560 = vadd.f32 0.0, %v559
    %v561 = vpop.f32.mrb[0].mxu0
    %v562 = vpop.f32.mrb[0].mxu0
    %v563 = vadd.f32 0.0, %v562
    %v564 = vpop.f32.mrb[0].mxu0
    %565 = vmatprep.mubr.bf16.mxu0 0
    %566 = vmatmul.mubr.bf16.gmra.mrb[0].mxu0 %v429
    %v567 = vpop.f32.mrb[0].mxu0
    %v568 = vadd.f32 0.0, %v567
    %v569 = vpop.f32.mrb[0].mxu0
    %v570 = vpop.f32.mrb[0].mxu0
    %v571 = vadd.f32 0.0, %v570
    %v572 = vpop.f32.mrb[0].mxu0
    %573 = vmatprep.mubr.bf16.mxu0 0
    %574 = vmatmul.mubr.bf16.gmra.mrb[0].mxu0 %v432
    %v575 = vpop.f32.mrb[0].mxu0
    %v576 = vadd.f32 0.0, %v575
    %v577 = vpop.f32.mrb[0].mxu0
    %v578 = vpop.f32.mrb[0].mxu0
    %v579 = vadd.f32 0.0, %v578
    %v580 = vpop.f32.mrb[0].mxu0
    %581 = vmatprep.mubr.bf16.mxu0 0
    %582 = vmatmul.mubr.bf16.gmra.mrb[0].mxu0 %v435
    %v583 = vpop.f32.mrb[0].mxu0
    %v584 = vadd.f32 0.0, %v583
    %v585 = vpop.f32.mrb[0].mxu0
    %v586 = vpop.f32.mrb[0].mxu0
    %v587 = vadd.f32 0.0, %v586
    %v588 = vpop.f32.mrb[0].mxu0
    %589 = vmatprep.mubr.bf16.mxu0 0
    %590 = vmatmul.mubr.bf16.gmra.mrb[0].mxu0 %v438
    %v591 = vpop.f32.mrb[0].mxu0
    %v592 = vadd.f32 0.0, %v591
    %v593 = vpop.f32.mrb[0].mxu0
    %v594 = vpop.f32.mrb[0].mxu0
    %v595 = vadd.f32 0.0, %v594
    %v596 = vpop.f32.mrb[0].mxu0
    %597 = vmatprep.mubr.bf16.mxu0 0
    %598 = vmatmul.mubr.bf16.gmra.mrb[0].mxu0 %v441
    %v599 = vpop.f32.mrb[0].mxu0
    %v600 = vadd.f32 0.0, %v599
    %v601 = vpop.f32.mrb[0].mxu0
    %v602 = vpop.f32.mrb[0].mxu0
    %v603 = vadd.f32 0.0, %v602
    %v604 = vpop.f32.mrb[0].mxu0
    %605 = vmatprep.mubr.bf16.mxu0 0
    %606 = vmatmul.mubr.bf16.gmra.mrb[0].mxu0 %v444
    %v607 = vpop.f32.mrb[0].mxu0
    %v608 = vadd.f32 0.0, %v607
    %v609 = vpop.f32.mrb[0].mxu0
    %v610 = vpop.f32.mrb[0].mxu0
    %v611 = vadd.f32 0.0, %v610
    %v612 = vpop.f32.mrb[0].mxu0
    %613 = vmatprep.mubr.bf16.mxu0 0
    %614 = vmatmul.mubr.bf16.gmra.mrb[0].mxu0 %v447
    %v615 = vpop.f32.mrb[0].mxu0
    %v616 = vadd.f32 0.0, %v615
    %v617 = vpop.f32.mrb[0].mxu0
    %v618 = vpop.f32.mrb[0].mxu0
    %v619 = vadd.f32 0.0, %v618
    %v620 = vpop.f32.mrb[0].mxu0
    %621 = vmatprep.mubr.bf16.mxu0 0
    %622 = vmatmul.mubr.bf16.gmra.mrb[0].mxu0 %v450
    %v623 = vpop.f32.mrb[0].mxu0
    %v624 = vadd.f32 0.0, %v623
    %v625 = vpop.f32.mrb[0].mxu0
    %v626 = vpop.f32.mrb[0].mxu0
    %v627 = vadd.f32 0.0, %v626
    %v628 = vpop.f32.mrb[0].mxu0
    %629 = vmatprep.mubr.bf16.mxu0 0
    %630 = vmatmul.mubr.bf16.gmra.mrb[0].mxu0 %v453
    %v631 = vpop.f32.mrb[0].mxu0
    %v632 = vadd.f32 0.0, %v631
    %v633 = vpop.f32.mrb[0].mxu0
    %v634 = vpop.f32.mrb[0].mxu0
    %v635 = vadd.f32 0.0, %v634
    %v636 = vpop.f32.mrb[0].mxu0
    %637 = vmatprep.mubr.bf16.mxu0 0
    %638 = vmatmul.mubr.bf16.gmra.mrb[0].mxu0 %v456
    %v639 = vpop.f32.mrb[0].mxu0
    %v640 = vadd.f32 0.0, %v639
    %v641 = vpop.f32.mrb[0].mxu0
    %v642 = vpop.f32.mrb[0].mxu0
    %v643 = vadd.f32 0.0, %v642
    %v644 = vpop.f32.mrb[0].mxu0
    %645 = vmatprep.mubr.bf16.mxu0 0
    %646 = vmatmul.mubr.bf16.gmra.mrb[0].mxu0 %v459
    %v647 = vpop.f32.mrb[0].mxu0
    %v648 = vadd.f32 0.0, %v647
    %v649 = vpop.f32.mrb[0].mxu0
    %v650 = vpop.f32.mrb[0].mxu0
    %v651 = vadd.f32 0.0, %v650
    %v652 = vpop.f32.mrb[0].mxu0
    %653 = vmatprep.mubr.bf16.mxu0 0
    %654 = vmatmul.mubr.bf16.gmra.mrb[0].mxu0 %v462
    %v655 = vpop.f32.mrb[0].mxu0
    %v656 = vadd.f32 0.0, %v655
    %v657 = vpop.f32.mrb[0].mxu0
    %v658 = vpop.f32.mrb[0].mxu0
    %v659 = vadd.f32 0.0, %v658
    %v660 = vpop.f32.mrb[0].mxu0
    %661 = vmatprep.mubr.bf16.mxu0 0
    %662 = vmatmul.mubr.bf16.gmra.mrb[0].mxu0 %v465
    %v663 = vpop.f32.mrb[0].mxu0
    %v664 = vadd.f32 0.0, %v663
    %v665 = vpop.f32.mrb[0].mxu0
    %v666 = vpop.f32.mrb[0].mxu0
    %v667 = vadd.f32 0.0, %v666
    %v668 = vpop.f32.mrb[0].mxu0
    %669 = vmatprep.mubr.bf16.mxu0 0
    %670 = vmatmul.mubr.bf16.gmra.mrb[0].mxu0 %v468
    %v671 = vpop.f32.mrb[0].mxu0
    %v672 = vadd.f32 0.0, %v671
    %v673 = vpop.f32.mrb[0].mxu0
    %v674 = vpop.f32.mrb[0].mxu0
    %v675 = vadd.f32 0.0, %v674
    %v676 = vpop.f32.mrb[0].mxu0
    %677 = vmatprep.mubr.bf16.mxu0 0
    %678 = vmatmul.mubr.bf16.gmra.mrb[0].mxu0 %v471
    %v679 = vpop.f32.mrb[0].mxu0
    %v680 = vadd.f32 0.0, %v679
    %v681 = vpop.f32.mrb[0].mxu0
    %v682 = vpop.f32.mrb[0].mxu0
    %v683 = vadd.f32 0.0, %v682
    %v684 = vpop.f32.mrb[0].mxu0
    %685 = vmatprep.mubr.bf16.mxu0 0
    %686 = vmatmul.mubr.bf16.gmra.mrb[0].mxu0 %v474
    %v687 = vpop.f32.mrb[0].mxu0
    %v688 = vadd.f32 0.0, %v687
    %v689 = vpop.f32.mrb[0].mxu0
    %v690 = vpop.f32.mrb[0].mxu0
    %v691 = vadd.f32 0.0, %v690
    %v692 = vpop.f32.mrb[0].mxu0
    %693 = vmatprep.mubr.bf16.mxu0 0
    %694 = vmatmul.mubr.bf16.gmra.mrb[0].mxu0 %v477
    %v695 = vpop.f32.mrb[0].mxu0
    %v696 = vadd.f32 0.0, %v695
    %v697 = vpop.f32.mrb[0].mxu0
    %v698 = vpop.f32.mrb[0].mxu0
    %v699 = vadd.f32 0.0, %v698
    %v700 = vpop.f32.mrb[0].mxu0
    %701 = vmatprep.mubr.bf16.mxu0 0
    %702 = vmatmul.mubr.bf16.gmra.mrb[0].mxu0 %v480
    %v703 = vpop.f32.mrb[0].mxu0
    %v704 = vadd.f32 0.0, %v703
    %v705 = vpop.f32.mrb[0].mxu0
    %v706 = vpop.f32.mrb[0].mxu0
    %v707 = vadd.f32 0.0, %v706
    %v708 = vpop.f32.mrb[0].mxu0
    %709 = vmatprep.mubr.bf16.mxu0 0
    %710 = vmatmul.mubr.bf16.gmra.mrb[0].mxu0 %v483
    %v711 = vpop.f32.mrb[0].mxu0
    %v712 = vadd.f32 0.0, %v711
    %v713 = vpop.f32.mrb[0].mxu0
    %v714 = vpop.f32.mrb[0].mxu0
    %v715 = vpop.f32.mrb[0].mxu0
    %716 = vdwg.mxu0
    %vm717 = vcmp.ge.f32.partialorder %v520, 0.0
    %vm718 = vcmp.ge.f32.partialorder %v523, 0.0
    %vm719 = vcmp.ge.f32.partialorder %v528, 0.0
    %vm720 = vcmp.ge.f32.partialorder %v531, 0.0
    %vm721 = vcmp.ge.f32.partialorder %v536, 0.0
    %vm722 = vcmp.ge.f32.partialorder %v539, 0.0
    %vm723 = vcmp.ge.f32.partialorder %v544, 0.0
    %vm724 = vcmp.ge.f32.partialorder %v547, 0.0
    %vm725 = vcmp.ge.f32.partialorder %v552, 0.0
    %vm726 = vcmp.ge.f32.partialorder %v555, 0.0
    %vm727 = vcmp.ge.f32.partialorder %v560, 0.0
    %vm728 = vcmp.ge.f32.partialorder %v563, 0.0
    %vm729 = vcmp.ge.f32.partialorder %v568, 0.0
    %vm730 = vcmp.ge.f32.partialorder %v571, 0.0
    %vm731 = vcmp.ge.f32.partialorder %v576, 0.0
    %vm732 = vcmp.ge.f32.partialorder %v579, 0.0
    %vm733 = vcmp.ge.f32.partialorder %v584, 0.0
    %vm734 = vcmp.ge.f32.partialorder %v587, 0.0
    %vm735 = vcmp.ge.f32.partialorder %v592, 0.0
    %vm736 = vcmp.ge.f32.partialorder %v595, 0.0
    %vm737 = vcmp.ge.f32.partialorder %v600, 0.0
    %vm738 = vcmp.ge.f32.partialorder %v603, 0.0
    %vm739 = vcmp.ge.f32.partialorder %v608, 0.0
    %vm740 = vcmp.ge.f32.partialorder %v611, 0.0
    %vm741 = vcmp.ge.f32.partialorder %v616, 0.0
    %vm742 = vcmp.ge.f32.partialorder %v619, 0.0
    %vm743 = vcmp.ge.f32.partialorder %v624, 0.0
    %vm744 = vcmp.ge.f32.partialorder %v627, 0.0
    %vm745 = vcmp.ge.f32.partialorder %v632, 0.0
    %vm746 = vcmp.ge.f32.partialorder %v635, 0.0
    %vm747 = vcmp.ge.f32.partialorder %v640, 0.0
    %vm748 = vcmp.ge.f32.partialorder %v643, 0.0
    %vm749 = vcmp.ge.f32.partialorder %v648, 0.0
    %vm750 = vcmp.ge.f32.partialorder %v651, 0.0
    %vm751 = vcmp.ge.f32.partialorder %v656, 0.0
    %vm752 = vcmp.ge.f32.partialorder %v659, 0.0
    %vm753 = vcmp.ge.f32.partialorder %v664, 0.0
    %vm754 = vcmp.ge.f32.partialorder %v667, 0.0
    %vm755 = vcmp.ge.f32.partialorder %v672, 0.0
    %vm756 = vcmp.ge.f32.partialorder %v675, 0.0
    %vm757 = vcmp.ge.f32.partialorder %v680, 0.0
    %vm758 = vcmp.ge.f32.partialorder %v683, 0.0
    %vm759 = vcmp.ge.f32.partialorder %v688, 0.0
    %vm760 = vcmp.ge.f32.partialorder %v691, 0.0
    %vm761 = vcmp.ge.f32.partialorder %v696, 0.0
    %vm762 = vcmp.ge.f32.partialorder %v699, 0.0
    %vm763 = vcmp.ge.f32.partialorder %v704, 0.0
    %vm764 = vcmp.ge.f32.partialorder %v707, 0.0
    %vm765 = vcmp.ge.f32.partialorder %v712, 0.0
    %v766 = vmul.f32 %v520, 0.2
    %v767 = vmul.f32 %v523, 0.2
    %v768 = vmul.f32 %v528, 0.2
    %v769 = vmul.f32 %v531, 0.2
    %v770 = vmul.f32 %v536, 0.2
    %v771 = vmul.f32 %v539, 0.2
    %v772 = vmul.f32 %v544, 0.2
    %v773 = vmul.f32 %v547, 0.2
    %v774 = vmul.f32 %v552, 0.2
    %v775 = vmul.f32 %v555, 0.2
    %v776 = vmul.f32 %v560, 0.2
    %v777 = vmul.f32 %v563, 0.2
    %v778 = vmul.f32 %v568, 0.2
    %v779 = vmul.f32 %v571, 0.2
    %v780 = vmul.f32 %v576, 0.2
    %v781 = vmul.f32 %v579, 0.2
    %v782 = vmul.f32 %v584, 0.2
    %v783 = vmul.f32 %v587, 0.2
    %v784 = vmul.f32 %v592, 0.2
    %v785 = vmul.f32 %v595, 0.2
    %v786 = vmul.f32 %v600, 0.2
    %v787 = vmul.f32 %v603, 0.2
    %v788 = vmul.f32 %v608, 0.2
    %v789 = vmul.f32 %v611, 0.2
    %v790 = vmul.f32 %v616, 0.2
    %v791 = vmul.f32 %v619, 0.2
    %v792 = vmul.f32 %v624, 0.2
    %v793 = vmul.f32 %v627, 0.2
    %v794 = vmul.f32 %v632, 0.2
    %v795 = vmul.f32 %v635, 0.2
    %v796 = vmul.f32 %v640, 0.2
    %v797 = vmul.f32 %v643, 0.2
    %v798 = vmul.f32 %v648, 0.2
    %v799 = vmul.f32 %v651, 0.2
    %v800 = vmul.f32 %v656, 0.2
    %v801 = vmul.f32 %v659, 0.2
    %v802 = vmul.f32 %v664, 0.2
    %v803 = vmul.f32 %v667, 0.2
    %v804 = vmul.f32 %v672, 0.2
    %v805 = vmul.f32 %v675, 0.2
    %v806 = vmul.f32 %v680, 0.2
    %v807 = vmul.f32 %v683, 0.2
    %v808 = vmul.f32 %v688, 0.2
    %v809 = vmul.f32 %v691, 0.2
    %v810 = vmul.f32 %v696, 0.2
    %v811 = vmul.f32 %v699, 0.2
    %v812 = vmul.f32 %v704, 0.2
    %v813 = vmul.f32 %v707, 0.2
    %v814 = vmul.f32 %v712, 0.2
    %v815 = vsel %vm717, %v520, %v766
    %v816 = vsel %vm718, %v523, %v767
    %v817 = vsel %vm719, %v528, %v768
    %v818 = vsel %vm720, %v531, %v769
    %v819 = vsel %vm721, %v536, %v770
    %v820 = vsel %vm722, %v539, %v771
    %v821 = vsel %vm723, %v544, %v772
    %v822 = vsel %vm724, %v547, %v773
    %v823 = vsel %vm725, %v552, %v774
    %v824 = vsel %vm726, %v555, %v775
    %v825 = vsel %vm727, %v560, %v776
    %v826 = vsel %vm728, %v563, %v777
    %v827 = vsel %vm729, %v568, %v778
    %v828 = vsel %vm730, %v571, %v779
    %v829 = vsel %vm731, %v576, %v780
    %v830 = vsel %vm732, %v579, %v781
    %v831 = vsel %vm733, %v584, %v782
    %v832 = vsel %vm734, %v587, %v783
    %v833 = vsel %vm735, %v592, %v784
    %v834 = vsel %vm736, %v595, %v785
    %v835 = vsel %vm737, %v600, %v786
    %v836 = vsel %vm738, %v603, %v787
    %v837 = vsel %vm739, %v608, %v788
    %v838 = vsel %vm740, %v611, %v789
    %v839 = vsel %vm741, %v616, %v790
    %v840 = vsel %vm742, %v619, %v791
    %v841 = vsel %vm743, %v624, %v792
    %v842 = vsel %vm744, %v627, %v793
    %v843 = vsel %vm745, %v632, %v794
    %v844 = vsel %vm746, %v635, %v795
    %v845 = vsel %vm747, %v640, %v796
    %v846 = vsel %vm748, %v643, %v797
    %v847 = vsel %vm749, %v648, %v798
    %v848 = vsel %vm750, %v651, %v799
    %v849 = vsel %vm751, %v656, %v800
    %v850 = vsel %vm752, %v659, %v801
    %v851 = vsel %vm753, %v664, %v802
    %v852 = vsel %vm754, %v667, %v803
    %v853 = vsel %vm755, %v672, %v804
    %v854 = vsel %vm756, %v675, %v805
    %v855 = vsel %vm757, %v680, %v806
    %v856 = vsel %vm758, %v683, %v807
    %v857 = vsel %vm759, %v688, %v808
    %v858 = vsel %vm760, %v691, %v809
    %v859 = vsel %vm761, %v696, %v810
    %v860 = vsel %vm762, %v699, %v811
    %v861 = vsel %vm763, %v704, %v812
    %v862 = vsel %vm764, %v707, %v813
    %v863 = vsel %vm765, %v712, %v814
    %v864 = vpack.c.bf16 %v816, %v815
    %v865 = vpack.c.bf16 %v818, %v817
    %v866 = vpack.c.bf16 %v820, %v819
    %v867 = vpack.c.bf16 %v822, %v821
    %v868 = vpack.c.bf16 %v824, %v823
    %v869 = vpack.c.bf16 %v826, %v825
    %v870 = vpack.c.bf16 %v828, %v827
    %v871 = vpack.c.bf16 %v830, %v829
    %v872 = vpack.c.bf16 %v832, %v831
    %v873 = vpack.c.bf16 %v834, %v833
    %v874 = vpack.c.bf16 %v836, %v835
    %v875 = vpack.c.bf16 %v838, %v837
    %v876 = vpack.c.bf16 %v840, %v839
    %v877 = vpack.c.bf16 %v842, %v841
    %v878 = vpack.c.bf16 %v844, %v843
    %v879 = vpack.c.bf16 %v846, %v845
    %v880 = vpack.c.bf16 %v848, %v847
    %v881 = vpack.c.bf16 %v850, %v849
    %v882 = vpack.c.bf16 %v852, %v851
    %v883 = vpack.c.bf16 %v854, %v853
    %v884 = vpack.c.bf16 %v856, %v855
    %v885 = vpack.c.bf16 %v858, %v857
    %v886 = vpack.c.bf16 %v860, %v859
    %v887 = vpack.c.bf16 %v862, %v861
    %v888 = vpack.c.bf16 %v863, %v863
    %v914 = vunpack.c.l.b16 %v864
    %v915 = vunpack.c.h.b16 %v864
    %v916 = vunpack.c.l.b16 %v865
    %v917 = vunpack.c.h.b16 %v865
    %v918 = vunpack.c.l.b16 %v866
    %v919 = vunpack.c.h.b16 %v866
    %v920 = vunpack.c.l.b16 %v867
    %v921 = vunpack.c.h.b16 %v867
    %v922 = vunpack.c.l.b16 %v868
    %v923 = vunpack.c.h.b16 %v868
    %v924 = vunpack.c.l.b16 %v869
    %v925 = vunpack.c.h.b16 %v869
    %v926 = vunpack.c.l.b16 %v870
    %v927 = vunpack.c.h.b16 %v870
    %v928 = vunpack.c.l.b16 %v871
    %v929 = vunpack.c.h.b16 %v871
    %v930 = vunpack.c.l.b16 %v872
    %v931 = vunpack.c.h.b16 %v872
    %v932 = vunpack.c.l.b16 %v873
    %v933 = vunpack.c.h.b16 %v873
    %v934 = vunpack.c.l.b16 %v874
    %v935 = vunpack.c.h.b16 %v874
    %v936 = vunpack.c.l.b16 %v875
    %v937 = vunpack.c.h.b16 %v875
    %v938 = vunpack.c.l.b16 %v876
    %v939 = vunpack.c.h.b16 %v876
    %v940 = vunpack.c.l.b16 %v877
    %v941 = vunpack.c.h.b16 %v877
    %v942 = vunpack.c.l.b16 %v878
    %v943 = vunpack.c.h.b16 %v878
    %v944 = vunpack.c.l.b16 %v879
    %v945 = vunpack.c.h.b16 %v879
    %v946 = vunpack.c.l.b16 %v880
    %v947 = vunpack.c.h.b16 %v880
    %v948 = vunpack.c.l.b16 %v881
    %v949 = vunpack.c.h.b16 %v881
    %v950 = vunpack.c.l.b16 %v882
    %v951 = vunpack.c.h.b16 %v882
    %v952 = vunpack.c.l.b16 %v883
    %v953 = vunpack.c.h.b16 %v883
    %v954 = vunpack.c.l.b16 %v884
    %v955 = vunpack.c.h.b16 %v884
    %v956 = vunpack.c.l.b16 %v885
    %v957 = vunpack.c.h.b16 %v885
    %v958 = vunpack.c.l.b16 %v886
    %v959 = vunpack.c.h.b16 %v886
    %v960 = vunpack.c.l.b16 %v887
    %v961 = vunpack.c.h.b16 %v887
    %v962 = vunpack.c.l.b16 %v888
    %v963 = vpack.c.b16 %v914, %v914
    %v964 = vpack.c.b16 %v915, %v915
    %v965 = vpack.c.b16 %v916, %v916
    %v966 = vpack.c.b16 %v917, %v917
    %v967 = vpack.c.b16 %v918, %v918
    %v968 = vpack.c.b16 %v919, %v919
    %v969 = vpack.c.b16 %v920, %v920
    %v970 = vpack.c.b16 %v921, %v921
    %v971 = vpack.c.b16 %v922, %v922
    %v972 = vpack.c.b16 %v923, %v923
    %v973 = vpack.c.b16 %v924, %v924
    %v974 = vpack.c.b16 %v925, %v925
    %v975 = vpack.c.b16 %v926, %v926
    %v976 = vpack.c.b16 %v927, %v927
    %v977 = vpack.c.b16 %v928, %v928
    %v978 = vpack.c.b16 %v929, %v929
    %v979 = vpack.c.b16 %v930, %v930
    %v980 = vpack.c.b16 %v931, %v931
    %v981 = vpack.c.b16 %v932, %v932
    %v982 = vpack.c.b16 %v933, %v933
    %v983 = vpack.c.b16 %v934, %v934
    %v984 = vpack.c.b16 %v935, %v935
    %v985 = vpack.c.b16 %v936, %v936
    %v986 = vpack.c.b16 %v937, %v937
    %v987 = vpack.c.b16 %v938, %v938
    %v988 = vpack.c.b16 %v939, %v939
    %v989 = vpack.c.b16 %v940, %v940
    %v990 = vpack.c.b16 %v941, %v941
    %v991 = vpack.c.b16 %v942, %v942
    %v992 = vpack.c.b16 %v943, %v943
    %v993 = vpack.c.b16 %v944, %v944
    %v994 = vpack.c.b16 %v945, %v945
    %v995 = vpack.c.b16 %v946, %v946
    %v996 = vpack.c.b16 %v947, %v947
    %v997 = vpack.c.b16 %v948, %v948
    %v998 = vpack.c.b16 %v949, %v949
    %v999 = vpack.c.b16 %v950, %v950
    %v1000 = vpack.c.b16 %v951, %v951
    %v1001 = vpack.c.b16 %v952, %v952
    %v1002 = vpack.c.b16 %v953, %v953
    %v1003 = vpack.c.b16 %v954, %v954
    %v1004 = vpack.c.b16 %v955, %v955
    %v1005 = vpack.c.b16 %v956, %v956
    %v1006 = vpack.c.b16 %v957, %v957
    %v1007 = vpack.c.b16 %v958, %v958
    %v1008 = vpack.c.b16 %v959, %v959
    %v1009 = vpack.c.b16 %v960, %v960
    %v1010 = vpack.c.b16 %v961, %v961
    %v1011 = vpack.c.b16 %v962, %v962
    %vm1061 = vcmask 519168
    %1062 = vst.msk [vmem:[#allocation2] sm:$0xf] %vm1061, %v963
    %1063 = vst.msk [vmem:[#allocation2 + $0x4] sm:$0xf] %vm1061, %v964
    %1064 = vst.msk [vmem:[#allocation2 + $0x8] sm:$0xf] %vm1061, %v965
    %1065 = vst.msk [vmem:[#allocation2 + $0xc] sm:$0xf] %vm1061, %v966
    %1066 = vst.msk [vmem:[#allocation2 + $0x10] sm:$0xf] %vm1061, %v967
    %1067 = vst.msk [vmem:[#allocation2 + $0x14] sm:$0xf] %vm1061, %v968
    %1068 = vst.msk [vmem:[#allocation2 + $0x18] sm:$0xf] %vm1061, %v969
    %1069 = vst.msk [vmem:[#allocation2 + $0x1c] sm:$0xf] %vm1061, %v970
    %1070 = vst.msk [vmem:[#allocation2 + $0x20] sm:$0xf] %vm1061, %v971
    %1071 = vst.msk [vmem:[#allocation2 + $0x24] sm:$0xf] %vm1061, %v972
    %1072 = vst.msk [vmem:[#allocation2 + $0x28] sm:$0xf] %vm1061, %v973
    %1073 = vst.msk [vmem:[#allocation2 + $0x2c] sm:$0xf] %vm1061, %v974
    %1074 = vst.msk [vmem:[#allocation2 + $0x30] sm:$0xf] %vm1061, %v975
    %1075 = vst.msk [vmem:[#allocation2 + $0x34] sm:$0xf] %vm1061, %v976
    %1076 = vst.msk [vmem:[#allocation2 + $0x38] sm:$0xf] %vm1061, %v977
    %1077 = vst.msk [vmem:[#allocation2 + $0x3c] sm:$0xf] %vm1061, %v978
    %1078 = vst.msk [vmem:[#allocation2 + $0x40] sm:$0xf] %vm1061, %v979
    %1079 = vst.msk [vmem:[#allocation2 + $0x44] sm:$0xf] %vm1061, %v980
    %1080 = vst.msk [vmem:[#allocation2 + $0x48] sm:$0xf] %vm1061, %v981
    %1081 = vst.msk [vmem:[#allocation2 + $0x4c] sm:$0xf] %vm1061, %v982
    %1082 = vst.msk [vmem:[#allocation2 + $0x50] sm:$0xf] %vm1061, %v983
    %1083 = vst.msk [vmem:[#allocation2 + $0x54] sm:$0xf] %vm1061, %v984
    %1084 = vst.msk [vmem:[#allocation2 + $0x58] sm:$0xf] %vm1061, %v985
    %1085 = vst.msk [vmem:[#allocation2 + $0x5c] sm:$0xf] %vm1061, %v986
    %1086 = vst.msk [vmem:[#allocation2 + $0x60] sm:$0xf] %vm1061, %v987
    %1087 = vst.msk [vmem:[#allocation2 + $0x64] sm:$0xf] %vm1061, %v988
    %1088 = vst.msk [vmem:[#allocation2 + $0x68] sm:$0xf] %vm1061, %v989
    %1089 = vst.msk [vmem:[#allocation2 + $0x6c] sm:$0xf] %vm1061, %v990
    %1090 = vst.msk [vmem:[#allocation2 + $0x70] sm:$0xf] %vm1061, %v991
    %1091 = vst.msk [vmem:[#allocation2 + $0x74] sm:$0xf] %vm1061, %v992
    %1092 = vst.msk [vmem:[#allocation2 + $0x78] sm:$0xf] %vm1061, %v993
    %1093 = vst.msk [vmem:[#allocation2 + $0x7c] sm:$0xf] %vm1061, %v994
    %1094 = vst.msk [vmem:[#allocation2 + $0x80] sm:$0xf] %vm1061, %v995
    %1095 = vst.msk [vmem:[#allocation2 + $0x84] sm:$0xf] %vm1061, %v996
    %1096 = vst.msk [vmem:[#allocation2 + $0x88] sm:$0xf] %vm1061, %v997
    %1097 = vst.msk [vmem:[#allocation2 + $0x8c] sm:$0xf] %vm1061, %v998
    %1098 = vst.msk [vmem:[#allocation2 + $0x90] sm:$0xf] %vm1061, %v999
    %1099 = vst.msk [vmem:[#allocation2 + $0x94] sm:$0xf] %vm1061, %v1000
    %1100 = vst.msk [vmem:[#allocation2 + $0x98] sm:$0xf] %vm1061, %v1001
    %1101 = vst.msk [vmem:[#allocation2 + $0x9c] sm:$0xf] %vm1061, %v1002
    %1102 = vst.msk [vmem:[#allocation2 + $0xa0] sm:$0xf] %vm1061, %v1003
    %1103 = vst.msk [vmem:[#allocation2 + $0xa4] sm:$0xf] %vm1061, %v1004
    %1104 = vst.msk [vmem:[#allocation2 + $0xa8] sm:$0xf] %vm1061, %v1005
    %1105 = vst.msk [vmem:[#allocation2 + $0xac] sm:$0xf] %vm1061, %v1006
    %1106 = vst.msk [vmem:[#allocation2 + $0xb0] sm:$0xf] %vm1061, %v1007
    %1107 = vst.msk [vmem:[#allocation2 + $0xb4] sm:$0xf] %vm1061, %v1008
    %1108 = vst.msk [vmem:[#allocation2 + $0xb8] sm:$0xf] %vm1061, %v1009
    %1109 = vst.msk [vmem:[#allocation2 + $0xbc] sm:$0xf] %vm1061, %v1010
    %1110 = vst.msk [vmem:[#allocation2 + $0xc0] sm:$0xf] %vm1061, %v1011
    %v1111 = vld [vmem:[#allocation2] sm:$0xf]
    %v1112 = vld [vmem:[#allocation2 + $0x4] sm:$0x3]
    %v1113 = vld [vmem:[#allocation2 + $0x30] sm:$0xe]
    %v1114 = vld [vmem:[#allocation2 + $0x34] sm:$0x7]
    %v1115 = vld [vmem:[#allocation2] sm:$0xe]
    %v1116 = vld [vmem:[#allocation2 + $0x4] sm:$0x7]
    %v1117 = vld [vmem:[#allocation2 + $0x30] sm:$0xc]
    %v1118 = vld [vmem:[#allocation2 + $0x34] sm:$0xf]
    %v1119 = vld [vmem:[#allocation2 + $0x60] sm:$0xc]
    %v1120 = vld [vmem:[#allocation2 + $0x64] sm:$0xf]
    %v1121 = vld [vmem:[#allocation2 + $0x90] sm:$0x8]
    %v1122 = vld [vmem:[#allocation2 + $0x94] sm:$0xf]
    %v1123 = vld [vmem:[#allocation2 + $0x98] sm:$0x1]
    %v1124 = vld [vmem:[#allocation2 + $0x60] sm:$0x8]
    %v1125 = vld [vmem:[#allocation2 + $0x68] sm:$0x1]
    %v1126 = vld [vmem:[#allocation2 + $0x98] sm:$0x3]
    %v1127 = vld [vmem:[#allocation2 + $0x4] sm:$0x8]
    %v1128 = vld [vmem:[#allocation2 + $0x8] sm:$0xf]
    %v1129 = vld [vmem:[#allocation2 + $0xc] sm:$0x1]
    %v1130 = vld [vmem:[#allocation2 + $0x38] sm:$0xf]
    %v1131 = vld [vmem:[#allocation2 + $0x3c] sm:$0x3]
    %v1132 = vld [vmem:[#allocation2 + $0xc] sm:$0x3]
    %v1133 = vld [vmem:[#allocation2 + $0x38] sm:$0xe]
    %v1134 = vld [vmem:[#allocation2 + $0x3c] sm:$0x7]
    %v1135 = vld [vmem:[#allocation2 + $0x68] sm:$0xe]
    %v1136 = vld [vmem:[#allocation2 + $0x6c] sm:$0x7]
    %v1137 = vld [vmem:[#allocation2 + $0x98] sm:$0xc]
    %v1138 = vld [vmem:[#allocation2 + $0x9c] sm:$0xf]
    %v1139 = vld [vmem:[#allocation2 + $0x68] sm:$0xc]
    %v1140 = vld [vmem:[#allocation2 + $0x6c] sm:$0xf]
    %v1141 = vld [vmem:[#allocation2 + $0x98] sm:$0x8]
    %v1142 = vld [vmem:[#allocation2 + $0xa0] sm:$0x1]
    %v1145 = vunpack.c.l.b16 %v1111
    %v1146 = vunpack.c.l.b16 %v1112
    %v1147 = vpack.c.b16 %v1146, %v1145
    %v1150 = vunpack.c.l.b16 %v1113
    %v1151 = vunpack.c.l.b16 %v1114
    %v1152 = vpack.c.b16 %v1151, %v1150
    %v1153 = vrot.slane %v1152, 1
    %1154 = vrot.lane.b32.xlu0 %v1153, 64
    %v1155 = vpop.permute.xlu0 %1154
    %v1158 = vunpack.c.l.b16 %v1115
    %v1159 = vunpack.c.l.b16 %v1116
    %v1160 = vpack.c.b16 %v1159, %v1158
    %v1161 = vrot.slane %v1160, 1
    %v1164 = vunpack.c.l.b16 %v1117
    %v1165 = vunpack.c.l.b16 %v1118
    %v1166 = vpack.c.b16 %v1165, %v1164
    %v1167 = vrot.slane %v1166, 2
    %1168 = vrot.lane.b32.xlu0 %v1167, 64
    %v1169 = vpop.permute.xlu0 %1168
    %v1172 = vunpack.c.l.b16 %v1119
    %v1173 = vunpack.c.l.b16 %v1120
    %v1174 = vpack.c.b16 %v1173, %v1172
    %v1175 = vrot.slane %v1174, 2
    %v1179 = vunpack.c.l.b16 %v1121
    %v1180 = vunpack.c.l.b16 %v1122
    %v1181 = vunpack.c.l.b16 %v1123
    %v1182 = vpack.c.b16 %v1180, %v1179
    %v1183 = vpack.c.b16 %v1181, %v1181
    %vm1184 = vcmask 1044480
    %v1185 = vrot.slane %v1182, 3
    %v1186 = vrot.slane %v1183, 3
    %v1187 = vsel %vm1184, %v1185, %v1186
    %1188 = vrot.lane.b32.xlu0 %v1187, 64
    %v1189 = vpop.permute.xlu0 %1188
    %v1192 = vunpack.c.l.b16 %v1124
    %v1193 = vunpack.c.l.b16 %v1125
    %v1194 = vpack.c.b16 %v1173, %v1192
    %v1195 = vpack.c.b16 %v1193, %v1193
    %v1196 = vrot.slane %v1194, 3
    %v1197 = vrot.slane %v1195, 3
    %v1198 = vsel %vm1184, %v1196, %v1197
    %v1200 = vunpack.c.l.b16 %v1126
    %v1201 = vpack.c.b16 %v1200, %v1180
    %1202 = vrot.lane.b32.xlu0 %v1201, 64
    %v1203 = vpop.permute.xlu0 %1202
    %v1207 = vunpack.c.l.b16 %v1127
    %v1208 = vunpack.c.l.b16 %v1128
    %v1209 = vunpack.c.l.b16 %v1129
    %v1210 = vpack.c.b16 %v1208, %v1207
    %v1211 = vpack.c.b16 %v1209, %v1209
    %v1212 = vrot.slane %v1210, 3
    %v1213 = vrot.slane %v1211, 3
    %v1214 = vsel %vm1184, %v1212, %v1213
    %v1217 = vunpack.c.l.b16 %v1130
    %v1218 = vunpack.c.l.b16 %v1131
    %v1219 = vpack.c.b16 %v1218, %v1217
    %1220 = vrot.lane.b32.xlu0 %v1219, 64
    %v1221 = vpop.permute.xlu0 %1220
    %v1223 = vunpack.c.l.b16 %v1132
    %v1224 = vpack.c.b16 %v1223, %v1208
    %v1227 = vunpack.c.l.b16 %v1133
    %v1228 = vunpack.c.l.b16 %v1134
    %v1229 = vpack.c.b16 %v1228, %v1227
    %v1230 = vrot.slane %v1229, 1
    %1231 = vrot.lane.b32.xlu0 %v1230, 64
    %v1232 = vpop.permute.xlu0 %1231
    %v1235 = vunpack.c.l.b16 %v1135
    %v1236 = vunpack.c.l.b16 %v1136
    %v1237 = vpack.c.b16 %v1236, %v1235
    %v1238 = vrot.slane %v1237, 1
    %v1241 = vunpack.c.l.b16 %v1137
    %v1242 = vunpack.c.l.b16 %v1138
    %v1243 = vpack.c.b16 %v1242, %v1241
    %v1244 = vrot.slane %v1243, 2
    %1245 = vrot.lane.b32.xlu0 %v1244, 64
    %v1246 = vpop.permute.xlu0 %1245
    %v1249 = vunpack.c.l.b16 %v1139
    %v1250 = vunpack.c.l.b16 %v1140
    %v1251 = vpack.c.b16 %v1250, %v1249
    %v1252 = vrot.slane %v1251, 2
    %v1255 = vunpack.c.l.b16 %v1141
    %v1256 = vunpack.c.l.b16 %v1142
    %v1257 = vpack.c.b16 %v1242, %v1255
    %v1258 = vpack.c.b16 %v1256, %v1256
    %v1259 = vrot.slane %v1257, 3
    %v1260 = vrot.slane %v1258, 3
    %v1261 = vsel %vm1184, %v1259, %v1260
    %1262 = vrot.lane.b32.xlu0 %v1261, 64
    %v1263 = vpop.permute.xlu0 %1262
    %vm1264 = vcmask 523264
    %v1267 = vsel %vm1264, %v1147, %v1155
    %v1271 = vsel %vm1264, %v1161, %v1169
    %v1275 = vsel %vm1264, %v1175, %v1189
    %v1279 = vsel %vm1264, %v1198, %v1203
    %v1283 = vsel %vm1264, %v1214, %v1221
    %v1287 = vsel %vm1264, %v1224, %v1232
    %v1291 = vsel %vm1264, %v1238, %v1246
    %v1295 = vsel %vm1264, %v1252, %v1263
    %v1297 = vld [vmem:[#allocation11] sm:$0xf]
    %v1298 = vld [vmem:[#allocation11 + $0x4] sm:$0xf]
    %v1299 = vld [vmem:[#allocation11 + $0x8] sm:$0xf]
    %v1300 = vld [vmem:[#allocation11 + $0xc] sm:$0xf]
    %v1301 = vld [vmem:[#allocation11 + $0x10] sm:$0xf]
    %v1302 = vld [vmem:[#allocation11 + $0x14] sm:$0xf]
    %v1303 = vld [vmem:[#allocation11 + $0x18] sm:$0xf]
    %v1304 = vld [vmem:[#allocation11 + $0x1c] sm:$0xf]
    %v1305 = vld [vmem:[#allocation11 + $0x20] sm:$0xf]
    %v1306 = vld [vmem:[#allocation11 + $0x24] sm:$0xf]
    %v1307 = vld [vmem:[#allocation11 + $0x28] sm:$0xf]
    %v1308 = vld [vmem:[#allocation11 + $0x2c] sm:$0xf]
    %v1309 = vld [vmem:[#allocation11 + $0x30] sm:$0xf]
    %v1310 = vld [vmem:[#allocation11 + $0x34] sm:$0xf]
    %v1311 = vld [vmem:[#allocation11 + $0x38] sm:$0xf]
    %v1312 = vld [vmem:[#allocation11 + $0x3c] sm:$0xf]
    %v1313 = vld [vmem:[#allocation11 + $0x40] sm:$0xf]
    %v1314 = vld [vmem:[#allocation11 + $0x44] sm:$0xf]
    %v1315 = vld [vmem:[#allocation11 + $0x48] sm:$0xf]
    %v1316 = vld [vmem:[#allocation11 + $0x4c] sm:$0xf]
    %v1317 = vld [vmem:[#allocation11 + $0x50] sm:$0xf]
    %v1318 = vld [vmem:[#allocation11 + $0x54] sm:$0xf]
    %v1319 = vld [vmem:[#allocation11 + $0x58] sm:$0xf]
    %v1320 = vld [vmem:[#allocation11 + $0x5c] sm:$0xf]
    %v1321 = vld [vmem:[#allocation11 + $0x60] sm:$0xf]
    %v1322 = vld [vmem:[#allocation11 + $0x64] sm:$0xf]
    %v1323 = vld [vmem:[#allocation11 + $0x68] sm:$0xf]
    %v1324 = vld [vmem:[#allocation11 + $0x6c] sm:$0xf]
    %v1325 = vld [vmem:[#allocation11 + $0x70] sm:$0xf]
    %v1326 = vld [vmem:[#allocation11 + $0x74] sm:$0xf]
    %v1327 = vld [vmem:[#allocation11 + $0x78] sm:$0xf]
    %v1328 = vld [vmem:[#allocation11 + $0x7c] sm:$0xf]
    %v1329 = vld [vmem:[#allocation11 + $0x80] sm:$0xf]
    %v1330 = vld [vmem:[#allocation11 + $0x84] sm:$0xf]
    %v1331 = vld [vmem:[#allocation11 + $0x88] sm:$0xf]
    %v1332 = vld [vmem:[#allocation11 + $0x8c] sm:$0xf]
    %v1333 = vld [vmem:[#allocation11 + $0x90] sm:$0xf]
    %v1334 = vld [vmem:[#allocation11 + $0x94] sm:$0xf]
    %v1335 = vld [vmem:[#allocation11 + $0x98] sm:$0xf]
    %v1336 = vld [vmem:[#allocation11 + $0x9c] sm:$0xf]
    %v1337 = vld [vmem:[#allocation11 + $0xa0] sm:$0xf]
    %v1338 = vld [vmem:[#allocation11 + $0xa4] sm:$0xf]
    %v1339 = vld [vmem:[#allocation11 + $0xa8] sm:$0xf]
    %v1340 = vld [vmem:[#allocation11 + $0xac] sm:$0xf]
    %v1341 = vld [vmem:[#allocation11 + $0xb0] sm:$0xf]
    %v1342 = vld [vmem:[#allocation11 + $0xb4] sm:$0xf]
    %v1343 = vld [vmem:[#allocation11 + $0xb8] sm:$0xf]
    %v1344 = vld [vmem:[#allocation11 + $0xbc] sm:$0xf]
    %v1345 = vld [vmem:[#allocation11 + $0xc0] sm:$0xf]
    %v1346 = vld [vmem:[#allocation11 + $0xc4] sm:$0xf]
    %v1347 = vld [vmem:[#allocation11 + $0xc8] sm:$0xf]
    %v1348 = vld [vmem:[#allocation11 + $0xcc] sm:$0xf]
    %v1349 = vld [vmem:[#allocation11 + $0xd0] sm:$0xf]
    %v1350 = vld [vmem:[#allocation11 + $0xd4] sm:$0xf]
    %v1351 = vld [vmem:[#allocation11 + $0xd8] sm:$0xf]
    %v1352 = vld [vmem:[#allocation11 + $0xdc] sm:$0xf]
    %v1353 = vld [vmem:[#allocation11 + $0xe0] sm:$0xf]
    %v1354 = vld [vmem:[#allocation11 + $0xe4] sm:$0xf]
    %v1355 = vld [vmem:[#allocation11 + $0xe8] sm:$0xf]
    %v1356 = vld [vmem:[#allocation11 + $0xec] sm:$0xf]
    %v1357 = vld [vmem:[#allocation11 + $0xf0] sm:$0xf]
    %v1358 = vld [vmem:[#allocation11 + $0xf4] sm:$0xf]
    %v1359 = vld [vmem:[#allocation11 + $0xf8] sm:$0xf]
    %v1360 = vld [vmem:[#allocation11 + $0xfc] sm:$0xf]
    %v1361 = vld [vmem:[#allocation11 + $0x100] sm:$0xf]
    %v1362 = vld [vmem:[#allocation11 + $0x104] sm:$0xf]
    %v1363 = vld [vmem:[#allocation11 + $0x108] sm:$0xf]
    %v1364 = vld [vmem:[#allocation11 + $0x10c] sm:$0xf]
    %v1365 = vld [vmem:[#allocation11 + $0x110] sm:$0xf]
    %v1366 = vld [vmem:[#allocation11 + $0x114] sm:$0xf]
    %v1367 = vld [vmem:[#allocation11 + $0x118] sm:$0xf]
    %v1368 = vld [vmem:[#allocation11 + $0x11c] sm:$0xf]
    %v1369 = vld [vmem:[#allocation11 + $0x120] sm:$0xf]
    %v1370 = vld [vmem:[#allocation11 + $0x124] sm:$0xf]
    %v1371 = vld [vmem:[#allocation11 + $0x128] sm:$0xf]
    %v1372 = vld [vmem:[#allocation11 + $0x12c] sm:$0xf]
    %v1373 = vld [vmem:[#allocation11 + $0x130] sm:$0xf]
    %v1374 = vld [vmem:[#allocation11 + $0x134] sm:$0xf]
    %v1375 = vld [vmem:[#allocation11 + $0x138] sm:$0xf]
    %v1376 = vld [vmem:[#allocation11 + $0x13c] sm:$0xf]
    %v1377 = vld [vmem:[#allocation11 + $0x140] sm:$0xf]
    %v1378 = vld [vmem:[#allocation11 + $0x144] sm:$0xf]
    %v1379 = vld [vmem:[#allocation11 + $0x148] sm:$0xf]
    %v1380 = vld [vmem:[#allocation11 + $0x14c] sm:$0xf]
    %v1381 = vld [vmem:[#allocation11 + $0x150] sm:$0xf]
    %v1382 = vld [vmem:[#allocation11 + $0x154] sm:$0xf]
    %v1383 = vld [vmem:[#allocation11 + $0x158] sm:$0xf]
    %v1384 = vld [vmem:[#allocation11 + $0x15c] sm:$0xf]
    %v1385 = vld [vmem:[#allocation11 + $0x160] sm:$0xf]
    %v1386 = vld [vmem:[#allocation11 + $0x164] sm:$0xf]
    %v1387 = vld [vmem:[#allocation11 + $0x168] sm:$0xf]
    %v1388 = vld [vmem:[#allocation11 + $0x16c] sm:$0xf]
    %v1389 = vld [vmem:[#allocation11 + $0x170] sm:$0xf]
    %v1390 = vld [vmem:[#allocation11 + $0x174] sm:$0xf]
    %v1391 = vld [vmem:[#allocation11 + $0x178] sm:$0xf]
    %v1392 = vld [vmem:[#allocation11 + $0x17c] sm:$0xf]
    %v1393 = vld [vmem:[#allocation11 + $0x180] sm:$0xf]
    %v1394 = vld [vmem:[#allocation11 + $0x184] sm:$0xf]
    %v1395 = vld [vmem:[#allocation11 + $0x188] sm:$0xf]
    %v1396 = vld [vmem:[#allocation11 + $0x18c] sm:$0xf]
    %v1397 = vld [vmem:[#allocation11 + $0x190] sm:$0xf]
    %v1398 = vld [vmem:[#allocation11 + $0x194] sm:$0xf]
    %v1399 = vld [vmem:[#allocation11 + $0x198] sm:$0xf]
    %v1400 = vld [vmem:[#allocation11 + $0x19c] sm:$0xf]
    %v1401 = vld [vmem:[#allocation11 + $0x1a0] sm:$0xf]
    %v1402 = vld [vmem:[#allocation11 + $0x1a4] sm:$0xf]
    %v1403 = vld [vmem:[#allocation11 + $0x1a8] sm:$0xf]
    %v1404 = vld [vmem:[#allocation11 + $0x1ac] sm:$0xf]
    %v1405 = vld [vmem:[#allocation11 + $0x1b0] sm:$0xf]
    %v1406 = vld [vmem:[#allocation11 + $0x1b4] sm:$0xf]
    %v1407 = vld [vmem:[#allocation11 + $0x1b8] sm:$0xf]
    %v1408 = vld [vmem:[#allocation11 + $0x1bc] sm:$0xf]
    %v1409 = vld [vmem:[#allocation11 + $0x1c0] sm:$0xf]
    %v1410 = vld [vmem:[#allocation11 + $0x1c4] sm:$0xf]
    %v1411 = vld [vmem:[#allocation11 + $0x1c8] sm:$0xf]
    %v1412 = vld [vmem:[#allocation11 + $0x1cc] sm:$0xf]
    %v1413 = vld [vmem:[#allocation11 + $0x1d0] sm:$0xf]
    %v1414 = vld [vmem:[#allocation11 + $0x1d4] sm:$0xf]
    %v1415 = vld [vmem:[#allocation11 + $0x1d8] sm:$0xf]
    %v1416 = vld [vmem:[#allocation11 + $0x1dc] sm:$0xf]
    %v1417 = vld [vmem:[#allocation11 + $0x1e0] sm:$0xf]
    %v1418 = vld [vmem:[#allocation11 + $0x1e4] sm:$0xf]
    %v1419 = vld [vmem:[#allocation11 + $0x1e8] sm:$0xf]
    %v1420 = vld [vmem:[#allocation11 + $0x1ec] sm:$0xf]
    %v1421 = vld [vmem:[#allocation11 + $0x1f0] sm:$0xf]
    %v1422 = vld [vmem:[#allocation11 + $0x1f4] sm:$0xf]
    %v1423 = vld [vmem:[#allocation11 + $0x1f8] sm:$0xf]
    %v1424 = vld [vmem:[#allocation11 + $0x1fc] sm:$0xf]
    %v1553 = vunpack.c.l.b16 %v1297
    %v1554 = vunpack.c.l.b16 %v1298
    %v1555 = vunpack.c.l.b16 %v1299
    %v1556 = vunpack.c.l.b16 %v1300
    %v1557 = vunpack.c.l.b16 %v1301
    %v1558 = vunpack.c.l.b16 %v1302
    %v1559 = vunpack.c.l.b16 %v1303
    %v1560 = vunpack.c.l.b16 %v1304
    %v1561 = vunpack.c.l.b16 %v1305
    %v1562 = vunpack.c.l.b16 %v1306
    %v1563 = vunpack.c.l.b16 %v1307
    %v1564 = vunpack.c.l.b16 %v1308
    %v1565 = vunpack.c.l.b16 %v1309
    %v1566 = vunpack.c.l.b16 %v1310
    %v1567 = vunpack.c.l.b16 %v1311
    %v1568 = vunpack.c.l.b16 %v1312
    %v1569 = vunpack.c.l.b16 %v1313
    %v1570 = vunpack.c.l.b16 %v1314
    %v1571 = vunpack.c.l.b16 %v1315
    %v1572 = vunpack.c.l.b16 %v1316
    %v1573 = vunpack.c.l.b16 %v1317
    %v1574 = vunpack.c.l.b16 %v1318
    %v1575 = vunpack.c.l.b16 %v1319
    %v1576 = vunpack.c.l.b16 %v1320
    %v1577 = vunpack.c.l.b16 %v1321
    %v1578 = vunpack.c.l.b16 %v1322
    %v1579 = vunpack.c.l.b16 %v1323
    %v1580 = vunpack.c.l.b16 %v1324
    %v1581 = vunpack.c.l.b16 %v1325
    %v1582 = vunpack.c.l.b16 %v1326
    %v1583 = vunpack.c.l.b16 %v1327
    %v1584 = vunpack.c.l.b16 %v1328
    %v1585 = vunpack.c.l.b16 %v1329
    %v1586 = vunpack.c.l.b16 %v1330
    %v1587 = vunpack.c.l.b16 %v1331
    %v1588 = vunpack.c.l.b16 %v1332
    %v1589 = vunpack.c.l.b16 %v1333
    %v1590 = vunpack.c.l.b16 %v1334
    %v1591 = vunpack.c.l.b16 %v1335
    %v1592 = vunpack.c.l.b16 %v1336
    %v1593 = vunpack.c.l.b16 %v1337
    %v1594 = vunpack.c.l.b16 %v1338
    %v1595 = vunpack.c.l.b16 %v1339
    %v1596 = vunpack.c.l.b16 %v1340
    %v1597 = vunpack.c.l.b16 %v1341
    %v1598 = vunpack.c.l.b16 %v1342
    %v1599 = vunpack.c.l.b16 %v1343
    %v1600 = vunpack.c.l.b16 %v1344
    %v1601 = vunpack.c.l.b16 %v1345
    %v1602 = vunpack.c.l.b16 %v1346
    %v1603 = vunpack.c.l.b16 %v1347
    %v1604 = vunpack.c.l.b16 %v1348
    %v1605 = vunpack.c.l.b16 %v1349
    %v1606 = vunpack.c.l.b16 %v1350
    %v1607 = vunpack.c.l.b16 %v1351
    %v1608 = vunpack.c.l.b16 %v1352
    %v1609 = vunpack.c.l.b16 %v1353
    %v1610 = vunpack.c.l.b16 %v1354
    %v1611 = vunpack.c.l.b16 %v1355
    %v1612 = vunpack.c.l.b16 %v1356
    %v1613 = vunpack.c.l.b16 %v1357
    %v1614 = vunpack.c.l.b16 %v1358
    %v1615 = vunpack.c.l.b16 %v1359
    %v1616 = vunpack.c.l.b16 %v1360
    %v1617 = vunpack.c.l.b16 %v1361
    %v1618 = vunpack.c.l.b16 %v1362
    %v1619 = vunpack.c.l.b16 %v1363
    %v1620 = vunpack.c.l.b16 %v1364
    %v1621 = vunpack.c.l.b16 %v1365
    %v1622 = vunpack.c.l.b16 %v1366
    %v1623 = vunpack.c.l.b16 %v1367
    %v1624 = vunpack.c.l.b16 %v1368
    %v1625 = vunpack.c.l.b16 %v1369
    %v1626 = vunpack.c.l.b16 %v1370
    %v1627 = vunpack.c.l.b16 %v1371
    %v1628 = vunpack.c.l.b16 %v1372
    %v1629 = vunpack.c.l.b16 %v1373
    %v1630 = vunpack.c.l.b16 %v1374
    %v1631 = vunpack.c.l.b16 %v1375
    %v1632 = vunpack.c.l.b16 %v1376
    %v1633 = vunpack.c.l.b16 %v1377
    %v1634 = vunpack.c.l.b16 %v1378
    %v1635 = vunpack.c.l.b16 %v1379
    %v1636 = vunpack.c.l.b16 %v1380
    %v1637 = vunpack.c.l.b16 %v1381
    %v1638 = vunpack.c.l.b16 %v1382
    %v1639 = vunpack.c.l.b16 %v1383
    %v1640 = vunpack.c.l.b16 %v1384
    %v1641 = vunpack.c.l.b16 %v1385
    %v1642 = vunpack.c.l.b16 %v1386
    %v1643 = vunpack.c.l.b16 %v1387
    %v1644 = vunpack.c.l.b16 %v1388
    %v1645 = vunpack.c.l.b16 %v1389
    %v1646 = vunpack.c.l.b16 %v1390
    %v1647 = vunpack.c.l.b16 %v1391
    %v1648 = vunpack.c.l.b16 %v1392
    %v1649 = vunpack.c.l.b16 %v1393
    %v1650 = vunpack.c.l.b16 %v1394
    %v1651 = vunpack.c.l.b16 %v1395
    %v1652 = vunpack.c.l.b16 %v1396
    %v1653 = vunpack.c.l.b16 %v1397
    %v1654 = vunpack.c.l.b16 %v1398
    %v1655 = vunpack.c.l.b16 %v1399
    %v1656 = vunpack.c.l.b16 %v1400
    %v1657 = vunpack.c.l.b16 %v1401
    %v1658 = vunpack.c.l.b16 %v1402
    %v1659 = vunpack.c.l.b16 %v1403
    %v1660 = vunpack.c.l.b16 %v1404
    %v1661 = vunpack.c.l.b16 %v1405
    %v1662 = vunpack.c.l.b16 %v1406
    %v1663 = vunpack.c.l.b16 %v1407
    %v1664 = vunpack.c.l.b16 %v1408
    %v1665 = vunpack.c.l.b16 %v1409
    %v1666 = vunpack.c.l.b16 %v1410
    %v1667 = vunpack.c.l.b16 %v1411
    %v1668 = vunpack.c.l.b16 %v1412
    %v1669 = vunpack.c.l.b16 %v1413
    %v1670 = vunpack.c.l.b16 %v1414
    %v1671 = vunpack.c.l.b16 %v1415
    %v1672 = vunpack.c.l.b16 %v1416
    %v1673 = vunpack.c.l.b16 %v1417
    %v1674 = vunpack.c.l.b16 %v1418
    %v1675 = vunpack.c.l.b16 %v1419
    %v1676 = vunpack.c.l.b16 %v1420
    %v1677 = vunpack.c.l.b16 %v1421
    %v1678 = vunpack.c.l.b16 %v1422
    %v1679 = vunpack.c.l.b16 %v1423
    %v1680 = vunpack.c.l.b16 %v1424
    %v1681 = vpack.c.b16 %v1554, %v1553
    %v1682 = vpack.c.b16 %v1556, %v1555
    %v1683 = vpack.c.b16 %v1558, %v1557
    %v1684 = vpack.c.b16 %v1560, %v1559
    %v1685 = vpack.c.b16 %v1562, %v1561
    %v1686 = vpack.c.b16 %v1564, %v1563
    %v1687 = vpack.c.b16 %v1566, %v1565
    %v1688 = vpack.c.b16 %v1568, %v1567
    %v1689 = vpack.c.b16 %v1570, %v1569
    %v1690 = vpack.c.b16 %v1572, %v1571
    %v1691 = vpack.c.b16 %v1574, %v1573
    %v1692 = vpack.c.b16 %v1576, %v1575
    %v1693 = vpack.c.b16 %v1578, %v1577
    %v1694 = vpack.c.b16 %v1580, %v1579
    %v1695 = vpack.c.b16 %v1582, %v1581
    %v1696 = vpack.c.b16 %v1584, %v1583
    %v1697 = vpack.c.b16 %v1586, %v1585
    %v1698 = vpack.c.b16 %v1588, %v1587
    %v1699 = vpack.c.b16 %v1590, %v1589
    %v1700 = vpack.c.b16 %v1592, %v1591
    %v1701 = vpack.c.b16 %v1594, %v1593
    %v1702 = vpack.c.b16 %v1596, %v1595
    %v1703 = vpack.c.b16 %v1598, %v1597
    %v1704 = vpack.c.b16 %v1600, %v1599
    %v1705 = vpack.c.b16 %v1602, %v1601
    %v1706 = vpack.c.b16 %v1604, %v1603
    %v1707 = vpack.c.b16 %v1606, %v1605
    %v1708 = vpack.c.b16 %v1608, %v1607
    %v1709 = vpack.c.b16 %v1610, %v1609
    %v1710 = vpack.c.b16 %v1612, %v1611
    %v1711 = vpack.c.b16 %v1614, %v1613
    %v1712 = vpack.c.b16 %v1616, %v1615
    %v1713 = vpack.c.b16 %v1618, %v1617
    %v1714 = vpack.c.b16 %v1620, %v1619
    %v1715 = vpack.c.b16 %v1622, %v1621
    %v1716 = vpack.c.b16 %v1624, %v1623
    %v1717 = vpack.c.b16 %v1626, %v1625
    %v1718 = vpack.c.b16 %v1628, %v1627
    %v1719 = vpack.c.b16 %v1630, %v1629
    %v1720 = vpack.c.b16 %v1632, %v1631
    %v1721 = vpack.c.b16 %v1634, %v1633
    %v1722 = vpack.c.b16 %v1636, %v1635
    %v1723 = vpack.c.b16 %v1638, %v1637
    %v1724 = vpack.c.b16 %v1640, %v1639
    %v1725 = vpack.c.b16 %v1642, %v1641
    %v1726 = vpack.c.b16 %v1644, %v1643
    %v1727 = vpack.c.b16 %v1646, %v1645
    %v1728 = vpack.c.b16 %v1648, %v1647
    %v1729 = vpack.c.b16 %v1650, %v1649
    %v1730 = vpack.c.b16 %v1652, %v1651
    %v1731 = vpack.c.b16 %v1654, %v1653
    %v1732 = vpack.c.b16 %v1656, %v1655
    %v1733 = vpack.c.b16 %v1658, %v1657
    %v1734 = vpack.c.b16 %v1660, %v1659
    %v1735 = vpack.c.b16 %v1662, %v1661
    %v1736 = vpack.c.b16 %v1664, %v1663
    %v1737 = vpack.c.b16 %v1666, %v1665
    %v1738 = vpack.c.b16 %v1668, %v1667
    %v1739 = vpack.c.b16 %v1670, %v1669
    %v1740 = vpack.c.b16 %v1672, %v1671
    %v1741 = vpack.c.b16 %v1674, %v1673
    %v1742 = vpack.c.b16 %v1676, %v1675
    %v1743 = vpack.c.b16 %v1678, %v1677
    %v1744 = vpack.c.b16 %v1680, %v1679
    %1809 = vmatprep.subr.bf16.mxu0 0
    %1810 = vmatpush1.bf16.msra.mxu0 %v1681
    %1811 = vmatprep.subr.bf16.mxu0 0
    %1812 = vmatpush1.bf16.msra.mxu0 %v1682
    %1813 = vmatprep.subr.bf16.mxu0 0
    %1814 = vmatpush1.bf16.msra.mxu0 %v1683
    %1815 = vmatprep.subr.bf16.mxu0 0
    %1816 = vmatpush1.bf16.msra.mxu0 %v1684
    %1817 = vmatprep.subr.bf16.mxu0 0
    %1818 = vmatpush1.bf16.msra.mxu0 %v1685
    %1819 = vmatprep.subr.bf16.mxu0 0
    %1820 = vmatpush1.bf16.msra.mxu0 %v1686
    %1821 = vmatprep.subr.bf16.mxu0 0
    %1822 = vmatpush1.bf16.msra.mxu0 %v1687
    %1823 = vmatprep.subr.bf16.mxu0 0
    %1824 = vmatpush1.bf16.msra.mxu0 %v1688
    %1825 = vmatprep.subr.bf16.mxu0 0
    %1826 = vmatpush1.bf16.msra.mxu0 %v1689
    %1827 = vmatprep.subr.bf16.mxu0 0
    %1828 = vmatpush1.bf16.msra.mxu0 %v1690
    %1829 = vmatprep.subr.bf16.mxu0 0
    %1830 = vmatpush1.bf16.msra.mxu0 %v1691
    %1831 = vmatprep.subr.bf16.mxu0 0
    %1832 = vmatpush1.bf16.msra.mxu0 %v1692
    %1833 = vmatprep.subr.bf16.mxu0 0
    %1834 = vmatpush1.bf16.msra.mxu0 %v1693
    %1835 = vmatprep.subr.bf16.mxu0 0
    %1836 = vmatpush1.bf16.msra.mxu0 %v1694
    %1837 = vmatprep.subr.bf16.mxu0 0
    %1838 = vmatpush1.bf16.msra.mxu0 %v1695
    %1839 = vmatprep.subr.bf16.mxu0 0
    %1840 = vmatpush1.bf16.msra.mxu0 %v1696
    %1841 = vmatprep.mubr.bf16.mxu0 %v1271
    %1842 = vmatmul.mubr.bf16.gmra.mrb[0].mxu0 %v1267
    %v1843 = vpop.f32.mrb[0].mxu0
    %v1844 = vadd.f32 0.0, %v1843
    %v1845 = vpop.f32.mrb[0].mxu0
    %v1846 = vpop.f32.mrb[0].mxu0
    %v1847 = vadd.f32 0.0, %v1846
    %v1848 = vpop.f32.mrb[0].mxu0
    %1849 = vdwg.mxu0
    %1850 = vmatprep.subr.bf16.mxu0 0
    %1851 = vmatpush1.bf16.msra.mxu0 %v1697
    %1852 = vmatprep.subr.bf16.mxu0 0
    %1853 = vmatpush1.bf16.msra.mxu0 %v1698
    %1854 = vmatprep.subr.bf16.mxu0 0
    %1855 = vmatpush1.bf16.msra.mxu0 %v1699
    %1856 = vmatprep.subr.bf16.mxu0 0
    %1857 = vmatpush1.bf16.msra.mxu0 %v1700
    %1858 = vmatprep.subr.bf16.mxu0 0
    %1859 = vmatpush1.bf16.msra.mxu0 %v1701
    %1860 = vmatprep.subr.bf16.mxu0 0
    %1861 = vmatpush1.bf16.msra.mxu0 %v1702
    %1862 = vmatprep.subr.bf16.mxu0 0
    %1863 = vmatpush1.bf16.msra.mxu0 %v1703
    %1864 = vmatprep.subr.bf16.mxu0 0
    %1865 = vmatpush1.bf16.msra.mxu0 %v1704
    %1866 = vmatprep.subr.bf16.mxu0 0
    %1867 = vmatpush1.bf16.msra.mxu0 %v1705
    %1868 = vmatprep.subr.bf16.mxu0 0
    %1869 = vmatpush1.bf16.msra.mxu0 %v1706
    %1870 = vmatprep.subr.bf16.mxu0 0
    %1871 = vmatpush1.bf16.msra.mxu0 %v1707
    %1872 = vmatprep.subr.bf16.mxu0 0
    %1873 = vmatpush1.bf16.msra.mxu0 %v1708
    %1874 = vmatprep.subr.bf16.mxu0 0
    %1875 = vmatpush1.bf16.msra.mxu0 %v1709
    %1876 = vmatprep.subr.bf16.mxu0 0
    %1877 = vmatpush1.bf16.msra.mxu0 %v1710
    %1878 = vmatprep.subr.bf16.mxu0 0
    %1879 = vmatpush1.bf16.msra.mxu0 %v1711
    %1880 = vmatprep.subr.bf16.mxu0 0
    %1881 = vmatpush1.bf16.msra.mxu0 %v1712
    %1882 = vmatprep.mubr.bf16.mxu0 %v1279
    %1883 = vmatmul.mubr.bf16.gmra.mrb[0].mxu0 %v1275
    %v1884 = vpop.f32.mrb[0].mxu0
    %v1885 = vadd.f32 %v1844, %v1884
    %v1886 = vpop.f32.mrb[0].mxu0
    %v1887 = vpop.f32.mrb[0].mxu0
    %v1888 = vadd.f32 %v1847, %v1887
    %v1889 = vpop.f32.mrb[0].mxu0
    %1890 = vdwg.mxu0
    %1891 = vmatprep.subr.bf16.mxu0 0
    %1892 = vmatpush1.bf16.msra.mxu0 %v1713
    %1893 = vmatprep.subr.bf16.mxu0 0
    %1894 = vmatpush1.bf16.msra.mxu0 %v1714
    %1895 = vmatprep.subr.bf16.mxu0 0
    %1896 = vmatpush1.bf16.msra.mxu0 %v1715
    %1897 = vmatprep.subr.bf16.mxu0 0
    %1898 = vmatpush1.bf16.msra.mxu0 %v1716
    %1899 = vmatprep.subr.bf16.mxu0 0
    %1900 = vmatpush1.bf16.msra.mxu0 %v1717
    %1901 = vmatprep.subr.bf16.mxu0 0
    %1902 = vmatpush1.bf16.msra.mxu0 %v1718
    %1903 = vmatprep.subr.bf16.mxu0 0
    %1904 = vmatpush1.bf16.msra.mxu0 %v1719
    %1905 = vmatprep.subr.bf16.mxu0 0
    %1906 = vmatpush1.bf16.msra.mxu0 %v1720
    %1907 = vmatprep.subr.bf16.mxu0 0
    %1908 = vmatpush1.bf16.msra.mxu0 %v1721
    %1909 = vmatprep.subr.bf16.mxu0 0
    %1910 = vmatpush1.bf16.msra.mxu0 %v1722
    %1911 = vmatprep.subr.bf16.mxu0 0
    %1912 = vmatpush1.bf16.msra.mxu0 %v1723
    %1913 = vmatprep.subr.bf16.mxu0 0
    %1914 = vmatpush1.bf16.msra.mxu0 %v1724
    %1915 = vmatprep.subr.bf16.mxu0 0
    %1916 = vmatpush1.bf16.msra.mxu0 %v1725
    %1917 = vmatprep.subr.bf16.mxu0 0
    %1918 = vmatpush1.bf16.msra.mxu0 %v1726
    %1919 = vmatprep.subr.bf16.mxu0 0
    %1920 = vmatpush1.bf16.msra.mxu0 %v1727
    %1921 = vmatprep.subr.bf16.mxu0 0
    %1922 = vmatpush1.bf16.msra.mxu0 %v1728
    %1923 = vmatprep.mubr.bf16.mxu0 %v1287
    %1924 = vmatmul.mubr.bf16.gmra.mrb[0].mxu0 %v1283
    %v1925 = vpop.f32.mrb[0].mxu0
    %v1926 = vadd.f32 %v1885, %v1925
    %v1927 = vpop.f32.mrb[0].mxu0
    %v1928 = vpop.f32.mrb[0].mxu0
    %v1929 = vadd.f32 %v1888, %v1928
    %v1930 = vpop.f32.mrb[0].mxu0
    %1931 = vdwg.mxu0
    %1932 = vmatprep.subr.bf16.mxu0 0
    %1933 = vmatpush1.bf16.msra.mxu0 %v1729
    %1934 = vmatprep.subr.bf16.mxu0 0
    %1935 = vmatpush1.bf16.msra.mxu0 %v1730
    %1936 = vmatprep.subr.bf16.mxu0 0
    %1937 = vmatpush1.bf16.msra.mxu0 %v1731
    %1938 = vmatprep.subr.bf16.mxu0 0
    %1939 = vmatpush1.bf16.msra.mxu0 %v1732
    %1940 = vmatprep.subr.bf16.mxu0 0
    %1941 = vmatpush1.bf16.msra.mxu0 %v1733
    %1942 = vmatprep.subr.bf16.mxu0 0
    %1943 = vmatpush1.bf16.msra.mxu0 %v1734
    %1944 = vmatprep.subr.bf16.mxu0 0
    %1945 = vmatpush1.bf16.msra.mxu0 %v1735
    %1946 = vmatprep.subr.bf16.mxu0 0
    %1947 = vmatpush1.bf16.msra.mxu0 %v1736
    %1948 = vmatprep.subr.bf16.mxu0 0
    %1949 = vmatpush1.bf16.msra.mxu0 %v1737
    %1950 = vmatprep.subr.bf16.mxu0 0
    %1951 = vmatpush1.bf16.msra.mxu0 %v1738
    %1952 = vmatprep.subr.bf16.mxu0 0
    %1953 = vmatpush1.bf16.msra.mxu0 %v1739
    %1954 = vmatprep.subr.bf16.mxu0 0
    %1955 = vmatpush1.bf16.msra.mxu0 %v1740
    %1956 = vmatprep.subr.bf16.mxu0 0
    %1957 = vmatpush1.bf16.msra.mxu0 %v1741
    %1958 = vmatprep.subr.bf16.mxu0 0
    %1959 = vmatpush1.bf16.msra.mxu0 %v1742
    %1960 = vmatprep.subr.bf16.mxu0 0
    %1961 = vmatpush1.bf16.msra.mxu0 %v1743
    %1962 = vmatprep.subr.bf16.mxu0 0
    %1963 = vmatpush1.bf16.msra.mxu0 %v1744
    %1964 = vmatprep.mubr.bf16.mxu0 %v1295
    %1965 = vmatmul.mubr.bf16.gmra.mrb[0].mxu0 %v1291
    %v1966 = vpop.f32.mrb[0].mxu0
    %v1967 = vadd.f32 %v1926, %v1966
    %v1968 = vpop.f32.mrb[0].mxu0
    %v1969 = vpop.f32.mrb[0].mxu0
    %v1970 = vadd.f32 %v1929, %v1969
    %v1971 = vpop.f32.mrb[0].mxu0
    %1972 = vdwg.mxu0
    %vm1973 = vcmp.ge.f32.partialorder %v1967, 0.0
    %vm1974 = vcmp.ge.f32.partialorder %v1970, 0.0
    %v1975 = vmul.f32 %v1967, 0.2
    %v1976 = vmul.f32 %v1970, 0.2
    %v1977 = vsel %vm1973, %v1967, %v1975
    %v1978 = vsel %vm1974, %v1970, %v1976
    %v1979 = vld [vmem:[#allocation13] sm:$0x1]
    %v1981 = vlaneseq
    %v1982 = vshrl.u32 %v1981, 7
    %v1983 = vsub.s32 0, %v1982
    %v1984 = vrot.slane %v1979, %v1983
    %v1986 = vmul.f32 %v1977, %v1984
    %v1987 = vmul.f32 %v1978, %v1984
    %v1988 = vld [vmem:[#allocation14] sm:$0x1]
    %v1990 = vlaneseq
    %v1991 = vshrl.u32 %v1990, 7
    %v1992 = vsub.s32 0, %v1991
    %v1993 = vrot.slane %v1988, %v1992
    %v1995 = vadd.f32 %v1986, %v1993
    %v1996 = vadd.f32 %v1987, %v1993
    %v1997 = vpack.c.bf16 %v1996, %v1995
    %v1999 = vunpack.c.l.b16 %v1997
    %v2000 = vunpack.c.h.b16 %v1997
    %v2001 = vpack.c.b16 %v1999, %v1999
    %v2002 = vpack.c.b16 %v2000, %v2000
    %2005 = vst [vmem:[#allocation3] sm:$0xf] %v2001
    %2006 = vst [vmem:[#allocation3 + $0x4] sm:$0x3] %v2002
    %v2007 = vld [vmem:[#allocation2 + $0x4] sm:$0x8]
    %v2008 = vld [vmem:[#allocation2 + $0x8] sm:$0xf]
    %v2009 = vld [vmem:[#allocation2 + $0xc] sm:$0x1]
    %v2010 = vld [vmem:[#allocation2 + $0x38] sm:$0xf]
    %v2011 = vld [vmem:[#allocation2 + $0x3c] sm:$0x3]
    %v2012 = vld [vmem:[#allocation2 + $0xc] sm:$0x3]
    %v2013 = vld [vmem:[#allocation2 + $0x38] sm:$0xe]
    %v2014 = vld [vmem:[#allocation2 + $0x3c] sm:$0x7]
    %v2015 = vld [vmem:[#allocation2 + $0x68] sm:$0xe]
    %v2016 = vld [vmem:[#allocation2 + $0x6c] sm:$0x7]
    %v2017 = vld [vmem:[#allocation2 + $0x98] sm:$0xc]
    %v2018 = vld [vmem:[#allocation2 + $0x9c] sm:$0xf]
    %v2019 = vld [vmem:[#allocation2 + $0x68] sm:$0xc]
    %v2020 = vld [vmem:[#allocation2 + $0x6c] sm:$0xf]
    %v2021 = vld [vmem:[#allocation2 + $0x98] sm:$0x8]
    %v2022 = vld [vmem:[#allocation2 + $0xa0] sm:$0x1]
    %v2023 = vld [vmem:[#allocation2 + $0xc] sm:$0xc]
    %v2024 = vld [vmem:[#allocation2 + $0x10] sm:$0xf]
    %v2025 = vld [vmem:[#allocation2 + $0x3c] sm:$0x8]
    %v2026 = vld [vmem:[#allocation2 + $0x40] sm:$0xf]
    %v2027 = vld [vmem:[#allocation2 + $0x44] sm:$0x1]
    %v2028 = vld [vmem:[#allocation2 + $0xc] sm:$0x8]
    %v2029 = vld [vmem:[#allocation2 + $0x14] sm:$0x1]
    %v2030 = vld [vmem:[#allocation2 + $0x44] sm:$0x3]
    %v2031 = vld [vmem:[#allocation2 + $0x70] sm:$0xf]
    %v2032 = vld [vmem:[#allocation2 + $0x74] sm:$0x3]
    %v2033 = vld [vmem:[#allocation2 + $0xa0] sm:$0xe]
    %v2034 = vld [vmem:[#allocation2 + $0xa4] sm:$0x7]
    %v2035 = vld [vmem:[#allocation2 + $0x70] sm:$0xe]
    %v2036 = vld [vmem:[#allocation2 + $0x74] sm:$0x7]
    %v2037 = vld [vmem:[#allocation2 + $0xa0] sm:$0xc]
    %v2038 = vld [vmem:[#allocation2 + $0xa4] sm:$0xf]
    %v2042 = vunpack.c.l.b16 %v2007
    %v2043 = vunpack.c.l.b16 %v2008
    %v2044 = vunpack.c.l.b16 %v2009
    %v2045 = vpack.c.b16 %v2043, %v2042
    %v2046 = vpack.c.b16 %v2044, %v2044
    %v2049 = vunpack.c.l.b16 %v2010
    %v2050 = vunpack.c.l.b16 %v2011
    %v2051 = vpack.c.b16 %v2050, %v2049
    %v2052 = vrot.slane %v2051, 5
    %2053 = vrot.lane.b32.xlu0 %v2052, 64
    %v2054 = vpop.permute.xlu0 %2053
    %v2056 = vunpack.c.l.b16 %v2012
    %v2057 = vpack.c.b16 %v2056, %v2043
    %v2058 = vrot.slane %v2057, 5
    %v2061 = vunpack.c.l.b16 %v2013
    %v2062 = vunpack.c.l.b16 %v2014
    %v2063 = vpack.c.b16 %v2062, %v2061
    %v2064 = vrot.slane %v2063, 6
    %2065 = vrot.lane.b32.xlu0 %v2064, 64
    %v2066 = vpop.permute.xlu0 %2065
    %v2069 = vunpack.c.l.b16 %v2015
    %v2070 = vunpack.c.l.b16 %v2016
    %v2071 = vpack.c.b16 %v2070, %v2069
    %v2072 = vrot.slane %v2071, 6
    %v2075 = vunpack.c.l.b16 %v2017
    %v2076 = vunpack.c.l.b16 %v2018
    %v2077 = vpack.c.b16 %v2076, %v2075
    %v2078 = vrot.slane %v2077, 7
    %2079 = vrot.lane.b32.xlu0 %v2078, 64
    %v2080 = vpop.permute.xlu0 %2079
    %v2083 = vunpack.c.l.b16 %v2019
    %v2084 = vunpack.c.l.b16 %v2020
    %v2085 = vpack.c.b16 %v2084, %v2083
    %v2086 = vrot.slane %v2085, 7
    %v2089 = vunpack.c.l.b16 %v2021
    %v2090 = vunpack.c.l.b16 %v2022
    %v2091 = vpack.c.b16 %v2076, %v2089
    %v2092 = vpack.c.b16 %v2090, %v2090
    %2093 = vrot.lane.b32.xlu0 %v2091, 64
    %v2094 = vpop.permute.xlu0 %2093
    %2095 = vrot.lane.b32.xlu0 %v2092, 64
    %v2096 = vpop.permute.xlu0 %2095
    %v2099 = vunpack.c.l.b16 %v2023
    %v2100 = vunpack.c.l.b16 %v2024
    %v2101 = vpack.c.b16 %v2100, %v2099
    %v2102 = vrot.slane %v2101, 7
    %v2106 = vunpack.c.l.b16 %v2025
    %v2107 = vunpack.c.l.b16 %v2026
    %v2108 = vunpack.c.l.b16 %v2027
    %v2109 = vpack.c.b16 %v2107, %v2106
    %v2110 = vpack.c.b16 %v2108, %v2108
    %2111 = vrot.lane.b32.xlu0 %v2109, 64
    %v2112 = vpop.permute.xlu0 %2111
    %2113 = vrot.lane.b32.xlu0 %v2110, 64
    %v2114 = vpop.permute.xlu0 %2113
    %v2117 = vunpack.c.l.b16 %v2028
    %v2118 = vunpack.c.l.b16 %v2029
    %v2119 = vpack.c.b16 %v2100, %v2117
    %v2120 = vpack.c.b16 %v2118, %v2118
    %v2122 = vunpack.c.l.b16 %v2030
    %v2123 = vpack.c.b16 %v2122, %v2107
    %v2124 = vrot.slane %v2123, 5
    %2125 = vrot.lane.b32.xlu0 %v2124, 64
    %v2126 = vpop.permute.xlu0 %2125
    %v2129 = vunpack.c.l.b16 %v2031
    %v2130 = vunpack.c.l.b16 %v2032
    %v2131 = vpack.c.b16 %v2130, %v2129
    %v2132 = vrot.slane %v2131, 5
    %v2135 = vunpack.c.l.b16 %v2033
    %v2136 = vunpack.c.l.b16 %v2034
    %v2137 = vpack.c.b16 %v2136, %v2135
    %v2138 = vrot.slane %v2137, 6
    %2139 = vrot.lane.b32.xlu0 %v2138, 64
    %v2140 = vpop.permute.xlu0 %2139
    %v2143 = vunpack.c.l.b16 %v2035
    %v2144 = vunpack.c.l.b16 %v2036
    %v2145 = vpack.c.b16 %v2144, %v2143
    %v2146 = vrot.slane %v2145, 6
    %v2149 = vunpack.c.l.b16 %v2037
    %v2150 = vunpack.c.l.b16 %v2038
    %v2151 = vpack.c.b16 %v2150, %v2149
    %v2152 = vrot.slane %v2151, 7
    %2153 = vrot.lane.b32.xlu0 %v2152, 64
    %v2154 = vpop.permute.xlu0 %2153
    %v2157 = vsel %vm1264, %v2045, %v2054
    %v2159 = vsel %vm1264, %v2046, %v2054
    %v2162 = vsel %vm1264, %v2058, %v2066
    %v2165 = vsel %vm1264, %v2072, %v2080
    %v2168 = vsel %vm1264, %v2086, %v2094
    %v2170 = vsel %vm1264, %v2086, %v2096
    %v2173 = vsel %vm1264, %v2102, %v2112
    %v2175 = vsel %vm1264, %v2102, %v2114
    %v2178 = vsel %vm1264, %v2119, %v2126
    %v2180 = vsel %vm1264, %v2120, %v2126
    %v2183 = vsel %vm1264, %v2132, %v2140
    %v2186 = vsel %vm1264, %v2146, %v2154
    %v2187 = vld [vmem:[#allocation11] sm:$0xf]
    %v2188 = vld [vmem:[#allocation11 + $0x4] sm:$0xf]
    %v2189 = vld [vmem:[#allocation11 + $0x8] sm:$0xf]
    %v2190 = vld [vmem:[#allocation11 + $0xc] sm:$0xf]
    %v2191 = vld [vmem:[#allocation11 + $0x10] sm:$0xf]
    %v2192 = vld [vmem:[#allocation11 + $0x14] sm:$0xf]
    %v2193 = vld [vmem:[#allocation11 + $0x18] sm:$0xf]
    %v2194 = vld [vmem:[#allocation11 + $0x1c] sm:$0xf]
    %v2195 = vld [vmem:[#allocation11 + $0x20] sm:$0xf]
    %v2196 = vld [vmem:[#allocation11 + $0x24] sm:$0xf]
    %v2197 = vld [vmem:[#allocation11 + $0x28] sm:$0xf]
    %v2198 = vld [vmem:[#allocation11 + $0x2c] sm:$0xf]
    %v2199 = vld [vmem:[#allocation11 + $0x30] sm:$0xf]
    %v2200 = vld [vmem:[#allocation11 + $0x34] sm:$0xf]
    %v2201 = vld [vmem:[#allocation11 + $0x38] sm:$0xf]
    %v2202 = vld [vmem:[#allocation11 + $0x3c] sm:$0xf]
    %v2203 = vld [vmem:[#allocation11 + $0x40] sm:$0xf]
    %v2204 = vld [vmem:[#allocation11 + $0x44] sm:$0xf]
    %v2205 = vld [vmem:[#allocation11 + $0x48] sm:$0xf]
    %v2206 = vld [vmem:[#allocation11 + $0x4c] sm:$0xf]
    %v2207 = vld [vmem:[#allocation11 + $0x50] sm:$0xf]
    %v2208 = vld [vmem:[#allocation11 + $0x54] sm:$0xf]
    %v2209 = vld [vmem:[#allocation11 + $0x58] sm:$0xf]
    %v2210 = vld [vmem:[#allocation11 + $0x5c] sm:$0xf]
    %v2211 = vld [vmem:[#allocation11 + $0x60] sm:$0xf]
    %v2212 = vld [vmem:[#allocation11 + $0x64] sm:$0xf]
    %v2213 = vld [vmem:[#allocation11 + $0x68] sm:$0xf]
    %v2214 = vld [vmem:[#allocation11 + $0x6c] sm:$0xf]
    %v2215 = vld [vmem:[#allocation11 + $0x70] sm:$0xf]
    %v2216 = vld [vmem:[#allocation11 + $0x74] sm:$0xf]
    %v2217 = vld [vmem:[#allocation11 + $0x78] sm:$0xf]
    %v2218 = vld [vmem:[#allocation11 + $0x7c] sm:$0xf]
    %v2219 = vld [vmem:[#allocation11 + $0x80] sm:$0xf]
    %v2220 = vld [vmem:[#allocation11 + $0x84] sm:$0xf]
    %v2221 = vld [vmem:[#allocation11 + $0x88] sm:$0xf]
    %v2222 = vld [vmem:[#allocation11 + $0x8c] sm:$0xf]
    %v2223 = vld [vmem:[#allocation11 + $0x90] sm:$0xf]
    %v2224 = vld [vmem:[#allocation11 + $0x94] sm:$0xf]
    %v2225 = vld [vmem:[#allocation11 + $0x98] sm:$0xf]
    %v2226 = vld [vmem:[#allocation11 + $0x9c] sm:$0xf]
    %v2227 = vld [vmem:[#allocation11 + $0xa0] sm:$0xf]
    %v2228 = vld [vmem:[#allocation11 + $0xa4] sm:$0xf]
    %v2229 = vld [vmem:[#allocation11 + $0xa8] sm:$0xf]
    %v2230 = vld [vmem:[#allocation11 + $0xac] sm:$0xf]
    %v2231 = vld [vmem:[#allocation11 + $0xb0] sm:$0xf]
    %v2232 = vld [vmem:[#allocation11 + $0xb4] sm:$0xf]
    %v2233 = vld [vmem:[#allocation11 + $0xb8] sm:$0xf]
    %v2234 = vld [vmem:[#allocation11 + $0xbc] sm:$0xf]
    %v2235 = vld [vmem:[#allocation11 + $0xc0] sm:$0xf]
    %v2236 = vld [vmem:[#allocation11 + $0xc4] sm:$0xf]
    %v2237 = vld [vmem:[#allocation11 + $0xc8] sm:$0xf]
    %v2238 = vld [vmem:[#allocation11 + $0xcc] sm:$0xf]
    %v2239 = vld [vmem:[#allocation11 + $0xd0] sm:$0xf]
    %v2240 = vld [vmem:[#allocation11 + $0xd4] sm:$0xf]
    %v2241 = vld [vmem:[#allocation11 + $0xd8] sm:$0xf]
    %v2242 = vld [vmem:[#allocation11 + $0xdc] sm:$0xf]
    %v2243 = vld [vmem:[#allocation11 + $0xe0] sm:$0xf]
    %v2244 = vld [vmem:[#allocation11 + $0xe4] sm:$0xf]
    %v2245 = vld [vmem:[#allocation11 + $0xe8] sm:$0xf]
    %v2246 = vld [vmem:[#allocation11 + $0xec] sm:$0xf]
    %v2247 = vld [vmem:[#allocation11 + $0xf0] sm:$0xf]
    %v2248 = vld [vmem:[#allocation11 + $0xf4] sm:$0xf]
    %v2249 = vld [vmem:[#allocation11 + $0xf8] sm:$0xf]
    %v2250 = vld [vmem:[#allocation11 + $0xfc] sm:$0xf]
    %v2251 = vld [vmem:[#allocation11 + $0x100] sm:$0xf]
    %v2252 = vld [vmem:[#allocation11 + $0x104] sm:$0xf]
    %v2253 = vld [vmem:[#allocation11 + $0x108] sm:$0xf]
    %v2254 = vld [vmem:[#allocation11 + $0x10c] sm:$0xf]
    %v2255 = vld [vmem:[#allocation11 + $0x110] sm:$0xf]
    %v2256 = vld [vmem:[#allocation11 + $0x114] sm:$0xf]
    %v2257 = vld [vmem:[#allocation11 + $0x118] sm:$0xf]
    %v2258 = vld [vmem:[#allocation11 + $0x11c] sm:$0xf]
    %v2259 = vld [vmem:[#allocation11 + $0x120] sm:$0xf]
    %v2260 = vld [vmem:[#allocation11 + $0x124] sm:$0xf]
    %v2261 = vld [vmem:[#allocation11 + $0x128] sm:$0xf]
    %v2262 = vld [vmem:[#allocation11 + $0x12c] sm:$0xf]
    %v2263 = vld [vmem:[#allocation11 + $0x130] sm:$0xf]
    %v2264 = vld [vmem:[#allocation11 + $0x134] sm:$0xf]
    %v2265 = vld [vmem:[#allocation11 + $0x138] sm:$0xf]
    %v2266 = vld [vmem:[#allocation11 + $0x13c] sm:$0xf]
    %v2267 = vld [vmem:[#allocation11 + $0x140] sm:$0xf]
    %v2268 = vld [vmem:[#allocation11 + $0x144] sm:$0xf]
    %v2269 = vld [vmem:[#allocation11 + $0x148] sm:$0xf]
    %v2270 = vld [vmem:[#allocation11 + $0x14c] sm:$0xf]
    %v2271 = vld [vmem:[#allocation11 + $0x150] sm:$0xf]
    %v2272 = vld [vmem:[#allocation11 + $0x154] sm:$0xf]
    %v2273 = vld [vmem:[#allocation11 + $0x158] sm:$0xf]
    %v2274 = vld [vmem:[#allocation11 + $0x15c] sm:$0xf]
    %v2275 = vld [vmem:[#allocation11 + $0x160] sm:$0xf]
    %v2276 = vld [vmem:[#allocation11 + $0x164] sm:$0xf]
    %v2277 = vld [vmem:[#allocation11 + $0x168] sm:$0xf]
    %v2278 = vld [vmem:[#allocation11 + $0x16c] sm:$0xf]
    %v2279 = vld [vmem:[#allocation11 + $0x170] sm:$0xf]
    %v2280 = vld [vmem:[#allocation11 + $0x174] sm:$0xf]
    %v2281 = vld [vmem:[#allocation11 + $0x178] sm:$0xf]
    %v2282 = vld [vmem:[#allocation11 + $0x17c] sm:$0xf]
    %v2283 = vld [vmem:[#allocation11 + $0x180] sm:$0xf]
    %v2284 = vld [vmem:[#allocation11 + $0x184] sm:$0xf]
    %v2285 = vld [vmem:[#allocation11 + $0x188] sm:$0xf]
    %v2286 = vld [vmem:[#allocation11 + $0x18c] sm:$0xf]
    %v2287 = vld [vmem:[#allocation11 + $0x190] sm:$0xf]
    %v2288 = vld [vmem:[#allocation11 + $0x194] sm:$0xf]
    %v2289 = vld [vmem:[#allocation11 + $0x198] sm:$0xf]
    %v2290 = vld [vmem:[#allocation11 + $0x19c] sm:$0xf]
    %v2291 = vld [vmem:[#allocation11 + $0x1a0] sm:$0xf]
    %v2292 = vld [vmem:[#allocation11 + $0x1a4] sm:$0xf]
    %v2293 = vld [vmem:[#allocation11 + $0x1a8] sm:$0xf]
    %v2294 = vld [vmem:[#allocation11 + $0x1ac] sm:$0xf]
    %v2295 = vld [vmem:[#allocation11 + $0x1b0] sm:$0xf]
    %v2296 = vld [vmem:[#allocation11 + $0x1b4] sm:$0xf]
    %v2297 = vld [vmem:[#allocation11 + $0x1b8] sm:$0xf]
    %v2298 = vld [vmem:[#allocation11 + $0x1bc] sm:$0xf]
    %v2299 = vld [vmem:[#allocation11 + $0x1c0] sm:$0xf]
    %v2300 = vld [vmem:[#allocation11 + $0x1c4] sm:$0xf]
    %v2301 = vld [vmem:[#allocation11 + $0x1c8] sm:$0xf]
    %v2302 = vld [vmem:[#allocation11 + $0x1cc] sm:$0xf]
    %v2303 = vld [vmem:[#allocation11 + $0x1d0] sm:$0xf]
    %v2304 = vld [vmem:[#allocation11 + $0x1d4] sm:$0xf]
    %v2305 = vld [vmem:[#allocation11 + $0x1d8] sm:$0xf]
    %v2306 = vld [vmem:[#allocation11 + $0x1dc] sm:$0xf]
    %v2307 = vld [vmem:[#allocation11 + $0x1e0] sm:$0xf]
    %v2308 = vld [vmem:[#allocation11 + $0x1e4] sm:$0xf]
    %v2309 = vld [vmem:[#allocation11 + $0x1e8] sm:$0xf]
    %v2310 = vld [vmem:[#allocation11 + $0x1ec] sm:$0xf]
    %v2311 = vld [vmem:[#allocation11 + $0x1f0] sm:$0xf]
    %v2312 = vld [vmem:[#allocation11 + $0x1f4] sm:$0xf]
    %v2313 = vld [vmem:[#allocation11 + $0x1f8] sm:$0xf]
    %v2314 = vld [vmem:[#allocation11 + $0x1fc] sm:$0xf]
    %v2327 = vrot.slane %v2157, 3
    %v2328 = vrot.slane %v2159, 3
    %v2329 = vsel %vm1184, %v2327, %v2328
    %v2330 = vrot.slane %v2162, 3
    %v2331 = vsel %vm1184, %v2330, %v2330
    %v2332 = vrot.slane %v2165, 3
    %v2333 = vsel %vm1184, %v2332, %v2332
    %v2334 = vrot.slane %v2168, 3
    %v2335 = vrot.slane %v2170, 3
    %v2336 = vsel %vm1184, %v2334, %v2335
    %v2337 = vrot.slane %v2173, 3
    %v2338 = vrot.slane %v2175, 3
    %v2339 = vsel %vm1184, %v2337, %v2338
    %v2340 = vrot.slane %v2178, 3
    %v2341 = vrot.slane %v2180, 3
    %v2342 = vsel %vm1184, %v2340, %v2341
    %v2343 = vrot.slane %v2183, 3
    %v2344 = vsel %vm1184, %v2343, %v2343
    %v2345 = vrot.slane %v2186, 3
    %v2346 = vsel %vm1184, %v2345, %v2345
    %v2483 = vunpack.c.l.b16 %v2187
    %v2484 = vunpack.c.l.b16 %v2188
    %v2485 = vunpack.c.l.b16 %v2189
    %v2486 = vunpack.c.l.b16 %v2190
    %v2487 = vunpack.c.l.b16 %v2191
    %v2488 = vunpack.c.l.b16 %v2192
    %v2489 = vunpack.c.l.b16 %v2193
    %v2490 = vunpack.c.l.b16 %v2194
    %v2491 = vunpack.c.l.b16 %v2195
    %v2492 = vunpack.c.l.b16 %v2196
    %v2493 = vunpack.c.l.b16 %v2197
    %v2494 = vunpack.c.l.b16 %v2198
    %v2495 = vunpack.c.l.b16 %v2199
    %v2496 = vunpack.c.l.b16 %v2200
    %v2497 = vunpack.c.l.b16 %v2201
    %v2498 = vunpack.c.l.b16 %v2202
    %v2499 = vunpack.c.l.b16 %v2203
    %v2500 = vunpack.c.l.b16 %v2204
    %v2501 = vunpack.c.l.b16 %v2205
    %v2502 = vunpack.c.l.b16 %v2206
    %v2503 = vunpack.c.l.b16 %v2207
    %v2504 = vunpack.c.l.b16 %v2208
    %v2505 = vunpack.c.l.b16 %v2209
    %v2506 = vunpack.c.l.b16 %v2210
    %v2507 = vunpack.c.l.b16 %v2211
    %v2508 = vunpack.c.l.b16 %v2212
    %v2509 = vunpack.c.l.b16 %v2213
    %v2510 = vunpack.c.l.b16 %v2214
    %v2511 = vunpack.c.l.b16 %v2215
    %v2512 = vunpack.c.l.b16 %v2216
    %v2513 = vunpack.c.l.b16 %v2217
    %v2514 = vunpack.c.l.b16 %v2218
    %v2515 = vunpack.c.l.b16 %v2219
    %v2516 = vunpack.c.l.b16 %v2220
    %v2517 = vunpack.c.l.b16 %v2221
    %v2518 = vunpack.c.l.b16 %v2222
    %v2519 = vunpack.c.l.b16 %v2223
    %v2520 = vunpack.c.l.b16 %v2224
    %v2521 = vunpack.c.l.b16 %v2225
    %v2522 = vunpack.c.l.b16 %v2226
    %v2523 = vunpack.c.l.b16 %v2227
    %v2524 = vunpack.c.l.b16 %v2228
    %v2525 = vunpack.c.l.b16 %v2229
    %v2526 = vunpack.c.l.b16 %v2230
    %v2527 = vunpack.c.l.b16 %v2231
    %v2528 = vunpack.c.l.b16 %v2232
    %v2529 = vunpack.c.l.b16 %v2233
    %v2530 = vunpack.c.l.b16 %v2234
    %v2531 = vunpack.c.l.b16 %v2235
    %v2532 = vunpack.c.l.b16 %v2236
    %v2533 = vunpack.c.l.b16 %v2237
    %v2534 = vunpack.c.l.b16 %v2238
    %v2535 = vunpack.c.l.b16 %v2239
    %v2536 = vunpack.c.l.b16 %v2240
    %v2537 = vunpack.c.l.b16 %v2241
    %v2538 = vunpack.c.l.b16 %v2242
    %v2539 = vunpack.c.l.b16 %v2243
    %v2540 = vunpack.c.l.b16 %v2244
    %v2541 = vunpack.c.l.b16 %v2245
    %v2542 = vunpack.c.l.b16 %v2246
    %v2543 = vunpack.c.l.b16 %v2247
    %v2544 = vunpack.c.l.b16 %v2248
    %v2545 = vunpack.c.l.b16 %v2249
    %v2546 = vunpack.c.l.b16 %v2250
    %v2547 = vunpack.c.l.b16 %v2251
    %v2548 = vunpack.c.l.b16 %v2252
    %v2549 = vunpack.c.l.b16 %v2253
    %v2550 = vunpack.c.l.b16 %v2254
    %v2551 = vunpack.c.l.b16 %v2255
    %v2552 = vunpack.c.l.b16 %v2256
    %v2553 = vunpack.c.l.b16 %v2257
    %v2554 = vunpack.c.l.b16 %v2258
    %v2555 = vunpack.c.l.b16 %v2259
    %v2556 = vunpack.c.l.b16 %v2260
    %v2557 = vunpack.c.l.b16 %v2261
    %v2558 = vunpack.c.l.b16 %v2262
    %v2559 = vunpack.c.l.b16 %v2263
    %v2560 = vunpack.c.l.b16 %v2264
    %v2561 = vunpack.c.l.b16 %v2265
    %v2562 = vunpack.c.l.b16 %v2266
    %v2563 = vunpack.c.l.b16 %v2267
    %v2564 = vunpack.c.l.b16 %v2268
    %v2565 = vunpack.c.l.b16 %v2269
    %v2566 = vunpack.c.l.b16 %v2270
    %v2567 = vunpack.c.l.b16 %v2271
    %v2568 = vunpack.c.l.b16 %v2272
    %v2569 = vunpack.c.l.b16 %v2273
    %v2570 = vunpack.c.l.b16 %v2274
    %v2571 = vunpack.c.l.b16 %v2275
    %v2572 = vunpack.c.l.b16 %v2276
    %v2573 = vunpack.c.l.b16 %v2277
    %v2574 = vunpack.c.l.b16 %v2278
    %v2575 = vunpack.c.l.b16 %v2279
    %v2576 = vunpack.c.l.b16 %v2280
    %v2577 = vunpack.c.l.b16 %v2281
    %v2578 = vunpack.c.l.b16 %v2282
    %v2579 = vunpack.c.l.b16 %v2283
    %v2580 = vunpack.c.l.b16 %v2284
    %v2581 = vunpack.c.l.b16 %v2285
    %v2582 = vunpack.c.l.b16 %v2286
    %v2583 = vunpack.c.l.b16 %v2287
    %v2584 = vunpack.c.l.b16 %v2288
    %v2585 = vunpack.c.l.b16 %v2289
    %v2586 = vunpack.c.l.b16 %v2290
    %v2587 = vunpack.c.l.b16 %v2291
    %v2588 = vunpack.c.l.b16 %v2292
    %v2589 = vunpack.c.l.b16 %v2293
    %v2590 = vunpack.c.l.b16 %v2294
    %v2591 = vunpack.c.l.b16 %v2295
    %v2592 = vunpack.c.l.b16 %v2296
    %v2593 = vunpack.c.l.b16 %v2297
    %v2594 = vunpack.c.l.b16 %v2298
    %v2595 = vunpack.c.l.b16 %v2299
    %v2596 = vunpack.c.l.b16 %v2300
    %v2597 = vunpack.c.l.b16 %v2301
    %v2598 = vunpack.c.l.b16 %v2302
    %v2599 = vunpack.c.l.b16 %v2303
    %v2600 = vunpack.c.l.b16 %v2304
    %v2601 = vunpack.c.l.b16 %v2305
    %v2602 = vunpack.c.l.b16 %v2306
    %v2603 = vunpack.c.l.b16 %v2307
    %v2604 = vunpack.c.l.b16 %v2308
    %v2605 = vunpack.c.l.b16 %v2309
    %v2606 = vunpack.c.l.b16 %v2310
    %v2607 = vunpack.c.l.b16 %v2311
    %v2608 = vunpack.c.l.b16 %v2312
    %v2609 = vunpack.c.l.b16 %v2313
    %v2610 = vunpack.c.l.b16 %v2314
    %v2611 = vpack.c.b16 %v2484, %v2483
    %v2612 = vpack.c.b16 %v2486, %v2485
    %v2613 = vpack.c.b16 %v2488, %v2487
    %v2614 = vpack.c.b16 %v2490, %v2489
    %v2615 = vpack.c.b16 %v2492, %v2491
    %v2616 = vpack.c.b16 %v2494, %v2493
    %v2617 = vpack.c.b16 %v2496, %v2495
    %v2618 = vpack.c.b16 %v2498, %v2497
    %v2619 = vpack.c.b16 %v2500, %v2499
    %v2620 = vpack.c.b16 %v2502, %v2501
    %v2621 = vpack.c.b16 %v2504, %v2503
    %v2622 = vpack.c.b16 %v2506, %v2505
    %v2623 = vpack.c.b16 %v2508, %v2507
    %v2624 = vpack.c.b16 %v2510, %v2509
    %v2625 = vpack.c.b16 %v2512, %v2511
    %v2626 = vpack.c.b16 %v2514, %v2513
    %v2627 = vpack.c.b16 %v2516, %v2515
    %v2628 = vpack.c.b16 %v2518, %v2517
    %v2629 = vpack.c.b16 %v2520, %v2519
    %v2630 = vpack.c.b16 %v2522, %v2521
    %v2631 = vpack.c.b16 %v2524, %v2523
    %v2632 = vpack.c.b16 %v2526, %v2525
    %v2633 = vpack.c.b16 %v2528, %v2527
    %v2634 = vpack.c.b16 %v2530, %v2529
    %v2635 = vpack.c.b16 %v2532, %v2531
    %v2636 = vpack.c.b16 %v2534, %v2533
    %v2637 = vpack.c.b16 %v2536, %v2535
    %v2638 = vpack.c.b16 %v2538, %v2537
    %v2639 = vpack.c.b16 %v2540, %v2539
    %v2640 = vpack.c.b16 %v2542, %v2541
    %v2641 = vpack.c.b16 %v2544, %v2543
    %v2642 = vpack.c.b16 %v2546, %v2545
    %v2643 = vpack.c.b16 %v2548, %v2547
    %v2644 = vpack.c.b16 %v2550, %v2549
    %v2645 = vpack.c.b16 %v2552, %v2551
    %v2646 = vpack.c.b16 %v2554, %v2553
    %v2647 = vpack.c.b16 %v2556, %v2555
    %v2648 = vpack.c.b16 %v2558, %v2557
    %v2649 = vpack.c.b16 %v2560, %v2559
    %v2650 = vpack.c.b16 %v2562, %v2561
    %v2651 = vpack.c.b16 %v2564, %v2563
    %v2652 = vpack.c.b16 %v2566, %v2565
    %v2653 = vpack.c.b16 %v2568, %v2567
    %v2654 = vpack.c.b16 %v2570, %v2569
    %v2655 = vpack.c.b16 %v2572, %v2571
    %v2656 = vpack.c.b16 %v2574, %v2573
    %v2657 = vpack.c.b16 %v2576, %v2575
    %v2658 = vpack.c.b16 %v2578, %v2577
    %v2659 = vpack.c.b16 %v2580, %v2579
    %v2660 = vpack.c.b16 %v2582, %v2581
    %v2661 = vpack.c.b16 %v2584, %v2583
    %v2662 = vpack.c.b16 %v2586, %v2585
    %v2663 = vpack.c.b16 %v2588, %v2587
    %v2664 = vpack.c.b16 %v2590, %v2589
    %v2665 = vpack.c.b16 %v2592, %v2591
    %v2666 = vpack.c.b16 %v2594, %v2593
    %v2667 = vpack.c.b16 %v2596, %v2595
    %v2668 = vpack.c.b16 %v2598, %v2597
    %v2669 = vpack.c.b16 %v2600, %v2599
    %v2670 = vpack.c.b16 %v2602, %v2601
    %v2671 = vpack.c.b16 %v2604, %v2603
    %v2672 = vpack.c.b16 %v2606, %v2605
    %v2673 = vpack.c.b16 %v2608, %v2607
    %v2674 = vpack.c.b16 %v2610, %v2609
    %2739 = vmatprep.subr.bf16.mxu0 0
    %2740 = vmatpush1.bf16.msra.mxu0 %v2611
    %2741 = vmatprep.subr.bf16.mxu0 0
    %2742 = vmatpush1.bf16.msra.mxu0 %v2612
    %2743 = vmatprep.subr.bf16.mxu0 0
    %2744 = vmatpush1.bf16.msra.mxu0 %v2613
    %2745 = vmatprep.subr.bf16.mxu0 0
    %2746 = vmatpush1.bf16.msra.mxu0 %v2614
    %2747 = vmatprep.subr.bf16.mxu0 0
    %2748 = vmatpush1.bf16.msra.mxu0 %v2615
    %2749 = vmatprep.subr.bf16.mxu0 0
    %2750 = vmatpush1.bf16.msra.mxu0 %v2616
    %2751 = vmatprep.subr.bf16.mxu0 0
    %2752 = vmatpush1.bf16.msra.mxu0 %v2617
    %2753 = vmatprep.subr.bf16.mxu0 0
    %2754 = vmatpush1.bf16.msra.mxu0 %v2618
    %2755 = vmatprep.subr.bf16.mxu0 0
    %2756 = vmatpush1.bf16.msra.mxu0 %v2619
    %2757 = vmatprep.subr.bf16.mxu0 0
    %2758 = vmatpush1.bf16.msra.mxu0 %v2620
    %2759 = vmatprep.subr.bf16.mxu0 0
    %2760 = vmatpush1.bf16.msra.mxu0 %v2621
    %2761 = vmatprep.subr.bf16.mxu0 0
    %2762 = vmatpush1.bf16.msra.mxu0 %v2622
    %2763 = vmatprep.subr.bf16.mxu0 0
    %2764 = vmatpush1.bf16.msra.mxu0 %v2623
    %2765 = vmatprep.subr.bf16.mxu0 0
    %2766 = vmatpush1.bf16.msra.mxu0 %v2624
    %2767 = vmatprep.subr.bf16.mxu0 0
    %2768 = vmatpush1.bf16.msra.mxu0 %v2625
    %2769 = vmatprep.subr.bf16.mxu0 0
    %2770 = vmatpush1.bf16.msra.mxu0 %v2626
    %2771 = vmatprep.mubr.bf16.mxu0 %v2331
    %2772 = vmatmul.mubr.bf16.gmra.mrb[0].mxu0 %v2329
    %v2773 = vpop.f32.mrb[0].mxu0
    %v2774 = vadd.f32 0.0, %v2773
    %v2775 = vpop.f32.mrb[0].mxu0
    %v2776 = vpop.f32.mrb[0].mxu0
    %v2777 = vadd.f32 0.0, %v2776
    %v2778 = vpop.f32.mrb[0].mxu0
    %2779 = vdwg.mxu0
    %2780 = vmatprep.subr.bf16.mxu0 0
    %2781 = vmatpush1.bf16.msra.mxu0 %v2627
    %2782 = vmatprep.subr.bf16.mxu0 0
    %2783 = vmatpush1.bf16.msra.mxu0 %v2628
    %2784 = vmatprep.subr.bf16.mxu0 0
    %2785 = vmatpush1.bf16.msra.mxu0 %v2629
    %2786 = vmatprep.subr.bf16.mxu0 0
    %2787 = vmatpush1.bf16.msra.mxu0 %v2630
    %2788 = vmatprep.subr.bf16.mxu0 0
    %2789 = vmatpush1.bf16.msra.mxu0 %v2631
    %2790 = vmatprep.subr.bf16.mxu0 0
    %2791 = vmatpush1.bf16.msra.mxu0 %v2632
    %2792 = vmatprep.subr.bf16.mxu0 0
    %2793 = vmatpush1.bf16.msra.mxu0 %v2633
    %2794 = vmatprep.subr.bf16.mxu0 0
    %2795 = vmatpush1.bf16.msra.mxu0 %v2634
    %2796 = vmatprep.subr.bf16.mxu0 0
    %2797 = vmatpush1.bf16.msra.mxu0 %v2635
    %2798 = vmatprep.subr.bf16.mxu0 0
    %2799 = vmatpush1.bf16.msra.mxu0 %v2636
    %2800 = vmatprep.subr.bf16.mxu0 0
    %2801 = vmatpush1.bf16.msra.mxu0 %v2637
    %2802 = vmatprep.subr.bf16.mxu0 0
    %2803 = vmatpush1.bf16.msra.mxu0 %v2638
    %2804 = vmatprep.subr.bf16.mxu0 0
    %2805 = vmatpush1.bf16.msra.mxu0 %v2639
    %2806 = vmatprep.subr.bf16.mxu0 0
    %2807 = vmatpush1.bf16.msra.mxu0 %v2640
    %2808 = vmatprep.subr.bf16.mxu0 0
    %2809 = vmatpush1.bf16.msra.mxu0 %v2641
    %2810 = vmatprep.subr.bf16.mxu0 0
    %2811 = vmatpush1.bf16.msra.mxu0 %v2642
    %2812 = vmatprep.mubr.bf16.mxu0 %v2336
    %2813 = vmatmul.mubr.bf16.gmra.mrb[0].mxu0 %v2333
    %v2814 = vpop.f32.mrb[0].mxu0
    %v2815 = vadd.f32 %v2774, %v2814
    %v2816 = vpop.f32.mrb[0].mxu0
    %v2817 = vpop.f32.mrb[0].mxu0
    %v2818 = vadd.f32 %v2777, %v2817
    %v2819 = vpop.f32.mrb[0].mxu0
    %2820 = vdwg.mxu0
    %2821 = vmatprep.subr.bf16.mxu0 0
    %2822 = vmatpush1.bf16.msra.mxu0 %v2643
    %2823 = vmatprep.subr.bf16.mxu0 0
    %2824 = vmatpush1.bf16.msra.mxu0 %v2644
    %2825 = vmatprep.subr.bf16.mxu0 0
    %2826 = vmatpush1.bf16.msra.mxu0 %v2645
    %2827 = vmatprep.subr.bf16.mxu0 0
    %2828 = vmatpush1.bf16.msra.mxu0 %v2646
    %2829 = vmatprep.subr.bf16.mxu0 0
    %2830 = vmatpush1.bf16.msra.mxu0 %v2647
    %2831 = vmatprep.subr.bf16.mxu0 0
    %2832 = vmatpush1.bf16.msra.mxu0 %v2648
    %2833 = vmatprep.subr.bf16.mxu0 0
    %2834 = vmatpush1.bf16.msra.mxu0 %v2649
    %2835 = vmatprep.subr.bf16.mxu0 0
    %2836 = vmatpush1.bf16.msra.mxu0 %v2650
    %2837 = vmatprep.subr.bf16.mxu0 0
    %2838 = vmatpush1.bf16.msra.mxu0 %v2651
    %2839 = vmatprep.subr.bf16.mxu0 0
    %2840 = vmatpush1.bf16.msra.mxu0 %v2652
    %2841 = vmatprep.subr.bf16.mxu0 0
    %2842 = vmatpush1.bf16.msra.mxu0 %v2653
    %2843 = vmatprep.subr.bf16.mxu0 0
    %2844 = vmatpush1.bf16.msra.mxu0 %v2654
    %2845 = vmatprep.subr.bf16.mxu0 0
    %2846 = vmatpush1.bf16.msra.mxu0 %v2655
    %2847 = vmatprep.subr.bf16.mxu0 0
    %2848 = vmatpush1.bf16.msra.mxu0 %v2656
    %2849 = vmatprep.subr.bf16.mxu0 0
    %2850 = vmatpush1.bf16.msra.mxu0 %v2657
    %2851 = vmatprep.subr.bf16.mxu0 0
    %2852 = vmatpush1.bf16.msra.mxu0 %v2658
    %2853 = vmatprep.mubr.bf16.mxu0 %v2342
    %2854 = vmatmul.mubr.bf16.gmra.mrb[0].mxu0 %v2339
    %v2855 = vpop.f32.mrb[0].mxu0
    %v2856 = vadd.f32 %v2815, %v2855
    %v2857 = vpop.f32.mrb[0].mxu0
    %v2858 = vpop.f32.mrb[0].mxu0
    %v2859 = vadd.f32 %v2818, %v2858
    %v2860 = vpop.f32.mrb[0].mxu0
    %2861 = vdwg.mxu0
    %2862 = vmatprep.subr.bf16.mxu0 0
    %2863 = vmatpush1.bf16.msra.mxu0 %v2659
    %2864 = vmatprep.subr.bf16.mxu0 0
    %2865 = vmatpush1.bf16.msra.mxu0 %v2660
    %2866 = vmatprep.subr.bf16.mxu0 0
    %2867 = vmatpush1.bf16.msra.mxu0 %v2661
    %2868 = vmatprep.subr.bf16.mxu0 0
    %2869 = vmatpush1.bf16.msra.mxu0 %v2662
    %2870 = vmatprep.subr.bf16.mxu0 0
    %2871 = vmatpush1.bf16.msra.mxu0 %v2663
    %2872 = vmatprep.subr.bf16.mxu0 0
    %2873 = vmatpush1.bf16.msra.mxu0 %v2664
    %2874 = vmatprep.subr.bf16.mxu0 0
    %2875 = vmatpush1.bf16.msra.mxu0 %v2665
    %2876 = vmatprep.subr.bf16.mxu0 0
    %2877 = vmatpush1.bf16.msra.mxu0 %v2666
    %2878 = vmatprep.subr.bf16.mxu0 0
    %2879 = vmatpush1.bf16.msra.mxu0 %v2667
    %2880 = vmatprep.subr.bf16.mxu0 0
    %2881 = vmatpush1.bf16.msra.mxu0 %v2668
    %2882 = vmatprep.subr.bf16.mxu0 0
    %2883 = vmatpush1.bf16.msra.mxu0 %v2669
    %2884 = vmatprep.subr.bf16.mxu0 0
    %2885 = vmatpush1.bf16.msra.mxu0 %v2670
    %2886 = vmatprep.subr.bf16.mxu0 0
    %2887 = vmatpush1.bf16.msra.mxu0 %v2671
    %2888 = vmatprep.subr.bf16.mxu0 0
    %2889 = vmatpush1.bf16.msra.mxu0 %v2672
    %2890 = vmatprep.subr.bf16.mxu0 0
    %2891 = vmatpush1.bf16.msra.mxu0 %v2673
    %2892 = vmatprep.subr.bf16.mxu0 0
    %2893 = vmatpush1.bf16.msra.mxu0 %v2674
    %2894 = vmatprep.mubr.bf16.mxu0 %v2346
    %2895 = vmatmul.mubr.bf16.gmra.mrb[0].mxu0 %v2344
    %v2896 = vpop.f32.mrb[0].mxu0
    %v2897 = vadd.f32 %v2856, %v2896
    %v2898 = vpop.f32.mrb[0].mxu0
    %v2899 = vpop.f32.mrb[0].mxu0
    %v2900 = vadd.f32 %v2859, %v2899
    %v2901 = vpop.f32.mrb[0].mxu0
    %2902 = vdwg.mxu0
    %vm2903 = vcmp.ge.f32.partialorder %v2897, 0.0
    %vm2904 = vcmp.ge.f32.partialorder %v2900, 0.0
    %v2905 = vmul.f32 %v2897, 0.2
    %v2906 = vmul.f32 %v2900, 0.2
    %v2907 = vsel %vm2903, %v2897, %v2905
    %v2908 = vsel %vm2904, %v2900, %v2906
    %v2909 = vld [vmem:[#allocation13] sm:$0x1]
    %v2911 = vlaneseq
    %v2912 = vshrl.u32 %v2911, 7
    %v2913 = vsub.s32 0, %v2912
    %v2914 = vrot.slane %v2909, %v2913
    %v2916 = vmul.f32 %v2907, %v2914
    %v2917 = vmul.f32 %v2908, %v2914
    %v2918 = vld [vmem:[#allocation14] sm:$0x1]
    %v2920 = vlaneseq
    %v2921 = vshrl.u32 %v2920, 7
    %v2922 = vsub.s32 0, %v2921
    %v2923 = vrot.slane %v2918, %v2922
    %v2925 = vadd.f32 %v2916, %v2923
    %v2926 = vadd.f32 %v2917, %v2923
    %v2927 = vpack.c.bf16 %v2926, %v2925
    %v2929 = vunpack.c.l.b16 %v2927
    %v2930 = vunpack.c.h.b16 %v2927
    %v2931 = vpack.c.b16 %v2929, %v2929
    %v2932 = vpack.c.b16 %v2930, %v2930
    %vm2933 = vcmask 1041408
    %vm2934 = vcmask 1045508
    %vm2935 = vmor %vm2933, %vm2934
    %v2936 = vrot.slane %v2931, 6
    %v2937 = vrot.slane %v2936, 4
    %v2938 = vrot.slane %v2932, 6
    %v2939 = vsel %vm2935, %v2937, %v2938
    %2942 = vst [vmem:[#allocation3 + $0x4] sm:$0xc] %v2936
    %2943 = vst [vmem:[#allocation3 + $0x8] sm:$0xf] %v2939
    %v2944 = vld [vmem:[#allocation2 + $0xc] sm:$0xc]
    %v2945 = vld [vmem:[#allocation2 + $0x10] sm:$0xf]
    %v2946 = vld [vmem:[#allocation2 + $0x3c] sm:$0x8]
    %v2947 = vld [vmem:[#allocation2 + $0x40] sm:$0xf]
    %v2948 = vld [vmem:[#allocation2 + $0x44] sm:$0x1]
    %v2949 = vld [vmem:[#allocation2 + $0xc] sm:$0x8]
    %v2950 = vld [vmem:[#allocation2 + $0x14] sm:$0x1]
    %v2951 = vld [vmem:[#allocation2 + $0x44] sm:$0x3]
    %v2952 = vld [vmem:[#allocation2 + $0x70] sm:$0xf]
    %v2953 = vld [vmem:[#allocation2 + $0x74] sm:$0x3]
    %v2954 = vld [vmem:[#allocation2 + $0xa0] sm:$0xe]
    %v2955 = vld [vmem:[#allocation2 + $0xa4] sm:$0x7]
    %v2956 = vld [vmem:[#allocation2 + $0x70] sm:$0xe]
    %v2957 = vld [vmem:[#allocation2 + $0x74] sm:$0x7]
    %v2958 = vld [vmem:[#allocation2 + $0xa0] sm:$0xc]
    %v2959 = vld [vmem:[#allocation2 + $0xa4] sm:$0xf]
    %v2960 = vld [vmem:[#allocation2 + $0x14] sm:$0xe]
    %v2961 = vld [vmem:[#allocation2 + $0x18] sm:$0x7]
    %v2962 = vld [vmem:[#allocation2 + $0x44] sm:$0xc]
    %v2963 = vld [vmem:[#allocation2 + $0x48] sm:$0xf]
    %v2964 = vld [vmem:[#allocation2 + $0x14] sm:$0xc]
    %v2965 = vld [vmem:[#allocation2 + $0x18] sm:$0xf]
    %v2966 = vld [vmem:[#allocation2 + $0x44] sm:$0x8]
    %v2967 = vld [vmem:[#allocation2 + $0x4c] sm:$0x1]
    %v2968 = vld [vmem:[#allocation2 + $0x74] sm:$0x8]
    %v2969 = vld [vmem:[#allocation2 + $0x78] sm:$0xf]
    %v2970 = vld [vmem:[#allocation2 + $0x7c] sm:$0x1]
    %v2971 = vld [vmem:[#allocation2 + $0xa8] sm:$0xf]
    %v2972 = vld [vmem:[#allocation2 + $0xac] sm:$0x3]
    %v2973 = vld [vmem:[#allocation2 + $0x7c] sm:$0x3]
    %v2974 = vld [vmem:[#allocation2 + $0xa8] sm:$0xe]
    %v2975 = vld [vmem:[#allocation2 + $0xac] sm:$0x7]
    %v2978 = vunpack.c.l.b16 %v2944
    %v2979 = vunpack.c.l.b16 %v2945
    %v2980 = vpack.c.b16 %v2979, %v2978
    %v2984 = vunpack.c.l.b16 %v2946
    %v2985 = vunpack.c.l.b16 %v2947
    %v2986 = vunpack.c.l.b16 %v2948
    %v2987 = vpack.c.b16 %v2985, %v2984
    %v2988 = vpack.c.b16 %v2986, %v2986
    %vm2989 = vcmask 1046528
    %v2990 = vrot.slane %v2987, 1
    %v2991 = vrot.slane %v2988, 1
    %v2992 = vsel %vm2989, %v2990, %v2991
    %2993 = vrot.lane.b32.xlu0 %v2992, 64
    %v2994 = vpop.permute.xlu0 %2993
    %v2997 = vunpack.c.l.b16 %v2949
    %v2998 = vunpack.c.l.b16 %v2950
    %v2999 = vpack.c.b16 %v2979, %v2997
    %v3000 = vpack.c.b16 %v2998, %v2998
    %v3001 = vrot.slane %v2999, 1
    %v3002 = vrot.slane %v3000, 1
    %v3003 = vsel %vm2989, %v3001, %v3002
    %v3005 = vunpack.c.l.b16 %v2951
    %v3006 = vpack.c.b16 %v3005, %v2985
    %v3007 = vrot.slane %v3006, 6
    %3008 = vrot.lane.b32.xlu0 %v3007, 64
    %v3009 = vpop.permute.xlu0 %3008
    %v3012 = vunpack.c.l.b16 %v2952
    %v3013 = vunpack.c.l.b16 %v2953
    %v3014 = vpack.c.b16 %v3013, %v3012
    %v3015 = vrot.slane %v3014, 6
    %v3018 = vunpack.c.l.b16 %v2954
    %v3019 = vunpack.c.l.b16 %v2955
    %v3020 = vpack.c.b16 %v3019, %v3018
    %v3021 = vrot.slane %v3020, 7
    %3022 = vrot.lane.b32.xlu0 %v3021, 64
    %v3023 = vpop.permute.xlu0 %3022
    %v3026 = vunpack.c.l.b16 %v2956
    %v3027 = vunpack.c.l.b16 %v2957
    %v3028 = vpack.c.b16 %v3027, %v3026
    %v3029 = vrot.slane %v3028, 7
    %v3032 = vunpack.c.l.b16 %v2958
    %v3033 = vunpack.c.l.b16 %v2959
    %v3034 = vpack.c.b16 %v3033, %v3032
    %3035 = vrot.lane.b32.xlu0 %v3034, 64
    %v3036 = vpop.permute.xlu0 %3035
    %v3039 = vunpack.c.l.b16 %v2960
    %v3040 = vunpack.c.l.b16 %v2961
    %v3041 = vpack.c.b16 %v3040, %v3039
    %v3042 = vrot.slane %v3041, 7
    %v3045 = vunpack.c.l.b16 %v2962
    %v3046 = vunpack.c.l.b16 %v2963
    %v3047 = vpack.c.b16 %v3046, %v3045
    %3048 = vrot.lane.b32.xlu0 %v3047, 64
    %v3049 = vpop.permute.xlu0 %3048
    %v3052 = vunpack.c.l.b16 %v2964
    %v3053 = vunpack.c.l.b16 %v2965
    %v3054 = vpack.c.b16 %v3053, %v3052
    %v3057 = vunpack.c.l.b16 %v2966
    %v3058 = vunpack.c.l.b16 %v2967
    %v3059 = vpack.c.b16 %v3046, %v3057
    %v3060 = vpack.c.b16 %v3058, %v3058
    %v3061 = vrot.slane %v3059, 1
    %v3062 = vrot.slane %v3060, 1
    %v3063 = vsel %vm2989, %v3061, %v3062
    %3064 = vrot.lane.b32.xlu0 %v3063, 64
    %v3065 = vpop.permute.xlu0 %3064
    %v3069 = vunpack.c.l.b16 %v2968
    %v3070 = vunpack.c.l.b16 %v2969
    %v3071 = vunpack.c.l.b16 %v2970
    %v3072 = vpack.c.b16 %v3070, %v3069
    %v3073 = vpack.c.b16 %v3071, %v3071
    %v3074 = vrot.slane %v3072, 1
    %v3075 = vrot.slane %v3073, 1
    %v3076 = vsel %vm2989, %v3074, %v3075
    %v3079 = vunpack.c.l.b16 %v2971
    %v3080 = vunpack.c.l.b16 %v2972
    %v3081 = vpack.c.b16 %v3080, %v3079
    %v3082 = vrot.slane %v3081, 6
    %3083 = vrot.lane.b32.xlu0 %v3082, 64
    %v3084 = vpop.permute.xlu0 %3083
    %v3086 = vunpack.c.l.b16 %v2973
    %v3087 = vpack.c.b16 %v3086, %v3070
    %v3088 = vrot.slane %v3087, 6
    %v3091 = vunpack.c.l.b16 %v2974
    %v3092 = vunpack.c.l.b16 %v2975
    %v3093 = vpack.c.b16 %v3092, %v3091
    %v3094 = vrot.slane %v3093, 7
    %3095 = vrot.lane.b32.xlu0 %v3094, 64
    %v3096 = vpop.permute.xlu0 %3095
    %v3099 = vsel %vm1264, %v2980, %v2994
    %v3102 = vsel %vm1264, %v3003, %v3009
    %v3105 = vsel %vm1264, %v3015, %v3023
    %v3108 = vsel %vm1264, %v3029, %v3036
    %v3111 = vsel %vm1264, %v3042, %v3049
    %v3114 = vsel %vm1264, %v3054, %v3065
    %v3117 = vsel %vm1264, %v3076, %v3084
    %v3120 = vsel %vm1264, %v3088, %v3096
    %v3121 = vld [vmem:[#allocation11] sm:$0xf]
    %v3122 = vld [vmem:[#allocation11 + $0x4] sm:$0xf]
    %v3123 = vld [vmem:[#allocation11 + $0x8] sm:$0xf]
    %v3124 = vld [vmem:[#allocation11 + $0xc] sm:$0xf]
    %v3125 = vld [vmem:[#allocation11 + $0x10] sm:$0xf]
    %v3126 = vld [vmem:[#allocation11 + $0x14] sm:$0xf]
    %v3127 = vld [vmem:[#allocation11 + $0x18] sm:$0xf]
    %v3128 = vld [vmem:[#allocation11 + $0x1c] sm:$0xf]
    %v3129 = vld [vmem:[#allocation11 + $0x20] sm:$0xf]
    %v3130 = vld [vmem:[#allocation11 + $0x24] sm:$0xf]
    %v3131 = vld [vmem:[#allocation11 + $0x28] sm:$0xf]
    %v3132 = vld [vmem:[#allocation11 + $0x2c] sm:$0xf]
    %v3133 = vld [vmem:[#allocation11 + $0x30] sm:$0xf]
    %v3134 = vld [vmem:[#allocation11 + $0x34] sm:$0xf]
    %v3135 = vld [vmem:[#allocation11 + $0x38] sm:$0xf]
    %v3136 = vld [vmem:[#allocation11 + $0x3c] sm:$0xf]
    %v3137 = vld [vmem:[#allocation11 + $0x40] sm:$0xf]
    %v3138 = vld [vmem:[#allocation11 + $0x44] sm:$0xf]
    %v3139 = vld [vmem:[#allocation11 + $0x48] sm:$0xf]
    %v3140 = vld [vmem:[#allocation11 + $0x4c] sm:$0xf]
    %v3141 = vld [vmem:[#allocation11 + $0x50] sm:$0xf]
    %v3142 = vld [vmem:[#allocation11 + $0x54] sm:$0xf]
    %v3143 = vld [vmem:[#allocation11 + $0x58] sm:$0xf]
    %v3144 = vld [vmem:[#allocation11 + $0x5c] sm:$0xf]
    %v3145 = vld [vmem:[#allocation11 + $0x60] sm:$0xf]
    %v3146 = vld [vmem:[#allocation11 + $0x64] sm:$0xf]
    %v3147 = vld [vmem:[#allocation11 + $0x68] sm:$0xf]
    %v3148 = vld [vmem:[#allocation11 + $0x6c] sm:$0xf]
    %v3149 = vld [vmem:[#allocation11 + $0x70] sm:$0xf]
    %v3150 = vld [vmem:[#allocation11 + $0x74] sm:$0xf]
    %v3151 = vld [vmem:[#allocation11 + $0x78] sm:$0xf]
    %v3152 = vld [vmem:[#allocation11 + $0x7c] sm:$0xf]
    %v3153 = vld [vmem:[#allocation11 + $0x80] sm:$0xf]
    %v3154 = vld [vmem:[#allocation11 + $0x84] sm:$0xf]
    %v3155 = vld [vmem:[#allocation11 + $0x88] sm:$0xf]
    %v3156 = vld [vmem:[#allocation11 + $0x8c] sm:$0xf]
    %v3157 = vld [vmem:[#allocation11 + $0x90] sm:$0xf]
    %v3158 = vld [vmem:[#allocation11 + $0x94] sm:$0xf]
    %v3159 = vld [vmem:[#allocation11 + $0x98] sm:$0xf]
    %v3160 = vld [vmem:[#allocation11 + $0x9c] sm:$0xf]
    %v3161 = vld [vmem:[#allocation11 + $0xa0] sm:$0xf]
    %v3162 = vld [vmem:[#allocation11 + $0xa4] sm:$0xf]
    %v3163 = vld [vmem:[#allocation11 + $0xa8] sm:$0xf]
    %v3164 = vld [vmem:[#allocation11 + $0xac] sm:$0xf]
    %v3165 = vld [vmem:[#allocation11 + $0xb0] sm:$0xf]
    %v3166 = vld [vmem:[#allocation11 + $0xb4] sm:$0xf]
    %v3167 = vld [vmem:[#allocation11 + $0xb8] sm:$0xf]
    %v3168 = vld [vmem:[#allocation11 + $0xbc] sm:$0xf]
    %v3169 = vld [vmem:[#allocation11 + $0xc0] sm:$0xf]
    %v3170 = vld [vmem:[#allocation11 + $0xc4] sm:$0xf]
    %v3171 = vld [vmem:[#allocation11 + $0xc8] sm:$0xf]
    %v3172 = vld [vmem:[#allocation11 + $0xcc] sm:$0xf]
    %v3173 = vld [vmem:[#allocation11 + $0xd0] sm:$0xf]
    %v3174 = vld [vmem:[#allocation11 + $0xd4] sm:$0xf]
    %v3175 = vld [vmem:[#allocation11 + $0xd8] sm:$0xf]
    %v3176 = vld [vmem:[#allocation11 + $0xdc] sm:$0xf]
    %v3177 = vld [vmem:[#allocation11 + $0xe0] sm:$0xf]
    %v3178 = vld [vmem:[#allocation11 + $0xe4] sm:$0xf]
    %v3179 = vld [vmem:[#allocation11 + $0xe8] sm:$0xf]
    %v3180 = vld [vmem:[#allocation11 + $0xec] sm:$0xf]
    %v3181 = vld [vmem:[#allocation11 + $0xf0] sm:$0xf]
    %v3182 = vld [vmem:[#allocation11 + $0xf4] sm:$0xf]
    %v3183 = vld [vmem:[#allocation11 + $0xf8] sm:$0xf]
    %v3184 = vld [vmem:[#allocation11 + $0xfc] sm:$0xf]
    %v3185 = vld [vmem:[#allocation11 + $0x100] sm:$0xf]
    %v3186 = vld [vmem:[#allocation11 + $0x104] sm:$0xf]
    %v3187 = vld [vmem:[#allocation11 + $0x108] sm:$0xf]
    %v3188 = vld [vmem:[#allocation11 + $0x10c] sm:$0xf]
    %v3189 = vld [vmem:[#allocation11 + $0x110] sm:$0xf]
    %v3190 = vld [vmem:[#allocation11 + $0x114] sm:$0xf]
    %v3191 = vld [vmem:[#allocation11 + $0x118] sm:$0xf]
    %v3192 = vld [vmem:[#allocation11 + $0x11c] sm:$0xf]
    %v3193 = vld [vmem:[#allocation11 + $0x120] sm:$0xf]
    %v3194 = vld [vmem:[#allocation11 + $0x124] sm:$0xf]
    %v3195 = vld [vmem:[#allocation11 + $0x128] sm:$0xf]
    %v3196 = vld [vmem:[#allocation11 + $0x12c] sm:$0xf]
    %v3197 = vld [vmem:[#allocation11 + $0x130] sm:$0xf]
    %v3198 = vld [vmem:[#allocation11 + $0x134] sm:$0xf]
    %v3199 = vld [vmem:[#allocation11 + $0x138] sm:$0xf]
    %v3200 = vld [vmem:[#allocation11 + $0x13c] sm:$0xf]
    %v3201 = vld [vmem:[#allocation11 + $0x140] sm:$0xf]
    %v3202 = vld [vmem:[#allocation11 + $0x144] sm:$0xf]
    %v3203 = vld [vmem:[#allocation11 + $0x148] sm:$0xf]
    %v3204 = vld [vmem:[#allocation11 + $0x14c] sm:$0xf]
    %v3205 = vld [vmem:[#allocation11 + $0x150] sm:$0xf]
    %v3206 = vld [vmem:[#allocation11 + $0x154] sm:$0xf]
    %v3207 = vld [vmem:[#allocation11 + $0x158] sm:$0xf]
    %v3208 = vld [vmem:[#allocation11 + $0x15c] sm:$0xf]
    %v3209 = vld [vmem:[#allocation11 + $0x160] sm:$0xf]
    %v3210 = vld [vmem:[#allocation11 + $0x164] sm:$0xf]
    %v3211 = vld [vmem:[#allocation11 + $0x168] sm:$0xf]
    %v3212 = vld [vmem:[#allocation11 + $0x16c] sm:$0xf]
    %v3213 = vld [vmem:[#allocation11 + $0x170] sm:$0xf]
    %v3214 = vld [vmem:[#allocation11 + $0x174] sm:$0xf]
    %v3215 = vld [vmem:[#allocation11 + $0x178] sm:$0xf]
    %v3216 = vld [vmem:[#allocation11 + $0x17c] sm:$0xf]
    %v3217 = vld [vmem:[#allocation11 + $0x180] sm:$0xf]
    %v3218 = vld [vmem:[#allocation11 + $0x184] sm:$0xf]
    %v3219 = vld [vmem:[#allocation11 + $0x188] sm:$0xf]
    %v3220 = vld [vmem:[#allocation11 + $0x18c] sm:$0xf]
    %v3221 = vld [vmem:[#allocation11 + $0x190] sm:$0xf]
    %v3222 = vld [vmem:[#allocation11 + $0x194] sm:$0xf]
    %v3223 = vld [vmem:[#allocation11 + $0x198] sm:$0xf]
    %v3224 = vld [vmem:[#allocation11 + $0x19c] sm:$0xf]
    %v3225 = vld [vmem:[#allocation11 + $0x1a0] sm:$0xf]
    %v3226 = vld [vmem:[#allocation11 + $0x1a4] sm:$0xf]
    %v3227 = vld [vmem:[#allocation11 + $0x1a8] sm:$0xf]
    %v3228 = vld [vmem:[#allocation11 + $0x1ac] sm:$0xf]
    %v3229 = vld [vmem:[#allocation11 + $0x1b0] sm:$0xf]
    %v3230 = vld [vmem:[#allocation11 + $0x1b4] sm:$0xf]
    %v3231 = vld [vmem:[#allocation11 + $0x1b8] sm:$0xf]
    %v3232 = vld [vmem:[#allocation11 + $0x1bc] sm:$0xf]
    %v3233 = vld [vmem:[#allocation11 + $0x1c0] sm:$0xf]
    %v3234 = vld [vmem:[#allocation11 + $0x1c4] sm:$0xf]
    %v3235 = vld [vmem:[#allocation11 + $0x1c8] sm:$0xf]
    %v3236 = vld [vmem:[#allocation11 + $0x1cc] sm:$0xf]
    %v3237 = vld [vmem:[#allocation11 + $0x1d0] sm:$0xf]
    %v3238 = vld [vmem:[#allocation11 + $0x1d4] sm:$0xf]
    %v3239 = vld [vmem:[#allocation11 + $0x1d8] sm:$0xf]
    %v3240 = vld [vmem:[#allocation11 + $0x1dc] sm:$0xf]
    %v3241 = vld [vmem:[#allocation11 + $0x1e0] sm:$0xf]
    %v3242 = vld [vmem:[#allocation11 + $0x1e4] sm:$0xf]
    %v3243 = vld [vmem:[#allocation11 + $0x1e8] sm:$0xf]
    %v3244 = vld [vmem:[#allocation11 + $0x1ec] sm:$0xf]
    %v3245 = vld [vmem:[#allocation11 + $0x1f0] sm:$0xf]
    %v3246 = vld [vmem:[#allocation11 + $0x1f4] sm:$0xf]
    %v3247 = vld [vmem:[#allocation11 + $0x1f8] sm:$0xf]
    %v3248 = vld [vmem:[#allocation11 + $0x1fc] sm:$0xf]
    %v3257 = vrot.slane %v3099, 2
    %v3258 = vrot.slane %v3102, 2
    %v3259 = vrot.slane %v3105, 2
    %v3260 = vrot.slane %v3108, 2
    %v3261 = vrot.slane %v3111, 2
    %v3262 = vrot.slane %v3114, 2
    %v3263 = vrot.slane %v3117, 2
    %v3264 = vrot.slane %v3120, 2
    %v3401 = vunpack.c.l.b16 %v3121
    %v3402 = vunpack.c.l.b16 %v3122
    %v3403 = vunpack.c.l.b16 %v3123
    %v3404 = vunpack.c.l.b16 %v3124
    %v3405 = vunpack.c.l.b16 %v3125
    %v3406 = vunpack.c.l.b16 %v3126
    %v3407 = vunpack.c.l.b16 %v3127
    %v3408 = vunpack.c.l.b16 %v3128
    %v3409 = vunpack.c.l.b16 %v3129
    %v3410 = vunpack.c.l.b16 %v3130
    %v3411 = vunpack.c.l.b16 %v3131
    %v3412 = vunpack.c.l.b16 %v3132
    %v3413 = vunpack.c.l.b16 %v3133
    %v3414 = vunpack.c.l.b16 %v3134
    %v3415 = vunpack.c.l.b16 %v3135
    %v3416 = vunpack.c.l.b16 %v3136
    %v3417 = vunpack.c.l.b16 %v3137
    %v3418 = vunpack.c.l.b16 %v3138
    %v3419 = vunpack.c.l.b16 %v3139
    %v3420 = vunpack.c.l.b16 %v3140
    %v3421 = vunpack.c.l.b16 %v3141
    %v3422 = vunpack.c.l.b16 %v3142
    %v3423 = vunpack.c.l.b16 %v3143
    %v3424 = vunpack.c.l.b16 %v3144
    %v3425 = vunpack.c.l.b16 %v3145
    %v3426 = vunpack.c.l.b16 %v3146
    %v3427 = vunpack.c.l.b16 %v3147
    %v3428 = vunpack.c.l.b16 %v3148
    %v3429 = vunpack.c.l.b16 %v3149
    %v3430 = vunpack.c.l.b16 %v3150
    %v3431 = vunpack.c.l.b16 %v3151
    %v3432 = vunpack.c.l.b16 %v3152
    %v3433 = vunpack.c.l.b16 %v3153
    %v3434 = vunpack.c.l.b16 %v3154
    %v3435 = vunpack.c.l.b16 %v3155
    %v3436 = vunpack.c.l.b16 %v3156
    %v3437 = vunpack.c.l.b16 %v3157
    %v3438 = vunpack.c.l.b16 %v3158
    %v3439 = vunpack.c.l.b16 %v3159
    %v3440 = vunpack.c.l.b16 %v3160
    %v3441 = vunpack.c.l.b16 %v3161
    %v3442 = vunpack.c.l.b16 %v3162
    %v3443 = vunpack.c.l.b16 %v3163
    %v3444 = vunpack.c.l.b16 %v3164
    %v3445 = vunpack.c.l.b16 %v3165
    %v3446 = vunpack.c.l.b16 %v3166
    %v3447 = vunpack.c.l.b16 %v3167
    %v3448 = vunpack.c.l.b16 %v3168
    %v3449 = vunpack.c.l.b16 %v3169
    %v3450 = vunpack.c.l.b16 %v3170
    %v3451 = vunpack.c.l.b16 %v3171
    %v3452 = vunpack.c.l.b16 %v3172
    %v3453 = vunpack.c.l.b16 %v3173
    %v3454 = vunpack.c.l.b16 %v3174
    %v3455 = vunpack.c.l.b16 %v3175
    %v3456 = vunpack.c.l.b16 %v3176
    %v3457 = vunpack.c.l.b16 %v3177
    %v3458 = vunpack.c.l.b16 %v3178
    %v3459 = vunpack.c.l.b16 %v3179
    %v3460 = vunpack.c.l.b16 %v3180
    %v3461 = vunpack.c.l.b16 %v3181
    %v3462 = vunpack.c.l.b16 %v3182
    %v3463 = vunpack.c.l.b16 %v3183
    %v3464 = vunpack.c.l.b16 %v3184
    %v3465 = vunpack.c.l.b16 %v3185
    %v3466 = vunpack.c.l.b16 %v3186
    %v3467 = vunpack.c.l.b16 %v3187
    %v3468 = vunpack.c.l.b16 %v3188
    %v3469 = vunpack.c.l.b16 %v3189
    %v3470 = vunpack.c.l.b16 %v3190
    %v3471 = vunpack.c.l.b16 %v3191
    %v3472 = vunpack.c.l.b16 %v3192
    %v3473 = vunpack.c.l.b16 %v3193
    %v3474 = vunpack.c.l.b16 %v3194
    %v3475 = vunpack.c.l.b16 %v3195
    %v3476 = vunpack.c.l.b16 %v3196
    %v3477 = vunpack.c.l.b16 %v3197
    %v3478 = vunpack.c.l.b16 %v3198
    %v3479 = vunpack.c.l.b16 %v3199
    %v3480 = vunpack.c.l.b16 %v3200
    %v3481 = vunpack.c.l.b16 %v3201
    %v3482 = vunpack.c.l.b16 %v3202
    %v3483 = vunpack.c.l.b16 %v3203
    %v3484 = vunpack.c.l.b16 %v3204
    %v3485 = vunpack.c.l.b16 %v3205
    %v3486 = vunpack.c.l.b16 %v3206
    %v3487 = vunpack.c.l.b16 %v3207
    %v3488 = vunpack.c.l.b16 %v3208
    %v3489 = vunpack.c.l.b16 %v3209
    %v3490 = vunpack.c.l.b16 %v3210
    %v3491 = vunpack.c.l.b16 %v3211
    %v3492 = vunpack.c.l.b16 %v3212
    %v3493 = vunpack.c.l.b16 %v3213
    %v3494 = vunpack.c.l.b16 %v3214
    %v3495 = vunpack.c.l.b16 %v3215
    %v3496 = vunpack.c.l.b16 %v3216
    %v3497 = vunpack.c.l.b16 %v3217
    %v3498 = vunpack.c.l.b16 %v3218
    %v3499 = vunpack.c.l.b16 %v3219
    %v3500 = vunpack.c.l.b16 %v3220
    %v3501 = vunpack.c.l.b16 %v3221
    %v3502 = vunpack.c.l.b16 %v3222
    %v3503 = vunpack.c.l.b16 %v3223
    %v3504 = vunpack.c.l.b16 %v3224
    %v3505 = vunpack.c.l.b16 %v3225
    %v3506 = vunpack.c.l.b16 %v3226
    %v3507 = vunpack.c.l.b16 %v3227
    %v3508 = vunpack.c.l.b16 %v3228
    %v3509 = vunpack.c.l.b16 %v3229
    %v3510 = vunpack.c.l.b16 %v3230
    %v3511 = vunpack.c.l.b16 %v3231
    %v3512 = vunpack.c.l.b16 %v3232
    %v3513 = vunpack.c.l.b16 %v3233
    %v3514 = vunpack.c.l.b16 %v3234
    %v3515 = vunpack.c.l.b16 %v3235
    %v3516 = vunpack.c.l.b16 %v3236
    %v3517 = vunpack.c.l.b16 %v3237
    %v3518 = vunpack.c.l.b16 %v3238
    %v3519 = vunpack.c.l.b16 %v3239
    %v3520 = vunpack.c.l.b16 %v3240
    %v3521 = vunpack.c.l.b16 %v3241
    %v3522 = vunpack.c.l.b16 %v3242
    %v3523 = vunpack.c.l.b16 %v3243
    %v3524 = vunpack.c.l.b16 %v3244
    %v3525 = vunpack.c.l.b16 %v3245
    %v3526 = vunpack.c.l.b16 %v3246
    %v3527 = vunpack.c.l.b16 %v3247
    %v3528 = vunpack.c.l.b16 %v3248
    %v3529 = vpack.c.b16 %v3402, %v3401
    %v3530 = vpack.c.b16 %v3404, %v3403
    %v3531 = vpack.c.b16 %v3406, %v3405
    %v3532 = vpack.c.b16 %v3408, %v3407
    %v3533 = vpack.c.b16 %v3410, %v3409
    %v3534 = vpack.c.b16 %v3412, %v3411
    %v3535 = vpack.c.b16 %v3414, %v3413
    %v3536 = vpack.c.b16 %v3416, %v3415
    %v3537 = vpack.c.b16 %v3418, %v3417
    %v3538 = vpack.c.b16 %v3420, %v3419
    %v3539 = vpack.c.b16 %v3422, %v3421
    %v3540 = vpack.c.b16 %v3424, %v3423
    %v3541 = vpack.c.b16 %v3426, %v3425
    %v3542 = vpack.c.b16 %v3428, %v3427
    %v3543 = vpack.c.b16 %v3430, %v3429
    %v3544 = vpack.c.b16 %v3432, %v3431
    %v3545 = vpack.c.b16 %v3434, %v3433
    %v3546 = vpack.c.b16 %v3436, %v3435
    %v3547 = vpack.c.b16 %v3438, %v3437
    %v3548 = vpack.c.b16 %v3440, %v3439
    %v3549 = vpack.c.b16 %v3442, %v3441
    %v3550 = vpack.c.b16 %v3444, %v3443
    %v3551 = vpack.c.b16 %v3446, %v3445
    %v3552 = vpack.c.b16 %v3448, %v3447
    %v3553 = vpack.c.b16 %v3450, %v3449
    %v3554 = vpack.c.b16 %v3452, %v3451
    %v3555 = vpack.c.b16 %v3454, %v3453
    %v3556 = vpack.c.b16 %v3456, %v3455
    %v3557 = vpack.c.b16 %v3458, %v3457
    %v3558 = vpack.c.b16 %v3460, %v3459
    %v3559 = vpack.c.b16 %v3462, %v3461
    %v3560 = vpack.c.b16 %v3464, %v3463
    %v3561 = vpack.c.b16 %v3466, %v3465
    %v3562 = vpack.c.b16 %v3468, %v3467
    %v3563 = vpack.c.b16 %v3470, %v3469
    %v3564 = vpack.c.b16 %v3472, %v3471
    %v3565 = vpack.c.b16 %v3474, %v3473
    %v3566 = vpack.c.b16 %v3476, %v3475
    %v3567 = vpack.c.b16 %v3478, %v3477
    %v3568 = vpack.c.b16 %v3480, %v3479
    %v3569 = vpack.c.b16 %v3482, %v3481
    %v3570 = vpack.c.b16 %v3484, %v3483
    %v3571 = vpack.c.b16 %v3486, %v3485
    %v3572 = vpack.c.b16 %v3488, %v3487
    %v3573 = vpack.c.b16 %v3490, %v3489
    %v3574 = vpack.c.b16 %v3492, %v3491
    %v3575 = vpack.c.b16 %v3494, %v3493
    %v3576 = vpack.c.b16 %v3496, %v3495
    %v3577 = vpack.c.b16 %v3498, %v3497
    %v3578 = vpack.c.b16 %v3500, %v3499
    %v3579 = vpack.c.b16 %v3502, %v3501
    %v3580 = vpack.c.b16 %v3504, %v3503
    %v3581 = vpack.c.b16 %v3506, %v3505
    %v3582 = vpack.c.b16 %v3508, %v3507
    %v3583 = vpack.c.b16 %v3510, %v3509
    %v3584 = vpack.c.b16 %v3512, %v3511
    %v3585 = vpack.c.b16 %v3514, %v3513
    %v3586 = vpack.c.b16 %v3516, %v3515
    %v3587 = vpack.c.b16 %v3518, %v3517
    %v3588 = vpack.c.b16 %v3520, %v3519
    %v3589 = vpack.c.b16 %v3522, %v3521
    %v3590 = vpack.c.b16 %v3524, %v3523
    %v3591 = vpack.c.b16 %v3526, %v3525
    %v3592 = vpack.c.b16 %v3528, %v3527
    %3657 = vmatprep.subr.bf16.mxu0 0
    %3658 = vmatpush1.bf16.msra.mxu0 %v3529
    %3659 = vmatprep.subr.bf16.mxu0 0
    %3660 = vmatpush1.bf16.msra.mxu0 %v3530
    %3661 = vmatprep.subr.bf16.mxu0 0
    %3662 = vmatpush1.bf16.msra.mxu0 %v3531
    %3663 = vmatprep.subr.bf16.mxu0 0
    %3664 = vmatpush1.bf16.msra.mxu0 %v3532
    %3665 = vmatprep.subr.bf16.mxu0 0
    %3666 = vmatpush1.bf16.msra.mxu0 %v3533
    %3667 = vmatprep.subr.bf16.mxu0 0
    %3668 = vmatpush1.bf16.msra.mxu0 %v3534
    %3669 = vmatprep.subr.bf16.mxu0 0
    %3670 = vmatpush1.bf16.msra.mxu0 %v3535
    %3671 = vmatprep.subr.bf16.mxu0 0
    %3672 = vmatpush1.bf16.msra.mxu0 %v3536
    %3673 = vmatprep.subr.bf16.mxu0 0
    %3674 = vmatpush1.bf16.msra.mxu0 %v3537
    %3675 = vmatprep.subr.bf16.mxu0 0
    %3676 = vmatpush1.bf16.msra.mxu0 %v3538
    %3677 = vmatprep.subr.bf16.mxu0 0
    %3678 = vmatpush1.bf16.msra.mxu0 %v3539
    %3679 = vmatprep.subr.bf16.mxu0 0
    %3680 = vmatpush1.bf16.msra.mxu0 %v3540
    %3681 = vmatprep.subr.bf16.mxu0 0
    %3682 = vmatpush1.bf16.msra.mxu0 %v3541
    %3683 = vmatprep.subr.bf16.mxu0 0
    %3684 = vmatpush1.bf16.msra.mxu0 %v3542
    %3685 = vmatprep.subr.bf16.mxu0 0
    %3686 = vmatpush1.bf16.msra.mxu0 %v3543
    %3687 = vmatprep.subr.bf16.mxu0 0
    %3688 = vmatpush1.bf16.msra.mxu0 %v3544
    %3689 = vmatprep.mubr.bf16.mxu0 %v3258
    %3690 = vmatmul.mubr.bf16.gmra.mrb[0].mxu0 %v3257
    %v3691 = vpop.f32.mrb[0].mxu0
    %v3692 = vadd.f32 0.0, %v3691
    %v3693 = vpop.f32.mrb[0].mxu0
    %v3694 = vpop.f32.mrb[0].mxu0
    %v3695 = vadd.f32 0.0, %v3694
    %v3696 = vpop.f32.mrb[0].mxu0
    %3697 = vdwg.mxu0
    %3698 = vmatprep.subr.bf16.mxu0 0
    %3699 = vmatpush1.bf16.msra.mxu0 %v3545
    %3700 = vmatprep.subr.bf16.mxu0 0
    %3701 = vmatpush1.bf16.msra.mxu0 %v3546
    %3702 = vmatprep.subr.bf16.mxu0 0
    %3703 = vmatpush1.bf16.msra.mxu0 %v3547
    %3704 = vmatprep.subr.bf16.mxu0 0
    %3705 = vmatpush1.bf16.msra.mxu0 %v3548
    %3706 = vmatprep.subr.bf16.mxu0 0
    %3707 = vmatpush1.bf16.msra.mxu0 %v3549
    %3708 = vmatprep.subr.bf16.mxu0 0
    %3709 = vmatpush1.bf16.msra.mxu0 %v3550
    %3710 = vmatprep.subr.bf16.mxu0 0
    %3711 = vmatpush1.bf16.msra.mxu0 %v3551
    %3712 = vmatprep.subr.bf16.mxu0 0
    %3713 = vmatpush1.bf16.msra.mxu0 %v3552
    %3714 = vmatprep.subr.bf16.mxu0 0
    %3715 = vmatpush1.bf16.msra.mxu0 %v3553
    %3716 = vmatprep.subr.bf16.mxu0 0
    %3717 = vmatpush1.bf16.msra.mxu0 %v3554
    %3718 = vmatprep.subr.bf16.mxu0 0
    %3719 = vmatpush1.bf16.msra.mxu0 %v3555
    %3720 = vmatprep.subr.bf16.mxu0 0
    %3721 = vmatpush1.bf16.msra.mxu0 %v3556
    %3722 = vmatprep.subr.bf16.mxu0 0
    %3723 = vmatpush1.bf16.msra.mxu0 %v3557
    %3724 = vmatprep.subr.bf16.mxu0 0
    %3725 = vmatpush1.bf16.msra.mxu0 %v3558
    %3726 = vmatprep.subr.bf16.mxu0 0
    %3727 = vmatpush1.bf16.msra.mxu0 %v3559
    %3728 = vmatprep.subr.bf16.mxu0 0
    %3729 = vmatpush1.bf16.msra.mxu0 %v3560
    %3730 = vmatprep.mubr.bf16.mxu0 %v3260
    %3731 = vmatmul.mubr.bf16.gmra.mrb[0].mxu0 %v3259
    %v3732 = vpop.f32.mrb[0].mxu0
    %v3733 = vadd.f32 %v3692, %v3732
    %v3734 = vpop.f32.mrb[0].mxu0
    %v3735 = vpop.f32.mrb[0].mxu0
    %v3736 = vadd.f32 %v3695, %v3735
    %v3737 = vpop.f32.mrb[0].mxu0
    %3738 = vdwg.mxu0
    %3739 = vmatprep.subr.bf16.mxu0 0
    %3740 = vmatpush1.bf16.msra.mxu0 %v3561
    %3741 = vmatprep.subr.bf16.mxu0 0
    %3742 = vmatpush1.bf16.msra.mxu0 %v3562
    %3743 = vmatprep.subr.bf16.mxu0 0
    %3744 = vmatpush1.bf16.msra.mxu0 %v3563
    %3745 = vmatprep.subr.bf16.mxu0 0
    %3746 = vmatpush1.bf16.msra.mxu0 %v3564
    %3747 = vmatprep.subr.bf16.mxu0 0
    %3748 = vmatpush1.bf16.msra.mxu0 %v3565
    %3749 = vmatprep.subr.bf16.mxu0 0
    %3750 = vmatpush1.bf16.msra.mxu0 %v3566
    %3751 = vmatprep.subr.bf16.mxu0 0
    %3752 = vmatpush1.bf16.msra.mxu0 %v3567
    %3753 = vmatprep.subr.bf16.mxu0 0
    %3754 = vmatpush1.bf16.msra.mxu0 %v3568
    %3755 = vmatprep.subr.bf16.mxu0 0
    %3756 = vmatpush1.bf16.msra.mxu0 %v3569
    %3757 = vmatprep.subr.bf16.mxu0 0
    %3758 = vmatpush1.bf16.msra.mxu0 %v3570
    %3759 = vmatprep.subr.bf16.mxu0 0
    %3760 = vmatpush1.bf16.msra.mxu0 %v3571
    %3761 = vmatprep.subr.bf16.mxu0 0
    %3762 = vmatpush1.bf16.msra.mxu0 %v3572
    %3763 = vmatprep.subr.bf16.mxu0 0
    %3764 = vmatpush1.bf16.msra.mxu0 %v3573
    %3765 = vmatprep.subr.bf16.mxu0 0
    %3766 = vmatpush1.bf16.msra.mxu0 %v3574
    %3767 = vmatprep.subr.bf16.mxu0 0
    %3768 = vmatpush1.bf16.msra.mxu0 %v3575
    %3769 = vmatprep.subr.bf16.mxu0 0
    %3770 = vmatpush1.bf16.msra.mxu0 %v3576
    %3771 = vmatprep.mubr.bf16.mxu0 %v3262
    %3772 = vmatmul.mubr.bf16.gmra.mrb[0].mxu0 %v3261
    %v3773 = vpop.f32.mrb[0].mxu0
    %v3774 = vadd.f32 %v3733, %v3773
    %v3775 = vpop.f32.mrb[0].mxu0
    %v3776 = vpop.f32.mrb[0].mxu0
    %v3777 = vadd.f32 %v3736, %v3776
    %v3778 = vpop.f32.mrb[0].mxu0
    %3779 = vdwg.mxu0
    %3780 = vmatprep.subr.bf16.mxu0 0
    %3781 = vmatpush1.bf16.msra.mxu0 %v3577
    %3782 = vmatprep.subr.bf16.mxu0 0
    %3783 = vmatpush1.bf16.msra.mxu0 %v3578
    %3784 = vmatprep.subr.bf16.mxu0 0
    %3785 = vmatpush1.bf16.msra.mxu0 %v3579
    %3786 = vmatprep.subr.bf16.mxu0 0
    %3787 = vmatpush1.bf16.msra.mxu0 %v3580
    %3788 = vmatprep.subr.bf16.mxu0 0
    %3789 = vmatpush1.bf16.msra.mxu0 %v3581
    %3790 = vmatprep.subr.bf16.mxu0 0
    %3791 = vmatpush1.bf16.msra.mxu0 %v3582
    %3792 = vmatprep.subr.bf16.mxu0 0
    %3793 = vmatpush1.bf16.msra.mxu0 %v3583
    %3794 = vmatprep.subr.bf16.mxu0 0
    %3795 = vmatpush1.bf16.msra.mxu0 %v3584
    %3796 = vmatprep.subr.bf16.mxu0 0
    %3797 = vmatpush1.bf16.msra.mxu0 %v3585
    %3798 = vmatprep.subr.bf16.mxu0 0
    %3799 = vmatpush1.bf16.msra.mxu0 %v3586
    %3800 = vmatprep.subr.bf16.mxu0 0
    %3801 = vmatpush1.bf16.msra.mxu0 %v3587
    %3802 = vmatprep.subr.bf16.mxu0 0
    %3803 = vmatpush1.bf16.msra.mxu0 %v3588
    %3804 = vmatprep.subr.bf16.mxu0 0
    %3805 = vmatpush1.bf16.msra.mxu0 %v3589
    %3806 = vmatprep.subr.bf16.mxu0 0
    %3807 = vmatpush1.bf16.msra.mxu0 %v3590
    %3808 = vmatprep.subr.bf16.mxu0 0
    %3809 = vmatpush1.bf16.msra.mxu0 %v3591
    %3810 = vmatprep.subr.bf16.mxu0 0
    %3811 = vmatpush1.bf16.msra.mxu0 %v3592
    %3812 = vmatprep.mubr.bf16.mxu0 %v3264
    %3813 = vmatmul.mubr.bf16.gmra.mrb[0].mxu0 %v3263
    %v3814 = vpop.f32.mrb[0].mxu0
    %v3815 = vadd.f32 %v3774, %v3814
    %v3816 = vpop.f32.mrb[0].mxu0
    %v3817 = vpop.f32.mrb[0].mxu0
    %v3818 = vadd.f32 %v3777, %v3817
    %v3819 = vpop.f32.mrb[0].mxu0
    %3820 = vdwg.mxu0
    %vm3821 = vcmp.ge.f32.partialorder %v3815, 0.0
    %vm3822 = vcmp.ge.f32.partialorder %v3818, 0.0
    %v3823 = vmul.f32 %v3815, 0.2
    %v3824 = vmul.f32 %v3818, 0.2
    %v3825 = vsel %vm3821, %v3815, %v3823
    %v3826 = vsel %vm3822, %v3818, %v3824
    %v3827 = vld [vmem:[#allocation13] sm:$0x1]
    %v3829 = vlaneseq
    %v3830 = vshrl.u32 %v3829, 7
    %v3831 = vsub.s32 0, %v3830
    %v3832 = vrot.slane %v3827, %v3831
    %v3834 = vmul.f32 %v3825, %v3832
    %v3835 = vmul.f32 %v3826, %v3832
    %v3836 = vld [vmem:[#allocation14] sm:$0x1]
    %v3838 = vlaneseq
    %v3839 = vshrl.u32 %v3838, 7
    %v3840 = vsub.s32 0, %v3839
    %v3841 = vrot.slane %v3836, %v3840
    %v3843 = vadd.f32 %v3834, %v3841
    %v3844 = vadd.f32 %v3835, %v3841
    %v3845 = vpack.c.bf16 %v3844, %v3843
    %v3847 = vunpack.c.l.b16 %v3845
    %v3848 = vunpack.c.h.b16 %v3845
    %v3849 = vpack.c.b16 %v3847, %v3847
    %v3850 = vpack.c.b16 %v3848, %v3848
    %3853 = vst [vmem:[#allocation3 + $0xc] sm:$0xf] %v3849
    %3854 = vst [vmem:[#allocation3 + $0x10] sm:$0x3] %v3850
    %v3855 = vld [vmem:[#allocation2 + $0x14] sm:$0xe]
    %v3856 = vld [vmem:[#allocation2 + $0x18] sm:$0x7]
    %v3857 = vld [vmem:[#allocation2 + $0x44] sm:$0xc]
    %v3858 = vld [vmem:[#allocation2 + $0x48] sm:$0xf]
    %v3859 = vld [vmem:[#allocation2 + $0x14] sm:$0xc]
    %v3860 = vld [vmem:[#allocation2 + $0x18] sm:$0xf]
    %v3861 = vld [vmem:[#allocation2 + $0x44] sm:$0x8]
    %v3862 = vld [vmem:[#allocation2 + $0x4c] sm:$0x1]
    %v3863 = vld [vmem:[#allocation2 + $0x74] sm:$0x8]
    %v3864 = vld [vmem:[#allocation2 + $0x78] sm:$0xf]
    %v3865 = vld [vmem:[#allocation2 + $0x7c] sm:$0x1]
    %v3866 = vld [vmem:[#allocation2 + $0xa8] sm:$0xf]
    %v3867 = vld [vmem:[#allocation2 + $0xac] sm:$0x3]
    %v3868 = vld [vmem:[#allocation2 + $0x7c] sm:$0x3]
    %v3869 = vld [vmem:[#allocation2 + $0xa8] sm:$0xe]
    %v3870 = vld [vmem:[#allocation2 + $0xac] sm:$0x7]
    %v3871 = vld [vmem:[#allocation2 + $0x1c] sm:$0xf]
    %v3872 = vld [vmem:[#allocation2 + $0x20] sm:$0x3]
    %v3873 = vld [vmem:[#allocation2 + $0x4c] sm:$0xe]
    %v3874 = vld [vmem:[#allocation2 + $0x50] sm:$0x7]
    %v3875 = vld [vmem:[#allocation2 + $0x1c] sm:$0xe]
    %v3876 = vld [vmem:[#allocation2 + $0x20] sm:$0x7]
    %v3877 = vld [vmem:[#allocation2 + $0x4c] sm:$0xc]
    %v3878 = vld [vmem:[#allocation2 + $0x50] sm:$0xf]
    %v3879 = vld [vmem:[#allocation2 + $0x7c] sm:$0xc]
    %v3880 = vld [vmem:[#allocation2 + $0x80] sm:$0xf]
    %v3881 = vld [vmem:[#allocation2 + $0xac] sm:$0x8]
    %v3882 = vld [vmem:[#allocation2 + $0xb0] sm:$0xf]
    %v3883 = vld [vmem:[#allocation2 + $0xb4] sm:$0x1]
    %v3884 = vld [vmem:[#allocation2 + $0x7c] sm:$0x8]
    %v3885 = vld [vmem:[#allocation2 + $0x84] sm:$0x1]
    %v3886 = vld [vmem:[#allocation2 + $0xb4] sm:$0x3]
    %v3889 = vunpack.c.l.b16 %v3855
    %v3890 = vunpack.c.l.b16 %v3856
    %v3891 = vpack.c.b16 %v3890, %v3889
    %v3894 = vunpack.c.l.b16 %v3857
    %v3895 = vunpack.c.l.b16 %v3858
    %v3896 = vpack.c.b16 %v3895, %v3894
    %v3897 = vrot.slane %v3896, 1
    %3898 = vrot.lane.b32.xlu0 %v3897, 64
    %v3899 = vpop.permute.xlu0 %3898
    %v3902 = vunpack.c.l.b16 %v3859
    %v3903 = vunpack.c.l.b16 %v3860
    %v3904 = vpack.c.b16 %v3903, %v3902
    %v3905 = vrot.slane %v3904, 1
    %v3908 = vunpack.c.l.b16 %v3861
    %v3909 = vunpack.c.l.b16 %v3862
    %v3910 = vpack.c.b16 %v3895, %v3908
    %v3911 = vpack.c.b16 %v3909, %v3909
    %vm3912 = vcmask 1045504
    %v3913 = vrot.slane %v3910, 2
    %v3914 = vrot.slane %v3911, 2
    %v3915 = vsel %vm3912, %v3913, %v3914
    %3916 = vrot.lane.b32.xlu0 %v3915, 64
    %v3917 = vpop.permute.xlu0 %3916
    %v3921 = vunpack.c.l.b16 %v3863
    %v3922 = vunpack.c.l.b16 %v3864
    %v3923 = vunpack.c.l.b16 %v3865
    %v3924 = vpack.c.b16 %v3922, %v3921
    %v3925 = vpack.c.b16 %v3923, %v3923
    %v3926 = vrot.slane %v3924, 2
    %v3927 = vrot.slane %v3925, 2
    %v3928 = vsel %vm3912, %v3926, %v3927
    %v3931 = vunpack.c.l.b16 %v3866
    %v3932 = vunpack.c.l.b16 %v3867
    %v3933 = vpack.c.b16 %v3932, %v3931
    %v3934 = vrot.slane %v3933, 7
    %3935 = vrot.lane.b32.xlu0 %v3934, 64
    %v3936 = vpop.permute.xlu0 %3935
    %v3938 = vunpack.c.l.b16 %v3868
    %v3939 = vpack.c.b16 %v3938, %v3922
    %v3940 = vrot.slane %v3939, 7
    %v3943 = vunpack.c.l.b16 %v3869
    %v3944 = vunpack.c.l.b16 %v3870
    %v3945 = vpack.c.b16 %v3944, %v3943
    %3946 = vrot.lane.b32.xlu0 %v3945, 64
    %v3947 = vpop.permute.xlu0 %3946
    %v3950 = vunpack.c.l.b16 %v3871
    %v3951 = vunpack.c.l.b16 %v3872
    %v3952 = vpack.c.b16 %v3951, %v3950
    %v3953 = vrot.slane %v3952, 7
    %v3956 = vunpack.c.l.b16 %v3873
    %v3957 = vunpack.c.l.b16 %v3874
    %v3958 = vpack.c.b16 %v3957, %v3956
    %3959 = vrot.lane.b32.xlu0 %v3958, 64
    %v3960 = vpop.permute.xlu0 %3959
    %v3963 = vunpack.c.l.b16 %v3875
    %v3964 = vunpack.c.l.b16 %v3876
    %v3965 = vpack.c.b16 %v3964, %v3963
    %v3968 = vunpack.c.l.b16 %v3877
    %v3969 = vunpack.c.l.b16 %v3878
    %v3970 = vpack.c.b16 %v3969, %v3968
    %v3971 = vrot.slane %v3970, 1
    %3972 = vrot.lane.b32.xlu0 %v3971, 64
    %v3973 = vpop.permute.xlu0 %3972
    %v3976 = vunpack.c.l.b16 %v3879
    %v3977 = vunpack.c.l.b16 %v3880
    %v3978 = vpack.c.b16 %v3977, %v3976
    %v3979 = vrot.slane %v3978, 1
    %v3983 = vunpack.c.l.b16 %v3881
    %v3984 = vunpack.c.l.b16 %v3882
    %v3985 = vunpack.c.l.b16 %v3883
    %v3986 = vpack.c.b16 %v3984, %v3983
    %v3987 = vpack.c.b16 %v3985, %v3985
    %v3988 = vrot.slane %v3986, 2
    %v3989 = vrot.slane %v3987, 2
    %v3990 = vsel %vm3912, %v3988, %v3989
    %3991 = vrot.lane.b32.xlu0 %v3990, 64
    %v3992 = vpop.permute.xlu0 %3991
    %v3995 = vunpack.c.l.b16 %v3884
    %v3996 = vunpack.c.l.b16 %v3885
    %v3997 = vpack.c.b16 %v3977, %v3995
    %v3998 = vpack.c.b16 %v3996, %v3996
    %v3999 = vrot.slane %v3997, 2
    %v4000 = vrot.slane %v3998, 2
    %v4001 = vsel %vm3912, %v3999, %v4000
    %v4003 = vunpack.c.l.b16 %v3886
    %v4004 = vpack.c.b16 %v4003, %v3984
    %v4005 = vrot.slane %v4004, 7
    %4006 = vrot.lane.b32.xlu0 %v4005, 64
    %v4007 = vpop.permute.xlu0 %4006
    %v4010 = vsel %vm1264, %v3891, %v3899
    %v4013 = vsel %vm1264, %v3905, %v3917
    %v4016 = vsel %vm1264, %v3928, %v3936
    %v4019 = vsel %vm1264, %v3940, %v3947
    %v4022 = vsel %vm1264, %v3953, %v3960
    %v4025 = vsel %vm1264, %v3965, %v3973
    %v4028 = vsel %vm1264, %v3979, %v3992
    %v4031 = vsel %vm1264, %v4001, %v4007
    %v4032 = vld [vmem:[#allocation11] sm:$0xf]
    %v4033 = vld [vmem:[#allocation11 + $0x4] sm:$0xf]
    %v4034 = vld [vmem:[#allocation11 + $0x8] sm:$0xf]
    %v4035 = vld [vmem:[#allocation11 + $0xc] sm:$0xf]
    %v4036 = vld [vmem:[#allocation11 + $0x10] sm:$0xf]
    %v4037 = vld [vmem:[#allocation11 + $0x14] sm:$0xf]
    %v4038 = vld [vmem:[#allocation11 + $0x18] sm:$0xf]
    %v4039 = vld [vmem:[#allocation11 + $0x1c] sm:$0xf]
    %v4040 = vld [vmem:[#allocation11 + $0x20] sm:$0xf]
    %v4041 = vld [vmem:[#allocation11 + $0x24] sm:$0xf]
    %v4042 = vld [vmem:[#allocation11 + $0x28] sm:$0xf]
    %v4043 = vld [vmem:[#allocation11 + $0x2c] sm:$0xf]
    %v4044 = vld [vmem:[#allocation11 + $0x30] sm:$0xf]
    %v4045 = vld [vmem:[#allocation11 + $0x34] sm:$0xf]
    %v4046 = vld [vmem:[#allocation11 + $0x38] sm:$0xf]
    %v4047 = vld [vmem:[#allocation11 + $0x3c] sm:$0xf]
    %v4048 = vld [vmem:[#allocation11 + $0x40] sm:$0xf]
    %v4049 = vld [vmem:[#allocation11 + $0x44] sm:$0xf]
    %v4050 = vld [vmem:[#allocation11 + $0x48] sm:$0xf]
    %v4051 = vld [vmem:[#allocation11 + $0x4c] sm:$0xf]
    %v4052 = vld [vmem:[#allocation11 + $0x50] sm:$0xf]
    %v4053 = vld [vmem:[#allocation11 + $0x54] sm:$0xf]
    %v4054 = vld [vmem:[#allocation11 + $0x58] sm:$0xf]
    %v4055 = vld [vmem:[#allocation11 + $0x5c] sm:$0xf]
    %v4056 = vld [vmem:[#allocation11 + $0x60] sm:$0xf]
    %v4057 = vld [vmem:[#allocation11 + $0x64] sm:$0xf]
    %v4058 = vld [vmem:[#allocation11 + $0x68] sm:$0xf]
    %v4059 = vld [vmem:[#allocation11 + $0x6c] sm:$0xf]
    %v4060 = vld [vmem:[#allocation11 + $0x70] sm:$0xf]
    %v4061 = vld [vmem:[#allocation11 + $0x74] sm:$0xf]
    %v4062 = vld [vmem:[#allocation11 + $0x78] sm:$0xf]
    %v4063 = vld [vmem:[#allocation11 + $0x7c] sm:$0xf]
    %v4064 = vld [vmem:[#allocation11 + $0x80] sm:$0xf]
    %v4065 = vld [vmem:[#allocation11 + $0x84] sm:$0xf]
    %v4066 = vld [vmem:[#allocation11 + $0x88] sm:$0xf]
    %v4067 = vld [vmem:[#allocation11 + $0x8c] sm:$0xf]
    %v4068 = vld [vmem:[#allocation11 + $0x90] sm:$0xf]
    %v4069 = vld [vmem:[#allocation11 + $0x94] sm:$0xf]
    %v4070 = vld [vmem:[#allocation11 + $0x98] sm:$0xf]
    %v4071 = vld [vmem:[#allocation11 + $0x9c] sm:$0xf]
    %v4072 = vld [vmem:[#allocation11 + $0xa0] sm:$0xf]
    %v4073 = vld [vmem:[#allocation11 + $0xa4] sm:$0xf]
    %v4074 = vld [vmem:[#allocation11 + $0xa8] sm:$0xf]
    %v4075 = vld [vmem:[#allocation11 + $0xac] sm:$0xf]
    %v4076 = vld [vmem:[#allocation11 + $0xb0] sm:$0xf]
    %v4077 = vld [vmem:[#allocation11 + $0xb4] sm:$0xf]
    %v4078 = vld [vmem:[#allocation11 + $0xb8] sm:$0xf]
    %v4079 = vld [vmem:[#allocation11 + $0xbc] sm:$0xf]
    %v4080 = vld [vmem:[#allocation11 + $0xc0] sm:$0xf]
    %v4081 = vld [vmem:[#allocation11 + $0xc4] sm:$0xf]
    %v4082 = vld [vmem:[#allocation11 + $0xc8] sm:$0xf]
    %v4083 = vld [vmem:[#allocation11 + $0xcc] sm:$0xf]
    %v4084 = vld [vmem:[#allocation11 + $0xd0] sm:$0xf]
    %v4085 = vld [vmem:[#allocation11 + $0xd4] sm:$0xf]
    %v4086 = vld [vmem:[#allocation11 + $0xd8] sm:$0xf]
    %v4087 = vld [vmem:[#allocation11 + $0xdc] sm:$0xf]
    %v4088 = vld [vmem:[#allocation11 + $0xe0] sm:$0xf]
    %v4089 = vld [vmem:[#allocation11 + $0xe4] sm:$0xf]
    %v4090 = vld [vmem:[#allocation11 + $0xe8] sm:$0xf]
    %v4091 = vld [vmem:[#allocation11 + $0xec] sm:$0xf]
    %v4092 = vld [vmem:[#allocation11 + $0xf0] sm:$0xf]
    %v4093 = vld [vmem:[#allocation11 + $0xf4] sm:$0xf]
    %v4094 = vld [vmem:[#allocation11 + $0xf8] sm:$0xf]
    %v4095 = vld [vmem:[#allocation11 + $0xfc] sm:$0xf]
    %v4096 = vld [vmem:[#allocation11 + $0x100] sm:$0xf]
    %v4097 = vld [vmem:[#allocation11 + $0x104] sm:$0xf]
    %v4098 = vld [vmem:[#allocation11 + $0x108] sm:$0xf]
    %v4099 = vld [vmem:[#allocation11 + $0x10c] sm:$0xf]
    %v4100 = vld [vmem:[#allocation11 + $0x110] sm:$0xf]
    %v4101 = vld [vmem:[#allocation11 + $0x114] sm:$0xf]
    %v4102 = vld [vmem:[#allocation11 + $0x118] sm:$0xf]
    %v4103 = vld [vmem:[#allocation11 + $0x11c] sm:$0xf]
    %v4104 = vld [vmem:[#allocation11 + $0x120] sm:$0xf]
    %v4105 = vld [vmem:[#allocation11 + $0x124] sm:$0xf]
    %v4106 = vld [vmem:[#allocation11 + $0x128] sm:$0xf]
    %v4107 = vld [vmem:[#allocation11 + $0x12c] sm:$0xf]
    %v4108 = vld [vmem:[#allocation11 + $0x130] sm:$0xf]
    %v4109 = vld [vmem:[#allocation11 + $0x134] sm:$0xf]
    %v4110 = vld [vmem:[#allocation11 + $0x138] sm:$0xf]
    %v4111 = vld [vmem:[#allocation11 + $0x13c] sm:$0xf]
    %v4112 = vld [vmem:[#allocation11 + $0x140] sm:$0xf]
    %v4113 = vld [vmem:[#allocation11 + $0x144] sm:$0xf]
    %v4114 = vld [vmem:[#allocation11 + $0x148] sm:$0xf]
    %v4115 = vld [vmem:[#allocation11 + $0x14c] sm:$0xf]
    %v4116 = vld [vmem:[#allocation11 + $0x150] sm:$0xf]
    %v4117 = vld [vmem:[#allocation11 + $0x154] sm:$0xf]
    %v4118 = vld [vmem:[#allocation11 + $0x158] sm:$0xf]
    %v4119 = vld [vmem:[#allocation11 + $0x15c] sm:$0xf]
    %v4120 = vld [vmem:[#allocation11 + $0x160] sm:$0xf]
    %v4121 = vld [vmem:[#allocation11 + $0x164] sm:$0xf]
    %v4122 = vld [vmem:[#allocation11 + $0x168] sm:$0xf]
    %v4123 = vld [vmem:[#allocation11 + $0x16c] sm:$0xf]
    %v4124 = vld [vmem:[#allocation11 + $0x170] sm:$0xf]
    %v4125 = vld [vmem:[#allocation11 + $0x174] sm:$0xf]
    %v4126 = vld [vmem:[#allocation11 + $0x178] sm:$0xf]
    %v4127 = vld [vmem:[#allocation11 + $0x17c] sm:$0xf]
    %v4128 = vld [vmem:[#allocation11 + $0x180] sm:$0xf]
    %v4129 = vld [vmem:[#allocation11 + $0x184] sm:$0xf]
    %v4130 = vld [vmem:[#allocation11 + $0x188] sm:$0xf]
    %v4131 = vld [vmem:[#allocation11 + $0x18c] sm:$0xf]
    %v4132 = vld [vmem:[#allocation11 + $0x190] sm:$0xf]
    %v4133 = vld [vmem:[#allocation11 + $0x194] sm:$0xf]
    %v4134 = vld [vmem:[#allocation11 + $0x198] sm:$0xf]
    %v4135 = vld [vmem:[#allocation11 + $0x19c] sm:$0xf]
    %v4136 = vld [vmem:[#allocation11 + $0x1a0] sm:$0xf]
    %v4137 = vld [vmem:[#allocation11 + $0x1a4] sm:$0xf]
    %v4138 = vld [vmem:[#allocation11 + $0x1a8] sm:$0xf]
    %v4139 = vld [vmem:[#allocation11 + $0x1ac] sm:$0xf]
    %v4140 = vld [vmem:[#allocation11 + $0x1b0] sm:$0xf]
    %v4141 = vld [vmem:[#allocation11 + $0x1b4] sm:$0xf]
    %v4142 = vld [vmem:[#allocation11 + $0x1b8] sm:$0xf]
    %v4143 = vld [vmem:[#allocation11 + $0x1bc] sm:$0xf]
    %v4144 = vld [vmem:[#allocation11 + $0x1c0] sm:$0xf]
    %v4145 = vld [vmem:[#allocation11 + $0x1c4] sm:$0xf]
    %v4146 = vld [vmem:[#allocation11 + $0x1c8] sm:$0xf]
    %v4147 = vld [vmem:[#allocation11 + $0x1cc] sm:$0xf]
    %v4148 = vld [vmem:[#allocation11 + $0x1d0] sm:$0xf]
    %v4149 = vld [vmem:[#allocation11 + $0x1d4] sm:$0xf]
    %v4150 = vld [vmem:[#allocation11 + $0x1d8] sm:$0xf]
    %v4151 = vld [vmem:[#allocation11 + $0x1dc] sm:$0xf]
    %v4152 = vld [vmem:[#allocation11 + $0x1e0] sm:$0xf]
    %v4153 = vld [vmem:[#allocation11 + $0x1e4] sm:$0xf]
    %v4154 = vld [vmem:[#allocation11 + $0x1e8] sm:$0xf]
    %v4155 = vld [vmem:[#allocation11 + $0x1ec] sm:$0xf]
    %v4156 = vld [vmem:[#allocation11 + $0x1f0] sm:$0xf]
    %v4157 = vld [vmem:[#allocation11 + $0x1f4] sm:$0xf]
    %v4158 = vld [vmem:[#allocation11 + $0x1f8] sm:$0xf]
    %v4159 = vld [vmem:[#allocation11 + $0x1fc] sm:$0xf]
    %v4168 = vrot.slane %v4010, 1
    %v4169 = vrot.slane %v4013, 1
    %v4170 = vrot.slane %v4016, 1
    %v4171 = vrot.slane %v4019, 1
    %v4172 = vrot.slane %v4022, 1
    %v4173 = vrot.slane %v4025, 1
    %v4174 = vrot.slane %v4028, 1
    %v4175 = vrot.slane %v4031, 1
    %v4312 = vunpack.c.l.b16 %v4032
    %v4313 = vunpack.c.l.b16 %v4033
    %v4314 = vunpack.c.l.b16 %v4034
    %v4315 = vunpack.c.l.b16 %v4035
    %v4316 = vunpack.c.l.b16 %v4036
    %v4317 = vunpack.c.l.b16 %v4037
    %v4318 = vunpack.c.l.b16 %v4038
    %v4319 = vunpack.c.l.b16 %v4039
    %v4320 = vunpack.c.l.b16 %v4040
    %v4321 = vunpack.c.l.b16 %v4041
    %v4322 = vunpack.c.l.b16 %v4042
    %v4323 = vunpack.c.l.b16 %v4043
    %v4324 = vunpack.c.l.b16 %v4044
    %v4325 = vunpack.c.l.b16 %v4045
    %v4326 = vunpack.c.l.b16 %v4046
    %v4327 = vunpack.c.l.b16 %v4047
    %v4328 = vunpack.c.l.b16 %v4048
    %v4329 = vunpack.c.l.b16 %v4049
    %v4330 = vunpack.c.l.b16 %v4050
    %v4331 = vunpack.c.l.b16 %v4051
    %v4332 = vunpack.c.l.b16 %v4052
    %v4333 = vunpack.c.l.b16 %v4053
    %v4334 = vunpack.c.l.b16 %v4054
    %v4335 = vunpack.c.l.b16 %v4055
    %v4336 = vunpack.c.l.b16 %v4056
    %v4337 = vunpack.c.l.b16 %v4057
    %v4338 = vunpack.c.l.b16 %v4058
    %v4339 = vunpack.c.l.b16 %v4059
    %v4340 = vunpack.c.l.b16 %v4060
    %v4341 = vunpack.c.l.b16 %v4061
    %v4342 = vunpack.c.l.b16 %v4062
    %v4343 = vunpack.c.l.b16 %v4063
    %v4344 = vunpack.c.l.b16 %v4064
    %v4345 = vunpack.c.l.b16 %v4065
    %v4346 = vunpack.c.l.b16 %v4066
    %v4347 = vunpack.c.l.b16 %v4067
    %v4348 = vunpack.c.l.b16 %v4068
    %v4349 = vunpack.c.l.b16 %v4069
    %v4350 = vunpack.c.l.b16 %v4070
    %v4351 = vunpack.c.l.b16 %v4071
    %v4352 = vunpack.c.l.b16 %v4072
    %v4353 = vunpack.c.l.b16 %v4073
    %v4354 = vunpack.c.l.b16 %v4074
    %v4355 = vunpack.c.l.b16 %v4075
    %v4356 = vunpack.c.l.b16 %v4076
    %v4357 = vunpack.c.l.b16 %v4077
    %v4358 = vunpack.c.l.b16 %v4078
    %v4359 = vunpack.c.l.b16 %v4079
    %v4360 = vunpack.c.l.b16 %v4080
    %v4361 = vunpack.c.l.b16 %v4081
    %v4362 = vunpack.c.l.b16 %v4082
    %v4363 = vunpack.c.l.b16 %v4083
    %v4364 = vunpack.c.l.b16 %v4084
    %v4365 = vunpack.c.l.b16 %v4085
    %v4366 = vunpack.c.l.b16 %v4086
    %v4367 = vunpack.c.l.b16 %v4087
    %v4368 = vunpack.c.l.b16 %v4088
    %v4369 = vunpack.c.l.b16 %v4089
    %v4370 = vunpack.c.l.b16 %v4090
    %v4371 = vunpack.c.l.b16 %v4091
    %v4372 = vunpack.c.l.b16 %v4092
    %v4373 = vunpack.c.l.b16 %v4093
    %v4374 = vunpack.c.l.b16 %v4094
    %v4375 = vunpack.c.l.b16 %v4095
    %v4376 = vunpack.c.l.b16 %v4096
    %v4377 = vunpack.c.l.b16 %v4097
    %v4378 = vunpack.c.l.b16 %v4098
    %v4379 = vunpack.c.l.b16 %v4099
    %v4380 = vunpack.c.l.b16 %v4100
    %v4381 = vunpack.c.l.b16 %v4101
    %v4382 = vunpack.c.l.b16 %v4102
    %v4383 = vunpack.c.l.b16 %v4103
    %v4384 = vunpack.c.l.b16 %v4104
    %v4385 = vunpack.c.l.b16 %v4105
    %v4386 = vunpack.c.l.b16 %v4106
    %v4387 = vunpack.c.l.b16 %v4107
    %v4388 = vunpack.c.l.b16 %v4108
    %v4389 = vunpack.c.l.b16 %v4109
    %v4390 = vunpack.c.l.b16 %v4110
    %v4391 = vunpack.c.l.b16 %v4111
    %v4392 = vunpack.c.l.b16 %v4112
    %v4393 = vunpack.c.l.b16 %v4113
    %v4394 = vunpack.c.l.b16 %v4114
    %v4395 = vunpack.c.l.b16 %v4115
    %v4396 = vunpack.c.l.b16 %v4116
    %v4397 = vunpack.c.l.b16 %v4117
    %v4398 = vunpack.c.l.b16 %v4118
    %v4399 = vunpack.c.l.b16 %v4119
    %v4400 = vunpack.c.l.b16 %v4120
    %v4401 = vunpack.c.l.b16 %v4121
    %v4402 = vunpack.c.l.b16 %v4122
    %v4403 = vunpack.c.l.b16 %v4123
    %v4404 = vunpack.c.l.b16 %v4124
    %v4405 = vunpack.c.l.b16 %v4125
    %v4406 = vunpack.c.l.b16 %v4126
    %v4407 = vunpack.c.l.b16 %v4127
    %v4408 = vunpack.c.l.b16 %v4128
    %v4409 = vunpack.c.l.b16 %v4129
    %v4410 = vunpack.c.l.b16 %v4130
    %v4411 = vunpack.c.l.b16 %v4131
    %v4412 = vunpack.c.l.b16 %v4132
    %v4413 = vunpack.c.l.b16 %v4133
    %v4414 = vunpack.c.l.b16 %v4134
    %v4415 = vunpack.c.l.b16 %v4135
    %v4416 = vunpack.c.l.b16 %v4136
    %v4417 = vunpack.c.l.b16 %v4137
    %v4418 = vunpack.c.l.b16 %v4138
    %v4419 = vunpack.c.l.b16 %v4139
    %v4420 = vunpack.c.l.b16 %v4140
    %v4421 = vunpack.c.l.b16 %v4141
    %v4422 = vunpack.c.l.b16 %v4142
    %v4423 = vunpack.c.l.b16 %v4143
    %v4424 = vunpack.c.l.b16 %v4144
    %v4425 = vunpack.c.l.b16 %v4145
    %v4426 = vunpack.c.l.b16 %v4146
    %v4427 = vunpack.c.l.b16 %v4147
    %v4428 = vunpack.c.l.b16 %v4148
    %v4429 = vunpack.c.l.b16 %v4149
    %v4430 = vunpack.c.l.b16 %v4150
    %v4431 = vunpack.c.l.b16 %v4151
    %v4432 = vunpack.c.l.b16 %v4152
    %v4433 = vunpack.c.l.b16 %v4153
    %v4434 = vunpack.c.l.b16 %v4154
    %v4435 = vunpack.c.l.b16 %v4155
    %v4436 = vunpack.c.l.b16 %v4156
    %v4437 = vunpack.c.l.b16 %v4157
    %v4438 = vunpack.c.l.b16 %v4158
    %v4439 = vunpack.c.l.b16 %v4159
    %v4440 = vpack.c.b16 %v4313, %v4312
    %v4441 = vpack.c.b16 %v4315, %v4314
    %v4442 = vpack.c.b16 %v4317, %v4316
    %v4443 = vpack.c.b16 %v4319, %v4318
    %v4444 = vpack.c.b16 %v4321, %v4320
    %v4445 = vpack.c.b16 %v4323, %v4322
    %v4446 = vpack.c.b16 %v4325, %v4324
    %v4447 = vpack.c.b16 %v4327, %v4326
    %v4448 = vpack.c.b16 %v4329, %v4328
    %v4449 = vpack.c.b16 %v4331, %v4330
    %v4450 = vpack.c.b16 %v4333, %v4332
    %v4451 = vpack.c.b16 %v4335, %v4334
    %v4452 = vpack.c.b16 %v4337, %v4336
    %v4453 = vpack.c.b16 %v4339, %v4338
    %v4454 = vpack.c.b16 %v4341, %v4340
    %v4455 = vpack.c.b16 %v4343, %v4342
    %v4456 = vpack.c.b16 %v4345, %v4344
    %v4457 = vpack.c.b16 %v4347, %v4346
    %v4458 = vpack.c.b16 %v4349, %v4348
    %v4459 = vpack.c.b16 %v4351, %v4350
    %v4460 = vpack.c.b16 %v4353, %v4352
    %v4461 = vpack.c.b16 %v4355, %v4354
    %v4462 = vpack.c.b16 %v4357, %v4356
    %v4463 = vpack.c.b16 %v4359, %v4358
    %v4464 = vpack.c.b16 %v4361, %v4360
    %v4465 = vpack.c.b16 %v4363, %v4362
    %v4466 = vpack.c.b16 %v4365, %v4364
    %v4467 = vpack.c.b16 %v4367, %v4366
    %v4468 = vpack.c.b16 %v4369, %v4368
    %v4469 = vpack.c.b16 %v4371, %v4370
    %v4470 = vpack.c.b16 %v4373, %v4372
    %v4471 = vpack.c.b16 %v4375, %v4374
    %v4472 = vpack.c.b16 %v4377, %v4376
    %v4473 = vpack.c.b16 %v4379, %v4378
    %v4474 = vpack.c.b16 %v4381, %v4380
    %v4475 = vpack.c.b16 %v4383, %v4382
    %v4476 = vpack.c.b16 %v4385, %v4384
    %v4477 = vpack.c.b16 %v4387, %v4386
    %v4478 = vpack.c.b16 %v4389, %v4388
    %v4479 = vpack.c.b16 %v4391, %v4390
    %v4480 = vpack.c.b16 %v4393, %v4392
    %v4481 = vpack.c.b16 %v4395, %v4394
    %v4482 = vpack.c.b16 %v4397, %v4396
    %v4483 = vpack.c.b16 %v4399, %v4398
    %v4484 = vpack.c.b16 %v4401, %v4400
    %v4485 = vpack.c.b16 %v4403, %v4402
    %v4486 = vpack.c.b16 %v4405, %v4404
    %v4487 = vpack.c.b16 %v4407, %v4406
    %v4488 = vpack.c.b16 %v4409, %v4408
    %v4489 = vpack.c.b16 %v4411, %v4410
    %v4490 = vpack.c.b16 %v4413, %v4412
    %v4491 = vpack.c.b16 %v4415, %v4414
    %v4492 = vpack.c.b16 %v4417, %v4416
    %v4493 = vpack.c.b16 %v4419, %v4418
    %v4494 = vpack.c.b16 %v4421, %v4420
    %v4495 = vpack.c.b16 %v4423, %v4422
    %v4496 = vpack.c.b16 %v4425, %v4424
    %v4497 = vpack.c.b16 %v4427, %v4426
    %v4498 = vpack.c.b16 %v4429, %v4428
    %v4499 = vpack.c.b16 %v4431, %v4430
    %v4500 = vpack.c.b16 %v4433, %v4432
    %v4501 = vpack.c.b16 %v4435, %v4434
    %v4502 = vpack.c.b16 %v4437, %v4436
    %v4503 = vpack.c.b16 %v4439, %v4438
    %4568 = vmatprep.subr.bf16.mxu0 0
    %4569 = vmatpush1.bf16.msra.mxu0 %v4440
    %4570 = vmatprep.subr.bf16.mxu0 0
    %4571 = vmatpush1.bf16.msra.mxu0 %v4441
    %4572 = vmatprep.subr.bf16.mxu0 0
    %4573 = vmatpush1.bf16.msra.mxu0 %v4442
    %4574 = vmatprep.subr.bf16.mxu0 0
    %4575 = vmatpush1.bf16.msra.mxu0 %v4443
    %4576 = vmatprep.subr.bf16.mxu0 0
    %4577 = vmatpush1.bf16.msra.mxu0 %v4444
    %4578 = vmatprep.subr.bf16.mxu0 0
    %4579 = vmatpush1.bf16.msra.mxu0 %v4445
    %4580 = vmatprep.subr.bf16.mxu0 0
    %4581 = vmatpush1.bf16.msra.mxu0 %v4446
    %4582 = vmatprep.subr.bf16.mxu0 0
    %4583 = vmatpush1.bf16.msra.mxu0 %v4447
    %4584 = vmatprep.subr.bf16.mxu0 0
    %4585 = vmatpush1.bf16.msra.mxu0 %v4448
    %4586 = vmatprep.subr.bf16.mxu0 0
    %4587 = vmatpush1.bf16.msra.mxu0 %v4449
    %4588 = vmatprep.subr.bf16.mxu0 0
    %4589 = vmatpush1.bf16.msra.mxu0 %v4450
    %4590 = vmatprep.subr.bf16.mxu0 0
    %4591 = vmatpush1.bf16.msra.mxu0 %v4451
    %4592 = vmatprep.subr.bf16.mxu0 0
    %4593 = vmatpush1.bf16.msra.mxu0 %v4452
    %4594 = vmatprep.subr.bf16.mxu0 0
    %4595 = vmatpush1.bf16.msra.mxu0 %v4453
    %4596 = vmatprep.subr.bf16.mxu0 0
    %4597 = vmatpush1.bf16.msra.mxu0 %v4454
    %4598 = vmatprep.subr.bf16.mxu0 0
    %4599 = vmatpush1.bf16.msra.mxu0 %v4455
    %4600 = vmatprep.mubr.bf16.mxu0 %v4169
    %4601 = vmatmul.mubr.bf16.gmra.mrb[0].mxu0 %v4168
    %v4602 = vpop.f32.mrb[0].mxu0
    %v4603 = vadd.f32 0.0, %v4602
    %v4604 = vpop.f32.mrb[0].mxu0
    %v4605 = vpop.f32.mrb[0].mxu0
    %v4606 = vadd.f32 0.0, %v4605
    %v4607 = vpop.f32.mrb[0].mxu0
    %4608 = vdwg.mxu0
    %4609 = vmatprep.subr.bf16.mxu0 0
    %4610 = vmatpush1.bf16.msra.mxu0 %v4456
    %4611 = vmatprep.subr.bf16.mxu0 0
    %4612 = vmatpush1.bf16.msra.mxu0 %v4457
    %4613 = vmatprep.subr.bf16.mxu0 0
    %4614 = vmatpush1.bf16.msra.mxu0 %v4458
    %4615 = vmatprep.subr.bf16.mxu0 0
    %4616 = vmatpush1.bf16.msra.mxu0 %v4459
    %4617 = vmatprep.subr.bf16.mxu0 0
    %4618 = vmatpush1.bf16.msra.mxu0 %v4460
    %4619 = vmatprep.subr.bf16.mxu0 0
    %4620 = vmatpush1.bf16.msra.mxu0 %v4461
    %4621 = vmatprep.subr.bf16.mxu0 0
    %4622 = vmatpush1.bf16.msra.mxu0 %v4462
    %4623 = vmatprep.subr.bf16.mxu0 0
    %4624 = vmatpush1.bf16.msra.mxu0 %v4463
    %4625 = vmatprep.subr.bf16.mxu0 0
    %4626 = vmatpush1.bf16.msra.mxu0 %v4464
    %4627 = vmatprep.subr.bf16.mxu0 0
    %4628 = vmatpush1.bf16.msra.mxu0 %v4465
    %4629 = vmatprep.subr.bf16.mxu0 0
    %4630 = vmatpush1.bf16.msra.mxu0 %v4466
    %4631 = vmatprep.subr.bf16.mxu0 0
    %4632 = vmatpush1.bf16.msra.mxu0 %v4467
    %4633 = vmatprep.subr.bf16.mxu0 0
    %4634 = vmatpush1.bf16.msra.mxu0 %v4468
    %4635 = vmatprep.subr.bf16.mxu0 0
    %4636 = vmatpush1.bf16.msra.mxu0 %v4469
    %4637 = vmatprep.subr.bf16.mxu0 0
    %4638 = vmatpush1.bf16.msra.mxu0 %v4470
    %4639 = vmatprep.subr.bf16.mxu0 0
    %4640 = vmatpush1.bf16.msra.mxu0 %v4471
    %4641 = vmatprep.mubr.bf16.mxu0 %v4171
    %4642 = vmatmul.mubr.bf16.gmra.mrb[0].mxu0 %v4170
    %v4643 = vpop.f32.mrb[0].mxu0
    %v4644 = vadd.f32 %v4603, %v4643
    %v4645 = vpop.f32.mrb[0].mxu0
    %v4646 = vpop.f32.mrb[0].mxu0
    %v4647 = vadd.f32 %v4606, %v4646
    %v4648 = vpop.f32.mrb[0].mxu0
    %4649 = vdwg.mxu0
    %4650 = vmatprep.subr.bf16.mxu0 0
    %4651 = vmatpush1.bf16.msra.mxu0 %v4472
    %4652 = vmatprep.subr.bf16.mxu0 0
    %4653 = vmatpush1.bf16.msra.mxu0 %v4473
    %4654 = vmatprep.subr.bf16.mxu0 0
    %4655 = vmatpush1.bf16.msra.mxu0 %v4474
    %4656 = vmatprep.subr.bf16.mxu0 0
    %4657 = vmatpush1.bf16.msra.mxu0 %v4475
    %4658 = vmatprep.subr.bf16.mxu0 0
    %4659 = vmatpush1.bf16.msra.mxu0 %v4476
    %4660 = vmatprep.subr.bf16.mxu0 0
    %4661 = vmatpush1.bf16.msra.mxu0 %v4477
    %4662 = vmatprep.subr.bf16.mxu0 0
    %4663 = vmatpush1.bf16.msra.mxu0 %v4478
    %4664 = vmatprep.subr.bf16.mxu0 0
    %4665 = vmatpush1.bf16.msra.mxu0 %v4479
    %4666 = vmatprep.subr.bf16.mxu0 0
    %4667 = vmatpush1.bf16.msra.mxu0 %v4480
    %4668 = vmatprep.subr.bf16.mxu0 0
    %4669 = vmatpush1.bf16.msra.mxu0 %v4481
    %4670 = vmatprep.subr.bf16.mxu0 0
    %4671 = vmatpush1.bf16.msra.mxu0 %v4482
    %4672 = vmatprep.subr.bf16.mxu0 0
    %4673 = vmatpush1.bf16.msra.mxu0 %v4483
    %4674 = vmatprep.subr.bf16.mxu0 0
    %4675 = vmatpush1.bf16.msra.mxu0 %v4484
    %4676 = vmatprep.subr.bf16.mxu0 0
    %4677 = vmatpush1.bf16.msra.mxu0 %v4485
    %4678 = vmatprep.subr.bf16.mxu0 0
    %4679 = vmatpush1.bf16.msra.mxu0 %v4486
    %4680 = vmatprep.subr.bf16.mxu0 0
    %4681 = vmatpush1.bf16.msra.mxu0 %v4487
    %4682 = vmatprep.mubr.bf16.mxu0 %v4173
    %4683 = vmatmul.mubr.bf16.gmra.mrb[0].mxu0 %v4172
    %v4684 = vpop.f32.mrb[0].mxu0
    %v4685 = vadd.f32 %v4644, %v4684
    %v4686 = vpop.f32.mrb[0].mxu0
    %v4687 = vpop.f32.mrb[0].mxu0
    %v4688 = vadd.f32 %v4647, %v4687
    %v4689 = vpop.f32.mrb[0].mxu0
    %4690 = vdwg.mxu0
    %4691 = vmatprep.subr.bf16.mxu0 0
    %4692 = vmatpush1.bf16.msra.mxu0 %v4488
    %4693 = vmatprep.subr.bf16.mxu0 0
    %4694 = vmatpush1.bf16.msra.mxu0 %v4489
    %4695 = vmatprep.subr.bf16.mxu0 0
    %4696 = vmatpush1.bf16.msra.mxu0 %v4490
    %4697 = vmatprep.subr.bf16.mxu0 0
    %4698 = vmatpush1.bf16.msra.mxu0 %v4491
    %4699 = vmatprep.subr.bf16.mxu0 0
    %4700 = vmatpush1.bf16.msra.mxu0 %v4492
    %4701 = vmatprep.subr.bf16.mxu0 0
    %4702 = vmatpush1.bf16.msra.mxu0 %v4493
    %4703 = vmatprep.subr.bf16.mxu0 0
    %4704 = vmatpush1.bf16.msra.mxu0 %v4494
    %4705 = vmatprep.subr.bf16.mxu0 0
    %4706 = vmatpush1.bf16.msra.mxu0 %v4495
    %4707 = vmatprep.subr.bf16.mxu0 0
    %4708 = vmatpush1.bf16.msra.mxu0 %v4496
    %4709 = vmatprep.subr.bf16.mxu0 0
    %4710 = vmatpush1.bf16.msra.mxu0 %v4497
    %4711 = vmatprep.subr.bf16.mxu0 0
    %4712 = vmatpush1.bf16.msra.mxu0 %v4498
    %4713 = vmatprep.subr.bf16.mxu0 0
    %4714 = vmatpush1.bf16.msra.mxu0 %v4499
    %4715 = vmatprep.subr.bf16.mxu0 0
    %4716 = vmatpush1.bf16.msra.mxu0 %v4500
    %4717 = vmatprep.subr.bf16.mxu0 0
    %4718 = vmatpush1.bf16.msra.mxu0 %v4501
    %4719 = vmatprep.subr.bf16.mxu0 0
    %4720 = vmatpush1.bf16.msra.mxu0 %v4502
    %4721 = vmatprep.subr.bf16.mxu0 0
    %4722 = vmatpush1.bf16.msra.mxu0 %v4503
    %4723 = vmatprep.mubr.bf16.mxu0 %v4175
    %4724 = vmatmul.mubr.bf16.gmra.mrb[0].mxu0 %v4174
    %v4725 = vpop.f32.mrb[0].mxu0
    %v4726 = vadd.f32 %v4685, %v4725
    %v4727 = vpop.f32.mrb[0].mxu0
    %v4728 = vpop.f32.mrb[0].mxu0
    %v4729 = vadd.f32 %v4688, %v4728
    %v4730 = vpop.f32.mrb[0].mxu0
    %4731 = vdwg.mxu0
    %vm4732 = vcmp.ge.f32.partialorder %v4726, 0.0
    %vm4733 = vcmp.ge.f32.partialorder %v4729, 0.0
    %v4734 = vmul.f32 %v4726, 0.2
    %v4735 = vmul.f32 %v4729, 0.2
    %v4736 = vsel %vm4732, %v4726, %v4734
    %v4737 = vsel %vm4733, %v4729, %v4735
    %v4738 = vld [vmem:[#allocation13] sm:$0x1]
    %v4740 = vlaneseq
    %v4741 = vshrl.u32 %v4740, 7
    %v4742 = vsub.s32 0, %v4741
    %v4743 = vrot.slane %v4738, %v4742
    %v4745 = vmul.f32 %v4736, %v4743
    %v4746 = vmul.f32 %v4737, %v4743
    %v4747 = vld [vmem:[#allocation14] sm:$0x1]
    %v4749 = vlaneseq
    %v4750 = vshrl.u32 %v4749, 7
    %v4751 = vsub.s32 0, %v4750
    %v4752 = vrot.slane %v4747, %v4751
    %v4754 = vadd.f32 %v4745, %v4752
    %v4755 = vadd.f32 %v4746, %v4752
    %v4756 = vpack.c.bf16 %v4755, %v4754
    %v4758 = vunpack.c.l.b16 %v4756
    %v4759 = vunpack.c.h.b16 %v4756
    %v4760 = vpack.c.b16 %v4758, %v4758
    %v4761 = vpack.c.b16 %v4759, %v4759
    %v4762 = vrot.slane %v4760, 6
    %v4763 = vrot.slane %v4762, 4
    %v4764 = vrot.slane %v4761, 6
    %v4765 = vsel %vm2935, %v4763, %v4764
    %4768 = vst [vmem:[#allocation3 + $0x10] sm:$0xc] %v4762
    %4769 = vst [vmem:[#allocation3 + $0x14] sm:$0xf] %v4765
    %v4770 = vld [vmem:[#allocation2 + $0x1c] sm:$0xf]
    %v4771 = vld [vmem:[#allocation2 + $0x20] sm:$0x3]
    %v4772 = vld [vmem:[#allocation2 + $0x4c] sm:$0xe]
    %v4773 = vld [vmem:[#allocation2 + $0x50] sm:$0x7]
    %v4774 = vld [vmem:[#allocation2 + $0x1c] sm:$0xe]
    %v4775 = vld [vmem:[#allocation2 + $0x20] sm:$0x7]
    %v4776 = vld [vmem:[#allocation2 + $0x4c] sm:$0xc]
    %v4777 = vld [vmem:[#allocation2 + $0x50] sm:$0xf]
    %v4778 = vld [vmem:[#allocation2 + $0x7c] sm:$0xc]
    %v4779 = vld [vmem:[#allocation2 + $0x80] sm:$0xf]
    %v4780 = vld [vmem:[#allocation2 + $0xac] sm:$0x8]
    %v4781 = vld [vmem:[#allocation2 + $0xb0] sm:$0xf]
    %v4782 = vld [vmem:[#allocation2 + $0xb4] sm:$0x1]
    %v4783 = vld [vmem:[#allocation2 + $0x7c] sm:$0x8]
    %v4784 = vld [vmem:[#allocation2 + $0x84] sm:$0x1]
    %v4785 = vld [vmem:[#allocation2 + $0xb4] sm:$0x3]
    %v4786 = vld [vmem:[#allocation2 + $0x20] sm:$0x8]
    %v4787 = vld [vmem:[#allocation2 + $0x24] sm:$0xf]
    %v4788 = vld [vmem:[#allocation2 + $0x28] sm:$0x1]
    %v4789 = vld [vmem:[#allocation2 + $0x54] sm:$0xf]
    %v4790 = vld [vmem:[#allocation2 + $0x58] sm:$0x3]
    %v4791 = vld [vmem:[#allocation2 + $0x28] sm:$0x3]
    %v4792 = vld [vmem:[#allocation2 + $0x54] sm:$0xe]
    %v4793 = vld [vmem:[#allocation2 + $0x58] sm:$0x7]
    %v4794 = vld [vmem:[#allocation2 + $0x84] sm:$0xe]
    %v4795 = vld [vmem:[#allocation2 + $0x88] sm:$0x7]
    %v4796 = vld [vmem:[#allocation2 + $0xb4] sm:$0xc]
    %v4797 = vld [vmem:[#allocation2 + $0xb8] sm:$0xf]
    %v4798 = vld [vmem:[#allocation2 + $0x84] sm:$0xc]
    %v4799 = vld [vmem:[#allocation2 + $0x88] sm:$0xf]
    %v4800 = vld [vmem:[#allocation2 + $0xb4] sm:$0x8]
    %v4801 = vld [vmem:[#allocation2 + $0xbc] sm:$0x1]
    %v4804 = vunpack.c.l.b16 %v4770
    %v4805 = vunpack.c.l.b16 %v4771
    %v4806 = vpack.c.b16 %v4805, %v4804
    %v4809 = vunpack.c.l.b16 %v4772
    %v4810 = vunpack.c.l.b16 %v4773
    %v4811 = vpack.c.b16 %v4810, %v4809
    %v4812 = vrot.slane %v4811, 1
    %4813 = vrot.lane.b32.xlu0 %v4812, 64
    %v4814 = vpop.permute.xlu0 %4813
    %v4817 = vunpack.c.l.b16 %v4774
    %v4818 = vunpack.c.l.b16 %v4775
    %v4819 = vpack.c.b16 %v4818, %v4817
    %v4820 = vrot.slane %v4819, 1
    %v4823 = vunpack.c.l.b16 %v4776
    %v4824 = vunpack.c.l.b16 %v4777
    %v4825 = vpack.c.b16 %v4824, %v4823
    %v4826 = vrot.slane %v4825, 2
    %4827 = vrot.lane.b32.xlu0 %v4826, 64
    %v4828 = vpop.permute.xlu0 %4827
    %v4831 = vunpack.c.l.b16 %v4778
    %v4832 = vunpack.c.l.b16 %v4779
    %v4833 = vpack.c.b16 %v4832, %v4831
    %v4834 = vrot.slane %v4833, 2
    %v4838 = vunpack.c.l.b16 %v4780
    %v4839 = vunpack.c.l.b16 %v4781
    %v4840 = vunpack.c.l.b16 %v4782
    %v4841 = vpack.c.b16 %v4839, %v4838
    %v4842 = vpack.c.b16 %v4840, %v4840
    %v4843 = vrot.slane %v4841, 3
    %v4844 = vrot.slane %v4842, 3
    %v4845 = vsel %vm1184, %v4843, %v4844
    %4846 = vrot.lane.b32.xlu0 %v4845, 64
    %v4847 = vpop.permute.xlu0 %4846
    %v4850 = vunpack.c.l.b16 %v4783
    %v4851 = vunpack.c.l.b16 %v4784
    %v4852 = vpack.c.b16 %v4832, %v4850
    %v4853 = vpack.c.b16 %v4851, %v4851
    %v4854 = vrot.slane %v4852, 3
    %v4855 = vrot.slane %v4853, 3
    %v4856 = vsel %vm1184, %v4854, %v4855
    %v4858 = vunpack.c.l.b16 %v4785
    %v4859 = vpack.c.b16 %v4858, %v4839
    %4860 = vrot.lane.b32.xlu0 %v4859, 64
    %v4861 = vpop.permute.xlu0 %4860
    %v4865 = vunpack.c.l.b16 %v4786
    %v4866 = vunpack.c.l.b16 %v4787
    %v4867 = vunpack.c.l.b16 %v4788
    %v4868 = vpack.c.b16 %v4866, %v4865
    %v4869 = vpack.c.b16 %v4867, %v4867
    %v4870 = vrot.slane %v4868, 3
    %v4871 = vrot.slane %v4869, 3
    %v4872 = vsel %vm1184, %v4870, %v4871
    %v4875 = vunpack.c.l.b16 %v4789
    %v4876 = vunpack.c.l.b16 %v4790
    %v4877 = vpack.c.b16 %v4876, %v4875
    %4878 = vrot.lane.b32.xlu0 %v4877, 64
    %v4879 = vpop.permute.xlu0 %4878
    %v4881 = vunpack.c.l.b16 %v4791
    %v4882 = vpack.c.b16 %v4881, %v4866
    %v4885 = vunpack.c.l.b16 %v4792
    %v4886 = vunpack.c.l.b16 %v4793
    %v4887 = vpack.c.b16 %v4886, %v4885
    %v4888 = vrot.slane %v4887, 1
    %4889 = vrot.lane.b32.xlu0 %v4888, 64
    %v4890 = vpop.permute.xlu0 %4889
    %v4893 = vunpack.c.l.b16 %v4794
    %v4894 = vunpack.c.l.b16 %v4795
    %v4895 = vpack.c.b16 %v4894, %v4893
    %v4896 = vrot.slane %v4895, 1
    %v4899 = vunpack.c.l.b16 %v4796
    %v4900 = vunpack.c.l.b16 %v4797
    %v4901 = vpack.c.b16 %v4900, %v4899
    %v4902 = vrot.slane %v4901, 2
    %4903 = vrot.lane.b32.xlu0 %v4902, 64
    %v4904 = vpop.permute.xlu0 %4903
    %v4907 = vunpack.c.l.b16 %v4798
    %v4908 = vunpack.c.l.b16 %v4799
    %v4909 = vpack.c.b16 %v4908, %v4907
    %v4910 = vrot.slane %v4909, 2
    %v4913 = vunpack.c.l.b16 %v4800
    %v4914 = vunpack.c.l.b16 %v4801
    %v4915 = vpack.c.b16 %v4900, %v4913
    %v4916 = vpack.c.b16 %v4914, %v4914
    %v4917 = vrot.slane %v4915, 3
    %v4918 = vrot.slane %v4916, 3
    %v4919 = vsel %vm1184, %v4917, %v4918
    %4920 = vrot.lane.b32.xlu0 %v4919, 64
    %v4921 = vpop.permute.xlu0 %4920
    %v4924 = vsel %vm1264, %v4806, %v4814
    %v4928 = vsel %vm1264, %v4820, %v4828
    %v4932 = vsel %vm1264, %v4834, %v4847
    %v4936 = vsel %vm1264, %v4856, %v4861
    %v4940 = vsel %vm1264, %v4872, %v4879
    %v4944 = vsel %vm1264, %v4882, %v4890
    %v4948 = vsel %vm1264, %v4896, %v4904
    %v4952 = vsel %vm1264, %v4910, %v4921
    %v4954 = vld [vmem:[#allocation11] sm:$0xf]
    %v4955 = vld [vmem:[#allocation11 + $0x4] sm:$0xf]
    %v4956 = vld [vmem:[#allocation11 + $0x8] sm:$0xf]
    %v4957 = vld [vmem:[#allocation11 + $0xc] sm:$0xf]
    %v4958 = vld [vmem:[#allocation11 + $0x10] sm:$0xf]
    %v4959 = vld [vmem:[#allocation11 + $0x14] sm:$0xf]
    %v4960 = vld [vmem:[#allocation11 + $0x18] sm:$0xf]
    %v4961 = vld [vmem:[#allocation11 + $0x1c] sm:$0xf]
    %v4962 = vld [vmem:[#allocation11 + $0x20] sm:$0xf]
    %v4963 = vld [vmem:[#allocation11 + $0x24] sm:$0xf]
    %v4964 = vld [vmem:[#allocation11 + $0x28] sm:$0xf]
    %v4965 = vld [vmem:[#allocation11 + $0x2c] sm:$0xf]
    %v4966 = vld [vmem:[#allocation11 + $0x30] sm:$0xf]
    %v4967 = vld [vmem:[#allocation11 + $0x34] sm:$0xf]
    %v4968 = vld [vmem:[#allocation11 + $0x38] sm:$0xf]
    %v4969 = vld [vmem:[#allocation11 + $0x3c] sm:$0xf]
    %v4970 = vld [vmem:[#allocation11 + $0x40] sm:$0xf]
    %v4971 = vld [vmem:[#allocation11 + $0x44] sm:$0xf]
    %v4972 = vld [vmem:[#allocation11 + $0x48] sm:$0xf]
    %v4973 = vld [vmem:[#allocation11 + $0x4c] sm:$0xf]
    %v4974 = vld [vmem:[#allocation11 + $0x50] sm:$0xf]
    %v4975 = vld [vmem:[#allocation11 + $0x54] sm:$0xf]
    %v4976 = vld [vmem:[#allocation11 + $0x58] sm:$0xf]
    %v4977 = vld [vmem:[#allocation11 + $0x5c] sm:$0xf]
    %v4978 = vld [vmem:[#allocation11 + $0x60] sm:$0xf]
    %v4979 = vld [vmem:[#allocation11 + $0x64] sm:$0xf]
    %v4980 = vld [vmem:[#allocation11 + $0x68] sm:$0xf]
    %v4981 = vld [vmem:[#allocation11 + $0x6c] sm:$0xf]
    %v4982 = vld [vmem:[#allocation11 + $0x70] sm:$0xf]
    %v4983 = vld [vmem:[#allocation11 + $0x74] sm:$0xf]
    %v4984 = vld [vmem:[#allocation11 + $0x78] sm:$0xf]
    %v4985 = vld [vmem:[#allocation11 + $0x7c] sm:$0xf]
    %v4986 = vld [vmem:[#allocation11 + $0x80] sm:$0xf]
    %v4987 = vld [vmem:[#allocation11 + $0x84] sm:$0xf]
    %v4988 = vld [vmem:[#allocation11 + $0x88] sm:$0xf]
    %v4989 = vld [vmem:[#allocation11 + $0x8c] sm:$0xf]
    %v4990 = vld [vmem:[#allocation11 + $0x90] sm:$0xf]
    %v4991 = vld [vmem:[#allocation11 + $0x94] sm:$0xf]
    %v4992 = vld [vmem:[#allocation11 + $0x98] sm:$0xf]
    %v4993 = vld [vmem:[#allocation11 + $0x9c] sm:$0xf]
    %v4994 = vld [vmem:[#allocation11 + $0xa0] sm:$0xf]
    %v4995 = vld [vmem:[#allocation11 + $0xa4] sm:$0xf]
    %v4996 = vld [vmem:[#allocation11 + $0xa8] sm:$0xf]
    %v4997 = vld [vmem:[#allocation11 + $0xac] sm:$0xf]
    %v4998 = vld [vmem:[#allocation11 + $0xb0] sm:$0xf]
    %v4999 = vld [vmem:[#allocation11 + $0xb4] sm:$0xf]
    %v5000 = vld [vmem:[#allocation11 + $0xb8] sm:$0xf]
    %v5001 = vld [vmem:[#allocation11 + $0xbc] sm:$0xf]
    %v5002 = vld [vmem:[#allocation11 + $0xc0] sm:$0xf]
    %v5003 = vld [vmem:[#allocation11 + $0xc4] sm:$0xf]
    %v5004 = vld [vmem:[#allocation11 + $0xc8] sm:$0xf]
    %v5005 = vld [vmem:[#allocation11 + $0xcc] sm:$0xf]
    %v5006 = vld [vmem:[#allocation11 + $0xd0] sm:$0xf]
    %v5007 = vld [vmem:[#allocation11 + $0xd4] sm:$0xf]
    %v5008 = vld [vmem:[#allocation11 + $0xd8] sm:$0xf]
    %v5009 = vld [vmem:[#allocation11 + $0xdc] sm:$0xf]
    %v5010 = vld [vmem:[#allocation11 + $0xe0] sm:$0xf]
    %v5011 = vld [vmem:[#allocation11 + $0xe4] sm:$0xf]
    %v5012 = vld [vmem:[#allocation11 + $0xe8] sm:$0xf]
    %v5013 = vld [vmem:[#allocation11 + $0xec] sm:$0xf]
    %v5014 = vld [vmem:[#allocation11 + $0xf0] sm:$0xf]
    %v5015 = vld [vmem:[#allocation11 + $0xf4] sm:$0xf]
    %v5016 = vld [vmem:[#allocation11 + $0xf8] sm:$0xf]
    %v5017 = vld [vmem:[#allocation11 + $0xfc] sm:$0xf]
    %v5018 = vld [vmem:[#allocation11 + $0x100] sm:$0xf]
    %v5019 = vld [vmem:[#allocation11 + $0x104] sm:$0xf]
    %v5020 = vld [vmem:[#allocation11 + $0x108] sm:$0xf]
    %v5021 = vld [vmem:[#allocation11 + $0x10c] sm:$0xf]
    %v5022 = vld [vmem:[#allocation11 + $0x110] sm:$0xf]
    %v5023 = vld [vmem:[#allocation11 + $0x114] sm:$0xf]
    %v5024 = vld [vmem:[#allocation11 + $0x118] sm:$0xf]
    %v5025 = vld [vmem:[#allocation11 + $0x11c] sm:$0xf]
    %v5026 = vld [vmem:[#allocation11 + $0x120] sm:$0xf]
    %v5027 = vld [vmem:[#allocation11 + $0x124] sm:$0xf]
    %v5028 = vld [vmem:[#allocation11 + $0x128] sm:$0xf]
    %v5029 = vld [vmem:[#allocation11 + $0x12c] sm:$0xf]
    %v5030 = vld [vmem:[#allocation11 + $0x130] sm:$0xf]
    %v5031 = vld [vmem:[#allocation11 + $0x134] sm:$0xf]
    %v5032 = vld [vmem:[#allocation11 + $0x138] sm:$0xf]
    %v5033 = vld [vmem:[#allocation11 + $0x13c] sm:$0xf]
    %v5034 = vld [vmem:[#allocation11 + $0x140] sm:$0xf]
    %v5035 = vld [vmem:[#allocation11 + $0x144] sm:$0xf]
    %v5036 = vld [vmem:[#allocation11 + $0x148] sm:$0xf]
    %v5037 = vld [vmem:[#allocation11 + $0x14c] sm:$0xf]
    %v5038 = vld [vmem:[#allocation11 + $0x150] sm:$0xf]
    %v5039 = vld [vmem:[#allocation11 + $0x154] sm:$0xf]
    %v5040 = vld [vmem:[#allocation11 + $0x158] sm:$0xf]
    %v5041 = vld [vmem:[#allocation11 + $0x15c] sm:$0xf]
    %v5042 = vld [vmem:[#allocation11 + $0x160] sm:$0xf]
    %v5043 = vld [vmem:[#allocation11 + $0x164] sm:$0xf]
    %v5044 = vld [vmem:[#allocation11 + $0x168] sm:$0xf]
    %v5045 = vld [vmem:[#allocation11 + $0x16c] sm:$0xf]
    %v5046 = vld [vmem:[#allocation11 + $0x170] sm:$0xf]
    %v5047 = vld [vmem:[#allocation11 + $0x174] sm:$0xf]
    %v5048 = vld [vmem:[#allocation11 + $0x178] sm:$0xf]
    %v5049 = vld [vmem:[#allocation11 + $0x17c] sm:$0xf]
    %v5050 = vld [vmem:[#allocation11 + $0x180] sm:$0xf]
    %v5051 = vld [vmem:[#allocation11 + $0x184] sm:$0xf]
    %v5052 = vld [vmem:[#allocation11 + $0x188] sm:$0xf]
    %v5053 = vld [vmem:[#allocation11 + $0x18c] sm:$0xf]
    %v5054 = vld [vmem:[#allocation11 + $0x190] sm:$0xf]
    %v5055 = vld [vmem:[#allocation11 + $0x194] sm:$0xf]
    %v5056 = vld [vmem:[#allocation11 + $0x198] sm:$0xf]
    %v5057 = vld [vmem:[#allocation11 + $0x19c] sm:$0xf]
    %v5058 = vld [vmem:[#allocation11 + $0x1a0] sm:$0xf]
    %v5059 = vld [vmem:[#allocation11 + $0x1a4] sm:$0xf]
    %v5060 = vld [vmem:[#allocation11 + $0x1a8] sm:$0xf]
    %v5061 = vld [vmem:[#allocation11 + $0x1ac] sm:$0xf]
    %v5062 = vld [vmem:[#allocation11 + $0x1b0] sm:$0xf]
    %v5063 = vld [vmem:[#allocation11 + $0x1b4] sm:$0xf]
    %v5064 = vld [vmem:[#allocation11 + $0x1b8] sm:$0xf]
    %v5065 = vld [vmem:[#allocation11 + $0x1bc] sm:$0xf]
    %v5066 = vld [vmem:[#allocation11 + $0x1c0] sm:$0xf]
    %v5067 = vld [vmem:[#allocation11 + $0x1c4] sm:$0xf]
    %v5068 = vld [vmem:[#allocation11 + $0x1c8] sm:$0xf]
    %v5069 = vld [vmem:[#allocation11 + $0x1cc] sm:$0xf]
    %v5070 = vld [vmem:[#allocation11 + $0x1d0] sm:$0xf]
    %v5071 = vld [vmem:[#allocation11 + $0x1d4] sm:$0xf]
    %v5072 = vld [vmem:[#allocation11 + $0x1d8] sm:$0xf]
    %v5073 = vld [vmem:[#allocation11 + $0x1dc] sm:$0xf]
    %v5074 = vld [vmem:[#allocation11 + $0x1e0] sm:$0xf]
    %v5075 = vld [vmem:[#allocation11 + $0x1e4] sm:$0xf]
    %v5076 = vld [vmem:[#allocation11 + $0x1e8] sm:$0xf]
    %v5077 = vld [vmem:[#allocation11 + $0x1ec] sm:$0xf]
    %v5078 = vld [vmem:[#allocation11 + $0x1f0] sm:$0xf]
    %v5079 = vld [vmem:[#allocation11 + $0x1f4] sm:$0xf]
    %v5080 = vld [vmem:[#allocation11 + $0x1f8] sm:$0xf]
    %v5081 = vld [vmem:[#allocation11 + $0x1fc] sm:$0xf]
    %v5210 = vunpack.c.l.b16 %v4954
    %v5211 = vunpack.c.l.b16 %v4955
    %v5212 = vunpack.c.l.b16 %v4956
    %v5213 = vunpack.c.l.b16 %v4957
    %v5214 = vunpack.c.l.b16 %v4958
    %v5215 = vunpack.c.l.b16 %v4959
    %v5216 = vunpack.c.l.b16 %v4960
    %v5217 = vunpack.c.l.b16 %v4961
    %v5218 = vunpack.c.l.b16 %v4962
    %v5219 = vunpack.c.l.b16 %v4963
    %v5220 = vunpack.c.l.b16 %v4964
    %v5221 = vunpack.c.l.b16 %v4965
    %v5222 = vunpack.c.l.b16 %v4966
    %v5223 = vunpack.c.l.b16 %v4967
    %v5224 = vunpack.c.l.b16 %v4968
    %v5225 = vunpack.c.l.b16 %v4969
    %v5226 = vunpack.c.l.b16 %v4970
    %v5227 = vunpack.c.l.b16 %v4971
    %v5228 = vunpack.c.l.b16 %v4972
    %v5229 = vunpack.c.l.b16 %v4973
    %v5230 = vunpack.c.l.b16 %v4974
    %v5231 = vunpack.c.l.b16 %v4975
    %v5232 = vunpack.c.l.b16 %v4976
    %v5233 = vunpack.c.l.b16 %v4977
    %v5234 = vunpack.c.l.b16 %v4978
    %v5235 = vunpack.c.l.b16 %v4979
    %v5236 = vunpack.c.l.b16 %v4980
    %v5237 = vunpack.c.l.b16 %v4981
    %v5238 = vunpack.c.l.b16 %v4982
    %v5239 = vunpack.c.l.b16 %v4983
    %v5240 = vunpack.c.l.b16 %v4984
    %v5241 = vunpack.c.l.b16 %v4985
    %v5242 = vunpack.c.l.b16 %v4986
    %v5243 = vunpack.c.l.b16 %v4987
    %v5244 = vunpack.c.l.b16 %v4988
    %v5245 = vunpack.c.l.b16 %v4989
    %v5246 = vunpack.c.l.b16 %v4990
    %v5247 = vunpack.c.l.b16 %v4991
    %v5248 = vunpack.c.l.b16 %v4992
    %v5249 = vunpack.c.l.b16 %v4993
    %v5250 = vunpack.c.l.b16 %v4994
    %v5251 = vunpack.c.l.b16 %v4995
    %v5252 = vunpack.c.l.b16 %v4996
    %v5253 = vunpack.c.l.b16 %v4997
    %v5254 = vunpack.c.l.b16 %v4998
    %v5255 = vunpack.c.l.b16 %v4999
    %v5256 = vunpack.c.l.b16 %v5000
    %v5257 = vunpack.c.l.b16 %v5001
    %v5258 = vunpack.c.l.b16 %v5002
    %v5259 = vunpack.c.l.b16 %v5003
    %v5260 = vunpack.c.l.b16 %v5004
    %v5261 = vunpack.c.l.b16 %v5005
    %v5262 = vunpack.c.l.b16 %v5006
    %v5263 = vunpack.c.l.b16 %v5007
    %v5264 = vunpack.c.l.b16 %v5008
    %v5265 = vunpack.c.l.b16 %v5009
    %v5266 = vunpack.c.l.b16 %v5010
    %v5267 = vunpack.c.l.b16 %v5011
    %v5268 = vunpack.c.l.b16 %v5012
    %v5269 = vunpack.c.l.b16 %v5013
    %v5270 = vunpack.c.l.b16 %v5014
    %v5271 = vunpack.c.l.b16 %v5015
    %v5272 = vunpack.c.l.b16 %v5016
    %v5273 = vunpack.c.l.b16 %v5017
    %v5274 = vunpack.c.l.b16 %v5018
    %v5275 = vunpack.c.l.b16 %v5019
    %v5276 = vunpack.c.l.b16 %v5020
    %v5277 = vunpack.c.l.b16 %v5021
    %v5278 = vunpack.c.l.b16 %v5022
    %v5279 = vunpack.c.l.b16 %v5023
    %v5280 = vunpack.c.l.b16 %v5024
    %v5281 = vunpack.c.l.b16 %v5025
    %v5282 = vunpack.c.l.b16 %v5026
    %v5283 = vunpack.c.l.b16 %v5027
    %v5284 = vunpack.c.l.b16 %v5028
    %v5285 = vunpack.c.l.b16 %v5029
    %v5286 = vunpack.c.l.b16 %v5030
    %v5287 = vunpack.c.l.b16 %v5031
    %v5288 = vunpack.c.l.b16 %v5032
    %v5289 = vunpack.c.l.b16 %v5033
    %v5290 = vunpack.c.l.b16 %v5034
    %v5291 = vunpack.c.l.b16 %v5035
    %v5292 = vunpack.c.l.b16 %v5036
    %v5293 = vunpack.c.l.b16 %v5037
    %v5294 = vunpack.c.l.b16 %v5038
    %v5295 = vunpack.c.l.b16 %v5039
    %v5296 = vunpack.c.l.b16 %v5040
    %v5297 = vunpack.c.l.b16 %v5041
    %v5298 = vunpack.c.l.b16 %v5042
    %v5299 = vunpack.c.l.b16 %v5043
    %v5300 = vunpack.c.l.b16 %v5044
    %v5301 = vunpack.c.l.b16 %v5045
    %v5302 = vunpack.c.l.b16 %v5046
    %v5303 = vunpack.c.l.b16 %v5047
    %v5304 = vunpack.c.l.b16 %v5048
    %v5305 = vunpack.c.l.b16 %v5049
    %v5306 = vunpack.c.l.b16 %v5050
    %v5307 = vunpack.c.l.b16 %v5051
    %v5308 = vunpack.c.l.b16 %v5052
    %v5309 = vunpack.c.l.b16 %v5053
    %v5310 = vunpack.c.l.b16 %v5054
    %v5311 = vunpack.c.l.b16 %v5055
    %v5312 = vunpack.c.l.b16 %v5056
    %v5313 = vunpack.c.l.b16 %v5057
    %v5314 = vunpack.c.l.b16 %v5058
    %v5315 = vunpack.c.l.b16 %v5059
    %v5316 = vunpack.c.l.b16 %v5060
    %v5317 = vunpack.c.l.b16 %v5061
    %v5318 = vunpack.c.l.b16 %v5062
    %v5319 = vunpack.c.l.b16 %v5063
    %v5320 = vunpack.c.l.b16 %v5064
    %v5321 = vunpack.c.l.b16 %v5065
    %v5322 = vunpack.c.l.b16 %v5066
    %v5323 = vunpack.c.l.b16 %v5067
    %v5324 = vunpack.c.l.b16 %v5068
    %v5325 = vunpack.c.l.b16 %v5069
    %v5326 = vunpack.c.l.b16 %v5070
    %v5327 = vunpack.c.l.b16 %v5071
    %v5328 = vunpack.c.l.b16 %v5072
    %v5329 = vunpack.c.l.b16 %v5073
    %v5330 = vunpack.c.l.b16 %v5074
    %v5331 = vunpack.c.l.b16 %v5075
    %v5332 = vunpack.c.l.b16 %v5076
    %v5333 = vunpack.c.l.b16 %v5077
    %v5334 = vunpack.c.l.b16 %v5078
    %v5335 = vunpack.c.l.b16 %v5079
    %v5336 = vunpack.c.l.b16 %v5080
    %v5337 = vunpack.c.l.b16 %v5081
    %v5338 = vpack.c.b16 %v5211, %v5210
    %v5339 = vpack.c.b16 %v5213, %v5212
    %v5340 = vpack.c.b16 %v5215, %v5214
    %v5341 = vpack.c.b16 %v5217, %v5216
    %v5342 = vpack.c.b16 %v5219, %v5218
    %v5343 = vpack.c.b16 %v5221, %v5220
    %v5344 = vpack.c.b16 %v5223, %v5222
    %v5345 = vpack.c.b16 %v5225, %v5224
    %v5346 = vpack.c.b16 %v5227, %v5226
    %v5347 = vpack.c.b16 %v5229, %v5228
    %v5348 = vpack.c.b16 %v5231, %v5230
    %v5349 = vpack.c.b16 %v5233, %v5232
    %v5350 = vpack.c.b16 %v5235, %v5234
    %v5351 = vpack.c.b16 %v5237, %v5236
    %v5352 = vpack.c.b16 %v5239, %v5238
    %v5353 = vpack.c.b16 %v5241, %v5240
    %v5354 = vpack.c.b16 %v5243, %v5242
    %v5355 = vpack.c.b16 %v5245, %v5244
    %v5356 = vpack.c.b16 %v5247, %v5246
    %v5357 = vpack.c.b16 %v5249, %v5248
    %v5358 = vpack.c.b16 %v5251, %v5250
    %v5359 = vpack.c.b16 %v5253, %v5252
    %v5360 = vpack.c.b16 %v5255, %v5254
    %v5361 = vpack.c.b16 %v5257, %v5256
    %v5362 = vpack.c.b16 %v5259, %v5258
    %v5363 = vpack.c.b16 %v5261, %v5260
    %v5364 = vpack.c.b16 %v5263, %v5262
    %v5365 = vpack.c.b16 %v5265, %v5264
    %v5366 = vpack.c.b16 %v5267, %v5266
    %v5367 = vpack.c.b16 %v5269, %v5268
    %v5368 = vpack.c.b16 %v5271, %v5270
    %v5369 = vpack.c.b16 %v5273, %v5272
    %v5370 = vpack.c.b16 %v5275, %v5274
    %v5371 = vpack.c.b16 %v5277, %v5276
    %v5372 = vpack.c.b16 %v5279, %v5278
    %v5373 = vpack.c.b16 %v5281, %v5280
    %v5374 = vpack.c.b16 %v5283, %v5282
    %v5375 = vpack.c.b16 %v5285, %v5284
    %v5376 = vpack.c.b16 %v5287, %v5286
    %v5377 = vpack.c.b16 %v5289, %v5288
    %v5378 = vpack.c.b16 %v5291, %v5290
    %v5379 = vpack.c.b16 %v5293, %v5292
    %v5380 = vpack.c.b16 %v5295, %v5294
    %v5381 = vpack.c.b16 %v5297, %v5296
    %v5382 = vpack.c.b16 %v5299, %v5298
    %v5383 = vpack.c.b16 %v5301, %v5300
    %v5384 = vpack.c.b16 %v5303, %v5302
    %v5385 = vpack.c.b16 %v5305, %v5304
    %v5386 = vpack.c.b16 %v5307, %v5306
    %v5387 = vpack.c.b16 %v5309, %v5308
    %v5388 = vpack.c.b16 %v5311, %v5310
    %v5389 = vpack.c.b16 %v5313, %v5312
    %v5390 = vpack.c.b16 %v5315, %v5314
    %v5391 = vpack.c.b16 %v5317, %v5316
    %v5392 = vpack.c.b16 %v5319, %v5318
    %v5393 = vpack.c.b16 %v5321, %v5320
    %v5394 = vpack.c.b16 %v5323, %v5322
    %v5395 = vpack.c.b16 %v5325, %v5324
    %v5396 = vpack.c.b16 %v5327, %v5326
    %v5397 = vpack.c.b16 %v5329, %v5328
    %v5398 = vpack.c.b16 %v5331, %v5330
    %v5399 = vpack.c.b16 %v5333, %v5332
    %v5400 = vpack.c.b16 %v5335, %v5334
    %v5401 = vpack.c.b16 %v5337, %v5336
    %5466 = vmatprep.subr.bf16.mxu0 0
    %5467 = vmatpush1.bf16.msra.mxu0 %v5338
    %5468 = vmatprep.subr.bf16.mxu0 0
    %5469 = vmatpush1.bf16.msra.mxu0 %v5339
    %5470 = vmatprep.subr.bf16.mxu0 0
    %5471 = vmatpush1.bf16.msra.mxu0 %v5340
    %5472 = vmatprep.subr.bf16.mxu0 0
    %5473 = vmatpush1.bf16.msra.mxu0 %v5341
    %5474 = vmatprep.subr.bf16.mxu0 0
    %5475 = vmatpush1.bf16.msra.mxu0 %v5342
    %5476 = vmatprep.subr.bf16.mxu0 0
    %5477 = vmatpush1.bf16.msra.mxu0 %v5343
    %5478 = vmatprep.subr.bf16.mxu0 0
    %5479 = vmatpush1.bf16.msra.mxu0 %v5344
    %5480 = vmatprep.subr.bf16.mxu0 0
    %5481 = vmatpush1.bf16.msra.mxu0 %v5345
    %5482 = vmatprep.subr.bf16.mxu0 0
    %5483 = vmatpush1.bf16.msra.mxu0 %v5346
    %5484 = vmatprep.subr.bf16.mxu0 0
    %5485 = vmatpush1.bf16.msra.mxu0 %v5347
    %5486 = vmatprep.subr.bf16.mxu0 0
    %5487 = vmatpush1.bf16.msra.mxu0 %v5348
    %5488 = vmatprep.subr.bf16.mxu0 0
    %5489 = vmatpush1.bf16.msra.mxu0 %v5349
    %5490 = vmatprep.subr.bf16.mxu0 0
    %5491 = vmatpush1.bf16.msra.mxu0 %v5350
    %5492 = vmatprep.subr.bf16.mxu0 0
    %5493 = vmatpush1.bf16.msra.mxu0 %v5351
    %5494 = vmatprep.subr.bf16.mxu0 0
    %5495 = vmatpush1.bf16.msra.mxu0 %v5352
    %5496 = vmatprep.subr.bf16.mxu0 0
    %5497 = vmatpush1.bf16.msra.mxu0 %v5353
    %5498 = vmatprep.mubr.bf16.mxu0 %v4928
    %5499 = vmatmul.mubr.bf16.gmra.mrb[0].mxu0 %v4924
    %v5500 = vpop.f32.mrb[0].mxu0
    %v5501 = vadd.f32 0.0, %v5500
    %v5502 = vpop.f32.mrb[0].mxu0
    %v5503 = vpop.f32.mrb[0].mxu0
    %v5504 = vadd.f32 0.0, %v5503
    %v5505 = vpop.f32.mrb[0].mxu0
    %5506 = vdwg.mxu0
    %5507 = vmatprep.subr.bf16.mxu0 0
    %5508 = vmatpush1.bf16.msra.mxu0 %v5354
    %5509 = vmatprep.subr.bf16.mxu0 0
    %5510 = vmatpush1.bf16.msra.mxu0 %v5355
    %5511 = vmatprep.subr.bf16.mxu0 0
    %5512 = vmatpush1.bf16.msra.mxu0 %v5356
    %5513 = vmatprep.subr.bf16.mxu0 0
    %5514 = vmatpush1.bf16.msra.mxu0 %v5357
    %5515 = vmatprep.subr.bf16.mxu0 0
    %5516 = vmatpush1.bf16.msra.mxu0 %v5358
    %5517 = vmatprep.subr.bf16.mxu0 0
    %5518 = vmatpush1.bf16.msra.mxu0 %v5359
    %5519 = vmatprep.subr.bf16.mxu0 0
    %5520 = vmatpush1.bf16.msra.mxu0 %v5360
    %5521 = vmatprep.subr.bf16.mxu0 0
    %5522 = vmatpush1.bf16.msra.mxu0 %v5361
    %5523 = vmatprep.subr.bf16.mxu0 0
    %5524 = vmatpush1.bf16.msra.mxu0 %v5362
    %5525 = vmatprep.subr.bf16.mxu0 0
    %5526 = vmatpush1.bf16.msra.mxu0 %v5363
    %5527 = vmatprep.subr.bf16.mxu0 0
    %5528 = vmatpush1.bf16.msra.mxu0 %v5364
    %5529 = vmatprep.subr.bf16.mxu0 0
    %5530 = vmatpush1.bf16.msra.mxu0 %v5365
    %5531 = vmatprep.subr.bf16.mxu0 0
    %5532 = vmatpush1.bf16.msra.mxu0 %v5366
    %5533 = vmatprep.subr.bf16.mxu0 0
    %5534 = vmatpush1.bf16.msra.mxu0 %v5367
    %5535 = vmatprep.subr.bf16.mxu0 0
    %5536 = vmatpush1.bf16.msra.mxu0 %v5368
    %5537 = vmatprep.subr.bf16.mxu0 0
    %5538 = vmatpush1.bf16.msra.mxu0 %v5369
    %5539 = vmatprep.mubr.bf16.mxu0 %v4936
    %5540 = vmatmul.mubr.bf16.gmra.mrb[0].mxu0 %v4932
    %v5541 = vpop.f32.mrb[0].mxu0
    %v5542 = vadd.f32 %v5501, %v5541
    %v5543 = vpop.f32.mrb[0].mxu0
    %v5544 = vpop.f32.mrb[0].mxu0
    %v5545 = vadd.f32 %v5504, %v5544
    %v5546 = vpop.f32.mrb[0].mxu0
    %5547 = vdwg.mxu0
    %5548 = vmatprep.subr.bf16.mxu0 0
    %5549 = vmatpush1.bf16.msra.mxu0 %v5370
    %5550 = vmatprep.subr.bf16.mxu0 0
    %5551 = vmatpush1.bf16.msra.mxu0 %v5371
    %5552 = vmatprep.subr.bf16.mxu0 0
    %5553 = vmatpush1.bf16.msra.mxu0 %v5372
    %5554 = vmatprep.subr.bf16.mxu0 0
    %5555 = vmatpush1.bf16.msra.mxu0 %v5373
    %5556 = vmatprep.subr.bf16.mxu0 0
    %5557 = vmatpush1.bf16.msra.mxu0 %v5374
    %5558 = vmatprep.subr.bf16.mxu0 0
    %5559 = vmatpush1.bf16.msra.mxu0 %v5375
    %5560 = vmatprep.subr.bf16.mxu0 0
    %5561 = vmatpush1.bf16.msra.mxu0 %v5376
    %5562 = vmatprep.subr.bf16.mxu0 0
    %5563 = vmatpush1.bf16.msra.mxu0 %v5377
    %5564 = vmatprep.subr.bf16.mxu0 0
    %5565 = vmatpush1.bf16.msra.mxu0 %v5378
    %5566 = vmatprep.subr.bf16.mxu0 0
    %5567 = vmatpush1.bf16.msra.mxu0 %v5379
    %5568 = vmatprep.subr.bf16.mxu0 0
    %5569 = vmatpush1.bf16.msra.mxu0 %v5380
    %5570 = vmatprep.subr.bf16.mxu0 0
    %5571 = vmatpush1.bf16.msra.mxu0 %v5381
    %5572 = vmatprep.subr.bf16.mxu0 0
    %5573 = vmatpush1.bf16.msra.mxu0 %v5382
    %5574 = vmatprep.subr.bf16.mxu0 0
    %5575 = vmatpush1.bf16.msra.mxu0 %v5383
    %5576 = vmatprep.subr.bf16.mxu0 0
    %5577 = vmatpush1.bf16.msra.mxu0 %v5384
    %5578 = vmatprep.subr.bf16.mxu0 0
    %5579 = vmatpush1.bf16.msra.mxu0 %v5385
    %5580 = vmatprep.mubr.bf16.mxu0 %v4944
    %5581 = vmatmul.mubr.bf16.gmra.mrb[0].mxu0 %v4940
    %v5582 = vpop.f32.mrb[0].mxu0
    %v5583 = vadd.f32 %v5542, %v5582
    %v5584 = vpop.f32.mrb[0].mxu0
    %v5585 = vpop.f32.mrb[0].mxu0
    %v5586 = vadd.f32 %v5545, %v5585
    %v5587 = vpop.f32.mrb[0].mxu0
    %5588 = vdwg.mxu0
    %5589 = vmatprep.subr.bf16.mxu0 0
    %5590 = vmatpush1.bf16.msra.mxu0 %v5386
    %5591 = vmatprep.subr.bf16.mxu0 0
    %5592 = vmatpush1.bf16.msra.mxu0 %v5387
    %5593 = vmatprep.subr.bf16.mxu0 0
    %5594 = vmatpush1.bf16.msra.mxu0 %v5388
    %5595 = vmatprep.subr.bf16.mxu0 0
    %5596 = vmatpush1.bf16.msra.mxu0 %v5389
    %5597 = vmatprep.subr.bf16.mxu0 0
    %5598 = vmatpush1.bf16.msra.mxu0 %v5390
    %5599 = vmatprep.subr.bf16.mxu0 0
    %5600 = vmatpush1.bf16.msra.mxu0 %v5391
    %5601 = vmatprep.subr.bf16.mxu0 0
    %5602 = vmatpush1.bf16.msra.mxu0 %v5392
    %5603 = vmatprep.subr.bf16.mxu0 0
    %5604 = vmatpush1.bf16.msra.mxu0 %v5393
    %5605 = vmatprep.subr.bf16.mxu0 0
    %5606 = vmatpush1.bf16.msra.mxu0 %v5394
    %5607 = vmatprep.subr.bf16.mxu0 0
    %5608 = vmatpush1.bf16.msra.mxu0 %v5395
    %5609 = vmatprep.subr.bf16.mxu0 0
    %5610 = vmatpush1.bf16.msra.mxu0 %v5396
    %5611 = vmatprep.subr.bf16.mxu0 0
    %5612 = vmatpush1.bf16.msra.mxu0 %v5397
    %5613 = vmatprep.subr.bf16.mxu0 0
    %5614 = vmatpush1.bf16.msra.mxu0 %v5398
    %5615 = vmatprep.subr.bf16.mxu0 0
    %5616 = vmatpush1.bf16.msra.mxu0 %v5399
    %5617 = vmatprep.subr.bf16.mxu0 0
    %5618 = vmatpush1.bf16.msra.mxu0 %v5400
    %5619 = vmatprep.subr.bf16.mxu0 0
    %5620 = vmatpush1.bf16.msra.mxu0 %v5401
    %5621 = vmatprep.mubr.bf16.mxu0 %v4952
    %5622 = vmatmul.mubr.bf16.gmra.mrb[0].mxu0 %v4948
    %v5623 = vpop.f32.mrb[0].mxu0
    %v5624 = vadd.f32 %v5583, %v5623
    %v5625 = vpop.f32.mrb[0].mxu0
    %v5626 = vpop.f32.mrb[0].mxu0
    %v5627 = vadd.f32 %v5586, %v5626
    %v5628 = vpop.f32.mrb[0].mxu0
    %5629 = vdwg.mxu0
    %vm5630 = vcmp.ge.f32.partialorder %v5624, 0.0
    %vm5631 = vcmp.ge.f32.partialorder %v5627, 0.0
    %v5632 = vmul.f32 %v5624, 0.2
    %v5633 = vmul.f32 %v5627, 0.2
    %v5634 = vsel %vm5630, %v5624, %v5632
    %v5635 = vsel %vm5631, %v5627, %v5633
    %v5636 = vld [vmem:[#allocation13] sm:$0x1]
    %v5638 = vlaneseq
    %v5639 = vshrl.u32 %v5638, 7
    %v5640 = vsub.s32 0, %v5639
    %v5641 = vrot.slane %v5636, %v5640
    %v5643 = vmul.f32 %v5634, %v5641
    %v5644 = vmul.f32 %v5635, %v5641
    %v5645 = vld [vmem:[#allocation14] sm:$0x1]
    %v5647 = vlaneseq
    %v5648 = vshrl.u32 %v5647, 7
    %v5649 = vsub.s32 0, %v5648
    %v5650 = vrot.slane %v5645, %v5649
    %v5652 = vadd.f32 %v5643, %v5650
    %v5653 = vadd.f32 %v5644, %v5650
    %v5654 = vpack.c.bf16 %v5653, %v5652
    %v5656 = vunpack.c.l.b16 %v5654
    %v5657 = vunpack.c.h.b16 %v5654
    %v5658 = vpack.c.b16 %v5656, %v5656
    %v5659 = vpack.c.b16 %v5657, %v5657
    %5662 = vst [vmem:[#allocation3 + $0x18] sm:$0xf] %v5658
    %5663 = vst [vmem:[#allocation3 + $0x1c] sm:$0x3] %v5659
    %v5664 = vld [vmem:[#allocation2 + $0x20] sm:$0x8]
    %v5665 = vld [vmem:[#allocation2 + $0x24] sm:$0xf]
    %v5666 = vld [vmem:[#allocation2 + $0x28] sm:$0x1]
    %v5667 = vld [vmem:[#allocation2 + $0x54] sm:$0xf]
    %v5668 = vld [vmem:[#allocation2 + $0x58] sm:$0x3]
    %v5669 = vld [vmem:[#allocation2 + $0x28] sm:$0x3]
    %v5670 = vld [vmem:[#allocation2 + $0x54] sm:$0xe]
    %v5671 = vld [vmem:[#allocation2 + $0x58] sm:$0x7]
    %v5672 = vld [vmem:[#allocation2 + $0x84] sm:$0xe]
    %v5673 = vld [vmem:[#allocation2 + $0x88] sm:$0x7]
    %v5674 = vld [vmem:[#allocation2 + $0xb4] sm:$0xc]
    %v5675 = vld [vmem:[#allocation2 + $0xb8] sm:$0xf]
    %v5676 = vld [vmem:[#allocation2 + $0x84] sm:$0xc]
    %v5677 = vld [vmem:[#allocation2 + $0x88] sm:$0xf]
    %v5678 = vld [vmem:[#allocation2 + $0xb4] sm:$0x8]
    %v5679 = vld [vmem:[#allocation2 + $0xbc] sm:$0x1]
    %v5680 = vld [vmem:[#allocation2 + $0x28] sm:$0xc]
    %v5681 = vld [vmem:[#allocation2 + $0x2c] sm:$0xf]
    %v5682 = vld [vmem:[#allocation2 + $0x58] sm:$0x8]
    %v5683 = vld [vmem:[#allocation2 + $0x5c] sm:$0xf]
    %v5684 = vld [vmem:[#allocation2 + $0x60] sm:$0x1]
    %v5685 = vld [vmem:[#allocation2 + $0x28] sm:$0x8]
    %v5686 = vld [vmem:[#allocation2 + $0x30] sm:$0x1]
    %v5687 = vld [vmem:[#allocation2 + $0x60] sm:$0x3]
    %v5688 = vld [vmem:[#allocation2 + $0x8c] sm:$0xf]
    %v5689 = vld [vmem:[#allocation2 + $0x90] sm:$0x3]
    %v5690 = vld [vmem:[#allocation2 + $0xbc] sm:$0xe]
    %v5691 = vld [vmem:[#allocation2 + $0xc0] sm:$0x7]
    %v5692 = vld [vmem:[#allocation2 + $0x8c] sm:$0xe]
    %v5693 = vld [vmem:[#allocation2 + $0x90] sm:$0x7]
    %v5694 = vld [vmem:[#allocation2 + $0xbc] sm:$0xc]
    %v5695 = vld [vmem:[#allocation2 + $0xc0] sm:$0xf]
    %v5699 = vunpack.c.l.b16 %v5664
    %v5700 = vunpack.c.l.b16 %v5665
    %v5701 = vunpack.c.l.b16 %v5666
    %v5702 = vpack.c.b16 %v5700, %v5699
    %v5703 = vpack.c.b16 %v5701, %v5701
    %v5706 = vunpack.c.l.b16 %v5667
    %v5707 = vunpack.c.l.b16 %v5668
    %v5708 = vpack.c.b16 %v5707, %v5706
    %v5709 = vrot.slane %v5708, 5
    %5710 = vrot.lane.b32.xlu0 %v5709, 64
    %v5711 = vpop.permute.xlu0 %5710
    %v5713 = vunpack.c.l.b16 %v5669
    %v5714 = vpack.c.b16 %v5713, %v5700
    %v5715 = vrot.slane %v5714, 5
    %v5718 = vunpack.c.l.b16 %v5670
    %v5719 = vunpack.c.l.b16 %v5671
    %v5720 = vpack.c.b16 %v5719, %v5718
    %v5721 = vrot.slane %v5720, 6
    %5722 = vrot.lane.b32.xlu0 %v5721, 64
    %v5723 = vpop.permute.xlu0 %5722
    %v5726 = vunpack.c.l.b16 %v5672
    %v5727 = vunpack.c.l.b16 %v5673
    %v5728 = vpack.c.b16 %v5727, %v5726
    %v5729 = vrot.slane %v5728, 6
    %v5732 = vunpack.c.l.b16 %v5674
    %v5733 = vunpack.c.l.b16 %v5675
    %v5734 = vpack.c.b16 %v5733, %v5732
    %v5735 = vrot.slane %v5734, 7
    %5736 = vrot.lane.b32.xlu0 %v5735, 64
    %v5737 = vpop.permute.xlu0 %5736
    %v5740 = vunpack.c.l.b16 %v5676
    %v5741 = vunpack.c.l.b16 %v5677
    %v5742 = vpack.c.b16 %v5741, %v5740
    %v5743 = vrot.slane %v5742, 7
    %v5746 = vunpack.c.l.b16 %v5678
    %v5747 = vunpack.c.l.b16 %v5679
    %v5748 = vpack.c.b16 %v5733, %v5746
    %v5749 = vpack.c.b16 %v5747, %v5747
    %5750 = vrot.lane.b32.xlu0 %v5748, 64
    %v5751 = vpop.permute.xlu0 %5750
    %5752 = vrot.lane.b32.xlu0 %v5749, 64
    %v5753 = vpop.permute.xlu0 %5752
    %v5756 = vunpack.c.l.b16 %v5680
    %v5757 = vunpack.c.l.b16 %v5681
    %v5758 = vpack.c.b16 %v5757, %v5756
    %v5759 = vrot.slane %v5758, 7
    %v5763 = vunpack.c.l.b16 %v5682
    %v5764 = vunpack.c.l.b16 %v5683
    %v5765 = vunpack.c.l.b16 %v5684
    %v5766 = vpack.c.b16 %v5764, %v5763
    %v5767 = vpack.c.b16 %v5765, %v5765
    %5768 = vrot.lane.b32.xlu0 %v5766, 64
    %v5769 = vpop.permute.xlu0 %5768
    %5770 = vrot.lane.b32.xlu0 %v5767, 64
    %v5771 = vpop.permute.xlu0 %5770
    %v5774 = vunpack.c.l.b16 %v5685
    %v5775 = vunpack.c.l.b16 %v5686
    %v5776 = vpack.c.b16 %v5757, %v5774
    %v5777 = vpack.c.b16 %v5775, %v5775
    %v5779 = vunpack.c.l.b16 %v5687
    %v5780 = vpack.c.b16 %v5779, %v5764
    %v5781 = vrot.slane %v5780, 5
    %5782 = vrot.lane.b32.xlu0 %v5781, 64
    %v5783 = vpop.permute.xlu0 %5782
    %v5786 = vunpack.c.l.b16 %v5688
    %v5787 = vunpack.c.l.b16 %v5689
    %v5788 = vpack.c.b16 %v5787, %v5786
    %v5789 = vrot.slane %v5788, 5
    %v5792 = vunpack.c.l.b16 %v5690
    %v5793 = vunpack.c.l.b16 %v5691
    %v5794 = vpack.c.b16 %v5793, %v5792
    %v5795 = vrot.slane %v5794, 6
    %5796 = vrot.lane.b32.xlu0 %v5795, 64
    %v5797 = vpop.permute.xlu0 %5796
    %v5800 = vunpack.c.l.b16 %v5692
    %v5801 = vunpack.c.l.b16 %v5693
    %v5802 = vpack.c.b16 %v5801, %v5800
    %v5803 = vrot.slane %v5802, 6
    %v5806 = vunpack.c.l.b16 %v5694
    %v5807 = vunpack.c.l.b16 %v5695
    %v5808 = vpack.c.b16 %v5807, %v5806
    %v5809 = vrot.slane %v5808, 7
    %5810 = vrot.lane.b32.xlu0 %v5809, 64
    %v5811 = vpop.permute.xlu0 %5810
    %v5814 = vsel %vm1264, %v5702, %v5711
    %v5816 = vsel %vm1264, %v5703, %v5711
    %v5819 = vsel %vm1264, %v5715, %v5723
    %v5822 = vsel %vm1264, %v5729, %v5737
    %v5825 = vsel %vm1264, %v5743, %v5751
    %v5827 = vsel %vm1264, %v5743, %v5753
    %v5830 = vsel %vm1264, %v5759, %v5769
    %v5832 = vsel %vm1264, %v5759, %v5771
    %v5835 = vsel %vm1264, %v5776, %v5783
    %v5837 = vsel %vm1264, %v5777, %v5783
    %v5840 = vsel %vm1264, %v5789, %v5797
    %v5843 = vsel %vm1264, %v5803, %v5811
    %v5844 = vld [vmem:[#allocation11] sm:$0xf]
    %v5845 = vld [vmem:[#allocation11 + $0x4] sm:$0xf]
    %v5846 = vld [vmem:[#allocation11 + $0x8] sm:$0xf]
    %v5847 = vld [vmem:[#allocation11 + $0xc] sm:$0xf]
    %v5848 = vld [vmem:[#allocation11 + $0x10] sm:$0xf]
    %v5849 = vld [vmem:[#allocation11 + $0x14] sm:$0xf]
    %v5850 = vld [vmem:[#allocation11 + $0x18] sm:$0xf]
    %v5851 = vld [vmem:[#allocation11 + $0x1c] sm:$0xf]
    %v5852 = vld [vmem:[#allocation11 + $0x20] sm:$0xf]
    %v5853 = vld [vmem:[#allocation11 + $0x24] sm:$0xf]
    %v5854 = vld [vmem:[#allocation11 + $0x28] sm:$0xf]
    %v5855 = vld [vmem:[#allocation11 + $0x2c] sm:$0xf]
    %v5856 = vld [vmem:[#allocation11 + $0x30] sm:$0xf]
    %v5857 = vld [vmem:[#allocation11 + $0x34] sm:$0xf]
    %v5858 = vld [vmem:[#allocation11 + $0x38] sm:$0xf]
    %v5859 = vld [vmem:[#allocation11 + $0x3c] sm:$0xf]
    %v5860 = vld [vmem:[#allocation11 + $0x40] sm:$0xf]
    %v5861 = vld [vmem:[#allocation11 + $0x44] sm:$0xf]
    %v5862 = vld [vmem:[#allocation11 + $0x48] sm:$0xf]
    %v5863 = vld [vmem:[#allocation11 + $0x4c] sm:$0xf]
    %v5864 = vld [vmem:[#allocation11 + $0x50] sm:$0xf]
    %v5865 = vld [vmem:[#allocation11 + $0x54] sm:$0xf]
    %v5866 = vld [vmem:[#allocation11 + $0x58] sm:$0xf]
    %v5867 = vld [vmem:[#allocation11 + $0x5c] sm:$0xf]
    %v5868 = vld [vmem:[#allocation11 + $0x60] sm:$0xf]
    %v5869 = vld [vmem:[#allocation11 + $0x64] sm:$0xf]
    %v5870 = vld [vmem:[#allocation11 + $0x68] sm:$0xf]
    %v5871 = vld [vmem:[#allocation11 + $0x6c] sm:$0xf]
    %v5872 = vld [vmem:[#allocation11 + $0x70] sm:$0xf]
    %v5873 = vld [vmem:[#allocation11 + $0x74] sm:$0xf]
    %v5874 = vld [vmem:[#allocation11 + $0x78] sm:$0xf]
    %v5875 = vld [vmem:[#allocation11 + $0x7c] sm:$0xf]
    %v5876 = vld [vmem:[#allocation11 + $0x80] sm:$0xf]
    %v5877 = vld [vmem:[#allocation11 + $0x84] sm:$0xf]
    %v5878 = vld [vmem:[#allocation11 + $0x88] sm:$0xf]
    %v5879 = vld [vmem:[#allocation11 + $0x8c] sm:$0xf]
    %v5880 = vld [vmem:[#allocation11 + $0x90] sm:$0xf]
    %v5881 = vld [vmem:[#allocation11 + $0x94] sm:$0xf]
    %v5882 = vld [vmem:[#allocation11 + $0x98] sm:$0xf]
    %v5883 = vld [vmem:[#allocation11 + $0x9c] sm:$0xf]
    %v5884 = vld [vmem:[#allocation11 + $0xa0] sm:$0xf]
    %v5885 = vld [vmem:[#allocation11 + $0xa4] sm:$0xf]
    %v5886 = vld [vmem:[#allocation11 + $0xa8] sm:$0xf]
    %v5887 = vld [vmem:[#allocation11 + $0xac] sm:$0xf]
    %v5888 = vld [vmem:[#allocation11 + $0xb0] sm:$0xf]
    %v5889 = vld [vmem:[#allocation11 + $0xb4] sm:$0xf]
    %v5890 = vld [vmem:[#allocation11 + $0xb8] sm:$0xf]
    %v5891 = vld [vmem:[#allocation11 + $0xbc] sm:$0xf]
    %v5892 = vld [vmem:[#allocation11 + $0xc0] sm:$0xf]
    %v5893 = vld [vmem:[#allocation11 + $0xc4] sm:$0xf]
    %v5894 = vld [vmem:[#allocation11 + $0xc8] sm:$0xf]
    %v5895 = vld [vmem:[#allocation11 + $0xcc] sm:$0xf]
    %v5896 = vld [vmem:[#allocation11 + $0xd0] sm:$0xf]
    %v5897 = vld [vmem:[#allocation11 + $0xd4] sm:$0xf]
    %v5898 = vld [vmem:[#allocation11 + $0xd8] sm:$0xf]
    %v5899 = vld [vmem:[#allocation11 + $0xdc] sm:$0xf]
    %v5900 = vld [vmem:[#allocation11 + $0xe0] sm:$0xf]
    %v5901 = vld [vmem:[#allocation11 + $0xe4] sm:$0xf]
    %v5902 = vld [vmem:[#allocation11 + $0xe8] sm:$0xf]
    %v5903 = vld [vmem:[#allocation11 + $0xec] sm:$0xf]
    %v5904 = vld [vmem:[#allocation11 + $0xf0] sm:$0xf]
    %v5905 = vld [vmem:[#allocation11 + $0xf4] sm:$0xf]
    %v5906 = vld [vmem:[#allocation11 + $0xf8] sm:$0xf]
    %v5907 = vld [vmem:[#allocation11 + $0xfc] sm:$0xf]
    %v5908 = vld [vmem:[#allocation11 + $0x100] sm:$0xf]
    %v5909 = vld [vmem:[#allocation11 + $0x104] sm:$0xf]
    %v5910 = vld [vmem:[#allocation11 + $0x108] sm:$0xf]
    %v5911 = vld [vmem:[#allocation11 + $0x10c] sm:$0xf]
    %v5912 = vld [vmem:[#allocation11 + $0x110] sm:$0xf]
    %v5913 = vld [vmem:[#allocation11 + $0x114] sm:$0xf]
    %v5914 = vld [vmem:[#allocation11 + $0x118] sm:$0xf]
    %v5915 = vld [vmem:[#allocation11 + $0x11c] sm:$0xf]
    %v5916 = vld [vmem:[#allocation11 + $0x120] sm:$0xf]
    %v5917 = vld [vmem:[#allocation11 + $0x124] sm:$0xf]
    %v5918 = vld [vmem:[#allocation11 + $0x128] sm:$0xf]
    %v5919 = vld [vmem:[#allocation11 + $0x12c] sm:$0xf]
    %v5920 = vld [vmem:[#allocation11 + $0x130] sm:$0xf]
    %v5921 = vld [vmem:[#allocation11 + $0x134] sm:$0xf]
    %v5922 = vld [vmem:[#allocation11 + $0x138] sm:$0xf]
    %v5923 = vld [vmem:[#allocation11 + $0x13c] sm:$0xf]
    %v5924 = vld [vmem:[#allocation11 + $0x140] sm:$0xf]
    %v5925 = vld [vmem:[#allocation11 + $0x144] sm:$0xf]
    %v5926 = vld [vmem:[#allocation11 + $0x148] sm:$0xf]
    %v5927 = vld [vmem:[#allocation11 + $0x14c] sm:$0xf]
    %v5928 = vld [vmem:[#allocation11 + $0x150] sm:$0xf]
    %v5929 = vld [vmem:[#allocation11 + $0x154] sm:$0xf]
    %v5930 = vld [vmem:[#allocation11 + $0x158] sm:$0xf]
    %v5931 = vld [vmem:[#allocation11 + $0x15c] sm:$0xf]
    %v5932 = vld [vmem:[#allocation11 + $0x160] sm:$0xf]
    %v5933 = vld [vmem:[#allocation11 + $0x164] sm:$0xf]
    %v5934 = vld [vmem:[#allocation11 + $0x168] sm:$0xf]
    %v5935 = vld [vmem:[#allocation11 + $0x16c] sm:$0xf]
    %v5936 = vld [vmem:[#allocation11 + $0x170] sm:$0xf]
    %v5937 = vld [vmem:[#allocation11 + $0x174] sm:$0xf]
    %v5938 = vld [vmem:[#allocation11 + $0x178] sm:$0xf]
    %v5939 = vld [vmem:[#allocation11 + $0x17c] sm:$0xf]
    %v5940 = vld [vmem:[#allocation11 + $0x180] sm:$0xf]
    %v5941 = vld [vmem:[#allocation11 + $0x184] sm:$0xf]
    %v5942 = vld [vmem:[#allocation11 + $0x188] sm:$0xf]
    %v5943 = vld [vmem:[#allocation11 + $0x18c] sm:$0xf]
    %v5944 = vld [vmem:[#allocation11 + $0x190] sm:$0xf]
    %v5945 = vld [vmem:[#allocation11 + $0x194] sm:$0xf]
    %v5946 = vld [vmem:[#allocation11 + $0x198] sm:$0xf]
    %v5947 = vld [vmem:[#allocation11 + $0x19c] sm:$0xf]
    %v5948 = vld [vmem:[#allocation11 + $0x1a0] sm:$0xf]
    %v5949 = vld [vmem:[#allocation11 + $0x1a4] sm:$0xf]
    %v5950 = vld [vmem:[#allocation11 + $0x1a8] sm:$0xf]
    %v5951 = vld [vmem:[#allocation11 + $0x1ac] sm:$0xf]
    %v5952 = vld [vmem:[#allocation11 + $0x1b0] sm:$0xf]
    %v5953 = vld [vmem:[#allocation11 + $0x1b4] sm:$0xf]
    %v5954 = vld [vmem:[#allocation11 + $0x1b8] sm:$0xf]
    %v5955 = vld [vmem:[#allocation11 + $0x1bc] sm:$0xf]
    %v5956 = vld [vmem:[#allocation11 + $0x1c0] sm:$0xf]
    %v5957 = vld [vmem:[#allocation11 + $0x1c4] sm:$0xf]
    %v5958 = vld [vmem:[#allocation11 + $0x1c8] sm:$0xf]
    %v5959 = vld [vmem:[#allocation11 + $0x1cc] sm:$0xf]
    %v5960 = vld [vmem:[#allocation11 + $0x1d0] sm:$0xf]
    %v5961 = vld [vmem:[#allocation11 + $0x1d4] sm:$0xf]
    %v5962 = vld [vmem:[#allocation11 + $0x1d8] sm:$0xf]
    %v5963 = vld [vmem:[#allocation11 + $0x1dc] sm:$0xf]
    %v5964 = vld [vmem:[#allocation11 + $0x1e0] sm:$0xf]
    %v5965 = vld [vmem:[#allocation11 + $0x1e4] sm:$0xf]
    %v5966 = vld [vmem:[#allocation11 + $0x1e8] sm:$0xf]
    %v5967 = vld [vmem:[#allocation11 + $0x1ec] sm:$0xf]
    %v5968 = vld [vmem:[#allocation11 + $0x1f0] sm:$0xf]
    %v5969 = vld [vmem:[#allocation11 + $0x1f4] sm:$0xf]
    %v5970 = vld [vmem:[#allocation11 + $0x1f8] sm:$0xf]
    %v5971 = vld [vmem:[#allocation11 + $0x1fc] sm:$0xf]
    %v5984 = vrot.slane %v5814, 3
    %v5985 = vrot.slane %v5816, 3
    %v5986 = vsel %vm1184, %v5984, %v5985
    %v5987 = vrot.slane %v5819, 3
    %v5988 = vsel %vm1184, %v5987, %v5987
    %v5989 = vrot.slane %v5822, 3
    %v5990 = vsel %vm1184, %v5989, %v5989
    %v5991 = vrot.slane %v5825, 3
    %v5992 = vrot.slane %v5827, 3
    %v5993 = vsel %vm1184, %v5991, %v5992
    %v5994 = vrot.slane %v5830, 3
    %v5995 = vrot.slane %v5832, 3
    %v5996 = vsel %vm1184, %v5994, %v5995
    %v5997 = vrot.slane %v5835, 3
    %v5998 = vrot.slane %v5837, 3
    %v5999 = vsel %vm1184, %v5997, %v5998
    %v6000 = vrot.slane %v5840, 3
    %v6001 = vsel %vm1184, %v6000, %v6000
    %v6002 = vrot.slane %v5843, 3
    %v6003 = vsel %vm1184, %v6002, %v6002
    %v6140 = vunpack.c.l.b16 %v5844
    %v6141 = vunpack.c.l.b16 %v5845
    %v6142 = vunpack.c.l.b16 %v5846
    %v6143 = vunpack.c.l.b16 %v5847
    %v6144 = vunpack.c.l.b16 %v5848
    %v6145 = vunpack.c.l.b16 %v5849
    %v6146 = vunpack.c.l.b16 %v5850
    %v6147 = vunpack.c.l.b16 %v5851
    %v6148 = vunpack.c.l.b16 %v5852
    %v6149 = vunpack.c.l.b16 %v5853
    %v6150 = vunpack.c.l.b16 %v5854
    %v6151 = vunpack.c.l.b16 %v5855
    %v6152 = vunpack.c.l.b16 %v5856
    %v6153 = vunpack.c.l.b16 %v5857
    %v6154 = vunpack.c.l.b16 %v5858
    %v6155 = vunpack.c.l.b16 %v5859
    %v6156 = vunpack.c.l.b16 %v5860
    %v6157 = vunpack.c.l.b16 %v5861
    %v6158 = vunpack.c.l.b16 %v5862
    %v6159 = vunpack.c.l.b16 %v5863
    %v6160 = vunpack.c.l.b16 %v5864
    %v6161 = vunpack.c.l.b16 %v5865
    %v6162 = vunpack.c.l.b16 %v5866
    %v6163 = vunpack.c.l.b16 %v5867
    %v6164 = vunpack.c.l.b16 %v5868
    %v6165 = vunpack.c.l.b16 %v5869
    %v6166 = vunpack.c.l.b16 %v5870
    %v6167 = vunpack.c.l.b16 %v5871
    %v6168 = vunpack.c.l.b16 %v5872
    %v6169 = vunpack.c.l.b16 %v5873
    %v6170 = vunpack.c.l.b16 %v5874
    %v6171 = vunpack.c.l.b16 %v5875
    %v6172 = vunpack.c.l.b16 %v5876
    %v6173 = vunpack.c.l.b16 %v5877
    %v6174 = vunpack.c.l.b16 %v5878
    %v6175 = vunpack.c.l.b16 %v5879
    %v6176 = vunpack.c.l.b16 %v5880
    %v6177 = vunpack.c.l.b16 %v5881
    %v6178 = vunpack.c.l.b16 %v5882
    %v6179 = vunpack.c.l.b16 %v5883
    %v6180 = vunpack.c.l.b16 %v5884
    %v6181 = vunpack.c.l.b16 %v5885
    %v6182 = vunpack.c.l.b16 %v5886
    %v6183 = vunpack.c.l.b16 %v5887
    %v6184 = vunpack.c.l.b16 %v5888
    %v6185 = vunpack.c.l.b16 %v5889
    %v6186 = vunpack.c.l.b16 %v5890
    %v6187 = vunpack.c.l.b16 %v5891
    %v6188 = vunpack.c.l.b16 %v5892
    %v6189 = vunpack.c.l.b16 %v5893
    %v6190 = vunpack.c.l.b16 %v5894
    %v6191 = vunpack.c.l.b16 %v5895
    %v6192 = vunpack.c.l.b16 %v5896
    %v6193 = vunpack.c.l.b16 %v5897
    %v6194 = vunpack.c.l.b16 %v5898
    %v6195 = vunpack.c.l.b16 %v5899
    %v6196 = vunpack.c.l.b16 %v5900
    %v6197 = vunpack.c.l.b16 %v5901
    %v6198 = vunpack.c.l.b16 %v5902
    %v6199 = vunpack.c.l.b16 %v5903
    %v6200 = vunpack.c.l.b16 %v5904
    %v6201 = vunpack.c.l.b16 %v5905
    %v6202 = vunpack.c.l.b16 %v5906
    %v6203 = vunpack.c.l.b16 %v5907
    %v6204 = vunpack.c.l.b16 %v5908
    %v6205 = vunpack.c.l.b16 %v5909
    %v6206 = vunpack.c.l.b16 %v5910
    %v6207 = vunpack.c.l.b16 %v5911
    %v6208 = vunpack.c.l.b16 %v5912
    %v6209 = vunpack.c.l.b16 %v5913
    %v6210 = vunpack.c.l.b16 %v5914
    %v6211 = vunpack.c.l.b16 %v5915
    %v6212 = vunpack.c.l.b16 %v5916
    %v6213 = vunpack.c.l.b16 %v5917
    %v6214 = vunpack.c.l.b16 %v5918
    %v6215 = vunpack.c.l.b16 %v5919
    %v6216 = vunpack.c.l.b16 %v5920
    %v6217 = vunpack.c.l.b16 %v5921
    %v6218 = vunpack.c.l.b16 %v5922
    %v6219 = vunpack.c.l.b16 %v5923
    %v6220 = vunpack.c.l.b16 %v5924
    %v6221 = vunpack.c.l.b16 %v5925
    %v6222 = vunpack.c.l.b16 %v5926
    %v6223 = vunpack.c.l.b16 %v5927
    %v6224 = vunpack.c.l.b16 %v5928
    %v6225 = vunpack.c.l.b16 %v5929
    %v6226 = vunpack.c.l.b16 %v5930
    %v6227 = vunpack.c.l.b16 %v5931
    %v6228 = vunpack.c.l.b16 %v5932
    %v6229 = vunpack.c.l.b16 %v5933
    %v6230 = vunpack.c.l.b16 %v5934
    %v6231 = vunpack.c.l.b16 %v5935
    %v6232 = vunpack.c.l.b16 %v5936
    %v6233 = vunpack.c.l.b16 %v5937
    %v6234 = vunpack.c.l.b16 %v5938
    %v6235 = vunpack.c.l.b16 %v5939
    %v6236 = vunpack.c.l.b16 %v5940
    %v6237 = vunpack.c.l.b16 %v5941
    %v6238 = vunpack.c.l.b16 %v5942
    %v6239 = vunpack.c.l.b16 %v5943
    %v6240 = vunpack.c.l.b16 %v5944
    %v6241 = vunpack.c.l.b16 %v5945
    %v6242 = vunpack.c.l.b16 %v5946
    %v6243 = vunpack.c.l.b16 %v5947
    %v6244 = vunpack.c.l.b16 %v5948
    %v6245 = vunpack.c.l.b16 %v5949
    %v6246 = vunpack.c.l.b16 %v5950
    %v6247 = vunpack.c.l.b16 %v5951
    %v6248 = vunpack.c.l.b16 %v5952
    %v6249 = vunpack.c.l.b16 %v5953
    %v6250 = vunpack.c.l.b16 %v5954
    %v6251 = vunpack.c.l.b16 %v5955
    %v6252 = vunpack.c.l.b16 %v5956
    %v6253 = vunpack.c.l.b16 %v5957
    %v6254 = vunpack.c.l.b16 %v5958
    %v6255 = vunpack.c.l.b16 %v5959
    %v6256 = vunpack.c.l.b16 %v5960
    %v6257 = vunpack.c.l.b16 %v5961
    %v6258 = vunpack.c.l.b16 %v5962
    %v6259 = vunpack.c.l.b16 %v5963
    %v6260 = vunpack.c.l.b16 %v5964
    %v6261 = vunpack.c.l.b16 %v5965
    %v6262 = vunpack.c.l.b16 %v5966
    %v6263 = vunpack.c.l.b16 %v5967
    %v6264 = vunpack.c.l.b16 %v5968
    %v6265 = vunpack.c.l.b16 %v5969
    %v6266 = vunpack.c.l.b16 %v5970
    %v6267 = vunpack.c.l.b16 %v5971
    %v6268 = vpack.c.b16 %v6141, %v6140
    %v6269 = vpack.c.b16 %v6143, %v6142
    %v6270 = vpack.c.b16 %v6145, %v6144
    %v6271 = vpack.c.b16 %v6147, %v6146
    %v6272 = vpack.c.b16 %v6149, %v6148
    %v6273 = vpack.c.b16 %v6151, %v6150
    %v6274 = vpack.c.b16 %v6153, %v6152
    %v6275 = vpack.c.b16 %v6155, %v6154
    %v6276 = vpack.c.b16 %v6157, %v6156
    %v6277 = vpack.c.b16 %v6159, %v6158
    %v6278 = vpack.c.b16 %v6161, %v6160
    %v6279 = vpack.c.b16 %v6163, %v6162
    %v6280 = vpack.c.b16 %v6165, %v6164
    %v6281 = vpack.c.b16 %v6167, %v6166
    %v6282 = vpack.c.b16 %v6169, %v6168
    %v6283 = vpack.c.b16 %v6171, %v6170
    %v6284 = vpack.c.b16 %v6173, %v6172
    %v6285 = vpack.c.b16 %v6175, %v6174
    %v6286 = vpack.c.b16 %v6177, %v6176
    %v6287 = vpack.c.b16 %v6179, %v6178
    %v6288 = vpack.c.b16 %v6181, %v6180
    %v6289 = vpack.c.b16 %v6183, %v6182
    %v6290 = vpack.c.b16 %v6185, %v6184
    %v6291 = vpack.c.b16 %v6187, %v6186
    %v6292 = vpack.c.b16 %v6189, %v6188
    %v6293 = vpack.c.b16 %v6191, %v6190
    %v6294 = vpack.c.b16 %v6193, %v6192
    %v6295 = vpack.c.b16 %v6195, %v6194
    %v6296 = vpack.c.b16 %v6197, %v6196
    %v6297 = vpack.c.b16 %v6199, %v6198
    %v6298 = vpack.c.b16 %v6201, %v6200
    %v6299 = vpack.c.b16 %v6203, %v6202
    %v6300 = vpack.c.b16 %v6205, %v6204
    %v6301 = vpack.c.b16 %v6207, %v6206
    %v6302 = vpack.c.b16 %v6209, %v6208
    %v6303 = vpack.c.b16 %v6211, %v6210
    %v6304 = vpack.c.b16 %v6213, %v6212
    %v6305 = vpack.c.b16 %v6215, %v6214
    %v6306 = vpack.c.b16 %v6217, %v6216
    %v6307 = vpack.c.b16 %v6219, %v6218
    %v6308 = vpack.c.b16 %v6221, %v6220
    %v6309 = vpack.c.b16 %v6223, %v6222
    %v6310 = vpack.c.b16 %v6225, %v6224
    %v6311 = vpack.c.b16 %v6227, %v6226
    %v6312 = vpack.c.b16 %v6229, %v6228
    %v6313 = vpack.c.b16 %v6231, %v6230
    %v6314 = vpack.c.b16 %v6233, %v6232
    %v6315 = vpack.c.b16 %v6235, %v6234
    %v6316 = vpack.c.b16 %v6237, %v6236
    %v6317 = vpack.c.b16 %v6239, %v6238
    %v6318 = vpack.c.b16 %v6241, %v6240
    %v6319 = vpack.c.b16 %v6243, %v6242
    %v6320 = vpack.c.b16 %v6245, %v6244
    %v6321 = vpack.c.b16 %v6247, %v6246
    %v6322 = vpack.c.b16 %v6249, %v6248
    %v6323 = vpack.c.b16 %v6251, %v6250
    %v6324 = vpack.c.b16 %v6253, %v6252
    %v6325 = vpack.c.b16 %v6255, %v6254
    %v6326 = vpack.c.b16 %v6257, %v6256
    %v6327 = vpack.c.b16 %v6259, %v6258
    %v6328 = vpack.c.b16 %v6261, %v6260
    %v6329 = vpack.c.b16 %v6263, %v6262
    %v6330 = vpack.c.b16 %v6265, %v6264
    %v6331 = vpack.c.b16 %v6267, %v6266
    %6396 = vmatprep.subr.bf16.mxu0 0
    %6397 = vmatpush1.bf16.msra.mxu0 %v6268
    %6398 = vmatprep.subr.bf16.mxu0 0
    %6399 = vmatpush1.bf16.msra.mxu0 %v6269
    %6400 = vmatprep.subr.bf16.mxu0 0
    %6401 = vmatpush1.bf16.msra.mxu0 %v6270
    %6402 = vmatprep.subr.bf16.mxu0 0
    %6403 = vmatpush1.bf16.msra.mxu0 %v6271
    %6404 = vmatprep.subr.bf16.mxu0 0
    %6405 = vmatpush1.bf16.msra.mxu0 %v6272
    %6406 = vmatprep.subr.bf16.mxu0 0
    %6407 = vmatpush1.bf16.msra.mxu0 %v6273
    %6408 = vmatprep.subr.bf16.mxu0 0
    %6409 = vmatpush1.bf16.msra.mxu0 %v6274
    %6410 = vmatprep.subr.bf16.mxu0 0
    %6411 = vmatpush1.bf16.msra.mxu0 %v6275
    %6412 = vmatprep.subr.bf16.mxu0 0
    %6413 = vmatpush1.bf16.msra.mxu0 %v6276
    %6414 = vmatprep.subr.bf16.mxu0 0
    %6415 = vmatpush1.bf16.msra.mxu0 %v6277
    %6416 = vmatprep.subr.bf16.mxu0 0
    %6417 = vmatpush1.bf16.msra.mxu0 %v6278
    %6418 = vmatprep.subr.bf16.mxu0 0
    %6419 = vmatpush1.bf16.msra.mxu0 %v6279
    %6420 = vmatprep.subr.bf16.mxu0 0
    %6421 = vmatpush1.bf16.msra.mxu0 %v6280
    %6422 = vmatprep.subr.bf16.mxu0 0
    %6423 = vmatpush1.bf16.msra.mxu0 %v6281
    %6424 = vmatprep.subr.bf16.mxu0 0
    %6425 = vmatpush1.bf16.msra.mxu0 %v6282
    %6426 = vmatprep.subr.bf16.mxu0 0
    %6427 = vmatpush1.bf16.msra.mxu0 %v6283
    %6428 = vmatprep.mubr.bf16.mxu0 %v5988
    %6429 = vmatmul.mubr.bf16.gmra.mrb[0].mxu0 %v5986
    %v6430 = vpop.f32.mrb[0].mxu0
    %v6431 = vadd.f32 0.0, %v6430
    %v6432 = vpop.f32.mrb[0].mxu0
    %v6433 = vpop.f32.mrb[0].mxu0
    %v6434 = vadd.f32 0.0, %v6433
    %v6435 = vpop.f32.mrb[0].mxu0
    %6436 = vdwg.mxu0
    %6437 = vmatprep.subr.bf16.mxu0 0
    %6438 = vmatpush1.bf16.msra.mxu0 %v6284
    %6439 = vmatprep.subr.bf16.mxu0 0
    %6440 = vmatpush1.bf16.msra.mxu0 %v6285
    %6441 = vmatprep.subr.bf16.mxu0 0
    %6442 = vmatpush1.bf16.msra.mxu0 %v6286
    %6443 = vmatprep.subr.bf16.mxu0 0
    %6444 = vmatpush1.bf16.msra.mxu0 %v6287
    %6445 = vmatprep.subr.bf16.mxu0 0
    %6446 = vmatpush1.bf16.msra.mxu0 %v6288
    %6447 = vmatprep.subr.bf16.mxu0 0
    %6448 = vmatpush1.bf16.msra.mxu0 %v6289
    %6449 = vmatprep.subr.bf16.mxu0 0
    %6450 = vmatpush1.bf16.msra.mxu0 %v6290
    %6451 = vmatprep.subr.bf16.mxu0 0
    %6452 = vmatpush1.bf16.msra.mxu0 %v6291
    %6453 = vmatprep.subr.bf16.mxu0 0
    %6454 = vmatpush1.bf16.msra.mxu0 %v6292
    %6455 = vmatprep.subr.bf16.mxu0 0
    %6456 = vmatpush1.bf16.msra.mxu0 %v6293
    %6457 = vmatprep.subr.bf16.mxu0 0
    %6458 = vmatpush1.bf16.msra.mxu0 %v6294
    %6459 = vmatprep.subr.bf16.mxu0 0
    %6460 = vmatpush1.bf16.msra.mxu0 %v6295
    %6461 = vmatprep.subr.bf16.mxu0 0
    %6462 = vmatpush1.bf16.msra.mxu0 %v6296
    %6463 = vmatprep.subr.bf16.mxu0 0
    %6464 = vmatpush1.bf16.msra.mxu0 %v6297
    %6465 = vmatprep.subr.bf16.mxu0 0
    %6466 = vmatpush1.bf16.msra.mxu0 %v6298
    %6467 = vmatprep.subr.bf16.mxu0 0
    %6468 = vmatpush1.bf16.msra.mxu0 %v6299
    %6469 = vmatprep.mubr.bf16.mxu0 %v5993
    %6470 = vmatmul.mubr.bf16.gmra.mrb[0].mxu0 %v5990
    %v6471 = vpop.f32.mrb[0].mxu0
    %v6472 = vadd.f32 %v6431, %v6471
    %v6473 = vpop.f32.mrb[0].mxu0
    %v6474 = vpop.f32.mrb[0].mxu0
    %v6475 = vadd.f32 %v6434, %v6474
    %v6476 = vpop.f32.mrb[0].mxu0
    %6477 = vdwg.mxu0
    %6478 = vmatprep.subr.bf16.mxu0 0
    %6479 = vmatpush1.bf16.msra.mxu0 %v6300
    %6480 = vmatprep.subr.bf16.mxu0 0
    %6481 = vmatpush1.bf16.msra.mxu0 %v6301
    %6482 = vmatprep.subr.bf16.mxu0 0
    %6483 = vmatpush1.bf16.msra.mxu0 %v6302
    %6484 = vmatprep.subr.bf16.mxu0 0
    %6485 = vmatpush1.bf16.msra.mxu0 %v6303
    %6486 = vmatprep.subr.bf16.mxu0 0
    %6487 = vmatpush1.bf16.msra.mxu0 %v6304
    %6488 = vmatprep.subr.bf16.mxu0 0
    %6489 = vmatpush1.bf16.msra.mxu0 %v6305
    %6490 = vmatprep.subr.bf16.mxu0 0
    %6491 = vmatpush1.bf16.msra.mxu0 %v6306
    %6492 = vmatprep.subr.bf16.mxu0 0
    %6493 = vmatpush1.bf16.msra.mxu0 %v6307
    %6494 = vmatprep.subr.bf16.mxu0 0
    %6495 = vmatpush1.bf16.msra.mxu0 %v6308
    %6496 = vmatprep.subr.bf16.mxu0 0
    %6497 = vmatpush1.bf16.msra.mxu0 %v6309
    %6498 = vmatprep.subr.bf16.mxu0 0
    %6499 = vmatpush1.bf16.msra.mxu0 %v6310
    %6500 = vmatprep.subr.bf16.mxu0 0
    %6501 = vmatpush1.bf16.msra.mxu0 %v6311
    %6502 = vmatprep.subr.bf16.mxu0 0
    %6503 = vmatpush1.bf16.msra.mxu0 %v6312
    %6504 = vmatprep.subr.bf16.mxu0 0
    %6505 = vmatpush1.bf16.msra.mxu0 %v6313
    %6506 = vmatprep.subr.bf16.mxu0 0
    %6507 = vmatpush1.bf16.msra.mxu0 %v6314
    %6508 = vmatprep.subr.bf16.mxu0 0
    %6509 = vmatpush1.bf16.msra.mxu0 %v6315
    %6510 = vmatprep.mubr.bf16.mxu0 %v5999
    %6511 = vmatmul.mubr.bf16.gmra.mrb[0].mxu0 %v5996
    %v6512 = vpop.f32.mrb[0].mxu0
    %v6513 = vadd.f32 %v6472, %v6512
    %v6514 = vpop.f32.mrb[0].mxu0
    %v6515 = vpop.f32.mrb[0].mxu0
    %v6516 = vadd.f32 %v6475, %v6515
    %v6517 = vpop.f32.mrb[0].mxu0
    %6518 = vdwg.mxu0
    %6519 = vmatprep.subr.bf16.mxu0 0
    %6520 = vmatpush1.bf16.msra.mxu0 %v6316
    %6521 = vmatprep.subr.bf16.mxu0 0
    %6522 = vmatpush1.bf16.msra.mxu0 %v6317
    %6523 = vmatprep.subr.bf16.mxu0 0
    %6524 = vmatpush1.bf16.msra.mxu0 %v6318
    %6525 = vmatprep.subr.bf16.mxu0 0
    %6526 = vmatpush1.bf16.msra.mxu0 %v6319
    %6527 = vmatprep.subr.bf16.mxu0 0
    %6528 = vmatpush1.bf16.msra.mxu0 %v6320
    %6529 = vmatprep.subr.bf16.mxu0 0
    %6530 = vmatpush1.bf16.msra.mxu0 %v6321
    %6531 = vmatprep.subr.bf16.mxu0 0
    %6532 = vmatpush1.bf16.msra.mxu0 %v6322
    %6533 = vmatprep.subr.bf16.mxu0 0
    %6534 = vmatpush1.bf16.msra.mxu0 %v6323
    %6535 = vmatprep.subr.bf16.mxu0 0
    %6536 = vmatpush1.bf16.msra.mxu0 %v6324
    %6537 = vmatprep.subr.bf16.mxu0 0
    %6538 = vmatpush1.bf16.msra.mxu0 %v6325
    %6539 = vmatprep.subr.bf16.mxu0 0
    %6540 = vmatpush1.bf16.msra.mxu0 %v6326
    %6541 = vmatprep.subr.bf16.mxu0 0
    %6542 = vmatpush1.bf16.msra.mxu0 %v6327
    %6543 = vmatprep.subr.bf16.mxu0 0
    %6544 = vmatpush1.bf16.msra.mxu0 %v6328
    %6545 = vmatprep.subr.bf16.mxu0 0
    %6546 = vmatpush1.bf16.msra.mxu0 %v6329
    %6547 = vmatprep.subr.bf16.mxu0 0
    %6548 = vmatpush1.bf16.msra.mxu0 %v6330
    %6549 = vmatprep.subr.bf16.mxu0 0
    %6550 = vmatpush1.bf16.msra.mxu0 %v6331
    %6551 = vmatprep.mubr.bf16.mxu0 %v6003
    %6552 = vmatmul.mubr.bf16.gmra.mrb[0].mxu0 %v6001
    %v6553 = vpop.f32.mrb[0].mxu0
    %v6554 = vadd.f32 %v6513, %v6553
    %v6555 = vpop.f32.mrb[0].mxu0
    %v6556 = vpop.f32.mrb[0].mxu0
    %v6557 = vadd.f32 %v6516, %v6556
    %v6558 = vpop.f32.mrb[0].mxu0
    %6559 = vdwg.mxu0
    %vm6560 = vcmp.ge.f32.partialorder %v6554, 0.0
    %vm6561 = vcmp.ge.f32.partialorder %v6557, 0.0
    %v6562 = vmul.f32 %v6554, 0.2
    %v6563 = vmul.f32 %v6557, 0.2
    %v6564 = vsel %vm6560, %v6554, %v6562
    %v6565 = vsel %vm6561, %v6557, %v6563
    %v6566 = vld [vmem:[#allocation13] sm:$0x1]
    %v6568 = vlaneseq
    %v6569 = vshrl.u32 %v6568, 7
    %v6570 = vsub.s32 0, %v6569
    %v6571 = vrot.slane %v6566, %v6570
    %v6573 = vmul.f32 %v6564, %v6571
    %v6574 = vmul.f32 %v6565, %v6571
    %v6575 = vld [vmem:[#allocation14] sm:$0x1]
    %v6577 = vlaneseq
    %v6578 = vshrl.u32 %v6577, 7
    %v6579 = vsub.s32 0, %v6578
    %v6580 = vrot.slane %v6575, %v6579
    %v6582 = vadd.f32 %v6573, %v6580
    %v6583 = vadd.f32 %v6574, %v6580
    %v6584 = vpack.c.bf16 %v6583, %v6582
    %v6586 = vunpack.c.l.b16 %v6584
    %v6587 = vunpack.c.h.b16 %v6584
    %v6588 = vpack.c.b16 %v6586, %v6586
    %v6589 = vpack.c.b16 %v6587, %v6587
    %v6590 = vrot.slane %v6588, 6
    %v6591 = vrot.slane %v6590, 4
    %v6592 = vrot.slane %v6589, 6
    %v6593 = vsel %vm2935, %v6591, %v6592
    %6596 = vst [vmem:[#allocation3 + $0x1c] sm:$0xc] %v6590
    %6597 = vst [vmem:[#allocation3 + $0x20] sm:$0xf] %v6593
    %s6598 = smul.u32 4, 144
    %s6599 = smul.u32 %s6598, 2
    %s6600 = sshll.u32 %s6599, 4
    %6601 = dma.done [#allocation7], %s6600
    %v6602 = vld [vmem:[#allocation3] sm:$0xf]
    %v6603 = vld [vmem:[#allocation3] sm:$0xe]
    %v6604 = vld [vmem:[#allocation3 + $0x4] sm:$0x1]
    %v6605 = vld [vmem:[#allocation3] sm:$0xc]
    %v6606 = vld [vmem:[#allocation3 + $0x4] sm:$0x3]
    %v6607 = vld [vmem:[#allocation3 + $0x4] sm:$0xc]
    %v6608 = vld [vmem:[#allocation3 + $0x8] sm:$0x3]
    %v6609 = vld [vmem:[#allocation3 + $0x4] sm:$0x8]
    %v6610 = vld [vmem:[#allocation3 + $0x8] sm:$0x7]
    %v6611 = vld [vmem:[#allocation3 + $0x8] sm:$0xf]
    %v6612 = vld [vmem:[#allocation3 + $0xc] sm:$0xf]
    %v6613 = vld [vmem:[#allocation3 + $0xc] sm:$0xe]
    %v6614 = vld [vmem:[#allocation3 + $0x10] sm:$0x1]
    %v6615 = vld [vmem:[#allocation3 + $0xc] sm:$0xc]
    %v6616 = vld [vmem:[#allocation3 + $0x10] sm:$0x3]
    %v6619 = vunpack.c.l.b16 %v6603
    %v6620 = vunpack.c.l.b16 %v6604
    %v6621 = vpack.c.b16 %v6620, %v6619
    %v6622 = vrot.slane %v6621, 1
    %v6626 = vunpack.c.l.b16 %v6605
    %v6627 = vunpack.c.l.b16 %v6606
    %v6628 = vpack.c.b16 %v6627, %v6626
    %v6629 = vrot.slane %v6628, 2
    %v6633 = vunpack.c.l.b16 %v6607
    %v6634 = vunpack.c.l.b16 %v6608
    %v6635 = vpack.c.b16 %v6634, %v6633
    %v6636 = vrot.slane %v6635, 2
    %v6640 = vunpack.c.l.b16 %v6609
    %v6641 = vunpack.c.l.b16 %v6610
    %v6642 = vpack.c.b16 %v6641, %v6640
    %v6643 = vrot.slane %v6642, 3
    %v6647 = vunpack.c.l.b16 %v6613
    %v6648 = vunpack.c.l.b16 %v6614
    %v6649 = vpack.c.b16 %v6648, %v6647
    %v6650 = vrot.slane %v6649, 1
    %v6654 = vunpack.c.l.b16 %v6615
    %v6655 = vunpack.c.l.b16 %v6616
    %v6656 = vpack.c.b16 %v6655, %v6654
    %v6657 = vrot.slane %v6656, 2
    %v6659 = vld [vmem:[#allocation5] sm:$0xff]
    %v6660 = vld [vmem:[#allocation5 + $0x8] sm:$0xff]
    %v6661 = vld [vmem:[#allocation5 + $0x10] sm:$0xff]
    %v6662 = vld [vmem:[#allocation5 + $0x18] sm:$0xff]
    %v6663 = vld [vmem:[#allocation5 + $0x20] sm:$0xff]
    %v6664 = vld [vmem:[#allocation5 + $0x28] sm:$0xff]
    %v6665 = vld [vmem:[#allocation5 + $0x30] sm:$0xff]
    %v6666 = vld [vmem:[#allocation5 + $0x38] sm:$0xff]
    %v6667 = vld [vmem:[#allocation5 + $0x40] sm:$0xff]
    %v6668 = vld [vmem:[#allocation5 + $0x48] sm:$0xff]
    %v6669 = vld [vmem:[#allocation5 + $0x50] sm:$0xff]
    %v6670 = vld [vmem:[#allocation5 + $0x58] sm:$0xff]
    %v6671 = vld [vmem:[#allocation5 + $0x60] sm:$0xff]
    %v6672 = vld [vmem:[#allocation5 + $0x68] sm:$0xff]
    %v6673 = vld [vmem:[#allocation5 + $0x70] sm:$0xff]
    %v6674 = vld [vmem:[#allocation5 + $0x78] sm:$0xff]
    %v6675 = vld [vmem:[#allocation5 + $0x80] sm:$0xff]
    %v6676 = vld [vmem:[#allocation5 + $0x88] sm:$0xff]
    %v6677 = vld [vmem:[#allocation5 + $0x90] sm:$0xff]
    %v6678 = vld [vmem:[#allocation5 + $0x98] sm:$0xff]
    %v6679 = vld [vmem:[#allocation5 + $0xa0] sm:$0xff]
    %v6680 = vld [vmem:[#allocation5 + $0xa8] sm:$0xff]
    %v6681 = vld [vmem:[#allocation5 + $0xb0] sm:$0xff]
    %v6682 = vld [vmem:[#allocation5 + $0xb8] sm:$0xff]
    %v6683 = vld [vmem:[#allocation5 + $0xc0] sm:$0xff]
    %v6684 = vld [vmem:[#allocation5 + $0xc8] sm:$0xff]
    %v6685 = vld [vmem:[#allocation5 + $0xd0] sm:$0xff]
    %v6686 = vld [vmem:[#allocation5 + $0xd8] sm:$0xff]
    %v6687 = vld [vmem:[#allocation5 + $0xe0] sm:$0xff]
    %v6688 = vld [vmem:[#allocation5 + $0xe8] sm:$0xff]
    %v6689 = vld [vmem:[#allocation5 + $0xf0] sm:$0xff]
    %v6690 = vld [vmem:[#allocation5 + $0xf8] sm:$0xff]
    %v6691 = vld [vmem:[#allocation5 + $0x100] sm:$0xff]
    %v6692 = vld [vmem:[#allocation5 + $0x108] sm:$0xff]
    %v6693 = vld [vmem:[#allocation5 + $0x110] sm:$0xff]
    %v6694 = vld [vmem:[#allocation5 + $0x118] sm:$0xff]
    %v6695 = vld [vmem:[#allocation5 + $0x120] sm:$0xff]
    %v6696 = vld [vmem:[#allocation5 + $0x128] sm:$0xff]
    %v6697 = vld [vmem:[#allocation5 + $0x130] sm:$0xff]
    %v6698 = vld [vmem:[#allocation5 + $0x138] sm:$0xff]
    %v6699 = vld [vmem:[#allocation5 + $0x140] sm:$0xff]
    %v6700 = vld [vmem:[#allocation5 + $0x148] sm:$0xff]
    %v6701 = vld [vmem:[#allocation5 + $0x150] sm:$0xff]
    %v6702 = vld [vmem:[#allocation5 + $0x158] sm:$0xff]
    %v6703 = vld [vmem:[#allocation5 + $0x160] sm:$0xff]
    %v6704 = vld [vmem:[#allocation5 + $0x168] sm:$0xff]
    %v6705 = vld [vmem:[#allocation5 + $0x170] sm:$0xff]
    %v6706 = vld [vmem:[#allocation5 + $0x178] sm:$0xff]
    %v6707 = vld [vmem:[#allocation5 + $0x180] sm:$0xff]
    %v6708 = vld [vmem:[#allocation5 + $0x188] sm:$0xff]
    %v6709 = vld [vmem:[#allocation5 + $0x190] sm:$0xff]
    %v6710 = vld [vmem:[#allocation5 + $0x198] sm:$0xff]
    %v6711 = vld [vmem:[#allocation5 + $0x1a0] sm:$0xff]
    %v6712 = vld [vmem:[#allocation5 + $0x1a8] sm:$0xff]
    %v6713 = vld [vmem:[#allocation5 + $0x1b0] sm:$0xff]
    %v6714 = vld [vmem:[#allocation5 + $0x1b8] sm:$0xff]
    %v6715 = vld [vmem:[#allocation5 + $0x1c0] sm:$0xff]
    %v6716 = vld [vmem:[#allocation5 + $0x1c8] sm:$0xff]
    %v6717 = vld [vmem:[#allocation5 + $0x1d0] sm:$0xff]
    %v6718 = vld [vmem:[#allocation5 + $0x1d8] sm:$0xff]
    %v6719 = vld [vmem:[#allocation5 + $0x1e0] sm:$0xff]
    %v6720 = vld [vmem:[#allocation5 + $0x1e8] sm:$0xff]
    %v6721 = vld [vmem:[#allocation5 + $0x1f0] sm:$0xff]
    %v6722 = vld [vmem:[#allocation5 + $0x1f8] sm:$0xff]
    %v6723 = vld [vmem:[#allocation5 + $0x200] sm:$0xff]
    %v6724 = vld [vmem:[#allocation5 + $0x208] sm:$0xff]
    %v6725 = vld [vmem:[#allocation5 + $0x210] sm:$0xff]
    %v6726 = vld [vmem:[#allocation5 + $0x218] sm:$0xff]
    %v6727 = vld [vmem:[#allocation5 + $0x220] sm:$0xff]
    %v6728 = vld [vmem:[#allocation5 + $0x228] sm:$0xff]
    %v6729 = vld [vmem:[#allocation5 + $0x230] sm:$0xff]
    %v6730 = vld [vmem:[#allocation5 + $0x238] sm:$0xff]
    %v6731 = vld [vmem:[#allocation5 + $0x240] sm:$0xff]
    %v6732 = vld [vmem:[#allocation5 + $0x248] sm:$0xff]
    %v6733 = vld [vmem:[#allocation5 + $0x250] sm:$0xff]
    %v6734 = vld [vmem:[#allocation5 + $0x258] sm:$0xff]
    %v6735 = vld [vmem:[#allocation5 + $0x260] sm:$0xff]
    %v6736 = vld [vmem:[#allocation5 + $0x268] sm:$0xff]
    %v6737 = vld [vmem:[#allocation5 + $0x270] sm:$0xff]
    %v6738 = vld [vmem:[#allocation5 + $0x278] sm:$0xff]
    %v6739 = vld [vmem:[#allocation5 + $0x280] sm:$0xff]
    %v6740 = vld [vmem:[#allocation5 + $0x288] sm:$0xff]
    %v6741 = vld [vmem:[#allocation5 + $0x290] sm:$0xff]
    %v6742 = vld [vmem:[#allocation5 + $0x298] sm:$0xff]
    %v6743 = vld [vmem:[#allocation5 + $0x2a0] sm:$0xff]
    %v6744 = vld [vmem:[#allocation5 + $0x2a8] sm:$0xff]
    %v6745 = vld [vmem:[#allocation5 + $0x2b0] sm:$0xff]
    %v6746 = vld [vmem:[#allocation5 + $0x2b8] sm:$0xff]
    %v6747 = vld [vmem:[#allocation5 + $0x2c0] sm:$0xff]
    %v6748 = vld [vmem:[#allocation5 + $0x2c8] sm:$0xff]
    %v6749 = vld [vmem:[#allocation5 + $0x2d0] sm:$0xff]
    %v6750 = vld [vmem:[#allocation5 + $0x2d8] sm:$0xff]
    %v6751 = vld [vmem:[#allocation5 + $0x2e0] sm:$0xff]
    %v6752 = vld [vmem:[#allocation5 + $0x2e8] sm:$0xff]
    %v6753 = vld [vmem:[#allocation5 + $0x2f0] sm:$0xff]
    %v6754 = vld [vmem:[#allocation5 + $0x2f8] sm:$0xff]
    %v6755 = vld [vmem:[#allocation5 + $0x300] sm:$0xff]
    %v6756 = vld [vmem:[#allocation5 + $0x308] sm:$0xff]
    %v6757 = vld [vmem:[#allocation5 + $0x310] sm:$0xff]
    %v6758 = vld [vmem:[#allocation5 + $0x318] sm:$0xff]
    %v6759 = vld [vmem:[#allocation5 + $0x320] sm:$0xff]
    %v6760 = vld [vmem:[#allocation5 + $0x328] sm:$0xff]
    %v6761 = vld [vmem:[#allocation5 + $0x330] sm:$0xff]
    %v6762 = vld [vmem:[#allocation5 + $0x338] sm:$0xff]
    %v6763 = vld [vmem:[#allocation5 + $0x340] sm:$0xff]
    %v6764 = vld [vmem:[#allocation5 + $0x348] sm:$0xff]
    %v6765 = vld [vmem:[#allocation5 + $0x350] sm:$0xff]
    %v6766 = vld [vmem:[#allocation5 + $0x358] sm:$0xff]
    %v6767 = vld [vmem:[#allocation5 + $0x360] sm:$0xff]
    %v6768 = vld [vmem:[#allocation5 + $0x368] sm:$0xff]
    %v6769 = vld [vmem:[#allocation5 + $0x370] sm:$0xff]
    %v6770 = vld [vmem:[#allocation5 + $0x378] sm:$0xff]
    %v6771 = vld [vmem:[#allocation5 + $0x380] sm:$0xff]
    %v6772 = vld [vmem:[#allocation5 + $0x388] sm:$0xff]
    %v6773 = vld [vmem:[#allocation5 + $0x390] sm:$0xff]
    %v6774 = vld [vmem:[#allocation5 + $0x398] sm:$0xff]
    %v6775 = vld [vmem:[#allocation5 + $0x3a0] sm:$0xff]
    %v6776 = vld [vmem:[#allocation5 + $0x3a8] sm:$0xff]
    %v6777 = vld [vmem:[#allocation5 + $0x3b0] sm:$0xff]
    %v6778 = vld [vmem:[#allocation5 + $0x3b8] sm:$0xff]
    %v6779 = vld [vmem:[#allocation5 + $0x3c0] sm:$0xff]
    %v6780 = vld [vmem:[#allocation5 + $0x3c8] sm:$0xff]
    %v6781 = vld [vmem:[#allocation5 + $0x3d0] sm:$0xff]
    %v6782 = vld [vmem:[#allocation5 + $0x3d8] sm:$0xff]
    %v6783 = vld [vmem:[#allocation5 + $0x3e0] sm:$0xff]
    %v6784 = vld [vmem:[#allocation5 + $0x3e8] sm:$0xff]
    %v6785 = vld [vmem:[#allocation5 + $0x3f0] sm:$0xff]
    %v6786 = vld [vmem:[#allocation5 + $0x3f8] sm:$0xff]
    %v6787 = vld [vmem:[#allocation5 + $0x400] sm:$0xff]
    %v6788 = vld [vmem:[#allocation5 + $0x408] sm:$0xff]
    %v6789 = vld [vmem:[#allocation5 + $0x410] sm:$0xff]
    %v6790 = vld [vmem:[#allocation5 + $0x418] sm:$0xff]
    %v6791 = vld [vmem:[#allocation5 + $0x420] sm:$0xff]
    %v6792 = vld [vmem:[#allocation5 + $0x428] sm:$0xff]
    %v6793 = vld [vmem:[#allocation5 + $0x430] sm:$0xff]
    %v6794 = vld [vmem:[#allocation5 + $0x438] sm:$0xff]
    %v6795 = vld [vmem:[#allocation5 + $0x440] sm:$0xff]
    %v6796 = vld [vmem:[#allocation5 + $0x448] sm:$0xff]
    %v6797 = vld [vmem:[#allocation5 + $0x450] sm:$0xff]
    %v6798 = vld [vmem:[#allocation5 + $0x458] sm:$0xff]
    %v6799 = vld [vmem:[#allocation5 + $0x460] sm:$0xff]
    %v6800 = vld [vmem:[#allocation5 + $0x468] sm:$0xff]
    %v6801 = vld [vmem:[#allocation5 + $0x470] sm:$0xff]
    %v6802 = vld [vmem:[#allocation5 + $0x478] sm:$0xff]
    %6803 = vmatprep.subr.bf16.mxu0 %v6660
    %6804 = vmatpush1.bf16.msra.mxu0 %v6659
    %6805 = vmatprep.subr.bf16.mxu0 %v6662
    %6806 = vmatpush1.bf16.msra.mxu0 %v6661
    %6807 = vmatprep.subr.bf16.mxu0 %v6664
    %6808 = vmatpush1.bf16.msra.mxu0 %v6663
    %6809 = vmatprep.subr.bf16.mxu0 %v6666
    %6810 = vmatpush1.bf16.msra.mxu0 %v6665
    %6811 = vmatprep.subr.bf16.mxu0 %v6668
    %6812 = vmatpush1.bf16.msra.mxu0 %v6667
    %6813 = vmatprep.subr.bf16.mxu0 %v6670
    %6814 = vmatpush1.bf16.msra.mxu0 %v6669
    %6815 = vmatprep.subr.bf16.mxu0 %v6672
    %6816 = vmatpush1.bf16.msra.mxu0 %v6671
    %6817 = vmatprep.subr.bf16.mxu0 %v6674
    %6818 = vmatpush1.bf16.msra.mxu0 %v6673
    %6819 = vmatprep.subr.bf16.mxu0 %v6676
    %6820 = vmatpush1.bf16.msra.mxu0 %v6675
    %6821 = vmatprep.subr.bf16.mxu0 %v6678
    %6822 = vmatpush1.bf16.msra.mxu0 %v6677
    %6823 = vmatprep.subr.bf16.mxu0 %v6680
    %6824 = vmatpush1.bf16.msra.mxu0 %v6679
    %6825 = vmatprep.subr.bf16.mxu0 %v6682
    %6826 = vmatpush1.bf16.msra.mxu0 %v6681
    %6827 = vmatprep.subr.bf16.mxu0 %v6684
    %6828 = vmatpush1.bf16.msra.mxu0 %v6683
    %6829 = vmatprep.subr.bf16.mxu0 %v6686
    %6830 = vmatpush1.bf16.msra.mxu0 %v6685
    %6831 = vmatprep.subr.bf16.mxu0 %v6688
    %6832 = vmatpush1.bf16.msra.mxu0 %v6687
    %6833 = vmatprep.subr.bf16.mxu0 %v6690
    %6834 = vmatpush1.bf16.msra.mxu0 %v6689
    %6835 = vmatprep.mubr.bf16.mxu0 %v6622
    %6836 = vmatmul.mubr.bf16.gmra.mrb[0].mxu0 %v6602
    %v6837 = vpop.f32.mrb[0].mxu0
    %v6838 = vadd.f32 0.0, %v6837
    %v6839 = vpop.f32.mrb[0].mxu0
    %v6840 = vadd.f32 0.0, %v6839
    %v6841 = vpop.f32.mrb[0].mxu0
    %v6842 = vpop.f32.mrb[0].mxu0
    %6843 = vdwg.mxu0
    %6844 = vmatprep.subr.bf16.mxu0 %v6692
    %6845 = vmatpush1.bf16.msra.mxu0 %v6691
    %6846 = vmatprep.subr.bf16.mxu0 %v6694
    %6847 = vmatpush1.bf16.msra.mxu0 %v6693
    %6848 = vmatprep.subr.bf16.mxu0 %v6696
    %6849 = vmatpush1.bf16.msra.mxu0 %v6695
    %6850 = vmatprep.subr.bf16.mxu0 %v6698
    %6851 = vmatpush1.bf16.msra.mxu0 %v6697
    %6852 = vmatprep.subr.bf16.mxu0 %v6700
    %6853 = vmatpush1.bf16.msra.mxu0 %v6699
    %6854 = vmatprep.subr.bf16.mxu0 %v6702
    %6855 = vmatpush1.bf16.msra.mxu0 %v6701
    %6856 = vmatprep.subr.bf16.mxu0 %v6704
    %6857 = vmatpush1.bf16.msra.mxu0 %v6703
    %6858 = vmatprep.subr.bf16.mxu0 %v6706
    %6859 = vmatpush1.bf16.msra.mxu0 %v6705
    %6860 = vmatprep.subr.bf16.mxu0 %v6708
    %6861 = vmatpush1.bf16.msra.mxu0 %v6707
    %6862 = vmatprep.subr.bf16.mxu0 %v6710
    %6863 = vmatpush1.bf16.msra.mxu0 %v6709
    %6864 = vmatprep.subr.bf16.mxu0 %v6712
    %6865 = vmatpush1.bf16.msra.mxu0 %v6711
    %6866 = vmatprep.subr.bf16.mxu0 %v6714
    %6867 = vmatpush1.bf16.msra.mxu0 %v6713
    %6868 = vmatprep.subr.bf16.mxu0 %v6716
    %6869 = vmatpush1.bf16.msra.mxu0 %v6715
    %6870 = vmatprep.subr.bf16.mxu0 %v6718
    %6871 = vmatpush1.bf16.msra.mxu0 %v6717
    %6872 = vmatprep.subr.bf16.mxu0 %v6720
    %6873 = vmatpush1.bf16.msra.mxu0 %v6719
    %6874 = vmatprep.subr.bf16.mxu0 %v6722
    %6875 = vmatpush1.bf16.msra.mxu0 %v6721
    %6876 = vmatprep.mubr.bf16.mxu0 %v6636
    %6877 = vmatmul.mubr.bf16.gmra.mrb[0].mxu0 %v6629
    %v6878 = vpop.f32.mrb[0].mxu0
    %v6879 = vadd.f32 %v6838, %v6878
    %v6880 = vpop.f32.mrb[0].mxu0
    %v6881 = vadd.f32 %v6840, %v6880
    %v6882 = vpop.f32.mrb[0].mxu0
    %v6883 = vpop.f32.mrb[0].mxu0
    %6884 = vdwg.mxu0
    %6885 = vmatprep.subr.bf16.mxu0 %v6724
    %6886 = vmatpush1.bf16.msra.mxu0 %v6723
    %6887 = vmatprep.subr.bf16.mxu0 %v6726
    %6888 = vmatpush1.bf16.msra.mxu0 %v6725
    %6889 = vmatprep.subr.bf16.mxu0 %v6728
    %6890 = vmatpush1.bf16.msra.mxu0 %v6727
    %6891 = vmatprep.subr.bf16.mxu0 %v6730
    %6892 = vmatpush1.bf16.msra.mxu0 %v6729
    %6893 = vmatprep.subr.bf16.mxu0 %v6732
    %6894 = vmatpush1.bf16.msra.mxu0 %v6731
    %6895 = vmatprep.subr.bf16.mxu0 %v6734
    %6896 = vmatpush1.bf16.msra.mxu0 %v6733
    %6897 = vmatprep.subr.bf16.mxu0 %v6736
    %6898 = vmatpush1.bf16.msra.mxu0 %v6735
    %6899 = vmatprep.subr.bf16.mxu0 %v6738
    %6900 = vmatpush1.bf16.msra.mxu0 %v6737
    %6901 = vmatprep.subr.bf16.mxu0 %v6740
    %6902 = vmatpush1.bf16.msra.mxu0 %v6739
    %6903 = vmatprep.subr.bf16.mxu0 %v6742
    %6904 = vmatpush1.bf16.msra.mxu0 %v6741
    %6905 = vmatprep.subr.bf16.mxu0 %v6744
    %6906 = vmatpush1.bf16.msra.mxu0 %v6743
    %6907 = vmatprep.subr.bf16.mxu0 %v6746
    %6908 = vmatpush1.bf16.msra.mxu0 %v6745
    %6909 = vmatprep.subr.bf16.mxu0 %v6748
    %6910 = vmatpush1.bf16.msra.mxu0 %v6747
    %6911 = vmatprep.subr.bf16.mxu0 %v6750
    %6912 = vmatpush1.bf16.msra.mxu0 %v6749
    %6913 = vmatprep.subr.bf16.mxu0 %v6752
    %6914 = vmatpush1.bf16.msra.mxu0 %v6751
    %6915 = vmatprep.subr.bf16.mxu0 %v6754
    %6916 = vmatpush1.bf16.msra.mxu0 %v6753
    %6917 = vmatprep.mubr.bf16.mxu0 %v6611
    %6918 = vmatmul.mubr.bf16.gmra.mrb[0].mxu0 %v6643
    %v6919 = vpop.f32.mrb[0].mxu0
    %v6920 = vadd.f32 %v6879, %v6919
    %v6921 = vpop.f32.mrb[0].mxu0
    %v6922 = vadd.f32 %v6881, %v6921
    %v6923 = vpop.f32.mrb[0].mxu0
    %v6924 = vpop.f32.mrb[0].mxu0
    %6925 = vdwg.mxu0
    %6926 = vmatprep.subr.bf16.mxu0 %v6756
    %6927 = vmatpush1.bf16.msra.mxu0 %v6755
    %6928 = vmatprep.subr.bf16.mxu0 %v6758
    %6929 = vmatpush1.bf16.msra.mxu0 %v6757
    %6930 = vmatprep.subr.bf16.mxu0 %v6760
    %6931 = vmatpush1.bf16.msra.mxu0 %v6759
    %6932 = vmatprep.subr.bf16.mxu0 %v6762
    %6933 = vmatpush1.bf16.msra.mxu0 %v6761
    %6934 = vmatprep.subr.bf16.mxu0 %v6764
    %6935 = vmatpush1.bf16.msra.mxu0 %v6763
    %6936 = vmatprep.subr.bf16.mxu0 %v6766
    %6937 = vmatpush1.bf16.msra.mxu0 %v6765
    %6938 = vmatprep.subr.bf16.mxu0 %v6768
    %6939 = vmatpush1.bf16.msra.mxu0 %v6767
    %6940 = vmatprep.subr.bf16.mxu0 %v6770
    %6941 = vmatpush1.bf16.msra.mxu0 %v6769
    %6942 = vmatprep.subr.bf16.mxu0 %v6772
    %6943 = vmatpush1.bf16.msra.mxu0 %v6771
    %6944 = vmatprep.subr.bf16.mxu0 %v6774
    %6945 = vmatpush1.bf16.msra.mxu0 %v6773
    %6946 = vmatprep.subr.bf16.mxu0 %v6776
    %6947 = vmatpush1.bf16.msra.mxu0 %v6775
    %6948 = vmatprep.subr.bf16.mxu0 %v6778
    %6949 = vmatpush1.bf16.msra.mxu0 %v6777
    %6950 = vmatprep.subr.bf16.mxu0 %v6780
    %6951 = vmatpush1.bf16.msra.mxu0 %v6779
    %6952 = vmatprep.subr.bf16.mxu0 %v6782
    %6953 = vmatpush1.bf16.msra.mxu0 %v6781
    %6954 = vmatprep.subr.bf16.mxu0 %v6784
    %6955 = vmatpush1.bf16.msra.mxu0 %v6783
    %6956 = vmatprep.subr.bf16.mxu0 %v6786
    %6957 = vmatpush1.bf16.msra.mxu0 %v6785
    %6958 = vmatprep.mubr.bf16.mxu0 %v6650
    %6959 = vmatmul.mubr.bf16.gmra.mrb[0].mxu0 %v6612
    %v6960 = vpop.f32.mrb[0].mxu0
    %v6961 = vadd.f32 %v6920, %v6960
    %v6962 = vpop.f32.mrb[0].mxu0
    %v6963 = vadd.f32 %v6922, %v6962
    %v6964 = vpop.f32.mrb[0].mxu0
    %v6965 = vpop.f32.mrb[0].mxu0
    %6966 = vdwg.mxu0
    %6967 = vmatprep.subr.bf16.mxu0 %v6788
    %6968 = vmatpush1.bf16.msra.mxu0 %v6787
    %6969 = vmatprep.subr.bf16.mxu0 %v6790
    %6970 = vmatpush1.bf16.msra.mxu0 %v6789
    %6971 = vmatprep.subr.bf16.mxu0 %v6792
    %6972 = vmatpush1.bf16.msra.mxu0 %v6791
    %6973 = vmatprep.subr.bf16.mxu0 %v6794
    %6974 = vmatpush1.bf16.msra.mxu0 %v6793
    %6975 = vmatprep.subr.bf16.mxu0 %v6796
    %6976 = vmatpush1.bf16.msra.mxu0 %v6795
    %6977 = vmatprep.subr.bf16.mxu0 %v6798
    %6978 = vmatpush1.bf16.msra.mxu0 %v6797
    %6979 = vmatprep.subr.bf16.mxu0 %v6800
    %6980 = vmatpush1.bf16.msra.mxu0 %v6799
    %6981 = vmatprep.subr.bf16.mxu0 %v6802
    %6982 = vmatpush1.bf16.msra.mxu0 %v6801
    %6983 = vmatprep.subr.bf16.mxu0 0
    %6984 = vmatpush1.bf16.msra.mxu0 0
    %6985 = vmatprep.subr.bf16.mxu0 0
    %6986 = vmatpush1.bf16.msra.mxu0 0
    %6987 = vmatprep.subr.bf16.mxu0 0
    %6988 = vmatpush1.bf16.msra.mxu0 0
    %6989 = vmatprep.subr.bf16.mxu0 0
    %6990 = vmatpush1.bf16.msra.mxu0 0
    %6991 = vmatprep.subr.bf16.mxu0 0
    %6992 = vmatpush1.bf16.msra.mxu0 0
    %6993 = vmatprep.subr.bf16.mxu0 0
    %6994 = vmatpush1.bf16.msra.mxu0 0
    %6995 = vmatprep.subr.bf16.mxu0 0
    %6996 = vmatpush1.bf16.msra.mxu0 0
    %6997 = vmatprep.subr.bf16.mxu0 0
    %6998 = vmatpush1.bf16.msra.mxu0 0
    %6999 = vmatprep.mubr.bf16.mxu0 0
    %7000 = vmatmul.mubr.bf16.gmra.mrb[0].mxu0 %v6657
    %v7001 = vpop.f32.mrb[0].mxu0
    %v7002 = vadd.f32 %v6961, %v7001
    %v7003 = vpop.f32.mrb[0].mxu0
    %v7004 = vadd.f32 %v6963, %v7003
    %v7005 = vpop.f32.mrb[0].mxu0
    %v7006 = vpop.f32.mrb[0].mxu0
    %7007 = vdwg.mxu0
    %vm7008 = vcmp.ge.f32.partialorder %v7002, 0.0
    %vm7009 = vcmp.ge.f32.partialorder %v7004, 0.0
    %v7010 = vmul.f32 %v7002, 0.2
    %v7011 = vmul.f32 %v7004, 0.2
    %v7012 = vsel %vm7008, %v7002, %v7010
    %v7013 = vsel %vm7009, %v7004, %v7011
    %v7014 = vld [vmem:[#allocation16] sm:$0x3]
    %v7016 = vlaneseq
    %v7017 = vshrl.u32 %v7016, 7
    %v7018 = vsub.s32 0, %v7017
    %v7019 = vrot.slane %v7014, %v7018
    %v7020 = vlaneseq
    %v7021 = vshrl.u32 %v7020, 7
    %v7022 = vsub.s32 1, %v7021
    %v7023 = vrot.slane %v7014, %v7022
    %v7026 = vmul.f32 %v7012, %v7019
    %v7027 = vmul.f32 %v7013, %v7023
    %v7028 = vld [vmem:[#allocation17] sm:$0x3]
    %v7030 = vlaneseq
    %v7031 = vshrl.u32 %v7030, 7
    %v7032 = vsub.s32 0, %v7031
    %v7033 = vrot.slane %v7028, %v7032
    %v7034 = vlaneseq
    %v7035 = vshrl.u32 %v7034, 7
    %v7036 = vsub.s32 1, %v7035
    %v7037 = vrot.slane %v7028, %v7036
    %v7040 = vadd.f32 %v7026, %v7033
    %v7041 = vadd.f32 %v7027, %v7037
    %v7042 = vpack.c.bf16 %v7040, %v7040
    %v7043 = vpack.c.bf16 %v7041, %v7041
    %7044 = vst [vmem:[#allocation4] sm:$0xf] %v7042
    %7045 = vst [vmem:[#allocation4 + $0x8] sm:$0xf] %v7043
    %v7046 = vld [vmem:[#allocation3 + $0x4] sm:$0xc]
    %v7047 = vld [vmem:[#allocation3 + $0x8] sm:$0x3]
    %v7048 = vld [vmem:[#allocation3 + $0x4] sm:$0x8]
    %v7049 = vld [vmem:[#allocation3 + $0x8] sm:$0x7]
    %v7050 = vld [vmem:[#allocation3 + $0x8] sm:$0xf]
    %v7051 = vld [vmem:[#allocation3 + $0xc] sm:$0xf]
    %v7052 = vld [vmem:[#allocation3 + $0xc] sm:$0xe]
    %v7053 = vld [vmem:[#allocation3 + $0x10] sm:$0x1]
    %v7054 = vld [vmem:[#allocation3 + $0xc] sm:$0xc]
    %v7055 = vld [vmem:[#allocation3 + $0x10] sm:$0x3]
    %v7056 = vld [vmem:[#allocation3 + $0x10] sm:$0xc]
    %v7057 = vld [vmem:[#allocation3 + $0x14] sm:$0x3]
    %v7058 = vld [vmem:[#allocation3 + $0x10] sm:$0x8]
    %v7059 = vld [vmem:[#allocation3 + $0x14] sm:$0x7]
    %v7060 = vld [vmem:[#allocation3 + $0x14] sm:$0xf]
    %v7063 = vunpack.c.l.b16 %v7046
    %v7064 = vunpack.c.l.b16 %v7047
    %v7065 = vpack.c.b16 %v7064, %v7063
    %v7068 = vunpack.c.l.b16 %v7048
    %v7069 = vunpack.c.l.b16 %v7049
    %v7070 = vpack.c.b16 %v7069, %v7068
    %v7071 = vrot.slane %v7070, 1
    %v7073 = vunpack.c.l.b16 %v7050
    %v7074 = vpack.c.b16 %v7073, %v7073
    %v7075 = vrot.slane %v7074, 6
    %v7077 = vunpack.c.l.b16 %v7051
    %v7078 = vpack.c.b16 %v7077, %v7077
    %v7079 = vrot.slane %v7078, 6
    %v7082 = vunpack.c.l.b16 %v7052
    %v7083 = vunpack.c.l.b16 %v7053
    %v7084 = vpack.c.b16 %v7083, %v7082
    %v7085 = vrot.slane %v7084, 7
    %v7088 = vunpack.c.l.b16 %v7054
    %v7089 = vunpack.c.l.b16 %v7055
    %v7090 = vpack.c.b16 %v7089, %v7088
    %v7093 = vunpack.c.l.b16 %v7056
    %v7094 = vunpack.c.l.b16 %v7057
    %v7095 = vpack.c.b16 %v7094, %v7093
    %v7098 = vunpack.c.l.b16 %v7058
    %v7099 = vunpack.c.l.b16 %v7059
    %v7100 = vpack.c.b16 %v7099, %v7098
    %v7101 = vrot.slane %v7100, 1
    %v7103 = vunpack.c.l.b16 %v7060
    %v7104 = vpack.c.b16 %v7103, %v7103
    %v7105 = vrot.slane %v7104, 6
    %v7106 = vld [vmem:[#allocation5] sm:$0xff]
    %v7107 = vld [vmem:[#allocation5 + $0x8] sm:$0xff]
    %v7108 = vld [vmem:[#allocation5 + $0x10] sm:$0xff]
    %v7109 = vld [vmem:[#allocation5 + $0x18] sm:$0xff]
    %v7110 = vld [vmem:[#allocation5 + $0x20] sm:$0xff]
    %v7111 = vld [vmem:[#allocation5 + $0x28] sm:$0xff]
    %v7112 = vld [vmem:[#allocation5 + $0x30] sm:$0xff]
    %v7113 = vld [vmem:[#allocation5 + $0x38] sm:$0xff]
    %v7114 = vld [vmem:[#allocation5 + $0x40] sm:$0xff]
    %v7115 = vld [vmem:[#allocation5 + $0x48] sm:$0xff]
    %v7116 = vld [vmem:[#allocation5 + $0x50] sm:$0xff]
    %v7117 = vld [vmem:[#allocation5 + $0x58] sm:$0xff]
    %v7118 = vld [vmem:[#allocation5 + $0x60] sm:$0xff]
    %v7119 = vld [vmem:[#allocation5 + $0x68] sm:$0xff]
    %v7120 = vld [vmem:[#allocation5 + $0x70] sm:$0xff]
    %v7121 = vld [vmem:[#allocation5 + $0x78] sm:$0xff]
    %v7122 = vld [vmem:[#allocation5 + $0x80] sm:$0xff]
    %v7123 = vld [vmem:[#allocation5 + $0x88] sm:$0xff]
    %v7124 = vld [vmem:[#allocation5 + $0x90] sm:$0xff]
    %v7125 = vld [vmem:[#allocation5 + $0x98] sm:$0xff]
    %v7126 = vld [vmem:[#allocation5 + $0xa0] sm:$0xff]
    %v7127 = vld [vmem:[#allocation5 + $0xa8] sm:$0xff]
    %v7128 = vld [vmem:[#allocation5 + $0xb0] sm:$0xff]
    %v7129 = vld [vmem:[#allocation5 + $0xb8] sm:$0xff]
    %v7130 = vld [vmem:[#allocation5 + $0xc0] sm:$0xff]
    %v7131 = vld [vmem:[#allocation5 + $0xc8] sm:$0xff]
    %v7132 = vld [vmem:[#allocation5 + $0xd0] sm:$0xff]
    %v7133 = vld [vmem:[#allocation5 + $0xd8] sm:$0xff]
    %v7134 = vld [vmem:[#allocation5 + $0xe0] sm:$0xff]
    %v7135 = vld [vmem:[#allocation5 + $0xe8] sm:$0xff]
    %v7136 = vld [vmem:[#allocation5 + $0xf0] sm:$0xff]
    %v7137 = vld [vmem:[#allocation5 + $0xf8] sm:$0xff]
    %v7138 = vld [vmem:[#allocation5 + $0x100] sm:$0xff]
    %v7139 = vld [vmem:[#allocation5 + $0x108] sm:$0xff]
    %v7140 = vld [vmem:[#allocation5 + $0x110] sm:$0xff]
    %v7141 = vld [vmem:[#allocation5 + $0x118] sm:$0xff]
    %v7142 = vld [vmem:[#allocation5 + $0x120] sm:$0xff]
    %v7143 = vld [vmem:[#allocation5 + $0x128] sm:$0xff]
    %v7144 = vld [vmem:[#allocation5 + $0x130] sm:$0xff]
    %v7145 = vld [vmem:[#allocation5 + $0x138] sm:$0xff]
    %v7146 = vld [vmem:[#allocation5 + $0x140] sm:$0xff]
    %v7147 = vld [vmem:[#allocation5 + $0x148] sm:$0xff]
    %v7148 = vld [vmem:[#allocation5 + $0x150] sm:$0xff]
    %v7149 = vld [vmem:[#allocation5 + $0x158] sm:$0xff]
    %v7150 = vld [vmem:[#allocation5 + $0x160] sm:$0xff]
    %v7151 = vld [vmem:[#allocation5 + $0x168] sm:$0xff]
    %v7152 = vld [vmem:[#allocation5 + $0x170] sm:$0xff]
    %v7153 = vld [vmem:[#allocation5 + $0x178] sm:$0xff]
    %v7154 = vld [vmem:[#allocation5 + $0x180] sm:$0xff]
    %v7155 = vld [vmem:[#allocation5 + $0x188] sm:$0xff]
    %v7156 = vld [vmem:[#allocation5 + $0x190] sm:$0xff]
    %v7157 = vld [vmem:[#allocation5 + $0x198] sm:$0xff]
    %v7158 = vld [vmem:[#allocation5 + $0x1a0] sm:$0xff]
    %v7159 = vld [vmem:[#allocation5 + $0x1a8] sm:$0xff]
    %v7160 = vld [vmem:[#allocation5 + $0x1b0] sm:$0xff]
    %v7161 = vld [vmem:[#allocation5 + $0x1b8] sm:$0xff]
    %v7162 = vld [vmem:[#allocation5 + $0x1c0] sm:$0xff]
    %v7163 = vld [vmem:[#allocation5 + $0x1c8] sm:$0xff]
    %v7164 = vld [vmem:[#allocation5 + $0x1d0] sm:$0xff]
    %v7165 = vld [vmem:[#allocation5 + $0x1d8] sm:$0xff]
    %v7166 = vld [vmem:[#allocation5 + $0x1e0] sm:$0xff]
    %v7167 = vld [vmem:[#allocation5 + $0x1e8] sm:$0xff]
    %v7168 = vld [vmem:[#allocation5 + $0x1f0] sm:$0xff]
    %v7169 = vld [vmem:[#allocation5 + $0x1f8] sm:$0xff]
    %v7170 = vld [vmem:[#allocation5 + $0x200] sm:$0xff]
    %v7171 = vld [vmem:[#allocation5 + $0x208] sm:$0xff]
    %v7172 = vld [vmem:[#allocation5 + $0x210] sm:$0xff]
    %v7173 = vld [vmem:[#allocation5 + $0x218] sm:$0xff]
    %v7174 = vld [vmem:[#allocation5 + $0x220] sm:$0xff]
    %v7175 = vld [vmem:[#allocation5 + $0x228] sm:$0xff]
    %v7176 = vld [vmem:[#allocation5 + $0x230] sm:$0xff]
    %v7177 = vld [vmem:[#allocation5 + $0x238] sm:$0xff]
    %v7178 = vld [vmem:[#allocation5 + $0x240] sm:$0xff]
    %v7179 = vld [vmem:[#allocation5 + $0x248] sm:$0xff]
    %v7180 = vld [vmem:[#allocation5 + $0x250] sm:$0xff]
    %v7181 = vld [vmem:[#allocation5 + $0x258] sm:$0xff]
    %v7182 = vld [vmem:[#allocation5 + $0x260] sm:$0xff]
    %v7183 = vld [vmem:[#allocation5 + $0x268] sm:$0xff]
    %v7184 = vld [vmem:[#allocation5 + $0x270] sm:$0xff]
    %v7185 = vld [vmem:[#allocation5 + $0x278] sm:$0xff]
    %v7186 = vld [vmem:[#allocation5 + $0x280] sm:$0xff]
    %v7187 = vld [vmem:[#allocation5 + $0x288] sm:$0xff]
    %v7188 = vld [vmem:[#allocation5 + $0x290] sm:$0xff]
    %v7189 = vld [vmem:[#allocation5 + $0x298] sm:$0xff]
    %v7190 = vld [vmem:[#allocation5 + $0x2a0] sm:$0xff]
    %v7191 = vld [vmem:[#allocation5 + $0x2a8] sm:$0xff]
    %v7192 = vld [vmem:[#allocation5 + $0x2b0] sm:$0xff]
    %v7193 = vld [vmem:[#allocation5 + $0x2b8] sm:$0xff]
    %v7194 = vld [vmem:[#allocation5 + $0x2c0] sm:$0xff]
    %v7195 = vld [vmem:[#allocation5 + $0x2c8] sm:$0xff]
    %v7196 = vld [vmem:[#allocation5 + $0x2d0] sm:$0xff]
    %v7197 = vld [vmem:[#allocation5 + $0x2d8] sm:$0xff]
    %v7198 = vld [vmem:[#allocation5 + $0x2e0] sm:$0xff]
    %v7199 = vld [vmem:[#allocation5 + $0x2e8] sm:$0xff]
    %v7200 = vld [vmem:[#allocation5 + $0x2f0] sm:$0xff]
    %v7201 = vld [vmem:[#allocation5 + $0x2f8] sm:$0xff]
    %v7202 = vld [vmem:[#allocation5 + $0x300] sm:$0xff]
    %v7203 = vld [vmem:[#allocation5 + $0x308] sm:$0xff]
    %v7204 = vld [vmem:[#allocation5 + $0x310] sm:$0xff]
    %v7205 = vld [vmem:[#allocation5 + $0x318] sm:$0xff]
    %v7206 = vld [vmem:[#allocation5 + $0x320] sm:$0xff]
    %v7207 = vld [vmem:[#allocation5 + $0x328] sm:$0xff]
    %v7208 = vld [vmem:[#allocation5 + $0x330] sm:$0xff]
    %v7209 = vld [vmem:[#allocation5 + $0x338] sm:$0xff]
    %v7210 = vld [vmem:[#allocation5 + $0x340] sm:$0xff]
    %v7211 = vld [vmem:[#allocation5 + $0x348] sm:$0xff]
    %v7212 = vld [vmem:[#allocation5 + $0x350] sm:$0xff]
    %v7213 = vld [vmem:[#allocation5 + $0x358] sm:$0xff]
    %v7214 = vld [vmem:[#allocation5 + $0x360] sm:$0xff]
    %v7215 = vld [vmem:[#allocation5 + $0x368] sm:$0xff]
    %v7216 = vld [vmem:[#allocation5 + $0x370] sm:$0xff]
    %v7217 = vld [vmem:[#allocation5 + $0x378] sm:$0xff]
    %v7218 = vld [vmem:[#allocation5 + $0x380] sm:$0xff]
    %v7219 = vld [vmem:[#allocation5 + $0x388] sm:$0xff]
    %v7220 = vld [vmem:[#allocation5 + $0x390] sm:$0xff]
    %v7221 = vld [vmem:[#allocation5 + $0x398] sm:$0xff]
    %v7222 = vld [vmem:[#allocation5 + $0x3a0] sm:$0xff]
    %v7223 = vld [vmem:[#allocation5 + $0x3a8] sm:$0xff]
    %v7224 = vld [vmem:[#allocation5 + $0x3b0] sm:$0xff]
    %v7225 = vld [vmem:[#allocation5 + $0x3b8] sm:$0xff]
    %v7226 = vld [vmem:[#allocation5 + $0x3c0] sm:$0xff]
    %v7227 = vld [vmem:[#allocation5 + $0x3c8] sm:$0xff]
    %v7228 = vld [vmem:[#allocation5 + $0x3d0] sm:$0xff]
    %v7229 = vld [vmem:[#allocation5 + $0x3d8] sm:$0xff]
    %v7230 = vld [vmem:[#allocation5 + $0x3e0] sm:$0xff]
    %v7231 = vld [vmem:[#allocation5 + $0x3e8] sm:$0xff]
    %v7232 = vld [vmem:[#allocation5 + $0x3f0] sm:$0xff]
    %v7233 = vld [vmem:[#allocation5 + $0x3f8] sm:$0xff]
    %v7234 = vld [vmem:[#allocation5 + $0x400] sm:$0xff]
    %v7235 = vld [vmem:[#allocation5 + $0x408] sm:$0xff]
    %v7236 = vld [vmem:[#allocation5 + $0x410] sm:$0xff]
    %v7237 = vld [vmem:[#allocation5 + $0x418] sm:$0xff]
    %v7238 = vld [vmem:[#allocation5 + $0x420] sm:$0xff]
    %v7239 = vld [vmem:[#allocation5 + $0x428] sm:$0xff]
    %v7240 = vld [vmem:[#allocation5 + $0x430] sm:$0xff]
    %v7241 = vld [vmem:[#allocation5 + $0x438] sm:$0xff]
    %v7242 = vld [vmem:[#allocation5 + $0x440] sm:$0xff]
    %v7243 = vld [vmem:[#allocation5 + $0x448] sm:$0xff]
    %v7244 = vld [vmem:[#allocation5 + $0x450] sm:$0xff]
    %v7245 = vld [vmem:[#allocation5 + $0x458] sm:$0xff]
    %v7246 = vld [vmem:[#allocation5 + $0x460] sm:$0xff]
    %v7247 = vld [vmem:[#allocation5 + $0x468] sm:$0xff]
    %v7248 = vld [vmem:[#allocation5 + $0x470] sm:$0xff]
    %v7249 = vld [vmem:[#allocation5 + $0x478] sm:$0xff]
    %v7250 = vrot.slane %v7065, 2
    %v7251 = vrot.slane %v7071, 2
    %v7252 = vrot.slane %v7075, 2
    %v7253 = vrot.slane %v7079, 2
    %v7254 = vrot.slane %v7085, 2
    %v7255 = vrot.slane %v7090, 2
    %v7256 = vrot.slane %v7095, 2
    %v7257 = vrot.slane %v7101, 2
    %v7258 = vrot.slane %v7105, 2
    %7268 = vmatprep.subr.bf16.mxu0 %v7107
    %7269 = vmatpush1.bf16.msra.mxu0 %v7106
    %7270 = vmatprep.subr.bf16.mxu0 %v7109
    %7271 = vmatpush1.bf16.msra.mxu0 %v7108
    %7272 = vmatprep.subr.bf16.mxu0 %v7111
    %7273 = vmatpush1.bf16.msra.mxu0 %v7110
    %7274 = vmatprep.subr.bf16.mxu0 %v7113
    %7275 = vmatpush1.bf16.msra.mxu0 %v7112
    %7276 = vmatprep.subr.bf16.mxu0 %v7115
    %7277 = vmatpush1.bf16.msra.mxu0 %v7114
    %7278 = vmatprep.subr.bf16.mxu0 %v7117
    %7279 = vmatpush1.bf16.msra.mxu0 %v7116
    %7280 = vmatprep.subr.bf16.mxu0 %v7119
    %7281 = vmatpush1.bf16.msra.mxu0 %v7118
    %7282 = vmatprep.subr.bf16.mxu0 %v7121
    %7283 = vmatpush1.bf16.msra.mxu0 %v7120
    %7284 = vmatprep.subr.bf16.mxu0 %v7123
    %7285 = vmatpush1.bf16.msra.mxu0 %v7122
    %7286 = vmatprep.subr.bf16.mxu0 %v7125
    %7287 = vmatpush1.bf16.msra.mxu0 %v7124
    %7288 = vmatprep.subr.bf16.mxu0 %v7127
    %7289 = vmatpush1.bf16.msra.mxu0 %v7126
    %7290 = vmatprep.subr.bf16.mxu0 %v7129
    %7291 = vmatpush1.bf16.msra.mxu0 %v7128
    %7292 = vmatprep.subr.bf16.mxu0 %v7131
    %7293 = vmatpush1.bf16.msra.mxu0 %v7130
    %7294 = vmatprep.subr.bf16.mxu0 %v7133
    %7295 = vmatpush1.bf16.msra.mxu0 %v7132
    %7296 = vmatprep.subr.bf16.mxu0 %v7135
    %7297 = vmatpush1.bf16.msra.mxu0 %v7134
    %7298 = vmatprep.subr.bf16.mxu0 %v7137
    %7299 = vmatpush1.bf16.msra.mxu0 %v7136
    %7300 = vmatprep.mubr.bf16.mxu0 %v7251
    %7301 = vmatmul.mubr.bf16.gmra.mrb[0].mxu0 %v7250
    %v7302 = vpop.f32.mrb[0].mxu0
    %v7303 = vadd.f32 0.0, %v7302
    %v7304 = vpop.f32.mrb[0].mxu0
    %v7305 = vadd.f32 0.0, %v7304
    %v7306 = vpop.f32.mrb[0].mxu0
    %v7307 = vpop.f32.mrb[0].mxu0
    %7308 = vdwg.mxu0
    %7309 = vmatprep.subr.bf16.mxu0 %v7139
    %7310 = vmatpush1.bf16.msra.mxu0 %v7138
    %7311 = vmatprep.subr.bf16.mxu0 %v7141
    %7312 = vmatpush1.bf16.msra.mxu0 %v7140
    %7313 = vmatprep.subr.bf16.mxu0 %v7143
    %7314 = vmatpush1.bf16.msra.mxu0 %v7142
    %7315 = vmatprep.subr.bf16.mxu0 %v7145
    %7316 = vmatpush1.bf16.msra.mxu0 %v7144
    %7317 = vmatprep.subr.bf16.mxu0 %v7147
    %7318 = vmatpush1.bf16.msra.mxu0 %v7146
    %7319 = vmatprep.subr.bf16.mxu0 %v7149
    %7320 = vmatpush1.bf16.msra.mxu0 %v7148
    %7321 = vmatprep.subr.bf16.mxu0 %v7151
    %7322 = vmatpush1.bf16.msra.mxu0 %v7150
    %7323 = vmatprep.subr.bf16.mxu0 %v7153
    %7324 = vmatpush1.bf16.msra.mxu0 %v7152
    %7325 = vmatprep.subr.bf16.mxu0 %v7155
    %7326 = vmatpush1.bf16.msra.mxu0 %v7154
    %7327 = vmatprep.subr.bf16.mxu0 %v7157
    %7328 = vmatpush1.bf16.msra.mxu0 %v7156
    %7329 = vmatprep.subr.bf16.mxu0 %v7159
    %7330 = vmatpush1.bf16.msra.mxu0 %v7158
    %7331 = vmatprep.subr.bf16.mxu0 %v7161
    %7332 = vmatpush1.bf16.msra.mxu0 %v7160
    %7333 = vmatprep.subr.bf16.mxu0 %v7163
    %7334 = vmatpush1.bf16.msra.mxu0 %v7162
    %7335 = vmatprep.subr.bf16.mxu0 %v7165
    %7336 = vmatpush1.bf16.msra.mxu0 %v7164
    %7337 = vmatprep.subr.bf16.mxu0 %v7167
    %7338 = vmatpush1.bf16.msra.mxu0 %v7166
    %7339 = vmatprep.subr.bf16.mxu0 %v7169
    %7340 = vmatpush1.bf16.msra.mxu0 %v7168
    %7341 = vmatprep.mubr.bf16.mxu0 %v7253
    %7342 = vmatmul.mubr.bf16.gmra.mrb[0].mxu0 %v7252
    %v7343 = vpop.f32.mrb[0].mxu0
    %v7344 = vadd.f32 %v7303, %v7343
    %v7345 = vpop.f32.mrb[0].mxu0
    %v7346 = vadd.f32 %v7305, %v7345
    %v7347 = vpop.f32.mrb[0].mxu0
    %v7348 = vpop.f32.mrb[0].mxu0
    %7349 = vdwg.mxu0
    %7350 = vmatprep.subr.bf16.mxu0 %v7171
    %7351 = vmatpush1.bf16.msra.mxu0 %v7170
    %7352 = vmatprep.subr.bf16.mxu0 %v7173
    %7353 = vmatpush1.bf16.msra.mxu0 %v7172
    %7354 = vmatprep.subr.bf16.mxu0 %v7175
    %7355 = vmatpush1.bf16.msra.mxu0 %v7174
    %7356 = vmatprep.subr.bf16.mxu0 %v7177
    %7357 = vmatpush1.bf16.msra.mxu0 %v7176
    %7358 = vmatprep.subr.bf16.mxu0 %v7179
    %7359 = vmatpush1.bf16.msra.mxu0 %v7178
    %7360 = vmatprep.subr.bf16.mxu0 %v7181
    %7361 = vmatpush1.bf16.msra.mxu0 %v7180
    %7362 = vmatprep.subr.bf16.mxu0 %v7183
    %7363 = vmatpush1.bf16.msra.mxu0 %v7182
    %7364 = vmatprep.subr.bf16.mxu0 %v7185
    %7365 = vmatpush1.bf16.msra.mxu0 %v7184
    %7366 = vmatprep.subr.bf16.mxu0 %v7187
    %7367 = vmatpush1.bf16.msra.mxu0 %v7186
    %7368 = vmatprep.subr.bf16.mxu0 %v7189
    %7369 = vmatpush1.bf16.msra.mxu0 %v7188
    %7370 = vmatprep.subr.bf16.mxu0 %v7191
    %7371 = vmatpush1.bf16.msra.mxu0 %v7190
    %7372 = vmatprep.subr.bf16.mxu0 %v7193
    %7373 = vmatpush1.bf16.msra.mxu0 %v7192
    %7374 = vmatprep.subr.bf16.mxu0 %v7195
    %7375 = vmatpush1.bf16.msra.mxu0 %v7194
    %7376 = vmatprep.subr.bf16.mxu0 %v7197
    %7377 = vmatpush1.bf16.msra.mxu0 %v7196
    %7378 = vmatprep.subr.bf16.mxu0 %v7199
    %7379 = vmatpush1.bf16.msra.mxu0 %v7198
    %7380 = vmatprep.subr.bf16.mxu0 %v7201
    %7381 = vmatpush1.bf16.msra.mxu0 %v7200
    %7382 = vmatprep.mubr.bf16.mxu0 %v7255
    %7383 = vmatmul.mubr.bf16.gmra.mrb[0].mxu0 %v7254
    %v7384 = vpop.f32.mrb[0].mxu0
    %v7385 = vadd.f32 %v7344, %v7384
    %v7386 = vpop.f32.mrb[0].mxu0
    %v7387 = vadd.f32 %v7346, %v7386
    %v7388 = vpop.f32.mrb[0].mxu0
    %v7389 = vpop.f32.mrb[0].mxu0
    %7390 = vdwg.mxu0
    %7391 = vmatprep.subr.bf16.mxu0 %v7203
    %7392 = vmatpush1.bf16.msra.mxu0 %v7202
    %7393 = vmatprep.subr.bf16.mxu0 %v7205
    %7394 = vmatpush1.bf16.msra.mxu0 %v7204
    %7395 = vmatprep.subr.bf16.mxu0 %v7207
    %7396 = vmatpush1.bf16.msra.mxu0 %v7206
    %7397 = vmatprep.subr.bf16.mxu0 %v7209
    %7398 = vmatpush1.bf16.msra.mxu0 %v7208
    %7399 = vmatprep.subr.bf16.mxu0 %v7211
    %7400 = vmatpush1.bf16.msra.mxu0 %v7210
    %7401 = vmatprep.subr.bf16.mxu0 %v7213
    %7402 = vmatpush1.bf16.msra.mxu0 %v7212
    %7403 = vmatprep.subr.bf16.mxu0 %v7215
    %7404 = vmatpush1.bf16.msra.mxu0 %v7214
    %7405 = vmatprep.subr.bf16.mxu0 %v7217
    %7406 = vmatpush1.bf16.msra.mxu0 %v7216
    %7407 = vmatprep.subr.bf16.mxu0 %v7219
    %7408 = vmatpush1.bf16.msra.mxu0 %v7218
    %7409 = vmatprep.subr.bf16.mxu0 %v7221
    %7410 = vmatpush1.bf16.msra.mxu0 %v7220
    %7411 = vmatprep.subr.bf16.mxu0 %v7223
    %7412 = vmatpush1.bf16.msra.mxu0 %v7222
    %7413 = vmatprep.subr.bf16.mxu0 %v7225
    %7414 = vmatpush1.bf16.msra.mxu0 %v7224
    %7415 = vmatprep.subr.bf16.mxu0 %v7227
    %7416 = vmatpush1.bf16.msra.mxu0 %v7226
    %7417 = vmatprep.subr.bf16.mxu0 %v7229
    %7418 = vmatpush1.bf16.msra.mxu0 %v7228
    %7419 = vmatprep.subr.bf16.mxu0 %v7231
    %7420 = vmatpush1.bf16.msra.mxu0 %v7230
    %7421 = vmatprep.subr.bf16.mxu0 %v7233
    %7422 = vmatpush1.bf16.msra.mxu0 %v7232
    %7423 = vmatprep.mubr.bf16.mxu0 %v7257
    %7424 = vmatmul.mubr.bf16.gmra.mrb[0].mxu0 %v7256
    %v7425 = vpop.f32.mrb[0].mxu0
    %v7426 = vadd.f32 %v7385, %v7425
    %v7427 = vpop.f32.mrb[0].mxu0
    %v7428 = vadd.f32 %v7387, %v7427
    %v7429 = vpop.f32.mrb[0].mxu0
    %v7430 = vpop.f32.mrb[0].mxu0
    %7431 = vdwg.mxu0
    %7432 = vmatprep.subr.bf16.mxu0 %v7235
    %7433 = vmatpush1.bf16.msra.mxu0 %v7234
    %7434 = vmatprep.subr.bf16.mxu0 %v7237
    %7435 = vmatpush1.bf16.msra.mxu0 %v7236
    %7436 = vmatprep.subr.bf16.mxu0 %v7239
    %7437 = vmatpush1.bf16.msra.mxu0 %v7238
    %7438 = vmatprep.subr.bf16.mxu0 %v7241
    %7439 = vmatpush1.bf16.msra.mxu0 %v7240
    %7440 = vmatprep.subr.bf16.mxu0 %v7243
    %7441 = vmatpush1.bf16.msra.mxu0 %v7242
    %7442 = vmatprep.subr.bf16.mxu0 %v7245
    %7443 = vmatpush1.bf16.msra.mxu0 %v7244
    %7444 = vmatprep.subr.bf16.mxu0 %v7247
    %7445 = vmatpush1.bf16.msra.mxu0 %v7246
    %7446 = vmatprep.subr.bf16.mxu0 %v7249
    %7447 = vmatpush1.bf16.msra.mxu0 %v7248
    %7448 = vmatprep.subr.bf16.mxu0 0
    %7449 = vmatpush1.bf16.msra.mxu0 0
    %7450 = vmatprep.subr.bf16.mxu0 0
    %7451 = vmatpush1.bf16.msra.mxu0 0
    %7452 = vmatprep.subr.bf16.mxu0 0
    %7453 = vmatpush1.bf16.msra.mxu0 0
    %7454 = vmatprep.subr.bf16.mxu0 0
    %7455 = vmatpush1.bf16.msra.mxu0 0
    %7456 = vmatprep.subr.bf16.mxu0 0
    %7457 = vmatpush1.bf16.msra.mxu0 0
    %7458 = vmatprep.subr.bf16.mxu0 0
    %7459 = vmatpush1.bf16.msra.mxu0 0
    %7460 = vmatprep.subr.bf16.mxu0 0
    %7461 = vmatpush1.bf16.msra.mxu0 0
    %7462 = vmatprep.subr.bf16.mxu0 0
    %7463 = vmatpush1.bf16.msra.mxu0 0
    %7464 = vmatprep.mubr.bf16.mxu0 0
    %7465 = vmatmul.mubr.bf16.gmra.mrb[0].mxu0 %v7258
    %v7466 = vpop.f32.mrb[0].mxu0
    %v7467 = vadd.f32 %v7426, %v7466
    %v7468 = vpop.f32.mrb[0].mxu0
    %v7469 = vadd.f32 %v7428, %v7468
    %v7470 = vpop.f32.mrb[0].mxu0
    %v7471 = vpop.f32.mrb[0].mxu0
    %7472 = vdwg.mxu0
    %vm7473 = vcmp.ge.f32.partialorder %v7467, 0.0
    %vm7474 = vcmp.ge.f32.partialorder %v7469, 0.0
    %v7475 = vmul.f32 %v7467, 0.2
    %v7476 = vmul.f32 %v7469, 0.2
    %v7477 = vsel %vm7473, %v7467, %v7475
    %v7478 = vsel %vm7474, %v7469, %v7476
    %v7479 = vld [vmem:[#allocation16] sm:$0x3]
    %v7481 = vlaneseq
    %v7482 = vshrl.u32 %v7481, 7
    %v7483 = vsub.s32 0, %v7482
    %v7484 = vrot.slane %v7479, %v7483
    %v7485 = vlaneseq
    %v7486 = vshrl.u32 %v7485, 7
    %v7487 = vsub.s32 1, %v7486
    %v7488 = vrot.slane %v7479, %v7487
    %v7491 = vmul.f32 %v7477, %v7484
    %v7492 = vmul.f32 %v7478, %v7488
    %v7493 = vld [vmem:[#allocation17] sm:$0x3]
    %v7495 = vlaneseq
    %v7496 = vshrl.u32 %v7495, 7
    %v7497 = vsub.s32 0, %v7496
    %v7498 = vrot.slane %v7493, %v7497
    %v7499 = vlaneseq
    %v7500 = vshrl.u32 %v7499, 7
    %v7501 = vsub.s32 1, %v7500
    %v7502 = vrot.slane %v7493, %v7501
    %v7505 = vadd.f32 %v7491, %v7498
    %v7506 = vadd.f32 %v7492, %v7502
    %v7507 = vpack.c.bf16 %v7505, %v7505
    %v7508 = vpack.c.bf16 %v7506, %v7506
    %v7511 = vrot.slane %v7507, 4
    %v7512 = vrot.slane %v7508, 4
    %7515 = vst [vmem:[#allocation4] sm:$0xf0] %v7511
    %7516 = vst [vmem:[#allocation4 + $0x8] sm:$0xf0] %v7512
    %v7517 = vld [vmem:[#allocation3 + $0xc] sm:$0xf]
    %v7518 = vld [vmem:[#allocation3 + $0xc] sm:$0xe]
    %v7519 = vld [vmem:[#allocation3 + $0x10] sm:$0x1]
    %v7520 = vld [vmem:[#allocation3 + $0xc] sm:$0xc]
    %v7521 = vld [vmem:[#allocation3 + $0x10] sm:$0x3]
    %v7522 = vld [vmem:[#allocation3 + $0x10] sm:$0xc]
    %v7523 = vld [vmem:[#allocation3 + $0x14] sm:$0x3]
    %v7524 = vld [vmem:[#allocation3 + $0x10] sm:$0x8]
    %v7525 = vld [vmem:[#allocation3 + $0x14] sm:$0x7]
    %v7526 = vld [vmem:[#allocation3 + $0x14] sm:$0xf]
    %v7527 = vld [vmem:[#allocation3 + $0x18] sm:$0xf]
    %v7528 = vld [vmem:[#allocation3 + $0x18] sm:$0xe]
    %v7529 = vld [vmem:[#allocation3 + $0x1c] sm:$0x1]
    %v7530 = vld [vmem:[#allocation3 + $0x18] sm:$0xc]
    %v7531 = vld [vmem:[#allocation3 + $0x1c] sm:$0x3]
    %v7534 = vunpack.c.l.b16 %v7518
    %v7535 = vunpack.c.l.b16 %v7519
    %v7536 = vpack.c.b16 %v7535, %v7534
    %v7537 = vrot.slane %v7536, 1
    %v7541 = vunpack.c.l.b16 %v7520
    %v7542 = vunpack.c.l.b16 %v7521
    %v7543 = vpack.c.b16 %v7542, %v7541
    %v7544 = vrot.slane %v7543, 2
    %v7548 = vunpack.c.l.b16 %v7522
    %v7549 = vunpack.c.l.b16 %v7523
    %v7550 = vpack.c.b16 %v7549, %v7548
    %v7551 = vrot.slane %v7550, 2
    %v7555 = vunpack.c.l.b16 %v7524
    %v7556 = vunpack.c.l.b16 %v7525
    %v7557 = vpack.c.b16 %v7556, %v7555
    %v7558 = vrot.slane %v7557, 3
    %v7562 = vunpack.c.l.b16 %v7528
    %v7563 = vunpack.c.l.b16 %v7529
    %v7564 = vpack.c.b16 %v7563, %v7562
    %v7565 = vrot.slane %v7564, 1
    %v7569 = vunpack.c.l.b16 %v7530
    %v7570 = vunpack.c.l.b16 %v7531
    %v7571 = vpack.c.b16 %v7570, %v7569
    %v7572 = vrot.slane %v7571, 2
    %v7574 = vld [vmem:[#allocation5] sm:$0xff]
    %v7575 = vld [vmem:[#allocation5 + $0x8] sm:$0xff]
    %v7576 = vld [vmem:[#allocation5 + $0x10] sm:$0xff]
    %v7577 = vld [vmem:[#allocation5 + $0x18] sm:$0xff]
    %v7578 = vld [vmem:[#allocation5 + $0x20] sm:$0xff]
    %v7579 = vld [vmem:[#allocation5 + $0x28] sm:$0xff]
    %v7580 = vld [vmem:[#allocation5 + $0x30] sm:$0xff]
    %v7581 = vld [vmem:[#allocation5 + $0x38] sm:$0xff]
    %v7582 = vld [vmem:[#allocation5 + $0x40] sm:$0xff]
    %v7583 = vld [vmem:[#allocation5 + $0x48] sm:$0xff]
    %v7584 = vld [vmem:[#allocation5 + $0x50] sm:$0xff]
    %v7585 = vld [vmem:[#allocation5 + $0x58] sm:$0xff]
    %v7586 = vld [vmem:[#allocation5 + $0x60] sm:$0xff]
    %v7587 = vld [vmem:[#allocation5 + $0x68] sm:$0xff]
    %v7588 = vld [vmem:[#allocation5 + $0x70] sm:$0xff]
    %v7589 = vld [vmem:[#allocation5 + $0x78] sm:$0xff]
    %v7590 = vld [vmem:[#allocation5 + $0x80] sm:$0xff]
    %v7591 = vld [vmem:[#allocation5 + $0x88] sm:$0xff]
    %v7592 = vld [vmem:[#allocation5 + $0x90] sm:$0xff]
    %v7593 = vld [vmem:[#allocation5 + $0x98] sm:$0xff]
    %v7594 = vld [vmem:[#allocation5 + $0xa0] sm:$0xff]
    %v7595 = vld [vmem:[#allocation5 + $0xa8] sm:$0xff]
    %v7596 = vld [vmem:[#allocation5 + $0xb0] sm:$0xff]
    %v7597 = vld [vmem:[#allocation5 + $0xb8] sm:$0xff]
    %v7598 = vld [vmem:[#allocation5 + $0xc0] sm:$0xff]
    %v7599 = vld [vmem:[#allocation5 + $0xc8] sm:$0xff]
    %v7600 = vld [vmem:[#allocation5 + $0xd0] sm:$0xff]
    %v7601 = vld [vmem:[#allocation5 + $0xd8] sm:$0xff]
    %v7602 = vld [vmem:[#allocation5 + $0xe0] sm:$0xff]
    %v7603 = vld [vmem:[#allocation5 + $0xe8] sm:$0xff]
    %v7604 = vld [vmem:[#allocation5 + $0xf0] sm:$0xff]
    %v7605 = vld [vmem:[#allocation5 + $0xf8] sm:$0xff]
    %v7606 = vld [vmem:[#allocation5 + $0x100] sm:$0xff]
    %v7607 = vld [vmem:[#allocation5 + $0x108] sm:$0xff]
    %v7608 = vld [vmem:[#allocation5 + $0x110] sm:$0xff]
    %v7609 = vld [vmem:[#allocation5 + $0x118] sm:$0xff]
    %v7610 = vld [vmem:[#allocation5 + $0x120] sm:$0xff]
    %v7611 = vld [vmem:[#allocation5 + $0x128] sm:$0xff]
    %v7612 = vld [vmem:[#allocation5 + $0x130] sm:$0xff]
    %v7613 = vld [vmem:[#allocation5 + $0x138] sm:$0xff]
    %v7614 = vld [vmem:[#allocation5 + $0x140] sm:$0xff]
    %v7615 = vld [vmem:[#allocation5 + $0x148] sm:$0xff]
    %v7616 = vld [vmem:[#allocation5 + $0x150] sm:$0xff]
    %v7617 = vld [vmem:[#allocation5 + $0x158] sm:$0xff]
    %v7618 = vld [vmem:[#allocation5 + $0x160] sm:$0xff]
    %v7619 = vld [vmem:[#allocation5 + $0x168] sm:$0xff]
    %v7620 = vld [vmem:[#allocation5 + $0x170] sm:$0xff]
    %v7621 = vld [vmem:[#allocation5 + $0x178] sm:$0xff]
    %v7622 = vld [vmem:[#allocation5 + $0x180] sm:$0xff]
    %v7623 = vld [vmem:[#allocation5 + $0x188] sm:$0xff]
    %v7624 = vld [vmem:[#allocation5 + $0x190] sm:$0xff]
    %v7625 = vld [vmem:[#allocation5 + $0x198] sm:$0xff]
    %v7626 = vld [vmem:[#allocation5 + $0x1a0] sm:$0xff]
    %v7627 = vld [vmem:[#allocation5 + $0x1a8] sm:$0xff]
    %v7628 = vld [vmem:[#allocation5 + $0x1b0] sm:$0xff]
    %v7629 = vld [vmem:[#allocation5 + $0x1b8] sm:$0xff]
    %v7630 = vld [vmem:[#allocation5 + $0x1c0] sm:$0xff]
    %v7631 = vld [vmem:[#allocation5 + $0x1c8] sm:$0xff]
    %v7632 = vld [vmem:[#allocation5 + $0x1d0] sm:$0xff]
    %v7633 = vld [vmem:[#allocation5 + $0x1d8] sm:$0xff]
    %v7634 = vld [vmem:[#allocation5 + $0x1e0] sm:$0xff]
    %v7635 = vld [vmem:[#allocation5 + $0x1e8] sm:$0xff]
    %v7636 = vld [vmem:[#allocation5 + $0x1f0] sm:$0xff]
    %v7637 = vld [vmem:[#allocation5 + $0x1f8] sm:$0xff]
    %v7638 = vld [vmem:[#allocation5 + $0x200] sm:$0xff]
    %v7639 = vld [vmem:[#allocation5 + $0x208] sm:$0xff]
    %v7640 = vld [vmem:[#allocation5 + $0x210] sm:$0xff]
    %v7641 = vld [vmem:[#allocation5 + $0x218] sm:$0xff]
    %v7642 = vld [vmem:[#allocation5 + $0x220] sm:$0xff]
    %v7643 = vld [vmem:[#allocation5 + $0x228] sm:$0xff]
    %v7644 = vld [vmem:[#allocation5 + $0x230] sm:$0xff]
    %v7645 = vld [vmem:[#allocation5 + $0x238] sm:$0xff]
    %v7646 = vld [vmem:[#allocation5 + $0x240] sm:$0xff]
    %v7647 = vld [vmem:[#allocation5 + $0x248] sm:$0xff]
    %v7648 = vld [vmem:[#allocation5 + $0x250] sm:$0xff]
    %v7649 = vld [vmem:[#allocation5 + $0x258] sm:$0xff]
    %v7650 = vld [vmem:[#allocation5 + $0x260] sm:$0xff]
    %v7651 = vld [vmem:[#allocation5 + $0x268] sm:$0xff]
    %v7652 = vld [vmem:[#allocation5 + $0x270] sm:$0xff]
    %v7653 = vld [vmem:[#allocation5 + $0x278] sm:$0xff]
    %v7654 = vld [vmem:[#allocation5 + $0x280] sm:$0xff]
    %v7655 = vld [vmem:[#allocation5 + $0x288] sm:$0xff]
    %v7656 = vld [vmem:[#allocation5 + $0x290] sm:$0xff]
    %v7657 = vld [vmem:[#allocation5 + $0x298] sm:$0xff]
    %v7658 = vld [vmem:[#allocation5 + $0x2a0] sm:$0xff]
    %v7659 = vld [vmem:[#allocation5 + $0x2a8] sm:$0xff]
    %v7660 = vld [vmem:[#allocation5 + $0x2b0] sm:$0xff]
    %v7661 = vld [vmem:[#allocation5 + $0x2b8] sm:$0xff]
    %v7662 = vld [vmem:[#allocation5 + $0x2c0] sm:$0xff]
    %v7663 = vld [vmem:[#allocation5 + $0x2c8] sm:$0xff]
    %v7664 = vld [vmem:[#allocation5 + $0x2d0] sm:$0xff]
    %v7665 = vld [vmem:[#allocation5 + $0x2d8] sm:$0xff]
    %v7666 = vld [vmem:[#allocation5 + $0x2e0] sm:$0xff]
    %v7667 = vld [vmem:[#allocation5 + $0x2e8] sm:$0xff]
    %v7668 = vld [vmem:[#allocation5 + $0x2f0] sm:$0xff]
    %v7669 = vld [vmem:[#allocation5 + $0x2f8] sm:$0xff]
    %v7670 = vld [vmem:[#allocation5 + $0x300] sm:$0xff]
    %v7671 = vld [vmem:[#allocation5 + $0x308] sm:$0xff]
    %v7672 = vld [vmem:[#allocation5 + $0x310] sm:$0xff]
    %v7673 = vld [vmem:[#allocation5 + $0x318] sm:$0xff]
    %v7674 = vld [vmem:[#allocation5 + $0x320] sm:$0xff]
    %v7675 = vld [vmem:[#allocation5 + $0x328] sm:$0xff]
    %v7676 = vld [vmem:[#allocation5 + $0x330] sm:$0xff]
    %v7677 = vld [vmem:[#allocation5 + $0x338] sm:$0xff]
    %v7678 = vld [vmem:[#allocation5 + $0x340] sm:$0xff]
    %v7679 = vld [vmem:[#allocation5 + $0x348] sm:$0xff]
    %v7680 = vld [vmem:[#allocation5 + $0x350] sm:$0xff]
    %v7681 = vld [vmem:[#allocation5 + $0x358] sm:$0xff]
    %v7682 = vld [vmem:[#allocation5 + $0x360] sm:$0xff]
    %v7683 = vld [vmem:[#allocation5 + $0x368] sm:$0xff]
    %v7684 = vld [vmem:[#allocation5 + $0x370] sm:$0xff]
    %v7685 = vld [vmem:[#allocation5 + $0x378] sm:$0xff]
    %v7686 = vld [vmem:[#allocation5 + $0x380] sm:$0xff]
    %v7687 = vld [vmem:[#allocation5 + $0x388] sm:$0xff]
    %v7688 = vld [vmem:[#allocation5 + $0x390] sm:$0xff]
    %v7689 = vld [vmem:[#allocation5 + $0x398] sm:$0xff]
    %v7690 = vld [vmem:[#allocation5 + $0x3a0] sm:$0xff]
    %v7691 = vld [vmem:[#allocation5 + $0x3a8] sm:$0xff]
    %v7692 = vld [vmem:[#allocation5 + $0x3b0] sm:$0xff]
    %v7693 = vld [vmem:[#allocation5 + $0x3b8] sm:$0xff]
    %v7694 = vld [vmem:[#allocation5 + $0x3c0] sm:$0xff]
    %v7695 = vld [vmem:[#allocation5 + $0x3c8] sm:$0xff]
    %v7696 = vld [vmem:[#allocation5 + $0x3d0] sm:$0xff]
    %v7697 = vld [vmem:[#allocation5 + $0x3d8] sm:$0xff]
    %v7698 = vld [vmem:[#allocation5 + $0x3e0] sm:$0xff]
    %v7699 = vld [vmem:[#allocation5 + $0x3e8] sm:$0xff]
    %v7700 = vld [vmem:[#allocation5 + $0x3f0] sm:$0xff]
    %v7701 = vld [vmem:[#allocation5 + $0x3f8] sm:$0xff]
    %v7702 = vld [vmem:[#allocation5 + $0x400] sm:$0xff]
    %v7703 = vld [vmem:[#allocation5 + $0x408] sm:$0xff]
    %v7704 = vld [vmem:[#allocation5 + $0x410] sm:$0xff]
    %v7705 = vld [vmem:[#allocation5 + $0x418] sm:$0xff]
    %v7706 = vld [vmem:[#allocation5 + $0x420] sm:$0xff]
    %v7707 = vld [vmem:[#allocation5 + $0x428] sm:$0xff]
    %v7708 = vld [vmem:[#allocation5 + $0x430] sm:$0xff]
    %v7709 = vld [vmem:[#allocation5 + $0x438] sm:$0xff]
    %v7710 = vld [vmem:[#allocation5 + $0x440] sm:$0xff]
    %v7711 = vld [vmem:[#allocation5 + $0x448] sm:$0xff]
    %v7712 = vld [vmem:[#allocation5 + $0x450] sm:$0xff]
    %v7713 = vld [vmem:[#allocation5 + $0x458] sm:$0xff]
    %v7714 = vld [vmem:[#allocation5 + $0x460] sm:$0xff]
    %v7715 = vld [vmem:[#allocation5 + $0x468] sm:$0xff]
    %v7716 = vld [vmem:[#allocation5 + $0x470] sm:$0xff]
    %v7717 = vld [vmem:[#allocation5 + $0x478] sm:$0xff]
    %7718 = vmatprep.subr.bf16.mxu0 %v7575
    %7719 = vmatpush1.bf16.msra.mxu0 %v7574
    %7720 = vmatprep.subr.bf16.mxu0 %v7577
    %7721 = vmatpush1.bf16.msra.mxu0 %v7576
    %7722 = vmatprep.subr.bf16.mxu0 %v7579
    %7723 = vmatpush1.bf16.msra.mxu0 %v7578
    %7724 = vmatprep.subr.bf16.mxu0 %v7581
    %7725 = vmatpush1.bf16.msra.mxu0 %v7580
    %7726 = vmatprep.subr.bf16.mxu0 %v7583
    %7727 = vmatpush1.bf16.msra.mxu0 %v7582
    %7728 = vmatprep.subr.bf16.mxu0 %v7585
    %7729 = vmatpush1.bf16.msra.mxu0 %v7584
    %7730 = vmatprep.subr.bf16.mxu0 %v7587
    %7731 = vmatpush1.bf16.msra.mxu0 %v7586
    %7732 = vmatprep.subr.bf16.mxu0 %v7589
    %7733 = vmatpush1.bf16.msra.mxu0 %v7588
    %7734 = vmatprep.subr.bf16.mxu0 %v7591
    %7735 = vmatpush1.bf16.msra.mxu0 %v7590
    %7736 = vmatprep.subr.bf16.mxu0 %v7593
    %7737 = vmatpush1.bf16.msra.mxu0 %v7592
    %7738 = vmatprep.subr.bf16.mxu0 %v7595
    %7739 = vmatpush1.bf16.msra.mxu0 %v7594
    %7740 = vmatprep.subr.bf16.mxu0 %v7597
    %7741 = vmatpush1.bf16.msra.mxu0 %v7596
    %7742 = vmatprep.subr.bf16.mxu0 %v7599
    %7743 = vmatpush1.bf16.msra.mxu0 %v7598
    %7744 = vmatprep.subr.bf16.mxu0 %v7601
    %7745 = vmatpush1.bf16.msra.mxu0 %v7600
    %7746 = vmatprep.subr.bf16.mxu0 %v7603
    %7747 = vmatpush1.bf16.msra.mxu0 %v7602
    %7748 = vmatprep.subr.bf16.mxu0 %v7605
    %7749 = vmatpush1.bf16.msra.mxu0 %v7604
    %7750 = vmatprep.mubr.bf16.mxu0 %v7537
    %7751 = vmatmul.mubr.bf16.gmra.mrb[0].mxu0 %v7517
    %v7752 = vpop.f32.mrb[0].mxu0
    %v7753 = vadd.f32 0.0, %v7752
    %v7754 = vpop.f32.mrb[0].mxu0
    %v7755 = vadd.f32 0.0, %v7754
    %v7756 = vpop.f32.mrb[0].mxu0
    %v7757 = vpop.f32.mrb[0].mxu0
    %7758 = vdwg.mxu0
    %7759 = vmatprep.subr.bf16.mxu0 %v7607
    %7760 = vmatpush1.bf16.msra.mxu0 %v7606
    %7761 = vmatprep.subr.bf16.mxu0 %v7609
    %7762 = vmatpush1.bf16.msra.mxu0 %v7608
    %7763 = vmatprep.subr.bf16.mxu0 %v7611
    %7764 = vmatpush1.bf16.msra.mxu0 %v7610
    %7765 = vmatprep.subr.bf16.mxu0 %v7613
    %7766 = vmatpush1.bf16.msra.mxu0 %v7612
    %7767 = vmatprep.subr.bf16.mxu0 %v7615
    %7768 = vmatpush1.bf16.msra.mxu0 %v7614
    %7769 = vmatprep.subr.bf16.mxu0 %v7617
    %7770 = vmatpush1.bf16.msra.mxu0 %v7616
    %7771 = vmatprep.subr.bf16.mxu0 %v7619
    %7772 = vmatpush1.bf16.msra.mxu0 %v7618
    %7773 = vmatprep.subr.bf16.mxu0 %v7621
    %7774 = vmatpush1.bf16.msra.mxu0 %v7620
    %7775 = vmatprep.subr.bf16.mxu0 %v7623
    %7776 = vmatpush1.bf16.msra.mxu0 %v7622
    %7777 = vmatprep.subr.bf16.mxu0 %v7625
    %7778 = vmatpush1.bf16.msra.mxu0 %v7624
    %7779 = vmatprep.subr.bf16.mxu0 %v7627
    %7780 = vmatpush1.bf16.msra.mxu0 %v7626
    %7781 = vmatprep.subr.bf16.mxu0 %v7629
    %7782 = vmatpush1.bf16.msra.mxu0 %v7628
    %7783 = vmatprep.subr.bf16.mxu0 %v7631
    %7784 = vmatpush1.bf16.msra.mxu0 %v7630
    %7785 = vmatprep.subr.bf16.mxu0 %v7633
    %7786 = vmatpush1.bf16.msra.mxu0 %v7632
    %7787 = vmatprep.subr.bf16.mxu0 %v7635
    %7788 = vmatpush1.bf16.msra.mxu0 %v7634
    %7789 = vmatprep.subr.bf16.mxu0 %v7637
    %7790 = vmatpush1.bf16.msra.mxu0 %v7636
    %7791 = vmatprep.mubr.bf16.mxu0 %v7551
    %7792 = vmatmul.mubr.bf16.gmra.mrb[0].mxu0 %v7544
    %v7793 = vpop.f32.mrb[0].mxu0
    %v7794 = vadd.f32 %v7753, %v7793
    %v7795 = vpop.f32.mrb[0].mxu0
    %v7796 = vadd.f32 %v7755, %v7795
    %v7797 = vpop.f32.mrb[0].mxu0
    %v7798 = vpop.f32.mrb[0].mxu0
    %7799 = vdwg.mxu0
    %7800 = vmatprep.subr.bf16.mxu0 %v7639
    %7801 = vmatpush1.bf16.msra.mxu0 %v7638
    %7802 = vmatprep.subr.bf16.mxu0 %v7641
    %7803 = vmatpush1.bf16.msra.mxu0 %v7640
    %7804 = vmatprep.subr.bf16.mxu0 %v7643
    %7805 = vmatpush1.bf16.msra.mxu0 %v7642
    %7806 = vmatprep.subr.bf16.mxu0 %v7645
    %7807 = vmatpush1.bf16.msra.mxu0 %v7644
    %7808 = vmatprep.subr.bf16.mxu0 %v7647
    %7809 = vmatpush1.bf16.msra.mxu0 %v7646
    %7810 = vmatprep.subr.bf16.mxu0 %v7649
    %7811 = vmatpush1.bf16.msra.mxu0 %v7648
    %7812 = vmatprep.subr.bf16.mxu0 %v7651
    %7813 = vmatpush1.bf16.msra.mxu0 %v7650
    %7814 = vmatprep.subr.bf16.mxu0 %v7653
    %7815 = vmatpush1.bf16.msra.mxu0 %v7652
    %7816 = vmatprep.subr.bf16.mxu0 %v7655
    %7817 = vmatpush1.bf16.msra.mxu0 %v7654
    %7818 = vmatprep.subr.bf16.mxu0 %v7657
    %7819 = vmatpush1.bf16.msra.mxu0 %v7656
    %7820 = vmatprep.subr.bf16.mxu0 %v7659
    %7821 = vmatpush1.bf16.msra.mxu0 %v7658
    %7822 = vmatprep.subr.bf16.mxu0 %v7661
    %7823 = vmatpush1.bf16.msra.mxu0 %v7660
    %7824 = vmatprep.subr.bf16.mxu0 %v7663
    %7825 = vmatpush1.bf16.msra.mxu0 %v7662
    %7826 = vmatprep.subr.bf16.mxu0 %v7665
    %7827 = vmatpush1.bf16.msra.mxu0 %v7664
    %7828 = vmatprep.subr.bf16.mxu0 %v7667
    %7829 = vmatpush1.bf16.msra.mxu0 %v7666
    %7830 = vmatprep.subr.bf16.mxu0 %v7669
    %7831 = vmatpush1.bf16.msra.mxu0 %v7668
    %7832 = vmatprep.mubr.bf16.mxu0 %v7526
    %7833 = vmatmul.mubr.bf16.gmra.mrb[0].mxu0 %v7558
    %v7834 = vpop.f32.mrb[0].mxu0
    %v7835 = vadd.f32 %v7794, %v7834
    %v7836 = vpop.f32.mrb[0].mxu0
    %v7837 = vadd.f32 %v7796, %v7836
    %v7838 = vpop.f32.mrb[0].mxu0
    %v7839 = vpop.f32.mrb[0].mxu0
    %7840 = vdwg.mxu0
    %7841 = vmatprep.subr.bf16.mxu0 %v7671
    %7842 = vmatpush1.bf16.msra.mxu0 %v7670
    %7843 = vmatprep.subr.bf16.mxu0 %v7673
    %7844 = vmatpush1.bf16.msra.mxu0 %v7672
    %7845 = vmatprep.subr.bf16.mxu0 %v7675
    %7846 = vmatpush1.bf16.msra.mxu0 %v7674
    %7847 = vmatprep.subr.bf16.mxu0 %v7677
    %7848 = vmatpush1.bf16.msra.mxu0 %v7676
    %7849 = vmatprep.subr.bf16.mxu0 %v7679
    %7850 = vmatpush1.bf16.msra.mxu0 %v7678
    %7851 = vmatprep.subr.bf16.mxu0 %v7681
    %7852 = vmatpush1.bf16.msra.mxu0 %v7680
    %7853 = vmatprep.subr.bf16.mxu0 %v7683
    %7854 = vmatpush1.bf16.msra.mxu0 %v7682
    %7855 = vmatprep.subr.bf16.mxu0 %v7685
    %7856 = vmatpush1.bf16.msra.mxu0 %v7684
    %7857 = vmatprep.subr.bf16.mxu0 %v7687
    %7858 = vmatpush1.bf16.msra.mxu0 %v7686
    %7859 = vmatprep.subr.bf16.mxu0 %v7689
    %7860 = vmatpush1.bf16.msra.mxu0 %v7688
    %7861 = vmatprep.subr.bf16.mxu0 %v7691
    %7862 = vmatpush1.bf16.msra.mxu0 %v7690
    %7863 = vmatprep.subr.bf16.mxu0 %v7693
    %7864 = vmatpush1.bf16.msra.mxu0 %v7692
    %7865 = vmatprep.subr.bf16.mxu0 %v7695
    %7866 = vmatpush1.bf16.msra.mxu0 %v7694
    %7867 = vmatprep.subr.bf16.mxu0 %v7697
    %7868 = vmatpush1.bf16.msra.mxu0 %v7696
    %7869 = vmatprep.subr.bf16.mxu0 %v7699
    %7870 = vmatpush1.bf16.msra.mxu0 %v7698
    %7871 = vmatprep.subr.bf16.mxu0 %v7701
    %7872 = vmatpush1.bf16.msra.mxu0 %v7700
    %7873 = vmatprep.mubr.bf16.mxu0 %v7565
    %7874 = vmatmul.mubr.bf16.gmra.mrb[0].mxu0 %v7527
    %v7875 = vpop.f32.mrb[0].mxu0
    %v7876 = vadd.f32 %v7835, %v7875
    %v7877 = vpop.f32.mrb[0].mxu0
    %v7878 = vadd.f32 %v7837, %v7877
    %v7879 = vpop.f32.mrb[0].mxu0
    %v7880 = vpop.f32.mrb[0].mxu0
    %7881 = vdwg.mxu0
    %7882 = vmatprep.subr.bf16.mxu0 %v7703
    %7883 = vmatpush1.bf16.msra.mxu0 %v7702
    %7884 = vmatprep.subr.bf16.mxu0 %v7705
    %7885 = vmatpush1.bf16.msra.mxu0 %v7704
    %7886 = vmatprep.subr.bf16.mxu0 %v7707
    %7887 = vmatpush1.bf16.msra.mxu0 %v7706
    %7888 = vmatprep.subr.bf16.mxu0 %v7709
    %7889 = vmatpush1.bf16.msra.mxu0 %v7708
    %7890 = vmatprep.subr.bf16.mxu0 %v7711
    %7891 = vmatpush1.bf16.msra.mxu0 %v7710
    %7892 = vmatprep.subr.bf16.mxu0 %v7713
    %7893 = vmatpush1.bf16.msra.mxu0 %v7712
    %7894 = vmatprep.subr.bf16.mxu0 %v7715
    %7895 = vmatpush1.bf16.msra.mxu0 %v7714
    %7896 = vmatprep.subr.bf16.mxu0 %v7717
    %7897 = vmatpush1.bf16.msra.mxu0 %v7716
    %7898 = vmatprep.subr.bf16.mxu0 0
    %7899 = vmatpush1.bf16.msra.mxu0 0
    %7900 = vmatprep.subr.bf16.mxu0 0
    %7901 = vmatpush1.bf16.msra.mxu0 0
    %7902 = vmatprep.subr.bf16.mxu0 0
    %7903 = vmatpush1.bf16.msra.mxu0 0
    %7904 = vmatprep.subr.bf16.mxu0 0
    %7905 = vmatpush1.bf16.msra.mxu0 0
    %7906 = vmatprep.subr.bf16.mxu0 0
    %7907 = vmatpush1.bf16.msra.mxu0 0
    %7908 = vmatprep.subr.bf16.mxu0 0
    %7909 = vmatpush1.bf16.msra.mxu0 0
    %7910 = vmatprep.subr.bf16.mxu0 0
    %7911 = vmatpush1.bf16.msra.mxu0 0
    %7912 = vmatprep.subr.bf16.mxu0 0
    %7913 = vmatpush1.bf16.msra.mxu0 0
    %7914 = vmatprep.mubr.bf16.mxu0 0
    %7915 = vmatmul.mubr.bf16.gmra.mrb[0].mxu0 %v7572
    %v7916 = vpop.f32.mrb[0].mxu0
    %v7917 = vadd.f32 %v7876, %v7916
    %v7918 = vpop.f32.mrb[0].mxu0
    %v7919 = vadd.f32 %v7878, %v7918
    %v7920 = vpop.f32.mrb[0].mxu0
    %v7921 = vpop.f32.mrb[0].mxu0
    %7922 = vdwg.mxu0
    %vm7923 = vcmp.ge.f32.partialorder %v7917, 0.0
    %vm7924 = vcmp.ge.f32.partialorder %v7919, 0.0
    %v7925 = vmul.f32 %v7917, 0.2
    %v7926 = vmul.f32 %v7919, 0.2
    %v7927 = vsel %vm7923, %v7917, %v7925
    %v7928 = vsel %vm7924, %v7919, %v7926
    %v7929 = vld [vmem:[#allocation16] sm:$0x3]
    %v7931 = vlaneseq
    %v7932 = vshrl.u32 %v7931, 7
    %v7933 = vsub.s32 0, %v7932
    %v7934 = vrot.slane %v7929, %v7933
    %v7935 = vlaneseq
    %v7936 = vshrl.u32 %v7935, 7
    %v7937 = vsub.s32 1, %v7936
    %v7938 = vrot.slane %v7929, %v7937
    %v7941 = vmul.f32 %v7927, %v7934
    %v7942 = vmul.f32 %v7928, %v7938
    %v7943 = vld [vmem:[#allocation17] sm:$0x3]
    %v7945 = vlaneseq
    %v7946 = vshrl.u32 %v7945, 7
    %v7947 = vsub.s32 0, %v7946
    %v7948 = vrot.slane %v7943, %v7947
    %v7949 = vlaneseq
    %v7950 = vshrl.u32 %v7949, 7
    %v7951 = vsub.s32 1, %v7950
    %v7952 = vrot.slane %v7943, %v7951
    %v7955 = vadd.f32 %v7941, %v7948
    %v7956 = vadd.f32 %v7942, %v7952
    %v7957 = vpack.c.bf16 %v7955, %v7955
    %v7958 = vpack.c.bf16 %v7956, %v7956
    %7959 = vst [vmem:[#allocation4 + $0x10] sm:$0xf] %v7957
    %7960 = vst [vmem:[#allocation4 + $0x18] sm:$0xf] %v7958
    %v7961 = vld [vmem:[#allocation3 + $0x10] sm:$0xc]
    %v7962 = vld [vmem:[#allocation3 + $0x14] sm:$0x3]
    %v7963 = vld [vmem:[#allocation3 + $0x10] sm:$0x8]
    %v7964 = vld [vmem:[#allocation3 + $0x14] sm:$0x7]
    %v7965 = vld [vmem:[#allocation3 + $0x14] sm:$0xf]
    %v7966 = vld [vmem:[#allocation3 + $0x18] sm:$0xf]
    %v7967 = vld [vmem:[#allocation3 + $0x18] sm:$0xe]
    %v7968 = vld [vmem:[#allocation3 + $0x1c] sm:$0x1]
    %v7969 = vld [vmem:[#allocation3 + $0x18] sm:$0xc]
    %v7970 = vld [vmem:[#allocation3 + $0x1c] sm:$0x3]
    %v7971 = vld [vmem:[#allocation3 + $0x1c] sm:$0xc]
    %v7972 = vld [vmem:[#allocation3 + $0x20] sm:$0x3]
    %v7973 = vld [vmem:[#allocation3 + $0x1c] sm:$0x8]
    %v7974 = vld [vmem:[#allocation3 + $0x20] sm:$0x7]
    %v7975 = vld [vmem:[#allocation3 + $0x20] sm:$0xf]
    %v7978 = vunpack.c.l.b16 %v7961
    %v7979 = vunpack.c.l.b16 %v7962
    %v7980 = vpack.c.b16 %v7979, %v7978
    %v7983 = vunpack.c.l.b16 %v7963
    %v7984 = vunpack.c.l.b16 %v7964
    %v7985 = vpack.c.b16 %v7984, %v7983
    %v7986 = vrot.slane %v7985, 1
    %v7988 = vunpack.c.l.b16 %v7965
    %v7989 = vpack.c.b16 %v7988, %v7988
    %v7990 = vrot.slane %v7989, 6
    %v7992 = vunpack.c.l.b16 %v7966
    %v7993 = vpack.c.b16 %v7992, %v7992
    %v7994 = vrot.slane %v7993, 6
    %v7997 = vunpack.c.l.b16 %v7967
    %v7998 = vunpack.c.l.b16 %v7968
    %v7999 = vpack.c.b16 %v7998, %v7997
    %v8000 = vrot.slane %v7999, 7
    %v8003 = vunpack.c.l.b16 %v7969
    %v8004 = vunpack.c.l.b16 %v7970
    %v8005 = vpack.c.b16 %v8004, %v8003
    %v8008 = vunpack.c.l.b16 %v7971
    %v8009 = vunpack.c.l.b16 %v7972
    %v8010 = vpack.c.b16 %v8009, %v8008
    %v8013 = vunpack.c.l.b16 %v7973
    %v8014 = vunpack.c.l.b16 %v7974
    %v8015 = vpack.c.b16 %v8014, %v8013
    %v8016 = vrot.slane %v8015, 1
    %v8018 = vunpack.c.l.b16 %v7975
    %v8019 = vpack.c.b16 %v8018, %v8018
    %v8020 = vrot.slane %v8019, 6
    %v8021 = vld [vmem:[#allocation5] sm:$0xff]
    %v8022 = vld [vmem:[#allocation5 + $0x8] sm:$0xff]
    %v8023 = vld [vmem:[#allocation5 + $0x10] sm:$0xff]
    %v8024 = vld [vmem:[#allocation5 + $0x18] sm:$0xff]
    %v8025 = vld [vmem:[#allocation5 + $0x20] sm:$0xff]
    %v8026 = vld [vmem:[#allocation5 + $0x28] sm:$0xff]
    %v8027 = vld [vmem:[#allocation5 + $0x30] sm:$0xff]
    %v8028 = vld [vmem:[#allocation5 + $0x38] sm:$0xff]
    %v8029 = vld [vmem:[#allocation5 + $0x40] sm:$0xff]
    %v8030 = vld [vmem:[#allocation5 + $0x48] sm:$0xff]
    %v8031 = vld [vmem:[#allocation5 + $0x50] sm:$0xff]
    %v8032 = vld [vmem:[#allocation5 + $0x58] sm:$0xff]
    %v8033 = vld [vmem:[#allocation5 + $0x60] sm:$0xff]
    %v8034 = vld [vmem:[#allocation5 + $0x68] sm:$0xff]
    %v8035 = vld [vmem:[#allocation5 + $0x70] sm:$0xff]
    %v8036 = vld [vmem:[#allocation5 + $0x78] sm:$0xff]
    %v8037 = vld [vmem:[#allocation5 + $0x80] sm:$0xff]
    %v8038 = vld [vmem:[#allocation5 + $0x88] sm:$0xff]
    %v8039 = vld [vmem:[#allocation5 + $0x90] sm:$0xff]
    %v8040 = vld [vmem:[#allocation5 + $0x98] sm:$0xff]
    %v8041 = vld [vmem:[#allocation5 + $0xa0] sm:$0xff]
    %v8042 = vld [vmem:[#allocation5 + $0xa8] sm:$0xff]
    %v8043 = vld [vmem:[#allocation5 + $0xb0] sm:$0xff]
    %v8044 = vld [vmem:[#allocation5 + $0xb8] sm:$0xff]
    %v8045 = vld [vmem:[#allocation5 + $0xc0] sm:$0xff]
    %v8046 = vld [vmem:[#allocation5 + $0xc8] sm:$0xff]
    %v8047 = vld [vmem:[#allocation5 + $0xd0] sm:$0xff]
    %v8048 = vld [vmem:[#allocation5 + $0xd8] sm:$0xff]
    %v8049 = vld [vmem:[#allocation5 + $0xe0] sm:$0xff]
    %v8050 = vld [vmem:[#allocation5 + $0xe8] sm:$0xff]
    %v8051 = vld [vmem:[#allocation5 + $0xf0] sm:$0xff]
    %v8052 = vld [vmem:[#allocation5 + $0xf8] sm:$0xff]
    %v8053 = vld [vmem:[#allocation5 + $0x100] sm:$0xff]
    %v8054 = vld [vmem:[#allocation5 + $0x108] sm:$0xff]
    %v8055 = vld [vmem:[#allocation5 + $0x110] sm:$0xff]
    %v8056 = vld [vmem:[#allocation5 + $0x118] sm:$0xff]
    %v8057 = vld [vmem:[#allocation5 + $0x120] sm:$0xff]
    %v8058 = vld [vmem:[#allocation5 + $0x128] sm:$0xff]
    %v8059 = vld [vmem:[#allocation5 + $0x130] sm:$0xff]
    %v8060 = vld [vmem:[#allocation5 + $0x138] sm:$0xff]
    %v8061 = vld [vmem:[#allocation5 + $0x140] sm:$0xff]
    %v8062 = vld [vmem:[#allocation5 + $0x148] sm:$0xff]
    %v8063 = vld [vmem:[#allocation5 + $0x150] sm:$0xff]
    %v8064 = vld [vmem:[#allocation5 + $0x158] sm:$0xff]
    %v8065 = vld [vmem:[#allocation5 + $0x160] sm:$0xff]
    %v8066 = vld [vmem:[#allocation5 + $0x168] sm:$0xff]
    %v8067 = vld [vmem:[#allocation5 + $0x170] sm:$0xff]
    %v8068 = vld [vmem:[#allocation5 + $0x178] sm:$0xff]
    %v8069 = vld [vmem:[#allocation5 + $0x180] sm:$0xff]
    %v8070 = vld [vmem:[#allocation5 + $0x188] sm:$0xff]
    %v8071 = vld [vmem:[#allocation5 + $0x190] sm:$0xff]
    %v8072 = vld [vmem:[#allocation5 + $0x198] sm:$0xff]
    %v8073 = vld [vmem:[#allocation5 + $0x1a0] sm:$0xff]
    %v8074 = vld [vmem:[#allocation5 + $0x1a8] sm:$0xff]
    %v8075 = vld [vmem:[#allocation5 + $0x1b0] sm:$0xff]
    %v8076 = vld [vmem:[#allocation5 + $0x1b8] sm:$0xff]
    %v8077 = vld [vmem:[#allocation5 + $0x1c0] sm:$0xff]
    %v8078 = vld [vmem:[#allocation5 + $0x1c8] sm:$0xff]
    %v8079 = vld [vmem:[#allocation5 + $0x1d0] sm:$0xff]
    %v8080 = vld [vmem:[#allocation5 + $0x1d8] sm:$0xff]
    %v8081 = vld [vmem:[#allocation5 + $0x1e0] sm:$0xff]
    %v8082 = vld [vmem:[#allocation5 + $0x1e8] sm:$0xff]
    %v8083 = vld [vmem:[#allocation5 + $0x1f0] sm:$0xff]
    %v8084 = vld [vmem:[#allocation5 + $0x1f8] sm:$0xff]
    %v8085 = vld [vmem:[#allocation5 + $0x200] sm:$0xff]
    %v8086 = vld [vmem:[#allocation5 + $0x208] sm:$0xff]
    %v8087 = vld [vmem:[#allocation5 + $0x210] sm:$0xff]
    %v8088 = vld [vmem:[#allocation5 + $0x218] sm:$0xff]
    %v8089 = vld [vmem:[#allocation5 + $0x220] sm:$0xff]
    %v8090 = vld [vmem:[#allocation5 + $0x228] sm:$0xff]
    %v8091 = vld [vmem:[#allocation5 + $0x230] sm:$0xff]
    %v8092 = vld [vmem:[#allocation5 + $0x238] sm:$0xff]
    %v8093 = vld [vmem:[#allocation5 + $0x240] sm:$0xff]
    %v8094 = vld [vmem:[#allocation5 + $0x248] sm:$0xff]
    %v8095 = vld [vmem:[#allocation5 + $0x250] sm:$0xff]
    %v8096 = vld [vmem:[#allocation5 + $0x258] sm:$0xff]
    %v8097 = vld [vmem:[#allocation5 + $0x260] sm:$0xff]
    %v8098 = vld [vmem:[#allocation5 + $0x268] sm:$0xff]
    %v8099 = vld [vmem:[#allocation5 + $0x270] sm:$0xff]
    %v8100 = vld [vmem:[#allocation5 + $0x278] sm:$0xff]
    %v8101 = vld [vmem:[#allocation5 + $0x280] sm:$0xff]
    %v8102 = vld [vmem:[#allocation5 + $0x288] sm:$0xff]
    %v8103 = vld [vmem:[#allocation5 + $0x290] sm:$0xff]
    %v8104 = vld [vmem:[#allocation5 + $0x298] sm:$0xff]
    %v8105 = vld [vmem:[#allocation5 + $0x2a0] sm:$0xff]
    %v8106 = vld [vmem:[#allocation5 + $0x2a8] sm:$0xff]
    %v8107 = vld [vmem:[#allocation5 + $0x2b0] sm:$0xff]
    %v8108 = vld [vmem:[#allocation5 + $0x2b8] sm:$0xff]
    %v8109 = vld [vmem:[#allocation5 + $0x2c0] sm:$0xff]
    %v8110 = vld [vmem:[#allocation5 + $0x2c8] sm:$0xff]
    %v8111 = vld [vmem:[#allocation5 + $0x2d0] sm:$0xff]
    %v8112 = vld [vmem:[#allocation5 + $0x2d8] sm:$0xff]
    %v8113 = vld [vmem:[#allocation5 + $0x2e0] sm:$0xff]
    %v8114 = vld [vmem:[#allocation5 + $0x2e8] sm:$0xff]
    %v8115 = vld [vmem:[#allocation5 + $0x2f0] sm:$0xff]
    %v8116 = vld [vmem:[#allocation5 + $0x2f8] sm:$0xff]
    %v8117 = vld [vmem:[#allocation5 + $0x300] sm:$0xff]
    %v8118 = vld [vmem:[#allocation5 + $0x308] sm:$0xff]
    %v8119 = vld [vmem:[#allocation5 + $0x310] sm:$0xff]
    %v8120 = vld [vmem:[#allocation5 + $0x318] sm:$0xff]
    %v8121 = vld [vmem:[#allocation5 + $0x320] sm:$0xff]
    %v8122 = vld [vmem:[#allocation5 + $0x328] sm:$0xff]
    %v8123 = vld [vmem:[#allocation5 + $0x330] sm:$0xff]
    %v8124 = vld [vmem:[#allocation5 + $0x338] sm:$0xff]
    %v8125 = vld [vmem:[#allocation5 + $0x340] sm:$0xff]
    %v8126 = vld [vmem:[#allocation5 + $0x348] sm:$0xff]
    %v8127 = vld [vmem:[#allocation5 + $0x350] sm:$0xff]
    %v8128 = vld [vmem:[#allocation5 + $0x358] sm:$0xff]
    %v8129 = vld [vmem:[#allocation5 + $0x360] sm:$0xff]
    %v8130 = vld [vmem:[#allocation5 + $0x368] sm:$0xff]
    %v8131 = vld [vmem:[#allocation5 + $0x370] sm:$0xff]
    %v8132 = vld [vmem:[#allocation5 + $0x378] sm:$0xff]
    %v8133 = vld [vmem:[#allocation5 + $0x380] sm:$0xff]
    %v8134 = vld [vmem:[#allocation5 + $0x388] sm:$0xff]
    %v8135 = vld [vmem:[#allocation5 + $0x390] sm:$0xff]
    %v8136 = vld [vmem:[#allocation5 + $0x398] sm:$0xff]
    %v8137 = vld [vmem:[#allocation5 + $0x3a0] sm:$0xff]
    %v8138 = vld [vmem:[#allocation5 + $0x3a8] sm:$0xff]
    %v8139 = vld [vmem:[#allocation5 + $0x3b0] sm:$0xff]
    %v8140 = vld [vmem:[#allocation5 + $0x3b8] sm:$0xff]
    %v8141 = vld [vmem:[#allocation5 + $0x3c0] sm:$0xff]
    %v8142 = vld [vmem:[#allocation5 + $0x3c8] sm:$0xff]
    %v8143 = vld [vmem:[#allocation5 + $0x3d0] sm:$0xff]
    %v8144 = vld [vmem:[#allocation5 + $0x3d8] sm:$0xff]
    %v8145 = vld [vmem:[#allocation5 + $0x3e0] sm:$0xff]
    %v8146 = vld [vmem:[#allocation5 + $0x3e8] sm:$0xff]
    %v8147 = vld [vmem:[#allocation5 + $0x3f0] sm:$0xff]
    %v8148 = vld [vmem:[#allocation5 + $0x3f8] sm:$0xff]
    %v8149 = vld [vmem:[#allocation5 + $0x400] sm:$0xff]
    %v8150 = vld [vmem:[#allocation5 + $0x408] sm:$0xff]
    %v8151 = vld [vmem:[#allocation5 + $0x410] sm:$0xff]
    %v8152 = vld [vmem:[#allocation5 + $0x418] sm:$0xff]
    %v8153 = vld [vmem:[#allocation5 + $0x420] sm:$0xff]
    %v8154 = vld [vmem:[#allocation5 + $0x428] sm:$0xff]
    %v8155 = vld [vmem:[#allocation5 + $0x430] sm:$0xff]
    %v8156 = vld [vmem:[#allocation5 + $0x438] sm:$0xff]
    %v8157 = vld [vmem:[#allocation5 + $0x440] sm:$0xff]
    %v8158 = vld [vmem:[#allocation5 + $0x448] sm:$0xff]
    %v8159 = vld [vmem:[#allocation5 + $0x450] sm:$0xff]
    %v8160 = vld [vmem:[#allocation5 + $0x458] sm:$0xff]
    %v8161 = vld [vmem:[#allocation5 + $0x460] sm:$0xff]
    %v8162 = vld [vmem:[#allocation5 + $0x468] sm:$0xff]
    %v8163 = vld [vmem:[#allocation5 + $0x470] sm:$0xff]
    %v8164 = vld [vmem:[#allocation5 + $0x478] sm:$0xff]
    %v8165 = vrot.slane %v7980, 2
    %v8166 = vrot.slane %v7986, 2
    %v8167 = vrot.slane %v7990, 2
    %v8168 = vrot.slane %v7994, 2
    %v8169 = vrot.slane %v8000, 2
    %v8170 = vrot.slane %v8005, 2
    %v8171 = vrot.slane %v8010, 2
    %v8172 = vrot.slane %v8016, 2
    %v8173 = vrot.slane %v8020, 2
    %8183 = vmatprep.subr.bf16.mxu0 %v8022
    %8184 = vmatpush1.bf16.msra.mxu0 %v8021
    %8185 = vmatprep.subr.bf16.mxu0 %v8024
    %8186 = vmatpush1.bf16.msra.mxu0 %v8023
    %8187 = vmatprep.subr.bf16.mxu0 %v8026
    %8188 = vmatpush1.bf16.msra.mxu0 %v8025
    %8189 = vmatprep.subr.bf16.mxu0 %v8028
    %8190 = vmatpush1.bf16.msra.mxu0 %v8027
    %8191 = vmatprep.subr.bf16.mxu0 %v8030
    %8192 = vmatpush1.bf16.msra.mxu0 %v8029
    %8193 = vmatprep.subr.bf16.mxu0 %v8032
    %8194 = vmatpush1.bf16.msra.mxu0 %v8031
    %8195 = vmatprep.subr.bf16.mxu0 %v8034
    %8196 = vmatpush1.bf16.msra.mxu0 %v8033
    %8197 = vmatprep.subr.bf16.mxu0 %v8036
    %8198 = vmatpush1.bf16.msra.mxu0 %v8035
    %8199 = vmatprep.subr.bf16.mxu0 %v8038
    %8200 = vmatpush1.bf16.msra.mxu0 %v8037
    %8201 = vmatprep.subr.bf16.mxu0 %v8040
    %8202 = vmatpush1.bf16.msra.mxu0 %v8039
    %8203 = vmatprep.subr.bf16.mxu0 %v8042
    %8204 = vmatpush1.bf16.msra.mxu0 %v8041
    %8205 = vmatprep.subr.bf16.mxu0 %v8044
    %8206 = vmatpush1.bf16.msra.mxu0 %v8043
    %8207 = vmatprep.subr.bf16.mxu0 %v8046
    %8208 = vmatpush1.bf16.msra.mxu0 %v8045
    %8209 = vmatprep.subr.bf16.mxu0 %v8048
    %8210 = vmatpush1.bf16.msra.mxu0 %v8047
    %8211 = vmatprep.subr.bf16.mxu0 %v8050
    %8212 = vmatpush1.bf16.msra.mxu0 %v8049
    %8213 = vmatprep.subr.bf16.mxu0 %v8052
    %8214 = vmatpush1.bf16.msra.mxu0 %v8051
    %8215 = vmatprep.mubr.bf16.mxu0 %v8166
    %8216 = vmatmul.mubr.bf16.gmra.mrb[0].mxu0 %v8165
    %v8217 = vpop.f32.mrb[0].mxu0
    %v8218 = vadd.f32 0.0, %v8217
    %v8219 = vpop.f32.mrb[0].mxu0
    %v8220 = vadd.f32 0.0, %v8219
    %v8221 = vpop.f32.mrb[0].mxu0
    %v8222 = vpop.f32.mrb[0].mxu0
    %8223 = vdwg.mxu0
    %8224 = vmatprep.subr.bf16.mxu0 %v8054
    %8225 = vmatpush1.bf16.msra.mxu0 %v8053
    %8226 = vmatprep.subr.bf16.mxu0 %v8056
    %8227 = vmatpush1.bf16.msra.mxu0 %v8055
    %8228 = vmatprep.subr.bf16.mxu0 %v8058
    %8229 = vmatpush1.bf16.msra.mxu0 %v8057
    %8230 = vmatprep.subr.bf16.mxu0 %v8060
    %8231 = vmatpush1.bf16.msra.mxu0 %v8059
    %8232 = vmatprep.subr.bf16.mxu0 %v8062
    %8233 = vmatpush1.bf16.msra.mxu0 %v8061
    %8234 = vmatprep.subr.bf16.mxu0 %v8064
    %8235 = vmatpush1.bf16.msra.mxu0 %v8063
    %8236 = vmatprep.subr.bf16.mxu0 %v8066
    %8237 = vmatpush1.bf16.msra.mxu0 %v8065
    %8238 = vmatprep.subr.bf16.mxu0 %v8068
    %8239 = vmatpush1.bf16.msra.mxu0 %v8067
    %8240 = vmatprep.subr.bf16.mxu0 %v8070
    %8241 = vmatpush1.bf16.msra.mxu0 %v8069
    %8242 = vmatprep.subr.bf16.mxu0 %v8072
    %8243 = vmatpush1.bf16.msra.mxu0 %v8071
    %8244 = vmatprep.subr.bf16.mxu0 %v8074
    %8245 = vmatpush1.bf16.msra.mxu0 %v8073
    %8246 = vmatprep.subr.bf16.mxu0 %v8076
    %8247 = vmatpush1.bf16.msra.mxu0 %v8075
    %8248 = vmatprep.subr.bf16.mxu0 %v8078
    %8249 = vmatpush1.bf16.msra.mxu0 %v8077
    %8250 = vmatprep.subr.bf16.mxu0 %v8080
    %8251 = vmatpush1.bf16.msra.mxu0 %v8079
    %8252 = vmatprep.subr.bf16.mxu0 %v8082
    %8253 = vmatpush1.bf16.msra.mxu0 %v8081
    %8254 = vmatprep.subr.bf16.mxu0 %v8084
    %8255 = vmatpush1.bf16.msra.mxu0 %v8083
    %8256 = vmatprep.mubr.bf16.mxu0 %v8168
    %8257 = vmatmul.mubr.bf16.gmra.mrb[0].mxu0 %v8167
    %v8258 = vpop.f32.mrb[0].mxu0
    %v8259 = vadd.f32 %v8218, %v8258
    %v8260 = vpop.f32.mrb[0].mxu0
    %v8261 = vadd.f32 %v8220, %v8260
    %v8262 = vpop.f32.mrb[0].mxu0
    %v8263 = vpop.f32.mrb[0].mxu0
    %8264 = vdwg.mxu0
    %8265 = vmatprep.subr.bf16.mxu0 %v8086
    %8266 = vmatpush1.bf16.msra.mxu0 %v8085
    %8267 = vmatprep.subr.bf16.mxu0 %v8088
    %8268 = vmatpush1.bf16.msra.mxu0 %v8087
    %8269 = vmatprep.subr.bf16.mxu0 %v8090
    %8270 = vmatpush1.bf16.msra.mxu0 %v8089
    %8271 = vmatprep.subr.bf16.mxu0 %v8092
    %8272 = vmatpush1.bf16.msra.mxu0 %v8091
    %8273 = vmatprep.subr.bf16.mxu0 %v8094
    %8274 = vmatpush1.bf16.msra.mxu0 %v8093
    %8275 = vmatprep.subr.bf16.mxu0 %v8096
    %8276 = vmatpush1.bf16.msra.mxu0 %v8095
    %8277 = vmatprep.subr.bf16.mxu0 %v8098
    %8278 = vmatpush1.bf16.msra.mxu0 %v8097
    %8279 = vmatprep.subr.bf16.mxu0 %v8100
    %8280 = vmatpush1.bf16.msra.mxu0 %v8099
    %8281 = vmatprep.subr.bf16.mxu0 %v8102
    %8282 = vmatpush1.bf16.msra.mxu0 %v8101
    %8283 = vmatprep.subr.bf16.mxu0 %v8104
    %8284 = vmatpush1.bf16.msra.mxu0 %v8103
    %8285 = vmatprep.subr.bf16.mxu0 %v8106
    %8286 = vmatpush1.bf16.msra.mxu0 %v8105
    %8287 = vmatprep.subr.bf16.mxu0 %v8108
    %8288 = vmatpush1.bf16.msra.mxu0 %v8107
    %8289 = vmatprep.subr.bf16.mxu0 %v8110
    %8290 = vmatpush1.bf16.msra.mxu0 %v8109
    %8291 = vmatprep.subr.bf16.mxu0 %v8112
    %8292 = vmatpush1.bf16.msra.mxu0 %v8111
    %8293 = vmatprep.subr.bf16.mxu0 %v8114
    %8294 = vmatpush1.bf16.msra.mxu0 %v8113
    %8295 = vmatprep.subr.bf16.mxu0 %v8116
    %8296 = vmatpush1.bf16.msra.mxu0 %v8115
    %8297 = vmatprep.mubr.bf16.mxu0 %v8170
    %8298 = vmatmul.mubr.bf16.gmra.mrb[0].mxu0 %v8169
    %v8299 = vpop.f32.mrb[0].mxu0
    %v8300 = vadd.f32 %v8259, %v8299
    %v8301 = vpop.f32.mrb[0].mxu0
    %v8302 = vadd.f32 %v8261, %v8301
    %v8303 = vpop.f32.mrb[0].mxu0
    %v8304 = vpop.f32.mrb[0].mxu0
    %8305 = vdwg.mxu0
    %8306 = vmatprep.subr.bf16.mxu0 %v8118
    %8307 = vmatpush1.bf16.msra.mxu0 %v8117
    %8308 = vmatprep.subr.bf16.mxu0 %v8120
    %8309 = vmatpush1.bf16.msra.mxu0 %v8119
    %8310 = vmatprep.subr.bf16.mxu0 %v8122
    %8311 = vmatpush1.bf16.msra.mxu0 %v8121
    %8312 = vmatprep.subr.bf16.mxu0 %v8124
    %8313 = vmatpush1.bf16.msra.mxu0 %v8123
    %8314 = vmatprep.subr.bf16.mxu0 %v8126
    %8315 = vmatpush1.bf16.msra.mxu0 %v8125
    %8316 = vmatprep.subr.bf16.mxu0 %v8128
    %8317 = vmatpush1.bf16.msra.mxu0 %v8127
    %8318 = vmatprep.subr.bf16.mxu0 %v8130
    %8319 = vmatpush1.bf16.msra.mxu0 %v8129
    %8320 = vmatprep.subr.bf16.mxu0 %v8132
    %8321 = vmatpush1.bf16.msra.mxu0 %v8131
    %8322 = vmatprep.subr.bf16.mxu0 %v8134
    %8323 = vmatpush1.bf16.msra.mxu0 %v8133
    %8324 = vmatprep.subr.bf16.mxu0 %v8136
    %8325 = vmatpush1.bf16.msra.mxu0 %v8135
    %8326 = vmatprep.subr.bf16.mxu0 %v8138
    %8327 = vmatpush1.bf16.msra.mxu0 %v8137
    %8328 = vmatprep.subr.bf16.mxu0 %v8140
    %8329 = vmatpush1.bf16.msra.mxu0 %v8139
    %8330 = vmatprep.subr.bf16.mxu0 %v8142
    %8331 = vmatpush1.bf16.msra.mxu0 %v8141
    %8332 = vmatprep.subr.bf16.mxu0 %v8144
    %8333 = vmatpush1.bf16.msra.mxu0 %v8143
    %8334 = vmatprep.subr.bf16.mxu0 %v8146
    %8335 = vmatpush1.bf16.msra.mxu0 %v8145
    %8336 = vmatprep.subr.bf16.mxu0 %v8148
    %8337 = vmatpush1.bf16.msra.mxu0 %v8147
    %8338 = vmatprep.mubr.bf16.mxu0 %v8172
    %8339 = vmatmul.mubr.bf16.gmra.mrb[0].mxu0 %v8171
    %v8340 = vpop.f32.mrb[0].mxu0
    %v8341 = vadd.f32 %v8300, %v8340
    %v8342 = vpop.f32.mrb[0].mxu0
    %v8343 = vadd.f32 %v8302, %v8342
    %v8344 = vpop.f32.mrb[0].mxu0
    %v8345 = vpop.f32.mrb[0].mxu0
    %8346 = vdwg.mxu0
    %8347 = vmatprep.subr.bf16.mxu0 %v8150
    %8348 = vmatpush1.bf16.msra.mxu0 %v8149
    %8349 = vmatprep.subr.bf16.mxu0 %v8152
    %8350 = vmatpush1.bf16.msra.mxu0 %v8151
    %8351 = vmatprep.subr.bf16.mxu0 %v8154
    %8352 = vmatpush1.bf16.msra.mxu0 %v8153
    %8353 = vmatprep.subr.bf16.mxu0 %v8156
    %8354 = vmatpush1.bf16.msra.mxu0 %v8155
    %8355 = vmatprep.subr.bf16.mxu0 %v8158
    %8356 = vmatpush1.bf16.msra.mxu0 %v8157
    %8357 = vmatprep.subr.bf16.mxu0 %v8160
    %8358 = vmatpush1.bf16.msra.mxu0 %v8159
    %8359 = vmatprep.subr.bf16.mxu0 %v8162
    %8360 = vmatpush1.bf16.msra.mxu0 %v8161
    %8361 = vmatprep.subr.bf16.mxu0 %v8164
    %8362 = vmatpush1.bf16.msra.mxu0 %v8163
    %8363 = vmatprep.subr.bf16.mxu0 0
    %8364 = vmatpush1.bf16.msra.mxu0 0
    %8365 = vmatprep.subr.bf16.mxu0 0
    %8366 = vmatpush1.bf16.msra.mxu0 0
    %8367 = vmatprep.subr.bf16.mxu0 0
    %8368 = vmatpush1.bf16.msra.mxu0 0
    %8369 = vmatprep.subr.bf16.mxu0 0
    %8370 = vmatpush1.bf16.msra.mxu0 0
    %8371 = vmatprep.subr.bf16.mxu0 0
    %8372 = vmatpush1.bf16.msra.mxu0 0
    %8373 = vmatprep.subr.bf16.mxu0 0
    %8374 = vmatpush1.bf16.msra.mxu0 0
    %8375 = vmatprep.subr.bf16.mxu0 0
    %8376 = vmatpush1.bf16.msra.mxu0 0
    %8377 = vmatprep.subr.bf16.mxu0 0
    %8378 = vmatpush1.bf16.msra.mxu0 0
    %8379 = vmatprep.mubr.bf16.mxu0 0
    %8380 = vmatmul.mubr.bf16.gmra.mrb[0].mxu0 %v8173
    %v8381 = vpop.f32.mrb[0].mxu0
    %v8382 = vadd.f32 %v8341, %v8381
    %v8383 = vpop.f32.mrb[0].mxu0
    %v8384 = vadd.f32 %v8343, %v8383
    %v8385 = vpop.f32.mrb[0].mxu0
    %v8386 = vpop.f32.mrb[0].mxu0
    %8387 = vdwg.mxu0
    %vm8388 = vcmp.ge.f32.partialorder %v8382, 0.0
    %vm8389 = vcmp.ge.f32.partialorder %v8384, 0.0
    %v8390 = vmul.f32 %v8382, 0.2
    %v8391 = vmul.f32 %v8384, 0.2
    %v8392 = vsel %vm8388, %v8382, %v8390
    %v8393 = vsel %vm8389, %v8384, %v8391
    %v8394 = vld [vmem:[#allocation16] sm:$0x3]
    %v8396 = vlaneseq
    %v8397 = vshrl.u32 %v8396, 7
    %v8398 = vsub.s32 0, %v8397
    %v8399 = vrot.slane %v8394, %v8398
    %v8400 = vlaneseq
    %v8401 = vshrl.u32 %v8400, 7
    %v8402 = vsub.s32 1, %v8401
    %v8403 = vrot.slane %v8394, %v8402
    %v8406 = vmul.f32 %v8392, %v8399
    %v8407 = vmul.f32 %v8393, %v8403
    %v8408 = vld [vmem:[#allocation17] sm:$0x3]
    %v8410 = vlaneseq
    %v8411 = vshrl.u32 %v8410, 7
    %v8412 = vsub.s32 0, %v8411
    %v8413 = vrot.slane %v8408, %v8412
    %v8414 = vlaneseq
    %v8415 = vshrl.u32 %v8414, 7
    %v8416 = vsub.s32 1, %v8415
    %v8417 = vrot.slane %v8408, %v8416
    %v8420 = vadd.f32 %v8406, %v8413
    %v8421 = vadd.f32 %v8407, %v8417
    %v8422 = vpack.c.bf16 %v8420, %v8420
    %v8423 = vpack.c.bf16 %v8421, %v8421
    %v8426 = vrot.slane %v8422, 4
    %v8427 = vrot.slane %v8423, 4
    %8430 = vst [vmem:[#allocation4 + $0x10] sm:$0xf0] %v8426
    %8431 = vst [vmem:[#allocation4 + $0x18] sm:$0xf0] %v8427
    %s8432 = smul.u32 4, 512
    %s8433 = smul.u32 %s8432, 4
    %s8434 = sshll.u32 %s8433, 4
    %8435 = dma.done %s186, %s8434
    %v8436 = vld [vmem:[#allocation4] sm:$0x1]
    %v8437 = vld [vmem:[#allocation4 + $0x8] sm:$0x1]
    %v8438 = vld [vmem:[#allocation4] sm:$0x2]
    %v8439 = vld [vmem:[#allocation4 + $0x8] sm:$0x2]
    %v8440 = vld [vmem:[#allocation4] sm:$0x4]
    %v8441 = vld [vmem:[#allocation4 + $0x8] sm:$0x4]
    %v8442 = vld [vmem:[#allocation4] sm:$0x8]
    %v8443 = vld [vmem:[#allocation4 + $0x8] sm:$0x8]
    %v8444 = vld [vmem:[#allocation4] sm:$0x10]
    %v8445 = vld [vmem:[#allocation4 + $0x8] sm:$0x10]
    %v8446 = vld [vmem:[#allocation4] sm:$0x20]
    %v8447 = vld [vmem:[#allocation4 + $0x8] sm:$0x20]
    %v8448 = vld [vmem:[#allocation4] sm:$0x40]
    %v8449 = vld [vmem:[#allocation4 + $0x8] sm:$0x40]
    %v8450 = vld [vmem:[#allocation4] sm:$0x80]
    %v8451 = vld [vmem:[#allocation4 + $0x8] sm:$0x80]
    %v8452 = vld [vmem:[#allocation4 + $0x10] sm:$0x1]
    %v8453 = vld [vmem:[#allocation4 + $0x18] sm:$0x1]
    %v8454 = vld [vmem:[#allocation4 + $0x10] sm:$0x2]
    %v8455 = vld [vmem:[#allocation4 + $0x18] sm:$0x2]
    %v8456 = vld [vmem:[#allocation4 + $0x10] sm:$0x4]
    %v8457 = vld [vmem:[#allocation4 + $0x18] sm:$0x4]
    %v8458 = vld [vmem:[#allocation4 + $0x10] sm:$0x8]
    %v8459 = vld [vmem:[#allocation4 + $0x18] sm:$0x8]
    %v8460 = vld [vmem:[#allocation4 + $0x10] sm:$0x10]
    %v8461 = vld [vmem:[#allocation4 + $0x18] sm:$0x10]
    %v8462 = vld [vmem:[#allocation4 + $0x10] sm:$0x20]
    %v8463 = vld [vmem:[#allocation4 + $0x18] sm:$0x20]
    %v8464 = vld [vmem:[#allocation4 + $0x10] sm:$0x40]
    %v8465 = vld [vmem:[#allocation4 + $0x18] sm:$0x40]
    %v8466 = vld [vmem:[#allocation4 + $0x10] sm:$0x80]
    %v8467 = vld [vmem:[#allocation4 + $0x18] sm:$0x80]
    %v8470 = vrot.slane %v8438, 1
    %v8471 = vrot.slane %v8439, 1
    %v8476 = vrot.slane %v8440, 2
    %v8477 = vrot.slane %v8441, 2
    %v8482 = vrot.slane %v8442, 3
    %v8483 = vrot.slane %v8443, 3
    %v8488 = vrot.slane %v8444, 4
    %v8489 = vrot.slane %v8445, 4
    %v8494 = vrot.slane %v8446, 5
    %v8495 = vrot.slane %v8447, 5
    %v8500 = vrot.slane %v8448, 6
    %v8501 = vrot.slane %v8449, 6
    %v8506 = vrot.slane %v8450, 7
    %v8507 = vrot.slane %v8451, 7
    %v8512 = vrot.slane %v8454, 1
    %v8513 = vrot.slane %v8455, 1
    %v8518 = vrot.slane %v8456, 2
    %v8519 = vrot.slane %v8457, 2
    %v8524 = vrot.slane %v8458, 3
    %v8525 = vrot.slane %v8459, 3
    %v8530 = vrot.slane %v8460, 4
    %v8531 = vrot.slane %v8461, 4
    %v8536 = vrot.slane %v8462, 5
    %v8537 = vrot.slane %v8463, 5
    %v8542 = vrot.slane %v8464, 6
    %v8543 = vrot.slane %v8465, 6
    %v8548 = vrot.slane %v8466, 7
    %v8549 = vrot.slane %v8467, 7
    %v8552 = vld [vmem:[#allocation6] sm:$0xff]
    %v8553 = vld [vmem:[#allocation6 + $0x8] sm:$0xff]
    %v8554 = vld [vmem:[#allocation6 + $0x10] sm:$0xff]
    %v8555 = vld [vmem:[#allocation6 + $0x18] sm:$0xff]
    %v8556 = vld [vmem:[#allocation6 + $0x20] sm:$0xff]
    %v8557 = vld [vmem:[#allocation6 + $0x28] sm:$0xff]
    %v8558 = vld [vmem:[#allocation6 + $0x30] sm:$0xff]
    %v8559 = vld [vmem:[#allocation6 + $0x38] sm:$0xff]
    %v8560 = vld [vmem:[#allocation6 + $0x40] sm:$0xff]
    %v8561 = vld [vmem:[#allocation6 + $0x48] sm:$0xff]
    %v8562 = vld [vmem:[#allocation6 + $0x50] sm:$0xff]
    %v8563 = vld [vmem:[#allocation6 + $0x58] sm:$0xff]
    %v8564 = vld [vmem:[#allocation6 + $0x60] sm:$0xff]
    %v8565 = vld [vmem:[#allocation6 + $0x68] sm:$0xff]
    %v8566 = vld [vmem:[#allocation6 + $0x70] sm:$0xff]
    %v8567 = vld [vmem:[#allocation6 + $0x78] sm:$0xff]
    %v8568 = vld [vmem:[#allocation6 + $0x80] sm:$0xff]
    %v8569 = vld [vmem:[#allocation6 + $0x88] sm:$0xff]
    %v8570 = vld [vmem:[#allocation6 + $0x90] sm:$0xff]
    %v8571 = vld [vmem:[#allocation6 + $0x98] sm:$0xff]
    %v8572 = vld [vmem:[#allocation6 + $0xa0] sm:$0xff]
    %v8573 = vld [vmem:[#allocation6 + $0xa8] sm:$0xff]
    %v8574 = vld [vmem:[#allocation6 + $0xb0] sm:$0xff]
    %v8575 = vld [vmem:[#allocation6 + $0xb8] sm:$0xff]
    %v8576 = vld [vmem:[#allocation6 + $0xc0] sm:$0xff]
    %v8577 = vld [vmem:[#allocation6 + $0xc8] sm:$0xff]
    %v8578 = vld [vmem:[#allocation6 + $0xd0] sm:$0xff]
    %v8579 = vld [vmem:[#allocation6 + $0xd8] sm:$0xff]
    %v8580 = vld [vmem:[#allocation6 + $0xe0] sm:$0xff]
    %v8581 = vld [vmem:[#allocation6 + $0xe8] sm:$0xff]
    %v8582 = vld [vmem:[#allocation6 + $0xf0] sm:$0xff]
    %v8583 = vld [vmem:[#allocation6 + $0xf8] sm:$0xff]
    %v8584 = vld [vmem:[#allocation6 + $0x100] sm:$0xff]
    %v8585 = vld [vmem:[#allocation6 + $0x108] sm:$0xff]
    %v8586 = vld [vmem:[#allocation6 + $0x110] sm:$0xff]
    %v8587 = vld [vmem:[#allocation6 + $0x118] sm:$0xff]
    %v8588 = vld [vmem:[#allocation6 + $0x120] sm:$0xff]
    %v8589 = vld [vmem:[#allocation6 + $0x128] sm:$0xff]
    %v8590 = vld [vmem:[#allocation6 + $0x130] sm:$0xff]
    %v8591 = vld [vmem:[#allocation6 + $0x138] sm:$0xff]
    %v8592 = vld [vmem:[#allocation6 + $0x140] sm:$0xff]
    %v8593 = vld [vmem:[#allocation6 + $0x148] sm:$0xff]
    %v8594 = vld [vmem:[#allocation6 + $0x150] sm:$0xff]
    %v8595 = vld [vmem:[#allocation6 + $0x158] sm:$0xff]
    %v8596 = vld [vmem:[#allocation6 + $0x160] sm:$0xff]
    %v8597 = vld [vmem:[#allocation6 + $0x168] sm:$0xff]
    %v8598 = vld [vmem:[#allocation6 + $0x170] sm:$0xff]
    %v8599 = vld [vmem:[#allocation6 + $0x178] sm:$0xff]
    %v8600 = vld [vmem:[#allocation6 + $0x180] sm:$0xff]
    %v8601 = vld [vmem:[#allocation6 + $0x188] sm:$0xff]
    %v8602 = vld [vmem:[#allocation6 + $0x190] sm:$0xff]
    %v8603 = vld [vmem:[#allocation6 + $0x198] sm:$0xff]
    %v8604 = vld [vmem:[#allocation6 + $0x1a0] sm:$0xff]
    %v8605 = vld [vmem:[#allocation6 + $0x1a8] sm:$0xff]
    %v8606 = vld [vmem:[#allocation6 + $0x1b0] sm:$0xff]
    %v8607 = vld [vmem:[#allocation6 + $0x1b8] sm:$0xff]
    %v8608 = vld [vmem:[#allocation6 + $0x1c0] sm:$0xff]
    %v8609 = vld [vmem:[#allocation6 + $0x1c8] sm:$0xff]
    %v8610 = vld [vmem:[#allocation6 + $0x1d0] sm:$0xff]
    %v8611 = vld [vmem:[#allocation6 + $0x1d8] sm:$0xff]
    %v8612 = vld [vmem:[#allocation6 + $0x1e0] sm:$0xff]
    %v8613 = vld [vmem:[#allocation6 + $0x1e8] sm:$0xff]
    %v8614 = vld [vmem:[#allocation6 + $0x1f0] sm:$0xff]
    %v8615 = vld [vmem:[#allocation6 + $0x1f8] sm:$0xff]
    %v8616 = vld [vmem:[#allocation6 + $0x200] sm:$0xff]
    %v8617 = vld [vmem:[#allocation6 + $0x208] sm:$0xff]
    %v8618 = vld [vmem:[#allocation6 + $0x210] sm:$0xff]
    %v8619 = vld [vmem:[#allocation6 + $0x218] sm:$0xff]
    %v8620 = vld [vmem:[#allocation6 + $0x220] sm:$0xff]
    %v8621 = vld [vmem:[#allocation6 + $0x228] sm:$0xff]
    %v8622 = vld [vmem:[#allocation6 + $0x230] sm:$0xff]
    %v8623 = vld [vmem:[#allocation6 + $0x238] sm:$0xff]
    %v8624 = vld [vmem:[#allocation6 + $0x240] sm:$0xff]
    %v8625 = vld [vmem:[#allocation6 + $0x248] sm:$0xff]
    %v8626 = vld [vmem:[#allocation6 + $0x250] sm:$0xff]
    %v8627 = vld [vmem:[#allocation6 + $0x258] sm:$0xff]
    %v8628 = vld [vmem:[#allocation6 + $0x260] sm:$0xff]
    %v8629 = vld [vmem:[#allocation6 + $0x268] sm:$0xff]
    %v8630 = vld [vmem:[#allocation6 + $0x270] sm:$0xff]
    %v8631 = vld [vmem:[#allocation6 + $0x278] sm:$0xff]
    %v8632 = vld [vmem:[#allocation6 + $0x280] sm:$0xff]
    %v8633 = vld [vmem:[#allocation6 + $0x288] sm:$0xff]
    %v8634 = vld [vmem:[#allocation6 + $0x290] sm:$0xff]
    %v8635 = vld [vmem:[#allocation6 + $0x298] sm:$0xff]
    %v8636 = vld [vmem:[#allocation6 + $0x2a0] sm:$0xff]
    %v8637 = vld [vmem:[#allocation6 + $0x2a8] sm:$0xff]
    %v8638 = vld [vmem:[#allocation6 + $0x2b0] sm:$0xff]
    %v8639 = vld [vmem:[#allocation6 + $0x2b8] sm:$0xff]
    %v8640 = vld [vmem:[#allocation6 + $0x2c0] sm:$0xff]
    %v8641 = vld [vmem:[#allocation6 + $0x2c8] sm:$0xff]
    %v8642 = vld [vmem:[#allocation6 + $0x2d0] sm:$0xff]
    %v8643 = vld [vmem:[#allocation6 + $0x2d8] sm:$0xff]
    %v8644 = vld [vmem:[#allocation6 + $0x2e0] sm:$0xff]
    %v8645 = vld [vmem:[#allocation6 + $0x2e8] sm:$0xff]
    %v8646 = vld [vmem:[#allocation6 + $0x2f0] sm:$0xff]
    %v8647 = vld [vmem:[#allocation6 + $0x2f8] sm:$0xff]
    %v8648 = vld [vmem:[#allocation6 + $0x300] sm:$0xff]
    %v8649 = vld [vmem:[#allocation6 + $0x308] sm:$0xff]
    %v8650 = vld [vmem:[#allocation6 + $0x310] sm:$0xff]
    %v8651 = vld [vmem:[#allocation6 + $0x318] sm:$0xff]
    %v8652 = vld [vmem:[#allocation6 + $0x320] sm:$0xff]
    %v8653 = vld [vmem:[#allocation6 + $0x328] sm:$0xff]
    %v8654 = vld [vmem:[#allocation6 + $0x330] sm:$0xff]
    %v8655 = vld [vmem:[#allocation6 + $0x338] sm:$0xff]
    %v8656 = vld [vmem:[#allocation6 + $0x340] sm:$0xff]
    %v8657 = vld [vmem:[#allocation6 + $0x348] sm:$0xff]
    %v8658 = vld [vmem:[#allocation6 + $0x350] sm:$0xff]
    %v8659 = vld [vmem:[#allocation6 + $0x358] sm:$0xff]
    %v8660 = vld [vmem:[#allocation6 + $0x360] sm:$0xff]
    %v8661 = vld [vmem:[#allocation6 + $0x368] sm:$0xff]
    %v8662 = vld [vmem:[#allocation6 + $0x370] sm:$0xff]
    %v8663 = vld [vmem:[#allocation6 + $0x378] sm:$0xff]
    %v8664 = vld [vmem:[#allocation6 + $0x380] sm:$0xff]
    %v8665 = vld [vmem:[#allocation6 + $0x388] sm:$0xff]
    %v8666 = vld [vmem:[#allocation6 + $0x390] sm:$0xff]
    %v8667 = vld [vmem:[#allocation6 + $0x398] sm:$0xff]
    %v8668 = vld [vmem:[#allocation6 + $0x3a0] sm:$0xff]
    %v8669 = vld [vmem:[#allocation6 + $0x3a8] sm:$0xff]
    %v8670 = vld [vmem:[#allocation6 + $0x3b0] sm:$0xff]
    %v8671 = vld [vmem:[#allocation6 + $0x3b8] sm:$0xff]
    %v8672 = vld [vmem:[#allocation6 + $0x3c0] sm:$0xff]
    %v8673 = vld [vmem:[#allocation6 + $0x3c8] sm:$0xff]
    %v8674 = vld [vmem:[#allocation6 + $0x3d0] sm:$0xff]
    %v8675 = vld [vmem:[#allocation6 + $0x3d8] sm:$0xff]
    %v8676 = vld [vmem:[#allocation6 + $0x3e0] sm:$0xff]
    %v8677 = vld [vmem:[#allocation6 + $0x3e8] sm:$0xff]
    %v8678 = vld [vmem:[#allocation6 + $0x3f0] sm:$0xff]
    %v8679 = vld [vmem:[#allocation6 + $0x3f8] sm:$0xff]
    %v8680 = vld [vmem:[#allocation6 + $0x400] sm:$0xff]
    %v8681 = vld [vmem:[#allocation6 + $0x408] sm:$0xff]
    %v8682 = vld [vmem:[#allocation6 + $0x410] sm:$0xff]
    %v8683 = vld [vmem:[#allocation6 + $0x418] sm:$0xff]
    %v8684 = vld [vmem:[#allocation6 + $0x420] sm:$0xff]
    %v8685 = vld [vmem:[#allocation6 + $0x428] sm:$0xff]
    %v8686 = vld [vmem:[#allocation6 + $0x430] sm:$0xff]
    %v8687 = vld [vmem:[#allocation6 + $0x438] sm:$0xff]
    %v8688 = vld [vmem:[#allocation6 + $0x440] sm:$0xff]
    %v8689 = vld [vmem:[#allocation6 + $0x448] sm:$0xff]
    %v8690 = vld [vmem:[#allocation6 + $0x450] sm:$0xff]
    %v8691 = vld [vmem:[#allocation6 + $0x458] sm:$0xff]
    %v8692 = vld [vmem:[#allocation6 + $0x460] sm:$0xff]
    %v8693 = vld [vmem:[#allocation6 + $0x468] sm:$0xff]
    %v8694 = vld [vmem:[#allocation6 + $0x470] sm:$0xff]
    %v8695 = vld [vmem:[#allocation6 + $0x478] sm:$0xff]
    %v8696 = vld [vmem:[#allocation6 + $0x480] sm:$0xff]
    %v8697 = vld [vmem:[#allocation6 + $0x488] sm:$0xff]
    %v8698 = vld [vmem:[#allocation6 + $0x490] sm:$0xff]
    %v8699 = vld [vmem:[#allocation6 + $0x498] sm:$0xff]
    %v8700 = vld [vmem:[#allocation6 + $0x4a0] sm:$0xff]
    %v8701 = vld [vmem:[#allocation6 + $0x4a8] sm:$0xff]
    %v8702 = vld [vmem:[#allocation6 + $0x4b0] sm:$0xff]
    %v8703 = vld [vmem:[#allocation6 + $0x4b8] sm:$0xff]
    %v8704 = vld [vmem:[#allocation6 + $0x4c0] sm:$0xff]
    %v8705 = vld [vmem:[#allocation6 + $0x4c8] sm:$0xff]
    %v8706 = vld [vmem:[#allocation6 + $0x4d0] sm:$0xff]
    %v8707 = vld [vmem:[#allocation6 + $0x4d8] sm:$0xff]
    %v8708 = vld [vmem:[#allocation6 + $0x4e0] sm:$0xff]
    %v8709 = vld [vmem:[#allocation6 + $0x4e8] sm:$0xff]
    %v8710 = vld [vmem:[#allocation6 + $0x4f0] sm:$0xff]
    %v8711 = vld [vmem:[#allocation6 + $0x4f8] sm:$0xff]
    %v8712 = vld [vmem:[#allocation6 + $0x500] sm:$0xff]
    %v8713 = vld [vmem:[#allocation6 + $0x508] sm:$0xff]
    %v8714 = vld [vmem:[#allocation6 + $0x510] sm:$0xff]
    %v8715 = vld [vmem:[#allocation6 + $0x518] sm:$0xff]
    %v8716 = vld [vmem:[#allocation6 + $0x520] sm:$0xff]
    %v8717 = vld [vmem:[#allocation6 + $0x528] sm:$0xff]
    %v8718 = vld [vmem:[#allocation6 + $0x530] sm:$0xff]
    %v8719 = vld [vmem:[#allocation6 + $0x538] sm:$0xff]
    %v8720 = vld [vmem:[#allocation6 + $0x540] sm:$0xff]
    %v8721 = vld [vmem:[#allocation6 + $0x548] sm:$0xff]
    %v8722 = vld [vmem:[#allocation6 + $0x550] sm:$0xff]
    %v8723 = vld [vmem:[#allocation6 + $0x558] sm:$0xff]
    %v8724 = vld [vmem:[#allocation6 + $0x560] sm:$0xff]
    %v8725 = vld [vmem:[#allocation6 + $0x568] sm:$0xff]
    %v8726 = vld [vmem:[#allocation6 + $0x570] sm:$0xff]
    %v8727 = vld [vmem:[#allocation6 + $0x578] sm:$0xff]
    %v8728 = vld [vmem:[#allocation6 + $0x580] sm:$0xff]
    %v8729 = vld [vmem:[#allocation6 + $0x588] sm:$0xff]
    %v8730 = vld [vmem:[#allocation6 + $0x590] sm:$0xff]
    %v8731 = vld [vmem:[#allocation6 + $0x598] sm:$0xff]
    %v8732 = vld [vmem:[#allocation6 + $0x5a0] sm:$0xff]
    %v8733 = vld [vmem:[#allocation6 + $0x5a8] sm:$0xff]
    %v8734 = vld [vmem:[#allocation6 + $0x5b0] sm:$0xff]
    %v8735 = vld [vmem:[#allocation6 + $0x5b8] sm:$0xff]
    %v8736 = vld [vmem:[#allocation6 + $0x5c0] sm:$0xff]
    %v8737 = vld [vmem:[#allocation6 + $0x5c8] sm:$0xff]
    %v8738 = vld [vmem:[#allocation6 + $0x5d0] sm:$0xff]
    %v8739 = vld [vmem:[#allocation6 + $0x5d8] sm:$0xff]
    %v8740 = vld [vmem:[#allocation6 + $0x5e0] sm:$0xff]
    %v8741 = vld [vmem:[#allocation6 + $0x5e8] sm:$0xff]
    %v8742 = vld [vmem:[#allocation6 + $0x5f0] sm:$0xff]
    %v8743 = vld [vmem:[#allocation6 + $0x5f8] sm:$0xff]
    %v8744 = vld [vmem:[#allocation6 + $0x600] sm:$0xff]
    %v8745 = vld [vmem:[#allocation6 + $0x608] sm:$0xff]
    %v8746 = vld [vmem:[#allocation6 + $0x610] sm:$0xff]
    %v8747 = vld [vmem:[#allocation6 + $0x618] sm:$0xff]
    %v8748 = vld [vmem:[#allocation6 + $0x620] sm:$0xff]
    %v8749 = vld [vmem:[#allocation6 + $0x628] sm:$0xff]
    %v8750 = vld [vmem:[#allocation6 + $0x630] sm:$0xff]
    %v8751 = vld [vmem:[#allocation6 + $0x638] sm:$0xff]
    %v8752 = vld [vmem:[#allocation6 + $0x640] sm:$0xff]
    %v8753 = vld [vmem:[#allocation6 + $0x648] sm:$0xff]
    %v8754 = vld [vmem:[#allocation6 + $0x650] sm:$0xff]
    %v8755 = vld [vmem:[#allocation6 + $0x658] sm:$0xff]
    %v8756 = vld [vmem:[#allocation6 + $0x660] sm:$0xff]
    %v8757 = vld [vmem:[#allocation6 + $0x668] sm:$0xff]
    %v8758 = vld [vmem:[#allocation6 + $0x670] sm:$0xff]
    %v8759 = vld [vmem:[#allocation6 + $0x678] sm:$0xff]
    %v8760 = vld [vmem:[#allocation6 + $0x680] sm:$0xff]
    %v8761 = vld [vmem:[#allocation6 + $0x688] sm:$0xff]
    %v8762 = vld [vmem:[#allocation6 + $0x690] sm:$0xff]
    %v8763 = vld [vmem:[#allocation6 + $0x698] sm:$0xff]
    %v8764 = vld [vmem:[#allocation6 + $0x6a0] sm:$0xff]
    %v8765 = vld [vmem:[#allocation6 + $0x6a8] sm:$0xff]
    %v8766 = vld [vmem:[#allocation6 + $0x6b0] sm:$0xff]
    %v8767 = vld [vmem:[#allocation6 + $0x6b8] sm:$0xff]
    %v8768 = vld [vmem:[#allocation6 + $0x6c0] sm:$0xff]
    %v8769 = vld [vmem:[#allocation6 + $0x6c8] sm:$0xff]
    %v8770 = vld [vmem:[#allocation6 + $0x6d0] sm:$0xff]
    %v8771 = vld [vmem:[#allocation6 + $0x6d8] sm:$0xff]
    %v8772 = vld [vmem:[#allocation6 + $0x6e0] sm:$0xff]
    %v8773 = vld [vmem:[#allocation6 + $0x6e8] sm:$0xff]
    %v8774 = vld [vmem:[#allocation6 + $0x6f0] sm:$0xff]
    %v8775 = vld [vmem:[#allocation6 + $0x6f8] sm:$0xff]
    %v8776 = vld [vmem:[#allocation6 + $0x700] sm:$0xff]
    %v8777 = vld [vmem:[#allocation6 + $0x708] sm:$0xff]
    %v8778 = vld [vmem:[#allocation6 + $0x710] sm:$0xff]
    %v8779 = vld [vmem:[#allocation6 + $0x718] sm:$0xff]
    %v8780 = vld [vmem:[#allocation6 + $0x720] sm:$0xff]
    %v8781 = vld [vmem:[#allocation6 + $0x728] sm:$0xff]
    %v8782 = vld [vmem:[#allocation6 + $0x730] sm:$0xff]
    %v8783 = vld [vmem:[#allocation6 + $0x738] sm:$0xff]
    %v8784 = vld [vmem:[#allocation6 + $0x740] sm:$0xff]
    %v8785 = vld [vmem:[#allocation6 + $0x748] sm:$0xff]
    %v8786 = vld [vmem:[#allocation6 + $0x750] sm:$0xff]
    %v8787 = vld [vmem:[#allocation6 + $0x758] sm:$0xff]
    %v8788 = vld [vmem:[#allocation6 + $0x760] sm:$0xff]
    %v8789 = vld [vmem:[#allocation6 + $0x768] sm:$0xff]
    %v8790 = vld [vmem:[#allocation6 + $0x770] sm:$0xff]
    %v8791 = vld [vmem:[#allocation6 + $0x778] sm:$0xff]
    %v8792 = vld [vmem:[#allocation6 + $0x780] sm:$0xff]
    %v8793 = vld [vmem:[#allocation6 + $0x788] sm:$0xff]
    %v8794 = vld [vmem:[#allocation6 + $0x790] sm:$0xff]
    %v8795 = vld [vmem:[#allocation6 + $0x798] sm:$0xff]
    %v8796 = vld [vmem:[#allocation6 + $0x7a0] sm:$0xff]
    %v8797 = vld [vmem:[#allocation6 + $0x7a8] sm:$0xff]
    %v8798 = vld [vmem:[#allocation6 + $0x7b0] sm:$0xff]
    %v8799 = vld [vmem:[#allocation6 + $0x7b8] sm:$0xff]
    %v8800 = vld [vmem:[#allocation6 + $0x7c0] sm:$0xff]
    %v8801 = vld [vmem:[#allocation6 + $0x7c8] sm:$0xff]
    %v8802 = vld [vmem:[#allocation6 + $0x7d0] sm:$0xff]
    %v8803 = vld [vmem:[#allocation6 + $0x7d8] sm:$0xff]
    %v8804 = vld [vmem:[#allocation6 + $0x7e0] sm:$0xff]
    %v8805 = vld [vmem:[#allocation6 + $0x7e8] sm:$0xff]
    %v8806 = vld [vmem:[#allocation6 + $0x7f0] sm:$0xff]
    %v8807 = vld [vmem:[#allocation6 + $0x7f8] sm:$0xff]
    %v8808 = vld [vmem:[#allocation6 + $0x800] sm:$0xff]
    %v8809 = vld [vmem:[#allocation6 + $0x808] sm:$0xff]
    %v8810 = vld [vmem:[#allocation6 + $0x810] sm:$0xff]
    %v8811 = vld [vmem:[#allocation6 + $0x818] sm:$0xff]
    %v8812 = vld [vmem:[#allocation6 + $0x820] sm:$0xff]
    %v8813 = vld [vmem:[#allocation6 + $0x828] sm:$0xff]
    %v8814 = vld [vmem:[#allocation6 + $0x830] sm:$0xff]
    %v8815 = vld [vmem:[#allocation6 + $0x838] sm:$0xff]
    %v8816 = vld [vmem:[#allocation6 + $0x840] sm:$0xff]
    %v8817 = vld [vmem:[#allocation6 + $0x848] sm:$0xff]
    %v8818 = vld [vmem:[#allocation6 + $0x850] sm:$0xff]
    %v8819 = vld [vmem:[#allocation6 + $0x858] sm:$0xff]
    %v8820 = vld [vmem:[#allocation6 + $0x860] sm:$0xff]
    %v8821 = vld [vmem:[#allocation6 + $0x868] sm:$0xff]
    %v8822 = vld [vmem:[#allocation6 + $0x870] sm:$0xff]
    %v8823 = vld [vmem:[#allocation6 + $0x878] sm:$0xff]
    %v8824 = vld [vmem:[#allocation6 + $0x880] sm:$0xff]
    %v8825 = vld [vmem:[#allocation6 + $0x888] sm:$0xff]
    %v8826 = vld [vmem:[#allocation6 + $0x890] sm:$0xff]
    %v8827 = vld [vmem:[#allocation6 + $0x898] sm:$0xff]
    %v8828 = vld [vmem:[#allocation6 + $0x8a0] sm:$0xff]
    %v8829 = vld [vmem:[#allocation6 + $0x8a8] sm:$0xff]
    %v8830 = vld [vmem:[#allocation6 + $0x8b0] sm:$0xff]
    %v8831 = vld [vmem:[#allocation6 + $0x8b8] sm:$0xff]
    %v8832 = vld [vmem:[#allocation6 + $0x8c0] sm:$0xff]
    %v8833 = vld [vmem:[#allocation6 + $0x8c8] sm:$0xff]
    %v8834 = vld [vmem:[#allocation6 + $0x8d0] sm:$0xff]
    %v8835 = vld [vmem:[#allocation6 + $0x8d8] sm:$0xff]
    %v8836 = vld [vmem:[#allocation6 + $0x8e0] sm:$0xff]
    %v8837 = vld [vmem:[#allocation6 + $0x8e8] sm:$0xff]
    %v8838 = vld [vmem:[#allocation6 + $0x8f0] sm:$0xff]
    %v8839 = vld [vmem:[#allocation6 + $0x8f8] sm:$0xff]
    %v8840 = vld [vmem:[#allocation6 + $0x900] sm:$0xff]
    %v8841 = vld [vmem:[#allocation6 + $0x908] sm:$0xff]
    %v8842 = vld [vmem:[#allocation6 + $0x910] sm:$0xff]
    %v8843 = vld [vmem:[#allocation6 + $0x918] sm:$0xff]
    %v8844 = vld [vmem:[#allocation6 + $0x920] sm:$0xff]
    %v8845 = vld [vmem:[#allocation6 + $0x928] sm:$0xff]
    %v8846 = vld [vmem:[#allocation6 + $0x930] sm:$0xff]
    %v8847 = vld [vmem:[#allocation6 + $0x938] sm:$0xff]
    %v8848 = vld [vmem:[#allocation6 + $0x940] sm:$0xff]
    %v8849 = vld [vmem:[#allocation6 + $0x948] sm:$0xff]
    %v8850 = vld [vmem:[#allocation6 + $0x950] sm:$0xff]
    %v8851 = vld [vmem:[#allocation6 + $0x958] sm:$0xff]
    %v8852 = vld [vmem:[#allocation6 + $0x960] sm:$0xff]
    %v8853 = vld [vmem:[#allocation6 + $0x968] sm:$0xff]
    %v8854 = vld [vmem:[#allocation6 + $0x970] sm:$0xff]
    %v8855 = vld [vmem:[#allocation6 + $0x978] sm:$0xff]
    %v8856 = vld [vmem:[#allocation6 + $0x980] sm:$0xff]
    %v8857 = vld [vmem:[#allocation6 + $0x988] sm:$0xff]
    %v8858 = vld [vmem:[#allocation6 + $0x990] sm:$0xff]
    %v8859 = vld [vmem:[#allocation6 + $0x998] sm:$0xff]
    %v8860 = vld [vmem:[#allocation6 + $0x9a0] sm:$0xff]
    %v8861 = vld [vmem:[#allocation6 + $0x9a8] sm:$0xff]
    %v8862 = vld [vmem:[#allocation6 + $0x9b0] sm:$0xff]
    %v8863 = vld [vmem:[#allocation6 + $0x9b8] sm:$0xff]
    %v8864 = vld [vmem:[#allocation6 + $0x9c0] sm:$0xff]
    %v8865 = vld [vmem:[#allocation6 + $0x9c8] sm:$0xff]
    %v8866 = vld [vmem:[#allocation6 + $0x9d0] sm:$0xff]
    %v8867 = vld [vmem:[#allocation6 + $0x9d8] sm:$0xff]
    %v8868 = vld [vmem:[#allocation6 + $0x9e0] sm:$0xff]
    %v8869 = vld [vmem:[#allocation6 + $0x9e8] sm:$0xff]
    %v8870 = vld [vmem:[#allocation6 + $0x9f0] sm:$0xff]
    %v8871 = vld [vmem:[#allocation6 + $0x9f8] sm:$0xff]
    %v8872 = vld [vmem:[#allocation6 + $0xa00] sm:$0xff]
    %v8873 = vld [vmem:[#allocation6 + $0xa08] sm:$0xff]
    %v8874 = vld [vmem:[#allocation6 + $0xa10] sm:$0xff]
    %v8875 = vld [vmem:[#allocation6 + $0xa18] sm:$0xff]
    %v8876 = vld [vmem:[#allocation6 + $0xa20] sm:$0xff]
    %v8877 = vld [vmem:[#allocation6 + $0xa28] sm:$0xff]
    %v8878 = vld [vmem:[#allocation6 + $0xa30] sm:$0xff]
    %v8879 = vld [vmem:[#allocation6 + $0xa38] sm:$0xff]
    %v8880 = vld [vmem:[#allocation6 + $0xa40] sm:$0xff]
    %v8881 = vld [vmem:[#allocation6 + $0xa48] sm:$0xff]
    %v8882 = vld [vmem:[#allocation6 + $0xa50] sm:$0xff]
    %v8883 = vld [vmem:[#allocation6 + $0xa58] sm:$0xff]
    %v8884 = vld [vmem:[#allocation6 + $0xa60] sm:$0xff]
    %v8885 = vld [vmem:[#allocation6 + $0xa68] sm:$0xff]
    %v8886 = vld [vmem:[#allocation6 + $0xa70] sm:$0xff]
    %v8887 = vld [vmem:[#allocation6 + $0xa78] sm:$0xff]
    %v8888 = vld [vmem:[#allocation6 + $0xa80] sm:$0xff]
    %v8889 = vld [vmem:[#allocation6 + $0xa88] sm:$0xff]
    %v8890 = vld [vmem:[#allocation6 + $0xa90] sm:$0xff]
    %v8891 = vld [vmem:[#allocation6 + $0xa98] sm:$0xff]
    %v8892 = vld [vmem:[#allocation6 + $0xaa0] sm:$0xff]
    %v8893 = vld [vmem:[#allocation6 + $0xaa8] sm:$0xff]
    %v8894 = vld [vmem:[#allocation6 + $0xab0] sm:$0xff]
    %v8895 = vld [vmem:[#allocation6 + $0xab8] sm:$0xff]
    %v8896 = vld [vmem:[#allocation6 + $0xac0] sm:$0xff]
    %v8897 = vld [vmem:[#allocation6 + $0xac8] sm:$0xff]
    %v8898 = vld [vmem:[#allocation6 + $0xad0] sm:$0xff]
    %v8899 = vld [vmem:[#allocation6 + $0xad8] sm:$0xff]
    %v8900 = vld [vmem:[#allocation6 + $0xae0] sm:$0xff]
    %v8901 = vld [vmem:[#allocation6 + $0xae8] sm:$0xff]
    %v8902 = vld [vmem:[#allocation6 + $0xaf0] sm:$0xff]
    %v8903 = vld [vmem:[#allocation6 + $0xaf8] sm:$0xff]
    %v8904 = vld [vmem:[#allocation6 + $0xb00] sm:$0xff]
    %v8905 = vld [vmem:[#allocation6 + $0xb08] sm:$0xff]
    %v8906 = vld [vmem:[#allocation6 + $0xb10] sm:$0xff]
    %v8907 = vld [vmem:[#allocation6 + $0xb18] sm:$0xff]
    %v8908 = vld [vmem:[#allocation6 + $0xb20] sm:$0xff]
    %v8909 = vld [vmem:[#allocation6 + $0xb28] sm:$0xff]
    %v8910 = vld [vmem:[#allocation6 + $0xb30] sm:$0xff]
    %v8911 = vld [vmem:[#allocation6 + $0xb38] sm:$0xff]
    %v8912 = vld [vmem:[#allocation6 + $0xb40] sm:$0xff]
    %v8913 = vld [vmem:[#allocation6 + $0xb48] sm:$0xff]
    %v8914 = vld [vmem:[#allocation6 + $0xb50] sm:$0xff]
    %v8915 = vld [vmem:[#allocation6 + $0xb58] sm:$0xff]
    %v8916 = vld [vmem:[#allocation6 + $0xb60] sm:$0xff]
    %v8917 = vld [vmem:[#allocation6 + $0xb68] sm:$0xff]
    %v8918 = vld [vmem:[#allocation6 + $0xb70] sm:$0xff]
    %v8919 = vld [vmem:[#allocation6 + $0xb78] sm:$0xff]
    %v8920 = vld [vmem:[#allocation6 + $0xb80] sm:$0xff]
    %v8921 = vld [vmem:[#allocation6 + $0xb88] sm:$0xff]
    %v8922 = vld [vmem:[#allocation6 + $0xb90] sm:$0xff]
    %v8923 = vld [vmem:[#allocation6 + $0xb98] sm:$0xff]
    %v8924 = vld [vmem:[#allocation6 + $0xba0] sm:$0xff]
    %v8925 = vld [vmem:[#allocation6 + $0xba8] sm:$0xff]
    %v8926 = vld [vmem:[#allocation6 + $0xbb0] sm:$0xff]
    %v8927 = vld [vmem:[#allocation6 + $0xbb8] sm:$0xff]
    %v8928 = vld [vmem:[#allocation6 + $0xbc0] sm:$0xff]
    %v8929 = vld [vmem:[#allocation6 + $0xbc8] sm:$0xff]
    %v8930 = vld [vmem:[#allocation6 + $0xbd0] sm:$0xff]
    %v8931 = vld [vmem:[#allocation6 + $0xbd8] sm:$0xff]
    %v8932 = vld [vmem:[#allocation6 + $0xbe0] sm:$0xff]
    %v8933 = vld [vmem:[#allocation6 + $0xbe8] sm:$0xff]
    %v8934 = vld [vmem:[#allocation6 + $0xbf0] sm:$0xff]
    %v8935 = vld [vmem:[#allocation6 + $0xbf8] sm:$0xff]
    %v8936 = vld [vmem:[#allocation6 + $0xc00] sm:$0xff]
    %v8937 = vld [vmem:[#allocation6 + $0xc08] sm:$0xff]
    %v8938 = vld [vmem:[#allocation6 + $0xc10] sm:$0xff]
    %v8939 = vld [vmem:[#allocation6 + $0xc18] sm:$0xff]
    %v8940 = vld [vmem:[#allocation6 + $0xc20] sm:$0xff]
    %v8941 = vld [vmem:[#allocation6 + $0xc28] sm:$0xff]
    %v8942 = vld [vmem:[#allocation6 + $0xc30] sm:$0xff]
    %v8943 = vld [vmem:[#allocation6 + $0xc38] sm:$0xff]
    %v8944 = vld [vmem:[#allocation6 + $0xc40] sm:$0xff]
    %v8945 = vld [vmem:[#allocation6 + $0xc48] sm:$0xff]
    %v8946 = vld [vmem:[#allocation6 + $0xc50] sm:$0xff]
    %v8947 = vld [vmem:[#allocation6 + $0xc58] sm:$0xff]
    %v8948 = vld [vmem:[#allocation6 + $0xc60] sm:$0xff]
    %v8949 = vld [vmem:[#allocation6 + $0xc68] sm:$0xff]
    %v8950 = vld [vmem:[#allocation6 + $0xc70] sm:$0xff]
    %v8951 = vld [vmem:[#allocation6 + $0xc78] sm:$0xff]
    %v8952 = vld [vmem:[#allocation6 + $0xc80] sm:$0xff]
    %v8953 = vld [vmem:[#allocation6 + $0xc88] sm:$0xff]
    %v8954 = vld [vmem:[#allocation6 + $0xc90] sm:$0xff]
    %v8955 = vld [vmem:[#allocation6 + $0xc98] sm:$0xff]
    %v8956 = vld [vmem:[#allocation6 + $0xca0] sm:$0xff]
    %v8957 = vld [vmem:[#allocation6 + $0xca8] sm:$0xff]
    %v8958 = vld [vmem:[#allocation6 + $0xcb0] sm:$0xff]
    %v8959 = vld [vmem:[#allocation6 + $0xcb8] sm:$0xff]
    %v8960 = vld [vmem:[#allocation6 + $0xcc0] sm:$0xff]
    %v8961 = vld [vmem:[#allocation6 + $0xcc8] sm:$0xff]
    %v8962 = vld [vmem:[#allocation6 + $0xcd0] sm:$0xff]
    %v8963 = vld [vmem:[#allocation6 + $0xcd8] sm:$0xff]
    %v8964 = vld [vmem:[#allocation6 + $0xce0] sm:$0xff]
    %v8965 = vld [vmem:[#allocation6 + $0xce8] sm:$0xff]
    %v8966 = vld [vmem:[#allocation6 + $0xcf0] sm:$0xff]
    %v8967 = vld [vmem:[#allocation6 + $0xcf8] sm:$0xff]
    %v8968 = vld [vmem:[#allocation6 + $0xd00] sm:$0xff]
    %v8969 = vld [vmem:[#allocation6 + $0xd08] sm:$0xff]
    %v8970 = vld [vmem:[#allocation6 + $0xd10] sm:$0xff]
    %v8971 = vld [vmem:[#allocation6 + $0xd18] sm:$0xff]
    %v8972 = vld [vmem:[#allocation6 + $0xd20] sm:$0xff]
    %v8973 = vld [vmem:[#allocation6 + $0xd28] sm:$0xff]
    %v8974 = vld [vmem:[#allocation6 + $0xd30] sm:$0xff]
    %v8975 = vld [vmem:[#allocation6 + $0xd38] sm:$0xff]
    %v8976 = vld [vmem:[#allocation6 + $0xd40] sm:$0xff]
    %v8977 = vld [vmem:[#allocation6 + $0xd48] sm:$0xff]
    %v8978 = vld [vmem:[#allocation6 + $0xd50] sm:$0xff]
    %v8979 = vld [vmem:[#allocation6 + $0xd58] sm:$0xff]
    %v8980 = vld [vmem:[#allocation6 + $0xd60] sm:$0xff]
    %v8981 = vld [vmem:[#allocation6 + $0xd68] sm:$0xff]
    %v8982 = vld [vmem:[#allocation6 + $0xd70] sm:$0xff]
    %v8983 = vld [vmem:[#allocation6 + $0xd78] sm:$0xff]
    %v8984 = vld [vmem:[#allocation6 + $0xd80] sm:$0xff]
    %v8985 = vld [vmem:[#allocation6 + $0xd88] sm:$0xff]
    %v8986 = vld [vmem:[#allocation6 + $0xd90] sm:$0xff]
    %v8987 = vld [vmem:[#allocation6 + $0xd98] sm:$0xff]
    %v8988 = vld [vmem:[#allocation6 + $0xda0] sm:$0xff]
    %v8989 = vld [vmem:[#allocation6 + $0xda8] sm:$0xff]
    %v8990 = vld [vmem:[#allocation6 + $0xdb0] sm:$0xff]
    %v8991 = vld [vmem:[#allocation6 + $0xdb8] sm:$0xff]
    %v8992 = vld [vmem:[#allocation6 + $0xdc0] sm:$0xff]
    %v8993 = vld [vmem:[#allocation6 + $0xdc8] sm:$0xff]
    %v8994 = vld [vmem:[#allocation6 + $0xdd0] sm:$0xff]
    %v8995 = vld [vmem:[#allocation6 + $0xdd8] sm:$0xff]
    %v8996 = vld [vmem:[#allocation6 + $0xde0] sm:$0xff]
    %v8997 = vld [vmem:[#allocation6 + $0xde8] sm:$0xff]
    %v8998 = vld [vmem:[#allocation6 + $0xdf0] sm:$0xff]
    %v8999 = vld [vmem:[#allocation6 + $0xdf8] sm:$0xff]
    %v9000 = vld [vmem:[#allocation6 + $0xe00] sm:$0xff]
    %v9001 = vld [vmem:[#allocation6 + $0xe08] sm:$0xff]
    %v9002 = vld [vmem:[#allocation6 + $0xe10] sm:$0xff]
    %v9003 = vld [vmem:[#allocation6 + $0xe18] sm:$0xff]
    %v9004 = vld [vmem:[#allocation6 + $0xe20] sm:$0xff]
    %v9005 = vld [vmem:[#allocation6 + $0xe28] sm:$0xff]
    %v9006 = vld [vmem:[#allocation6 + $0xe30] sm:$0xff]
    %v9007 = vld [vmem:[#allocation6 + $0xe38] sm:$0xff]
    %v9008 = vld [vmem:[#allocation6 + $0xe40] sm:$0xff]
    %v9009 = vld [vmem:[#allocation6 + $0xe48] sm:$0xff]
    %v9010 = vld [vmem:[#allocation6 + $0xe50] sm:$0xff]
    %v9011 = vld [vmem:[#allocation6 + $0xe58] sm:$0xff]
    %v9012 = vld [vmem:[#allocation6 + $0xe60] sm:$0xff]
    %v9013 = vld [vmem:[#allocation6 + $0xe68] sm:$0xff]
    %v9014 = vld [vmem:[#allocation6 + $0xe70] sm:$0xff]
    %v9015 = vld [vmem:[#allocation6 + $0xe78] sm:$0xff]
    %v9016 = vld [vmem:[#allocation6 + $0xe80] sm:$0xff]
    %v9017 = vld [vmem:[#allocation6 + $0xe88] sm:$0xff]
    %v9018 = vld [vmem:[#allocation6 + $0xe90] sm:$0xff]
    %v9019 = vld [vmem:[#allocation6 + $0xe98] sm:$0xff]
    %v9020 = vld [vmem:[#allocation6 + $0xea0] sm:$0xff]
    %v9021 = vld [vmem:[#allocation6 + $0xea8] sm:$0xff]
    %v9022 = vld [vmem:[#allocation6 + $0xeb0] sm:$0xff]
    %v9023 = vld [vmem:[#allocation6 + $0xeb8] sm:$0xff]
    %v9024 = vld [vmem:[#allocation6 + $0xec0] sm:$0xff]
    %v9025 = vld [vmem:[#allocation6 + $0xec8] sm:$0xff]
    %v9026 = vld [vmem:[#allocation6 + $0xed0] sm:$0xff]
    %v9027 = vld [vmem:[#allocation6 + $0xed8] sm:$0xff]
    %v9028 = vld [vmem:[#allocation6 + $0xee0] sm:$0xff]
    %v9029 = vld [vmem:[#allocation6 + $0xee8] sm:$0xff]
    %v9030 = vld [vmem:[#allocation6 + $0xef0] sm:$0xff]
    %v9031 = vld [vmem:[#allocation6 + $0xef8] sm:$0xff]
    %v9032 = vld [vmem:[#allocation6 + $0xf00] sm:$0xff]
    %v9033 = vld [vmem:[#allocation6 + $0xf08] sm:$0xff]
    %v9034 = vld [vmem:[#allocation6 + $0xf10] sm:$0xff]
    %v9035 = vld [vmem:[#allocation6 + $0xf18] sm:$0xff]
    %v9036 = vld [vmem:[#allocation6 + $0xf20] sm:$0xff]
    %v9037 = vld [vmem:[#allocation6 + $0xf28] sm:$0xff]
    %v9038 = vld [vmem:[#allocation6 + $0xf30] sm:$0xff]
    %v9039 = vld [vmem:[#allocation6 + $0xf38] sm:$0xff]
    %v9040 = vld [vmem:[#allocation6 + $0xf40] sm:$0xff]
    %v9041 = vld [vmem:[#allocation6 + $0xf48] sm:$0xff]
    %v9042 = vld [vmem:[#allocation6 + $0xf50] sm:$0xff]
    %v9043 = vld [vmem:[#allocation6 + $0xf58] sm:$0xff]
    %v9044 = vld [vmem:[#allocation6 + $0xf60] sm:$0xff]
    %v9045 = vld [vmem:[#allocation6 + $0xf68] sm:$0xff]
    %v9046 = vld [vmem:[#allocation6 + $0xf70] sm:$0xff]
    %v9047 = vld [vmem:[#allocation6 + $0xf78] sm:$0xff]
    %v9048 = vld [vmem:[#allocation6 + $0xf80] sm:$0xff]
    %v9049 = vld [vmem:[#allocation6 + $0xf88] sm:$0xff]
    %v9050 = vld [vmem:[#allocation6 + $0xf90] sm:$0xff]
    %v9051 = vld [vmem:[#allocation6 + $0xf98] sm:$0xff]
    %v9052 = vld [vmem:[#allocation6 + $0xfa0] sm:$0xff]
    %v9053 = vld [vmem:[#allocation6 + $0xfa8] sm:$0xff]
    %v9054 = vld [vmem:[#allocation6 + $0xfb0] sm:$0xff]
    %v9055 = vld [vmem:[#allocation6 + $0xfb8] sm:$0xff]
    %v9056 = vld [vmem:[#allocation6 + $0xfc0] sm:$0xff]
    %v9057 = vld [vmem:[#allocation6 + $0xfc8] sm:$0xff]
    %v9058 = vld [vmem:[#allocation6 + $0xfd0] sm:$0xff]
    %v9059 = vld [vmem:[#allocation6 + $0xfd8] sm:$0xff]
    %v9060 = vld [vmem:[#allocation6 + $0xfe0] sm:$0xff]
    %v9061 = vld [vmem:[#allocation6 + $0xfe8] sm:$0xff]
    %v9062 = vld [vmem:[#allocation6 + $0xff0] sm:$0xff]
    %v9063 = vld [vmem:[#allocation6 + $0xff8] sm:$0xff]
    %v9064 = vld [vmem:[#allocation6 + $0x1000] sm:$0xff]
    %v9065 = vld [vmem:[#allocation6 + $0x1008] sm:$0xff]
    %v9066 = vld [vmem:[#allocation6 + $0x1010] sm:$0xff]
    %v9067 = vld [vmem:[#allocation6 + $0x1018] sm:$0xff]
    %v9068 = vld [vmem:[#allocation6 + $0x1020] sm:$0xff]
    %v9069 = vld [vmem:[#allocation6 + $0x1028] sm:$0xff]
    %v9070 = vld [vmem:[#allocation6 + $0x1030] sm:$0xff]
    %v9071 = vld [vmem:[#allocation6 + $0x1038] sm:$0xff]
    %v9072 = vld [vmem:[#allocation6 + $0x1040] sm:$0xff]
    %v9073 = vld [vmem:[#allocation6 + $0x1048] sm:$0xff]
    %v9074 = vld [vmem:[#allocation6 + $0x1050] sm:$0xff]
    %v9075 = vld [vmem:[#allocation6 + $0x1058] sm:$0xff]
    %v9076 = vld [vmem:[#allocation6 + $0x1060] sm:$0xff]
    %v9077 = vld [vmem:[#allocation6 + $0x1068] sm:$0xff]
    %v9078 = vld [vmem:[#allocation6 + $0x1070] sm:$0xff]
    %v9079 = vld [vmem:[#allocation6 + $0x1078] sm:$0xff]
    %v9080 = vld [vmem:[#allocation6 + $0x1080] sm:$0xff]
    %v9081 = vld [vmem:[#allocation6 + $0x1088] sm:$0xff]
    %v9082 = vld [vmem:[#allocation6 + $0x1090] sm:$0xff]
    %v9083 = vld [vmem:[#allocation6 + $0x1098] sm:$0xff]
    %v9084 = vld [vmem:[#allocation6 + $0x10a0] sm:$0xff]
    %v9085 = vld [vmem:[#allocation6 + $0x10a8] sm:$0xff]
    %v9086 = vld [vmem:[#allocation6 + $0x10b0] sm:$0xff]
    %v9087 = vld [vmem:[#allocation6 + $0x10b8] sm:$0xff]
    %v9088 = vld [vmem:[#allocation6 + $0x10c0] sm:$0xff]
    %v9089 = vld [vmem:[#allocation6 + $0x10c8] sm:$0xff]
    %v9090 = vld [vmem:[#allocation6 + $0x10d0] sm:$0xff]
    %v9091 = vld [vmem:[#allocation6 + $0x10d8] sm:$0xff]
    %v9092 = vld [vmem:[#allocation6 + $0x10e0] sm:$0xff]
    %v9093 = vld [vmem:[#allocation6 + $0x10e8] sm:$0xff]
    %v9094 = vld [vmem:[#allocation6 + $0x10f0] sm:$0xff]
    %v9095 = vld [vmem:[#allocation6 + $0x10f8] sm:$0xff]
    %v9096 = vld [vmem:[#allocation6 + $0x1100] sm:$0xff]
    %v9097 = vld [vmem:[#allocation6 + $0x1108] sm:$0xff]
    %v9098 = vld [vmem:[#allocation6 + $0x1110] sm:$0xff]
    %v9099 = vld [vmem:[#allocation6 + $0x1118] sm:$0xff]
    %v9100 = vld [vmem:[#allocation6 + $0x1120] sm:$0xff]
    %v9101 = vld [vmem:[#allocation6 + $0x1128] sm:$0xff]
    %v9102 = vld [vmem:[#allocation6 + $0x1130] sm:$0xff]
    %v9103 = vld [vmem:[#allocation6 + $0x1138] sm:$0xff]
    %v9104 = vld [vmem:[#allocation6 + $0x1140] sm:$0xff]
    %v9105 = vld [vmem:[#allocation6 + $0x1148] sm:$0xff]
    %v9106 = vld [vmem:[#allocation6 + $0x1150] sm:$0xff]
    %v9107 = vld [vmem:[#allocation6 + $0x1158] sm:$0xff]
    %v9108 = vld [vmem:[#allocation6 + $0x1160] sm:$0xff]
    %v9109 = vld [vmem:[#allocation6 + $0x1168] sm:$0xff]
    %v9110 = vld [vmem:[#allocation6 + $0x1170] sm:$0xff]
    %v9111 = vld [vmem:[#allocation6 + $0x1178] sm:$0xff]
    %v9112 = vld [vmem:[#allocation6 + $0x1180] sm:$0xff]
    %v9113 = vld [vmem:[#allocation6 + $0x1188] sm:$0xff]
    %v9114 = vld [vmem:[#allocation6 + $0x1190] sm:$0xff]
    %v9115 = vld [vmem:[#allocation6 + $0x1198] sm:$0xff]
    %v9116 = vld [vmem:[#allocation6 + $0x11a0] sm:$0xff]
    %v9117 = vld [vmem:[#allocation6 + $0x11a8] sm:$0xff]
    %v9118 = vld [vmem:[#allocation6 + $0x11b0] sm:$0xff]
    %v9119 = vld [vmem:[#allocation6 + $0x11b8] sm:$0xff]
    %v9120 = vld [vmem:[#allocation6 + $0x11c0] sm:$0xff]
    %v9121 = vld [vmem:[#allocation6 + $0x11c8] sm:$0xff]
    %v9122 = vld [vmem:[#allocation6 + $0x11d0] sm:$0xff]
    %v9123 = vld [vmem:[#allocation6 + $0x11d8] sm:$0xff]
    %v9124 = vld [vmem:[#allocation6 + $0x11e0] sm:$0xff]
    %v9125 = vld [vmem:[#allocation6 + $0x11e8] sm:$0xff]
    %v9126 = vld [vmem:[#allocation6 + $0x11f0] sm:$0xff]
    %v9127 = vld [vmem:[#allocation6 + $0x11f8] sm:$0xff]
    %v9128 = vld [vmem:[#allocation6 + $0x1200] sm:$0xff]
    %v9129 = vld [vmem:[#allocation6 + $0x1208] sm:$0xff]
    %v9130 = vld [vmem:[#allocation6 + $0x1210] sm:$0xff]
    %v9131 = vld [vmem:[#allocation6 + $0x1218] sm:$0xff]
    %v9132 = vld [vmem:[#allocation6 + $0x1220] sm:$0xff]
    %v9133 = vld [vmem:[#allocation6 + $0x1228] sm:$0xff]
    %v9134 = vld [vmem:[#allocation6 + $0x1230] sm:$0xff]
    %v9135 = vld [vmem:[#allocation6 + $0x1238] sm:$0xff]
    %v9136 = vld [vmem:[#allocation6 + $0x1240] sm:$0xff]
    %v9137 = vld [vmem:[#allocation6 + $0x1248] sm:$0xff]
    %v9138 = vld [vmem:[#allocation6 + $0x1250] sm:$0xff]
    %v9139 = vld [vmem:[#allocation6 + $0x1258] sm:$0xff]
    %v9140 = vld [vmem:[#allocation6 + $0x1260] sm:$0xff]
    %v9141 = vld [vmem:[#allocation6 + $0x1268] sm:$0xff]
    %v9142 = vld [vmem:[#allocation6 + $0x1270] sm:$0xff]
    %v9143 = vld [vmem:[#allocation6 + $0x1278] sm:$0xff]
    %v9144 = vld [vmem:[#allocation6 + $0x1280] sm:$0xff]
    %v9145 = vld [vmem:[#allocation6 + $0x1288] sm:$0xff]
    %v9146 = vld [vmem:[#allocation6 + $0x1290] sm:$0xff]
    %v9147 = vld [vmem:[#allocation6 + $0x1298] sm:$0xff]
    %v9148 = vld [vmem:[#allocation6 + $0x12a0] sm:$0xff]
    %v9149 = vld [vmem:[#allocation6 + $0x12a8] sm:$0xff]
    %v9150 = vld [vmem:[#allocation6 + $0x12b0] sm:$0xff]
    %v9151 = vld [vmem:[#allocation6 + $0x12b8] sm:$0xff]
    %v9152 = vld [vmem:[#allocation6 + $0x12c0] sm:$0xff]
    %v9153 = vld [vmem:[#allocation6 + $0x12c8] sm:$0xff]
    %v9154 = vld [vmem:[#allocation6 + $0x12d0] sm:$0xff]
    %v9155 = vld [vmem:[#allocation6 + $0x12d8] sm:$0xff]
    %v9156 = vld [vmem:[#allocation6 + $0x12e0] sm:$0xff]
    %v9157 = vld [vmem:[#allocation6 + $0x12e8] sm:$0xff]
    %v9158 = vld [vmem:[#allocation6 + $0x12f0] sm:$0xff]
    %v9159 = vld [vmem:[#allocation6 + $0x12f8] sm:$0xff]
    %v9160 = vld [vmem:[#allocation6 + $0x1300] sm:$0xff]
    %v9161 = vld [vmem:[#allocation6 + $0x1308] sm:$0xff]
    %v9162 = vld [vmem:[#allocation6 + $0x1310] sm:$0xff]
    %v9163 = vld [vmem:[#allocation6 + $0x1318] sm:$0xff]
    %v9164 = vld [vmem:[#allocation6 + $0x1320] sm:$0xff]
    %v9165 = vld [vmem:[#allocation6 + $0x1328] sm:$0xff]
    %v9166 = vld [vmem:[#allocation6 + $0x1330] sm:$0xff]
    %v9167 = vld [vmem:[#allocation6 + $0x1338] sm:$0xff]
    %v9168 = vld [vmem:[#allocation6 + $0x1340] sm:$0xff]
    %v9169 = vld [vmem:[#allocation6 + $0x1348] sm:$0xff]
    %v9170 = vld [vmem:[#allocation6 + $0x1350] sm:$0xff]
    %v9171 = vld [vmem:[#allocation6 + $0x1358] sm:$0xff]
    %v9172 = vld [vmem:[#allocation6 + $0x1360] sm:$0xff]
    %v9173 = vld [vmem:[#allocation6 + $0x1368] sm:$0xff]
    %v9174 = vld [vmem:[#allocation6 + $0x1370] sm:$0xff]
    %v9175 = vld [vmem:[#allocation6 + $0x1378] sm:$0xff]
    %v9176 = vld [vmem:[#allocation6 + $0x1380] sm:$0xff]
    %v9177 = vld [vmem:[#allocation6 + $0x1388] sm:$0xff]
    %v9178 = vld [vmem:[#allocation6 + $0x1390] sm:$0xff]
    %v9179 = vld [vmem:[#allocation6 + $0x1398] sm:$0xff]
    %v9180 = vld [vmem:[#allocation6 + $0x13a0] sm:$0xff]
    %v9181 = vld [vmem:[#allocation6 + $0x13a8] sm:$0xff]
    %v9182 = vld [vmem:[#allocation6 + $0x13b0] sm:$0xff]
    %v9183 = vld [vmem:[#allocation6 + $0x13b8] sm:$0xff]
    %v9184 = vld [vmem:[#allocation6 + $0x13c0] sm:$0xff]
    %v9185 = vld [vmem:[#allocation6 + $0x13c8] sm:$0xff]
    %v9186 = vld [vmem:[#allocation6 + $0x13d0] sm:$0xff]
    %v9187 = vld [vmem:[#allocation6 + $0x13d8] sm:$0xff]
    %v9188 = vld [vmem:[#allocation6 + $0x13e0] sm:$0xff]
    %v9189 = vld [vmem:[#allocation6 + $0x13e8] sm:$0xff]
    %v9190 = vld [vmem:[#allocation6 + $0x13f0] sm:$0xff]
    %v9191 = vld [vmem:[#allocation6 + $0x13f8] sm:$0xff]
    %v9192 = vld [vmem:[#allocation6 + $0x1400] sm:$0xff]
    %v9193 = vld [vmem:[#allocation6 + $0x1408] sm:$0xff]
    %v9194 = vld [vmem:[#allocation6 + $0x1410] sm:$0xff]
    %v9195 = vld [vmem:[#allocation6 + $0x1418] sm:$0xff]
    %v9196 = vld [vmem:[#allocation6 + $0x1420] sm:$0xff]
    %v9197 = vld [vmem:[#allocation6 + $0x1428] sm:$0xff]
    %v9198 = vld [vmem:[#allocation6 + $0x1430] sm:$0xff]
    %v9199 = vld [vmem:[#allocation6 + $0x1438] sm:$0xff]
    %v9200 = vld [vmem:[#allocation6 + $0x1440] sm:$0xff]
    %v9201 = vld [vmem:[#allocation6 + $0x1448] sm:$0xff]
    %v9202 = vld [vmem:[#allocation6 + $0x1450] sm:$0xff]
    %v9203 = vld [vmem:[#allocation6 + $0x1458] sm:$0xff]
    %v9204 = vld [vmem:[#allocation6 + $0x1460] sm:$0xff]
    %v9205 = vld [vmem:[#allocation6 + $0x1468] sm:$0xff]
    %v9206 = vld [vmem:[#allocation6 + $0x1470] sm:$0xff]
    %v9207 = vld [vmem:[#allocation6 + $0x1478] sm:$0xff]
    %v9208 = vld [vmem:[#allocation6 + $0x1480] sm:$0xff]
    %v9209 = vld [vmem:[#allocation6 + $0x1488] sm:$0xff]
    %v9210 = vld [vmem:[#allocation6 + $0x1490] sm:$0xff]
    %v9211 = vld [vmem:[#allocation6 + $0x1498] sm:$0xff]
    %v9212 = vld [vmem:[#allocation6 + $0x14a0] sm:$0xff]
    %v9213 = vld [vmem:[#allocation6 + $0x14a8] sm:$0xff]
    %v9214 = vld [vmem:[#allocation6 + $0x14b0] sm:$0xff]
    %v9215 = vld [vmem:[#allocation6 + $0x14b8] sm:$0xff]
    %v9216 = vld [vmem:[#allocation6 + $0x14c0] sm:$0xff]
    %v9217 = vld [vmem:[#allocation6 + $0x14c8] sm:$0xff]
    %v9218 = vld [vmem:[#allocation6 + $0x14d0] sm:$0xff]
    %v9219 = vld [vmem:[#allocation6 + $0x14d8] sm:$0xff]
    %v9220 = vld [vmem:[#allocation6 + $0x14e0] sm:$0xff]
    %v9221 = vld [vmem:[#allocation6 + $0x14e8] sm:$0xff]
    %v9222 = vld [vmem:[#allocation6 + $0x14f0] sm:$0xff]
    %v9223 = vld [vmem:[#allocation6 + $0x14f8] sm:$0xff]
    %v9224 = vld [vmem:[#allocation6 + $0x1500] sm:$0xff]
    %v9225 = vld [vmem:[#allocation6 + $0x1508] sm:$0xff]
    %v9226 = vld [vmem:[#allocation6 + $0x1510] sm:$0xff]
    %v9227 = vld [vmem:[#allocation6 + $0x1518] sm:$0xff]
    %v9228 = vld [vmem:[#allocation6 + $0x1520] sm:$0xff]
    %v9229 = vld [vmem:[#allocation6 + $0x1528] sm:$0xff]
    %v9230 = vld [vmem:[#allocation6 + $0x1530] sm:$0xff]
    %v9231 = vld [vmem:[#allocation6 + $0x1538] sm:$0xff]
    %v9232 = vld [vmem:[#allocation6 + $0x1540] sm:$0xff]
    %v9233 = vld [vmem:[#allocation6 + $0x1548] sm:$0xff]
    %v9234 = vld [vmem:[#allocation6 + $0x1550] sm:$0xff]
    %v9235 = vld [vmem:[#allocation6 + $0x1558] sm:$0xff]
    %v9236 = vld [vmem:[#allocation6 + $0x1560] sm:$0xff]
    %v9237 = vld [vmem:[#allocation6 + $0x1568] sm:$0xff]
    %v9238 = vld [vmem:[#allocation6 + $0x1570] sm:$0xff]
    %v9239 = vld [vmem:[#allocation6 + $0x1578] sm:$0xff]
    %v9240 = vld [vmem:[#allocation6 + $0x1580] sm:$0xff]
    %v9241 = vld [vmem:[#allocation6 + $0x1588] sm:$0xff]
    %v9242 = vld [vmem:[#allocation6 + $0x1590] sm:$0xff]
    %v9243 = vld [vmem:[#allocation6 + $0x1598] sm:$0xff]
    %v9244 = vld [vmem:[#allocation6 + $0x15a0] sm:$0xff]
    %v9245 = vld [vmem:[#allocation6 + $0x15a8] sm:$0xff]
    %v9246 = vld [vmem:[#allocation6 + $0x15b0] sm:$0xff]
    %v9247 = vld [vmem:[#allocation6 + $0x15b8] sm:$0xff]
    %v9248 = vld [vmem:[#allocation6 + $0x15c0] sm:$0xff]
    %v9249 = vld [vmem:[#allocation6 + $0x15c8] sm:$0xff]
    %v9250 = vld [vmem:[#allocation6 + $0x15d0] sm:$0xff]
    %v9251 = vld [vmem:[#allocation6 + $0x15d8] sm:$0xff]
    %v9252 = vld [vmem:[#allocation6 + $0x15e0] sm:$0xff]
    %v9253 = vld [vmem:[#allocation6 + $0x15e8] sm:$0xff]
    %v9254 = vld [vmem:[#allocation6 + $0x15f0] sm:$0xff]
    %v9255 = vld [vmem:[#allocation6 + $0x15f8] sm:$0xff]
    %v9256 = vld [vmem:[#allocation6 + $0x1600] sm:$0xff]
    %v9257 = vld [vmem:[#allocation6 + $0x1608] sm:$0xff]
    %v9258 = vld [vmem:[#allocation6 + $0x1610] sm:$0xff]
    %v9259 = vld [vmem:[#allocation6 + $0x1618] sm:$0xff]
    %v9260 = vld [vmem:[#allocation6 + $0x1620] sm:$0xff]
    %v9261 = vld [vmem:[#allocation6 + $0x1628] sm:$0xff]
    %v9262 = vld [vmem:[#allocation6 + $0x1630] sm:$0xff]
    %v9263 = vld [vmem:[#allocation6 + $0x1638] sm:$0xff]
    %v9264 = vld [vmem:[#allocation6 + $0x1640] sm:$0xff]
    %v9265 = vld [vmem:[#allocation6 + $0x1648] sm:$0xff]
    %v9266 = vld [vmem:[#allocation6 + $0x1650] sm:$0xff]
    %v9267 = vld [vmem:[#allocation6 + $0x1658] sm:$0xff]
    %v9268 = vld [vmem:[#allocation6 + $0x1660] sm:$0xff]
    %v9269 = vld [vmem:[#allocation6 + $0x1668] sm:$0xff]
    %v9270 = vld [vmem:[#allocation6 + $0x1670] sm:$0xff]
    %v9271 = vld [vmem:[#allocation6 + $0x1678] sm:$0xff]
    %v9272 = vld [vmem:[#allocation6 + $0x1680] sm:$0xff]
    %v9273 = vld [vmem:[#allocation6 + $0x1688] sm:$0xff]
    %v9274 = vld [vmem:[#allocation6 + $0x1690] sm:$0xff]
    %v9275 = vld [vmem:[#allocation6 + $0x1698] sm:$0xff]
    %v9276 = vld [vmem:[#allocation6 + $0x16a0] sm:$0xff]
    %v9277 = vld [vmem:[#allocation6 + $0x16a8] sm:$0xff]
    %v9278 = vld [vmem:[#allocation6 + $0x16b0] sm:$0xff]
    %v9279 = vld [vmem:[#allocation6 + $0x16b8] sm:$0xff]
    %v9280 = vld [vmem:[#allocation6 + $0x16c0] sm:$0xff]
    %v9281 = vld [vmem:[#allocation6 + $0x16c8] sm:$0xff]
    %v9282 = vld [vmem:[#allocation6 + $0x16d0] sm:$0xff]
    %v9283 = vld [vmem:[#allocation6 + $0x16d8] sm:$0xff]
    %v9284 = vld [vmem:[#allocation6 + $0x16e0] sm:$0xff]
    %v9285 = vld [vmem:[#allocation6 + $0x16e8] sm:$0xff]
    %v9286 = vld [vmem:[#allocation6 + $0x16f0] sm:$0xff]
    %v9287 = vld [vmem:[#allocation6 + $0x16f8] sm:$0xff]
    %v9288 = vld [vmem:[#allocation6 + $0x1700] sm:$0xff]
    %v9289 = vld [vmem:[#allocation6 + $0x1708] sm:$0xff]
    %v9290 = vld [vmem:[#allocation6 + $0x1710] sm:$0xff]
    %v9291 = vld [vmem:[#allocation6 + $0x1718] sm:$0xff]
    %v9292 = vld [vmem:[#allocation6 + $0x1720] sm:$0xff]
    %v9293 = vld [vmem:[#allocation6 + $0x1728] sm:$0xff]
    %v9294 = vld [vmem:[#allocation6 + $0x1730] sm:$0xff]
    %v9295 = vld [vmem:[#allocation6 + $0x1738] sm:$0xff]
    %v9296 = vld [vmem:[#allocation6 + $0x1740] sm:$0xff]
    %v9297 = vld [vmem:[#allocation6 + $0x1748] sm:$0xff]
    %v9298 = vld [vmem:[#allocation6 + $0x1750] sm:$0xff]
    %v9299 = vld [vmem:[#allocation6 + $0x1758] sm:$0xff]
    %v9300 = vld [vmem:[#allocation6 + $0x1760] sm:$0xff]
    %v9301 = vld [vmem:[#allocation6 + $0x1768] sm:$0xff]
    %v9302 = vld [vmem:[#allocation6 + $0x1770] sm:$0xff]
    %v9303 = vld [vmem:[#allocation6 + $0x1778] sm:$0xff]
    %v9304 = vld [vmem:[#allocation6 + $0x1780] sm:$0xff]
    %v9305 = vld [vmem:[#allocation6 + $0x1788] sm:$0xff]
    %v9306 = vld [vmem:[#allocation6 + $0x1790] sm:$0xff]
    %v9307 = vld [vmem:[#allocation6 + $0x1798] sm:$0xff]
    %v9308 = vld [vmem:[#allocation6 + $0x17a0] sm:$0xff]
    %v9309 = vld [vmem:[#allocation6 + $0x17a8] sm:$0xff]
    %v9310 = vld [vmem:[#allocation6 + $0x17b0] sm:$0xff]
    %v9311 = vld [vmem:[#allocation6 + $0x17b8] sm:$0xff]
    %v9312 = vld [vmem:[#allocation6 + $0x17c0] sm:$0xff]
    %v9313 = vld [vmem:[#allocation6 + $0x17c8] sm:$0xff]
    %v9314 = vld [vmem:[#allocation6 + $0x17d0] sm:$0xff]
    %v9315 = vld [vmem:[#allocation6 + $0x17d8] sm:$0xff]
    %v9316 = vld [vmem:[#allocation6 + $0x17e0] sm:$0xff]
    %v9317 = vld [vmem:[#allocation6 + $0x17e8] sm:$0xff]
    %v9318 = vld [vmem:[#allocation6 + $0x17f0] sm:$0xff]
    %v9319 = vld [vmem:[#allocation6 + $0x17f8] sm:$0xff]
    %v9320 = vld [vmem:[#allocation6 + $0x1800] sm:$0xff]
    %v9321 = vld [vmem:[#allocation6 + $0x1808] sm:$0xff]
    %v9322 = vld [vmem:[#allocation6 + $0x1810] sm:$0xff]
    %v9323 = vld [vmem:[#allocation6 + $0x1818] sm:$0xff]
    %v9324 = vld [vmem:[#allocation6 + $0x1820] sm:$0xff]
    %v9325 = vld [vmem:[#allocation6 + $0x1828] sm:$0xff]
    %v9326 = vld [vmem:[#allocation6 + $0x1830] sm:$0xff]
    %v9327 = vld [vmem:[#allocation6 + $0x1838] sm:$0xff]
    %v9328 = vld [vmem:[#allocation6 + $0x1840] sm:$0xff]
    %v9329 = vld [vmem:[#allocation6 + $0x1848] sm:$0xff]
    %v9330 = vld [vmem:[#allocation6 + $0x1850] sm:$0xff]
    %v9331 = vld [vmem:[#allocation6 + $0x1858] sm:$0xff]
    %v9332 = vld [vmem:[#allocation6 + $0x1860] sm:$0xff]
    %v9333 = vld [vmem:[#allocation6 + $0x1868] sm:$0xff]
    %v9334 = vld [vmem:[#allocation6 + $0x1870] sm:$0xff]
    %v9335 = vld [vmem:[#allocation6 + $0x1878] sm:$0xff]
    %v9336 = vld [vmem:[#allocation6 + $0x1880] sm:$0xff]
    %v9337 = vld [vmem:[#allocation6 + $0x1888] sm:$0xff]
    %v9338 = vld [vmem:[#allocation6 + $0x1890] sm:$0xff]
    %v9339 = vld [vmem:[#allocation6 + $0x1898] sm:$0xff]
    %v9340 = vld [vmem:[#allocation6 + $0x18a0] sm:$0xff]
    %v9341 = vld [vmem:[#allocation6 + $0x18a8] sm:$0xff]
    %v9342 = vld [vmem:[#allocation6 + $0x18b0] sm:$0xff]
    %v9343 = vld [vmem:[#allocation6 + $0x18b8] sm:$0xff]
    %v9344 = vld [vmem:[#allocation6 + $0x18c0] sm:$0xff]
    %v9345 = vld [vmem:[#allocation6 + $0x18c8] sm:$0xff]
    %v9346 = vld [vmem:[#allocation6 + $0x18d0] sm:$0xff]
    %v9347 = vld [vmem:[#allocation6 + $0x18d8] sm:$0xff]
    %v9348 = vld [vmem:[#allocation6 + $0x18e0] sm:$0xff]
    %v9349 = vld [vmem:[#allocation6 + $0x18e8] sm:$0xff]
    %v9350 = vld [vmem:[#allocation6 + $0x18f0] sm:$0xff]
    %v9351 = vld [vmem:[#allocation6 + $0x18f8] sm:$0xff]
    %v9352 = vld [vmem:[#allocation6 + $0x1900] sm:$0xff]
    %v9353 = vld [vmem:[#allocation6 + $0x1908] sm:$0xff]
    %v9354 = vld [vmem:[#allocation6 + $0x1910] sm:$0xff]
    %v9355 = vld [vmem:[#allocation6 + $0x1918] sm:$0xff]
    %v9356 = vld [vmem:[#allocation6 + $0x1920] sm:$0xff]
    %v9357 = vld [vmem:[#allocation6 + $0x1928] sm:$0xff]
    %v9358 = vld [vmem:[#allocation6 + $0x1930] sm:$0xff]
    %v9359 = vld [vmem:[#allocation6 + $0x1938] sm:$0xff]
    %v9360 = vld [vmem:[#allocation6 + $0x1940] sm:$0xff]
    %v9361 = vld [vmem:[#allocation6 + $0x1948] sm:$0xff]
    %v9362 = vld [vmem:[#allocation6 + $0x1950] sm:$0xff]
    %v9363 = vld [vmem:[#allocation6 + $0x1958] sm:$0xff]
    %v9364 = vld [vmem:[#allocation6 + $0x1960] sm:$0xff]
    %v9365 = vld [vmem:[#allocation6 + $0x1968] sm:$0xff]
    %v9366 = vld [vmem:[#allocation6 + $0x1970] sm:$0xff]
    %v9367 = vld [vmem:[#allocation6 + $0x1978] sm:$0xff]
    %v9368 = vld [vmem:[#allocation6 + $0x1980] sm:$0xff]
    %v9369 = vld [vmem:[#allocation6 + $0x1988] sm:$0xff]
    %v9370 = vld [vmem:[#allocation6 + $0x1990] sm:$0xff]
    %v9371 = vld [vmem:[#allocation6 + $0x1998] sm:$0xff]
    %v9372 = vld [vmem:[#allocation6 + $0x19a0] sm:$0xff]
    %v9373 = vld [vmem:[#allocation6 + $0x19a8] sm:$0xff]
    %v9374 = vld [vmem:[#allocation6 + $0x19b0] sm:$0xff]
    %v9375 = vld [vmem:[#allocation6 + $0x19b8] sm:$0xff]
    %v9376 = vld [vmem:[#allocation6 + $0x19c0] sm:$0xff]
    %v9377 = vld [vmem:[#allocation6 + $0x19c8] sm:$0xff]
    %v9378 = vld [vmem:[#allocation6 + $0x19d0] sm:$0xff]
    %v9379 = vld [vmem:[#allocation6 + $0x19d8] sm:$0xff]
    %v9380 = vld [vmem:[#allocation6 + $0x19e0] sm:$0xff]
    %v9381 = vld [vmem:[#allocation6 + $0x19e8] sm:$0xff]
    %v9382 = vld [vmem:[#allocation6 + $0x19f0] sm:$0xff]
    %v9383 = vld [vmem:[#allocation6 + $0x19f8] sm:$0xff]
    %v9384 = vld [vmem:[#allocation6 + $0x1a00] sm:$0xff]
    %v9385 = vld [vmem:[#allocation6 + $0x1a08] sm:$0xff]
    %v9386 = vld [vmem:[#allocation6 + $0x1a10] sm:$0xff]
    %v9387 = vld [vmem:[#allocation6 + $0x1a18] sm:$0xff]
    %v9388 = vld [vmem:[#allocation6 + $0x1a20] sm:$0xff]
    %v9389 = vld [vmem:[#allocation6 + $0x1a28] sm:$0xff]
    %v9390 = vld [vmem:[#allocation6 + $0x1a30] sm:$0xff]
    %v9391 = vld [vmem:[#allocation6 + $0x1a38] sm:$0xff]
    %v9392 = vld [vmem:[#allocation6 + $0x1a40] sm:$0xff]
    %v9393 = vld [vmem:[#allocation6 + $0x1a48] sm:$0xff]
    %v9394 = vld [vmem:[#allocation6 + $0x1a50] sm:$0xff]
    %v9395 = vld [vmem:[#allocation6 + $0x1a58] sm:$0xff]
    %v9396 = vld [vmem:[#allocation6 + $0x1a60] sm:$0xff]
    %v9397 = vld [vmem:[#allocation6 + $0x1a68] sm:$0xff]
    %v9398 = vld [vmem:[#allocation6 + $0x1a70] sm:$0xff]
    %v9399 = vld [vmem:[#allocation6 + $0x1a78] sm:$0xff]
    %v9400 = vld [vmem:[#allocation6 + $0x1a80] sm:$0xff]
    %v9401 = vld [vmem:[#allocation6 + $0x1a88] sm:$0xff]
    %v9402 = vld [vmem:[#allocation6 + $0x1a90] sm:$0xff]
    %v9403 = vld [vmem:[#allocation6 + $0x1a98] sm:$0xff]
    %v9404 = vld [vmem:[#allocation6 + $0x1aa0] sm:$0xff]
    %v9405 = vld [vmem:[#allocation6 + $0x1aa8] sm:$0xff]
    %v9406 = vld [vmem:[#allocation6 + $0x1ab0] sm:$0xff]
    %v9407 = vld [vmem:[#allocation6 + $0x1ab8] sm:$0xff]
    %v9408 = vld [vmem:[#allocation6 + $0x1ac0] sm:$0xff]
    %v9409 = vld [vmem:[#allocation6 + $0x1ac8] sm:$0xff]
    %v9410 = vld [vmem:[#allocation6 + $0x1ad0] sm:$0xff]
    %v9411 = vld [vmem:[#allocation6 + $0x1ad8] sm:$0xff]
    %v9412 = vld [vmem:[#allocation6 + $0x1ae0] sm:$0xff]
    %v9413 = vld [vmem:[#allocation6 + $0x1ae8] sm:$0xff]
    %v9414 = vld [vmem:[#allocation6 + $0x1af0] sm:$0xff]
    %v9415 = vld [vmem:[#allocation6 + $0x1af8] sm:$0xff]
    %v9416 = vld [vmem:[#allocation6 + $0x1b00] sm:$0xff]
    %v9417 = vld [vmem:[#allocation6 + $0x1b08] sm:$0xff]
    %v9418 = vld [vmem:[#allocation6 + $0x1b10] sm:$0xff]
    %v9419 = vld [vmem:[#allocation6 + $0x1b18] sm:$0xff]
    %v9420 = vld [vmem:[#allocation6 + $0x1b20] sm:$0xff]
    %v9421 = vld [vmem:[#allocation6 + $0x1b28] sm:$0xff]
    %v9422 = vld [vmem:[#allocation6 + $0x1b30] sm:$0xff]
    %v9423 = vld [vmem:[#allocation6 + $0x1b38] sm:$0xff]
    %v9424 = vld [vmem:[#allocation6 + $0x1b40] sm:$0xff]
    %v9425 = vld [vmem:[#allocation6 + $0x1b48] sm:$0xff]
    %v9426 = vld [vmem:[#allocation6 + $0x1b50] sm:$0xff]
    %v9427 = vld [vmem:[#allocation6 + $0x1b58] sm:$0xff]
    %v9428 = vld [vmem:[#allocation6 + $0x1b60] sm:$0xff]
    %v9429 = vld [vmem:[#allocation6 + $0x1b68] sm:$0xff]
    %v9430 = vld [vmem:[#allocation6 + $0x1b70] sm:$0xff]
    %v9431 = vld [vmem:[#allocation6 + $0x1b78] sm:$0xff]
    %v9432 = vld [vmem:[#allocation6 + $0x1b80] sm:$0xff]
    %v9433 = vld [vmem:[#allocation6 + $0x1b88] sm:$0xff]
    %v9434 = vld [vmem:[#allocation6 + $0x1b90] sm:$0xff]
    %v9435 = vld [vmem:[#allocation6 + $0x1b98] sm:$0xff]
    %v9436 = vld [vmem:[#allocation6 + $0x1ba0] sm:$0xff]
    %v9437 = vld [vmem:[#allocation6 + $0x1ba8] sm:$0xff]
    %v9438 = vld [vmem:[#allocation6 + $0x1bb0] sm:$0xff]
    %v9439 = vld [vmem:[#allocation6 + $0x1bb8] sm:$0xff]
    %v9440 = vld [vmem:[#allocation6 + $0x1bc0] sm:$0xff]
    %v9441 = vld [vmem:[#allocation6 + $0x1bc8] sm:$0xff]
    %v9442 = vld [vmem:[#allocation6 + $0x1bd0] sm:$0xff]
    %v9443 = vld [vmem:[#allocation6 + $0x1bd8] sm:$0xff]
    %v9444 = vld [vmem:[#allocation6 + $0x1be0] sm:$0xff]
    %v9445 = vld [vmem:[#allocation6 + $0x1be8] sm:$0xff]
    %v9446 = vld [vmem:[#allocation6 + $0x1bf0] sm:$0xff]
    %v9447 = vld [vmem:[#allocation6 + $0x1bf8] sm:$0xff]
    %v9448 = vld [vmem:[#allocation6 + $0x1c00] sm:$0xff]
    %v9449 = vld [vmem:[#allocation6 + $0x1c08] sm:$0xff]
    %v9450 = vld [vmem:[#allocation6 + $0x1c10] sm:$0xff]
    %v9451 = vld [vmem:[#allocation6 + $0x1c18] sm:$0xff]
    %v9452 = vld [vmem:[#allocation6 + $0x1c20] sm:$0xff]
    %v9453 = vld [vmem:[#allocation6 + $0x1c28] sm:$0xff]
    %v9454 = vld [vmem:[#allocation6 + $0x1c30] sm:$0xff]
    %v9455 = vld [vmem:[#allocation6 + $0x1c38] sm:$0xff]
    %v9456 = vld [vmem:[#allocation6 + $0x1c40] sm:$0xff]
    %v9457 = vld [vmem:[#allocation6 + $0x1c48] sm:$0xff]
    %v9458 = vld [vmem:[#allocation6 + $0x1c50] sm:$0xff]
    %v9459 = vld [vmem:[#allocation6 + $0x1c58] sm:$0xff]
    %v9460 = vld [vmem:[#allocation6 + $0x1c60] sm:$0xff]
    %v9461 = vld [vmem:[#allocation6 + $0x1c68] sm:$0xff]
    %v9462 = vld [vmem:[#allocation6 + $0x1c70] sm:$0xff]
    %v9463 = vld [vmem:[#allocation6 + $0x1c78] sm:$0xff]
    %v9464 = vld [vmem:[#allocation6 + $0x1c80] sm:$0xff]
    %v9465 = vld [vmem:[#allocation6 + $0x1c88] sm:$0xff]
    %v9466 = vld [vmem:[#allocation6 + $0x1c90] sm:$0xff]
    %v9467 = vld [vmem:[#allocation6 + $0x1c98] sm:$0xff]
    %v9468 = vld [vmem:[#allocation6 + $0x1ca0] sm:$0xff]
    %v9469 = vld [vmem:[#allocation6 + $0x1ca8] sm:$0xff]
    %v9470 = vld [vmem:[#allocation6 + $0x1cb0] sm:$0xff]
    %v9471 = vld [vmem:[#allocation6 + $0x1cb8] sm:$0xff]
    %v9472 = vld [vmem:[#allocation6 + $0x1cc0] sm:$0xff]
    %v9473 = vld [vmem:[#allocation6 + $0x1cc8] sm:$0xff]
    %v9474 = vld [vmem:[#allocation6 + $0x1cd0] sm:$0xff]
    %v9475 = vld [vmem:[#allocation6 + $0x1cd8] sm:$0xff]
    %v9476 = vld [vmem:[#allocation6 + $0x1ce0] sm:$0xff]
    %v9477 = vld [vmem:[#allocation6 + $0x1ce8] sm:$0xff]
    %v9478 = vld [vmem:[#allocation6 + $0x1cf0] sm:$0xff]
    %v9479 = vld [vmem:[#allocation6 + $0x1cf8] sm:$0xff]
    %v9480 = vld [vmem:[#allocation6 + $0x1d00] sm:$0xff]
    %v9481 = vld [vmem:[#allocation6 + $0x1d08] sm:$0xff]
    %v9482 = vld [vmem:[#allocation6 + $0x1d10] sm:$0xff]
    %v9483 = vld [vmem:[#allocation6 + $0x1d18] sm:$0xff]
    %v9484 = vld [vmem:[#allocation6 + $0x1d20] sm:$0xff]
    %v9485 = vld [vmem:[#allocation6 + $0x1d28] sm:$0xff]
    %v9486 = vld [vmem:[#allocation6 + $0x1d30] sm:$0xff]
    %v9487 = vld [vmem:[#allocation6 + $0x1d38] sm:$0xff]
    %v9488 = vld [vmem:[#allocation6 + $0x1d40] sm:$0xff]
    %v9489 = vld [vmem:[#allocation6 + $0x1d48] sm:$0xff]
    %v9490 = vld [vmem:[#allocation6 + $0x1d50] sm:$0xff]
    %v9491 = vld [vmem:[#allocation6 + $0x1d58] sm:$0xff]
    %v9492 = vld [vmem:[#allocation6 + $0x1d60] sm:$0xff]
    %v9493 = vld [vmem:[#allocation6 + $0x1d68] sm:$0xff]
    %v9494 = vld [vmem:[#allocation6 + $0x1d70] sm:$0xff]
    %v9495 = vld [vmem:[#allocation6 + $0x1d78] sm:$0xff]
    %v9496 = vld [vmem:[#allocation6 + $0x1d80] sm:$0xff]
    %v9497 = vld [vmem:[#allocation6 + $0x1d88] sm:$0xff]
    %v9498 = vld [vmem:[#allocation6 + $0x1d90] sm:$0xff]
    %v9499 = vld [vmem:[#allocation6 + $0x1d98] sm:$0xff]
    %v9500 = vld [vmem:[#allocation6 + $0x1da0] sm:$0xff]
    %v9501 = vld [vmem:[#allocation6 + $0x1da8] sm:$0xff]
    %v9502 = vld [vmem:[#allocation6 + $0x1db0] sm:$0xff]
    %v9503 = vld [vmem:[#allocation6 + $0x1db8] sm:$0xff]
    %v9504 = vld [vmem:[#allocation6 + $0x1dc0] sm:$0xff]
    %v9505 = vld [vmem:[#allocation6 + $0x1dc8] sm:$0xff]
    %v9506 = vld [vmem:[#allocation6 + $0x1dd0] sm:$0xff]
    %v9507 = vld [vmem:[#allocation6 + $0x1dd8] sm:$0xff]
    %v9508 = vld [vmem:[#allocation6 + $0x1de0] sm:$0xff]
    %v9509 = vld [vmem:[#allocation6 + $0x1de8] sm:$0xff]
    %v9510 = vld [vmem:[#allocation6 + $0x1df0] sm:$0xff]
    %v9511 = vld [vmem:[#allocation6 + $0x1df8] sm:$0xff]
    %v9512 = vld [vmem:[#allocation6 + $0x1e00] sm:$0xff]
    %v9513 = vld [vmem:[#allocation6 + $0x1e08] sm:$0xff]
    %v9514 = vld [vmem:[#allocation6 + $0x1e10] sm:$0xff]
    %v9515 = vld [vmem:[#allocation6 + $0x1e18] sm:$0xff]
    %v9516 = vld [vmem:[#allocation6 + $0x1e20] sm:$0xff]
    %v9517 = vld [vmem:[#allocation6 + $0x1e28] sm:$0xff]
    %v9518 = vld [vmem:[#allocation6 + $0x1e30] sm:$0xff]
    %v9519 = vld [vmem:[#allocation6 + $0x1e38] sm:$0xff]
    %v9520 = vld [vmem:[#allocation6 + $0x1e40] sm:$0xff]
    %v9521 = vld [vmem:[#allocation6 + $0x1e48] sm:$0xff]
    %v9522 = vld [vmem:[#allocation6 + $0x1e50] sm:$0xff]
    %v9523 = vld [vmem:[#allocation6 + $0x1e58] sm:$0xff]
    %v9524 = vld [vmem:[#allocation6 + $0x1e60] sm:$0xff]
    %v9525 = vld [vmem:[#allocation6 + $0x1e68] sm:$0xff]
    %v9526 = vld [vmem:[#allocation6 + $0x1e70] sm:$0xff]
    %v9527 = vld [vmem:[#allocation6 + $0x1e78] sm:$0xff]
    %v9528 = vld [vmem:[#allocation6 + $0x1e80] sm:$0xff]
    %v9529 = vld [vmem:[#allocation6 + $0x1e88] sm:$0xff]
    %v9530 = vld [vmem:[#allocation6 + $0x1e90] sm:$0xff]
    %v9531 = vld [vmem:[#allocation6 + $0x1e98] sm:$0xff]
    %v9532 = vld [vmem:[#allocation6 + $0x1ea0] sm:$0xff]
    %v9533 = vld [vmem:[#allocation6 + $0x1ea8] sm:$0xff]
    %v9534 = vld [vmem:[#allocation6 + $0x1eb0] sm:$0xff]
    %v9535 = vld [vmem:[#allocation6 + $0x1eb8] sm:$0xff]
    %v9536 = vld [vmem:[#allocation6 + $0x1ec0] sm:$0xff]
    %v9537 = vld [vmem:[#allocation6 + $0x1ec8] sm:$0xff]
    %v9538 = vld [vmem:[#allocation6 + $0x1ed0] sm:$0xff]
    %v9539 = vld [vmem:[#allocation6 + $0x1ed8] sm:$0xff]
    %v9540 = vld [vmem:[#allocation6 + $0x1ee0] sm:$0xff]
    %v9541 = vld [vmem:[#allocation6 + $0x1ee8] sm:$0xff]
    %v9542 = vld [vmem:[#allocation6 + $0x1ef0] sm:$0xff]
    %v9543 = vld [vmem:[#allocation6 + $0x1ef8] sm:$0xff]
    %v9544 = vld [vmem:[#allocation6 + $0x1f00] sm:$0xff]
    %v9545 = vld [vmem:[#allocation6 + $0x1f08] sm:$0xff]
    %v9546 = vld [vmem:[#allocation6 + $0x1f10] sm:$0xff]
    %v9547 = vld [vmem:[#allocation6 + $0x1f18] sm:$0xff]
    %v9548 = vld [vmem:[#allocation6 + $0x1f20] sm:$0xff]
    %v9549 = vld [vmem:[#allocation6 + $0x1f28] sm:$0xff]
    %v9550 = vld [vmem:[#allocation6 + $0x1f30] sm:$0xff]
    %v9551 = vld [vmem:[#allocation6 + $0x1f38] sm:$0xff]
    %v9552 = vld [vmem:[#allocation6 + $0x1f40] sm:$0xff]
    %v9553 = vld [vmem:[#allocation6 + $0x1f48] sm:$0xff]
    %v9554 = vld [vmem:[#allocation6 + $0x1f50] sm:$0xff]
    %v9555 = vld [vmem:[#allocation6 + $0x1f58] sm:$0xff]
    %v9556 = vld [vmem:[#allocation6 + $0x1f60] sm:$0xff]
    %v9557 = vld [vmem:[#allocation6 + $0x1f68] sm:$0xff]
    %v9558 = vld [vmem:[#allocation6 + $0x1f70] sm:$0xff]
    %v9559 = vld [vmem:[#allocation6 + $0x1f78] sm:$0xff]
    %v9560 = vld [vmem:[#allocation6 + $0x1f80] sm:$0xff]
    %v9561 = vld [vmem:[#allocation6 + $0x1f88] sm:$0xff]
    %v9562 = vld [vmem:[#allocation6 + $0x1f90] sm:$0xff]
    %v9563 = vld [vmem:[#allocation6 + $0x1f98] sm:$0xff]
    %v9564 = vld [vmem:[#allocation6 + $0x1fa0] sm:$0xff]
    %v9565 = vld [vmem:[#allocation6 + $0x1fa8] sm:$0xff]
    %v9566 = vld [vmem:[#allocation6 + $0x1fb0] sm:$0xff]
    %v9567 = vld [vmem:[#allocation6 + $0x1fb8] sm:$0xff]
    %v9568 = vld [vmem:[#allocation6 + $0x1fc0] sm:$0xff]
    %v9569 = vld [vmem:[#allocation6 + $0x1fc8] sm:$0xff]
    %v9570 = vld [vmem:[#allocation6 + $0x1fd0] sm:$0xff]
    %v9571 = vld [vmem:[#allocation6 + $0x1fd8] sm:$0xff]
    %v9572 = vld [vmem:[#allocation6 + $0x1fe0] sm:$0xff]
    %v9573 = vld [vmem:[#allocation6 + $0x1fe8] sm:$0xff]
    %v9574 = vld [vmem:[#allocation6 + $0x1ff0] sm:$0xff]
    %v9575 = vld [vmem:[#allocation6 + $0x1ff8] sm:$0xff]
    %9576 = vmatprep.subr.bf16.mxu0 %v8553
    %9577 = vmatpush1.bf16.msra.mxu0 %v8552
    %9578 = vmatprep.subr.bf16.mxu0 %v8557
    %9579 = vmatpush1.bf16.msra.mxu0 %v8556
    %9580 = vmatprep.subr.bf16.mxu0 %v8561
    %9581 = vmatpush1.bf16.msra.mxu0 %v8560
    %9582 = vmatprep.subr.bf16.mxu0 %v8565
    %9583 = vmatpush1.bf16.msra.mxu0 %v8564
    %9584 = vmatprep.subr.bf16.mxu0 %v8569
    %9585 = vmatpush1.bf16.msra.mxu0 %v8568
    %9586 = vmatprep.subr.bf16.mxu0 %v8573
    %9587 = vmatpush1.bf16.msra.mxu0 %v8572
    %9588 = vmatprep.subr.bf16.mxu0 %v8577
    %9589 = vmatpush1.bf16.msra.mxu0 %v8576
    %9590 = vmatprep.subr.bf16.mxu0 %v8581
    %9591 = vmatpush1.bf16.msra.mxu0 %v8580
    %9592 = vmatprep.subr.bf16.mxu0 %v8585
    %9593 = vmatpush1.bf16.msra.mxu0 %v8584
    %9594 = vmatprep.subr.bf16.mxu0 %v8589
    %9595 = vmatpush1.bf16.msra.mxu0 %v8588
    %9596 = vmatprep.subr.bf16.mxu0 %v8593
    %9597 = vmatpush1.bf16.msra.mxu0 %v8592
    %9598 = vmatprep.subr.bf16.mxu0 %v8597
    %9599 = vmatpush1.bf16.msra.mxu0 %v8596
    %9600 = vmatprep.subr.bf16.mxu0 %v8601
    %9601 = vmatpush1.bf16.msra.mxu0 %v8600
    %9602 = vmatprep.subr.bf16.mxu0 %v8605
    %9603 = vmatpush1.bf16.msra.mxu0 %v8604
    %9604 = vmatprep.subr.bf16.mxu0 %v8609
    %9605 = vmatpush1.bf16.msra.mxu0 %v8608
    %9606 = vmatprep.subr.bf16.mxu0 %v8613
    %9607 = vmatpush1.bf16.msra.mxu0 %v8612
    %9608 = vmatprep.mubr.bf16.mxu0 %v8437
    %9609 = vmatmul.mubr.bf16.gmra.mrb[0].mxu0 %v8436
    %v9610 = vpop.f32.mrb[0].mxu0
    %v9611 = vadd.f32 0.0, %v9610
    %v9612 = vpop.f32.mrb[0].mxu0
    %v9613 = vadd.f32 0.0, %v9612
    %v9614 = vpop.f32.mrb[0].mxu0
    %v9615 = vpop.f32.mrb[0].mxu0
    %9616 = vdwg.mxu0
    %9617 = vmatprep.subr.bf16.mxu0 %v8617
    %9618 = vmatpush1.bf16.msra.mxu0 %v8616
    %9619 = vmatprep.subr.bf16.mxu0 %v8621
    %9620 = vmatpush1.bf16.msra.mxu0 %v8620
    %9621 = vmatprep.subr.bf16.mxu0 %v8625
    %9622 = vmatpush1.bf16.msra.mxu0 %v8624
    %9623 = vmatprep.subr.bf16.mxu0 %v8629
    %9624 = vmatpush1.bf16.msra.mxu0 %v8628
    %9625 = vmatprep.subr.bf16.mxu0 %v8633
    %9626 = vmatpush1.bf16.msra.mxu0 %v8632
    %9627 = vmatprep.subr.bf16.mxu0 %v8637
    %9628 = vmatpush1.bf16.msra.mxu0 %v8636
    %9629 = vmatprep.subr.bf16.mxu0 %v8641
    %9630 = vmatpush1.bf16.msra.mxu0 %v8640
    %9631 = vmatprep.subr.bf16.mxu0 %v8645
    %9632 = vmatpush1.bf16.msra.mxu0 %v8644
    %9633 = vmatprep.subr.bf16.mxu0 %v8649
    %9634 = vmatpush1.bf16.msra.mxu0 %v8648
    %9635 = vmatprep.subr.bf16.mxu0 %v8653
    %9636 = vmatpush1.bf16.msra.mxu0 %v8652
    %9637 = vmatprep.subr.bf16.mxu0 %v8657
    %9638 = vmatpush1.bf16.msra.mxu0 %v8656
    %9639 = vmatprep.subr.bf16.mxu0 %v8661
    %9640 = vmatpush1.bf16.msra.mxu0 %v8660
    %9641 = vmatprep.subr.bf16.mxu0 %v8665
    %9642 = vmatpush1.bf16.msra.mxu0 %v8664
    %9643 = vmatprep.subr.bf16.mxu0 %v8669
    %9644 = vmatpush1.bf16.msra.mxu0 %v8668
    %9645 = vmatprep.subr.bf16.mxu0 %v8673
    %9646 = vmatpush1.bf16.msra.mxu0 %v8672
    %9647 = vmatprep.subr.bf16.mxu0 %v8677
    %9648 = vmatpush1.bf16.msra.mxu0 %v8676
    %9649 = vmatprep.mubr.bf16.mxu0 %v8471
    %9650 = vmatmul.mubr.bf16.gmra.mrb[0].mxu0 %v8470
    %v9651 = vpop.f32.mrb[0].mxu0
    %v9652 = vadd.f32 %v9611, %v9651
    %v9653 = vpop.f32.mrb[0].mxu0
    %v9654 = vadd.f32 %v9613, %v9653
    %v9655 = vpop.f32.mrb[0].mxu0
    %v9656 = vpop.f32.mrb[0].mxu0
    %9657 = vdwg.mxu0
    %9658 = vmatprep.subr.bf16.mxu0 %v8681
    %9659 = vmatpush1.bf16.msra.mxu0 %v8680
    %9660 = vmatprep.subr.bf16.mxu0 %v8685
    %9661 = vmatpush1.bf16.msra.mxu0 %v8684
    %9662 = vmatprep.subr.bf16.mxu0 %v8689
    %9663 = vmatpush1.bf16.msra.mxu0 %v8688
    %9664 = vmatprep.subr.bf16.mxu0 %v8693
    %9665 = vmatpush1.bf16.msra.mxu0 %v8692
    %9666 = vmatprep.subr.bf16.mxu0 %v8697
    %9667 = vmatpush1.bf16.msra.mxu0 %v8696
    %9668 = vmatprep.subr.bf16.mxu0 %v8701
    %9669 = vmatpush1.bf16.msra.mxu0 %v8700
    %9670 = vmatprep.subr.bf16.mxu0 %v8705
    %9671 = vmatpush1.bf16.msra.mxu0 %v8704
    %9672 = vmatprep.subr.bf16.mxu0 %v8709
    %9673 = vmatpush1.bf16.msra.mxu0 %v8708
    %9674 = vmatprep.subr.bf16.mxu0 %v8713
    %9675 = vmatpush1.bf16.msra.mxu0 %v8712
    %9676 = vmatprep.subr.bf16.mxu0 %v8717
    %9677 = vmatpush1.bf16.msra.mxu0 %v8716
    %9678 = vmatprep.subr.bf16.mxu0 %v8721
    %9679 = vmatpush1.bf16.msra.mxu0 %v8720
    %9680 = vmatprep.subr.bf16.mxu0 %v8725
    %9681 = vmatpush1.bf16.msra.mxu0 %v8724
    %9682 = vmatprep.subr.bf16.mxu0 %v8729
    %9683 = vmatpush1.bf16.msra.mxu0 %v8728
    %9684 = vmatprep.subr.bf16.mxu0 %v8733
    %9685 = vmatpush1.bf16.msra.mxu0 %v8732
    %9686 = vmatprep.subr.bf16.mxu0 %v8737
    %9687 = vmatpush1.bf16.msra.mxu0 %v8736
    %9688 = vmatprep.subr.bf16.mxu0 %v8741
    %9689 = vmatpush1.bf16.msra.mxu0 %v8740
    %9690 = vmatprep.mubr.bf16.mxu0 %v8477
    %9691 = vmatmul.mubr.bf16.gmra.mrb[0].mxu0 %v8476
    %v9692 = vpop.f32.mrb[0].mxu0
    %v9693 = vadd.f32 %v9652, %v9692
    %v9694 = vpop.f32.mrb[0].mxu0
    %v9695 = vadd.f32 %v9654, %v9694
    %v9696 = vpop.f32.mrb[0].mxu0
    %v9697 = vpop.f32.mrb[0].mxu0
    %9698 = vdwg.mxu0
    %9699 = vmatprep.subr.bf16.mxu0 %v8745
    %9700 = vmatpush1.bf16.msra.mxu0 %v8744
    %9701 = vmatprep.subr.bf16.mxu0 %v8749
    %9702 = vmatpush1.bf16.msra.mxu0 %v8748
    %9703 = vmatprep.subr.bf16.mxu0 %v8753
    %9704 = vmatpush1.bf16.msra.mxu0 %v8752
    %9705 = vmatprep.subr.bf16.mxu0 %v8757
    %9706 = vmatpush1.bf16.msra.mxu0 %v8756
    %9707 = vmatprep.subr.bf16.mxu0 %v8761
    %9708 = vmatpush1.bf16.msra.mxu0 %v8760
    %9709 = vmatprep.subr.bf16.mxu0 %v8765
    %9710 = vmatpush1.bf16.msra.mxu0 %v8764
    %9711 = vmatprep.subr.bf16.mxu0 %v8769
    %9712 = vmatpush1.bf16.msra.mxu0 %v8768
    %9713 = vmatprep.subr.bf16.mxu0 %v8773
    %9714 = vmatpush1.bf16.msra.mxu0 %v8772
    %9715 = vmatprep.subr.bf16.mxu0 %v8777
    %9716 = vmatpush1.bf16.msra.mxu0 %v8776
    %9717 = vmatprep.subr.bf16.mxu0 %v8781
    %9718 = vmatpush1.bf16.msra.mxu0 %v8780
    %9719 = vmatprep.subr.bf16.mxu0 %v8785
    %9720 = vmatpush1.bf16.msra.mxu0 %v8784
    %9721 = vmatprep.subr.bf16.mxu0 %v8789
    %9722 = vmatpush1.bf16.msra.mxu0 %v8788
    %9723 = vmatprep.subr.bf16.mxu0 %v8793
    %9724 = vmatpush1.bf16.msra.mxu0 %v8792
    %9725 = vmatprep.subr.bf16.mxu0 %v8797
    %9726 = vmatpush1.bf16.msra.mxu0 %v8796
    %9727 = vmatprep.subr.bf16.mxu0 %v8801
    %9728 = vmatpush1.bf16.msra.mxu0 %v8800
    %9729 = vmatprep.subr.bf16.mxu0 %v8805
    %9730 = vmatpush1.bf16.msra.mxu0 %v8804
    %9731 = vmatprep.mubr.bf16.mxu0 %v8483
    %9732 = vmatmul.mubr.bf16.gmra.mrb[0].mxu0 %v8482
    %v9733 = vpop.f32.mrb[0].mxu0
    %v9734 = vadd.f32 %v9693, %v9733
    %v9735 = vpop.f32.mrb[0].mxu0
    %v9736 = vadd.f32 %v9695, %v9735
    %v9737 = vpop.f32.mrb[0].mxu0
    %v9738 = vpop.f32.mrb[0].mxu0
    %9739 = vdwg.mxu0
    %9740 = vmatprep.subr.bf16.mxu0 %v8809
    %9741 = vmatpush1.bf16.msra.mxu0 %v8808
    %9742 = vmatprep.subr.bf16.mxu0 %v8813
    %9743 = vmatpush1.bf16.msra.mxu0 %v8812
    %9744 = vmatprep.subr.bf16.mxu0 %v8817
    %9745 = vmatpush1.bf16.msra.mxu0 %v8816
    %9746 = vmatprep.subr.bf16.mxu0 %v8821
    %9747 = vmatpush1.bf16.msra.mxu0 %v8820
    %9748 = vmatprep.subr.bf16.mxu0 %v8825
    %9749 = vmatpush1.bf16.msra.mxu0 %v8824
    %9750 = vmatprep.subr.bf16.mxu0 %v8829
    %9751 = vmatpush1.bf16.msra.mxu0 %v8828
    %9752 = vmatprep.subr.bf16.mxu0 %v8833
    %9753 = vmatpush1.bf16.msra.mxu0 %v8832
    %9754 = vmatprep.subr.bf16.mxu0 %v8837
    %9755 = vmatpush1.bf16.msra.mxu0 %v8836
    %9756 = vmatprep.subr.bf16.mxu0 %v8841
    %9757 = vmatpush1.bf16.msra.mxu0 %v8840
    %9758 = vmatprep.subr.bf16.mxu0 %v8845
    %9759 = vmatpush1.bf16.msra.mxu0 %v8844
    %9760 = vmatprep.subr.bf16.mxu0 %v8849
    %9761 = vmatpush1.bf16.msra.mxu0 %v8848
    %9762 = vmatprep.subr.bf16.mxu0 %v8853
    %9763 = vmatpush1.bf16.msra.mxu0 %v8852
    %9764 = vmatprep.subr.bf16.mxu0 %v8857
    %9765 = vmatpush1.bf16.msra.mxu0 %v8856
    %9766 = vmatprep.subr.bf16.mxu0 %v8861
    %9767 = vmatpush1.bf16.msra.mxu0 %v8860
    %9768 = vmatprep.subr.bf16.mxu0 %v8865
    %9769 = vmatpush1.bf16.msra.mxu0 %v8864
    %9770 = vmatprep.subr.bf16.mxu0 %v8869
    %9771 = vmatpush1.bf16.msra.mxu0 %v8868
    %9772 = vmatprep.mubr.bf16.mxu0 %v8489
    %9773 = vmatmul.mubr.bf16.gmra.mrb[0].mxu0 %v8488
    %v9774 = vpop.f32.mrb[0].mxu0
    %v9775 = vadd.f32 %v9734, %v9774
    %v9776 = vpop.f32.mrb[0].mxu0
    %v9777 = vadd.f32 %v9736, %v9776
    %v9778 = vpop.f32.mrb[0].mxu0
    %v9779 = vpop.f32.mrb[0].mxu0
    %9780 = vdwg.mxu0
    %9781 = vmatprep.subr.bf16.mxu0 %v8873
    %9782 = vmatpush1.bf16.msra.mxu0 %v8872
    %9783 = vmatprep.subr.bf16.mxu0 %v8877
    %9784 = vmatpush1.bf16.msra.mxu0 %v8876
    %9785 = vmatprep.subr.bf16.mxu0 %v8881
    %9786 = vmatpush1.bf16.msra.mxu0 %v8880
    %9787 = vmatprep.subr.bf16.mxu0 %v8885
    %9788 = vmatpush1.bf16.msra.mxu0 %v8884
    %9789 = vmatprep.subr.bf16.mxu0 %v8889
    %9790 = vmatpush1.bf16.msra.mxu0 %v8888
    %9791 = vmatprep.subr.bf16.mxu0 %v8893
    %9792 = vmatpush1.bf16.msra.mxu0 %v8892
    %9793 = vmatprep.subr.bf16.mxu0 %v8897
    %9794 = vmatpush1.bf16.msra.mxu0 %v8896
    %9795 = vmatprep.subr.bf16.mxu0 %v8901
    %9796 = vmatpush1.bf16.msra.mxu0 %v8900
    %9797 = vmatprep.subr.bf16.mxu0 %v8905
    %9798 = vmatpush1.bf16.msra.mxu0 %v8904
    %9799 = vmatprep.subr.bf16.mxu0 %v8909
    %9800 = vmatpush1.bf16.msra.mxu0 %v8908
    %9801 = vmatprep.subr.bf16.mxu0 %v8913
    %9802 = vmatpush1.bf16.msra.mxu0 %v8912
    %9803 = vmatprep.subr.bf16.mxu0 %v8917
    %9804 = vmatpush1.bf16.msra.mxu0 %v8916
    %9805 = vmatprep.subr.bf16.mxu0 %v8921
    %9806 = vmatpush1.bf16.msra.mxu0 %v8920
    %9807 = vmatprep.subr.bf16.mxu0 %v8925
    %9808 = vmatpush1.bf16.msra.mxu0 %v8924
    %9809 = vmatprep.subr.bf16.mxu0 %v8929
    %9810 = vmatpush1.bf16.msra.mxu0 %v8928
    %9811 = vmatprep.subr.bf16.mxu0 %v8933
    %9812 = vmatpush1.bf16.msra.mxu0 %v8932
    %9813 = vmatprep.mubr.bf16.mxu0 %v8495
    %9814 = vmatmul.mubr.bf16.gmra.mrb[0].mxu0 %v8494
    %v9815 = vpop.f32.mrb[0].mxu0
    %v9816 = vadd.f32 %v9775, %v9815
    %v9817 = vpop.f32.mrb[0].mxu0
    %v9818 = vadd.f32 %v9777, %v9817
    %v9819 = vpop.f32.mrb[0].mxu0
    %v9820 = vpop.f32.mrb[0].mxu0
    %9821 = vdwg.mxu0
    %9822 = vmatprep.subr.bf16.mxu0 %v8937
    %9823 = vmatpush1.bf16.msra.mxu0 %v8936
    %9824 = vmatprep.subr.bf16.mxu0 %v8941
    %9825 = vmatpush1.bf16.msra.mxu0 %v8940
    %9826 = vmatprep.subr.bf16.mxu0 %v8945
    %9827 = vmatpush1.bf16.msra.mxu0 %v8944
    %9828 = vmatprep.subr.bf16.mxu0 %v8949
    %9829 = vmatpush1.bf16.msra.mxu0 %v8948
    %9830 = vmatprep.subr.bf16.mxu0 %v8953
    %9831 = vmatpush1.bf16.msra.mxu0 %v8952
    %9832 = vmatprep.subr.bf16.mxu0 %v8957
    %9833 = vmatpush1.bf16.msra.mxu0 %v8956
    %9834 = vmatprep.subr.bf16.mxu0 %v8961
    %9835 = vmatpush1.bf16.msra.mxu0 %v8960
    %9836 = vmatprep.subr.bf16.mxu0 %v8965
    %9837 = vmatpush1.bf16.msra.mxu0 %v8964
    %9838 = vmatprep.subr.bf16.mxu0 %v8969
    %9839 = vmatpush1.bf16.msra.mxu0 %v8968
    %9840 = vmatprep.subr.bf16.mxu0 %v8973
    %9841 = vmatpush1.bf16.msra.mxu0 %v8972
    %9842 = vmatprep.subr.bf16.mxu0 %v8977
    %9843 = vmatpush1.bf16.msra.mxu0 %v8976
    %9844 = vmatprep.subr.bf16.mxu0 %v8981
    %9845 = vmatpush1.bf16.msra.mxu0 %v8980
    %9846 = vmatprep.subr.bf16.mxu0 %v8985
    %9847 = vmatpush1.bf16.msra.mxu0 %v8984
    %9848 = vmatprep.subr.bf16.mxu0 %v8989
    %9849 = vmatpush1.bf16.msra.mxu0 %v8988
    %9850 = vmatprep.subr.bf16.mxu0 %v8993
    %9851 = vmatpush1.bf16.msra.mxu0 %v8992
    %9852 = vmatprep.subr.bf16.mxu0 %v8997
    %9853 = vmatpush1.bf16.msra.mxu0 %v8996
    %9854 = vmatprep.mubr.bf16.mxu0 %v8501
    %9855 = vmatmul.mubr.bf16.gmra.mrb[0].mxu0 %v8500
    %v9856 = vpop.f32.mrb[0].mxu0
    %v9857 = vadd.f32 %v9816, %v9856
    %v9858 = vpop.f32.mrb[0].mxu0
    %v9859 = vadd.f32 %v9818, %v9858
    %v9860 = vpop.f32.mrb[0].mxu0
    %v9861 = vpop.f32.mrb[0].mxu0
    %9862 = vdwg.mxu0
    %9863 = vmatprep.subr.bf16.mxu0 %v9001
    %9864 = vmatpush1.bf16.msra.mxu0 %v9000
    %9865 = vmatprep.subr.bf16.mxu0 %v9005
    %9866 = vmatpush1.bf16.msra.mxu0 %v9004
    %9867 = vmatprep.subr.bf16.mxu0 %v9009
    %9868 = vmatpush1.bf16.msra.mxu0 %v9008
    %9869 = vmatprep.subr.bf16.mxu0 %v9013
    %9870 = vmatpush1.bf16.msra.mxu0 %v9012
    %9871 = vmatprep.subr.bf16.mxu0 %v9017
    %9872 = vmatpush1.bf16.msra.mxu0 %v9016
    %9873 = vmatprep.subr.bf16.mxu0 %v9021
    %9874 = vmatpush1.bf16.msra.mxu0 %v9020
    %9875 = vmatprep.subr.bf16.mxu0 %v9025
    %9876 = vmatpush1.bf16.msra.mxu0 %v9024
    %9877 = vmatprep.subr.bf16.mxu0 %v9029
    %9878 = vmatpush1.bf16.msra.mxu0 %v9028
    %9879 = vmatprep.subr.bf16.mxu0 %v9033
    %9880 = vmatpush1.bf16.msra.mxu0 %v9032
    %9881 = vmatprep.subr.bf16.mxu0 %v9037
    %9882 = vmatpush1.bf16.msra.mxu0 %v9036
    %9883 = vmatprep.subr.bf16.mxu0 %v9041
    %9884 = vmatpush1.bf16.msra.mxu0 %v9040
    %9885 = vmatprep.subr.bf16.mxu0 %v9045
    %9886 = vmatpush1.bf16.msra.mxu0 %v9044
    %9887 = vmatprep.subr.bf16.mxu0 %v9049
    %9888 = vmatpush1.bf16.msra.mxu0 %v9048
    %9889 = vmatprep.subr.bf16.mxu0 %v9053
    %9890 = vmatpush1.bf16.msra.mxu0 %v9052
    %9891 = vmatprep.subr.bf16.mxu0 %v9057
    %9892 = vmatpush1.bf16.msra.mxu0 %v9056
    %9893 = vmatprep.subr.bf16.mxu0 %v9061
    %9894 = vmatpush1.bf16.msra.mxu0 %v9060
    %9895 = vmatprep.mubr.bf16.mxu0 %v8507
    %9896 = vmatmul.mubr.bf16.gmra.mrb[0].mxu0 %v8506
    %v9897 = vpop.f32.mrb[0].mxu0
    %v9898 = vadd.f32 %v9857, %v9897
    %v9899 = vpop.f32.mrb[0].mxu0
    %v9900 = vadd.f32 %v9859, %v9899
    %v9901 = vpop.f32.mrb[0].mxu0
    %v9902 = vpop.f32.mrb[0].mxu0
    %9903 = vdwg.mxu0
    %9904 = vmatprep.subr.bf16.mxu0 %v9065
    %9905 = vmatpush1.bf16.msra.mxu0 %v9064
    %9906 = vmatprep.subr.bf16.mxu0 %v9069
    %9907 = vmatpush1.bf16.msra.mxu0 %v9068
    %9908 = vmatprep.subr.bf16.mxu0 %v9073
    %9909 = vmatpush1.bf16.msra.mxu0 %v9072
    %9910 = vmatprep.subr.bf16.mxu0 %v9077
    %9911 = vmatpush1.bf16.msra.mxu0 %v9076
    %9912 = vmatprep.subr.bf16.mxu0 %v9081
    %9913 = vmatpush1.bf16.msra.mxu0 %v9080
    %9914 = vmatprep.subr.bf16.mxu0 %v9085
    %9915 = vmatpush1.bf16.msra.mxu0 %v9084
    %9916 = vmatprep.subr.bf16.mxu0 %v9089
    %9917 = vmatpush1.bf16.msra.mxu0 %v9088
    %9918 = vmatprep.subr.bf16.mxu0 %v9093
    %9919 = vmatpush1.bf16.msra.mxu0 %v9092
    %9920 = vmatprep.subr.bf16.mxu0 %v9097
    %9921 = vmatpush1.bf16.msra.mxu0 %v9096
    %9922 = vmatprep.subr.bf16.mxu0 %v9101
    %9923 = vmatpush1.bf16.msra.mxu0 %v9100
    %9924 = vmatprep.subr.bf16.mxu0 %v9105
    %9925 = vmatpush1.bf16.msra.mxu0 %v9104
    %9926 = vmatprep.subr.bf16.mxu0 %v9109
    %9927 = vmatpush1.bf16.msra.mxu0 %v9108
    %9928 = vmatprep.subr.bf16.mxu0 %v9113
    %9929 = vmatpush1.bf16.msra.mxu0 %v9112
    %9930 = vmatprep.subr.bf16.mxu0 %v9117
    %9931 = vmatpush1.bf16.msra.mxu0 %v9116
    %9932 = vmatprep.subr.bf16.mxu0 %v9121
    %9933 = vmatpush1.bf16.msra.mxu0 %v9120
    %9934 = vmatprep.subr.bf16.mxu0 %v9125
    %9935 = vmatpush1.bf16.msra.mxu0 %v9124
    %9936 = vmatprep.mubr.bf16.mxu0 %v8453
    %9937 = vmatmul.mubr.bf16.gmra.mrb[0].mxu0 %v8452
    %v9938 = vpop.f32.mrb[0].mxu0
    %v9939 = vadd.f32 %v9898, %v9938
    %v9940 = vpop.f32.mrb[0].mxu0
    %v9941 = vadd.f32 %v9900, %v9940
    %v9942 = vpop.f32.mrb[0].mxu0
    %v9943 = vpop.f32.mrb[0].mxu0
    %9944 = vdwg.mxu0
    %9945 = vmatprep.subr.bf16.mxu0 %v9129
    %9946 = vmatpush1.bf16.msra.mxu0 %v9128
    %9947 = vmatprep.subr.bf16.mxu0 %v9133
    %9948 = vmatpush1.bf16.msra.mxu0 %v9132
    %9949 = vmatprep.subr.bf16.mxu0 %v9137
    %9950 = vmatpush1.bf16.msra.mxu0 %v9136
    %9951 = vmatprep.subr.bf16.mxu0 %v9141
    %9952 = vmatpush1.bf16.msra.mxu0 %v9140
    %9953 = vmatprep.subr.bf16.mxu0 %v9145
    %9954 = vmatpush1.bf16.msra.mxu0 %v9144
    %9955 = vmatprep.subr.bf16.mxu0 %v9149
    %9956 = vmatpush1.bf16.msra.mxu0 %v9148
    %9957 = vmatprep.subr.bf16.mxu0 %v9153
    %9958 = vmatpush1.bf16.msra.mxu0 %v9152
    %9959 = vmatprep.subr.bf16.mxu0 %v9157
    %9960 = vmatpush1.bf16.msra.mxu0 %v9156
    %9961 = vmatprep.subr.bf16.mxu0 %v9161
    %9962 = vmatpush1.bf16.msra.mxu0 %v9160
    %9963 = vmatprep.subr.bf16.mxu0 %v9165
    %9964 = vmatpush1.bf16.msra.mxu0 %v9164
    %9965 = vmatprep.subr.bf16.mxu0 %v9169
    %9966 = vmatpush1.bf16.msra.mxu0 %v9168
    %9967 = vmatprep.subr.bf16.mxu0 %v9173
    %9968 = vmatpush1.bf16.msra.mxu0 %v9172
    %9969 = vmatprep.subr.bf16.mxu0 %v9177
    %9970 = vmatpush1.bf16.msra.mxu0 %v9176
    %9971 = vmatprep.subr.bf16.mxu0 %v9181
    %9972 = vmatpush1.bf16.msra.mxu0 %v9180
    %9973 = vmatprep.subr.bf16.mxu0 %v9185
    %9974 = vmatpush1.bf16.msra.mxu0 %v9184
    %9975 = vmatprep.subr.bf16.mxu0 %v9189
    %9976 = vmatpush1.bf16.msra.mxu0 %v9188
    %9977 = vmatprep.mubr.bf16.mxu0 %v8513
    %9978 = vmatmul.mubr.bf16.gmra.mrb[0].mxu0 %v8512
    %v9979 = vpop.f32.mrb[0].mxu0
    %v9980 = vadd.f32 %v9939, %v9979
    %v9981 = vpop.f32.mrb[0].mxu0
    %v9982 = vadd.f32 %v9941, %v9981
    %v9983 = vpop.f32.mrb[0].mxu0
    %v9984 = vpop.f32.mrb[0].mxu0
    %9985 = vdwg.mxu0
    %9986 = vmatprep.subr.bf16.mxu0 %v9193
    %9987 = vmatpush1.bf16.msra.mxu0 %v9192
    %9988 = vmatprep.subr.bf16.mxu0 %v9197
    %9989 = vmatpush1.bf16.msra.mxu0 %v9196
    %9990 = vmatprep.subr.bf16.mxu0 %v9201
    %9991 = vmatpush1.bf16.msra.mxu0 %v9200
    %9992 = vmatprep.subr.bf16.mxu0 %v9205
    %9993 = vmatpush1.bf16.msra.mxu0 %v9204
    %9994 = vmatprep.subr.bf16.mxu0 %v9209
    %9995 = vmatpush1.bf16.msra.mxu0 %v9208
    %9996 = vmatprep.subr.bf16.mxu0 %v9213
    %9997 = vmatpush1.bf16.msra.mxu0 %v9212
    %9998 = vmatprep.subr.bf16.mxu0 %v9217
    %9999 = vmatpush1.bf16.msra.mxu0 %v9216
    %10000 = vmatprep.subr.bf16.mxu0 %v9221
    %10001 = vmatpush1.bf16.msra.mxu0 %v9220
    %10002 = vmatprep.subr.bf16.mxu0 %v9225
    %10003 = vmatpush1.bf16.msra.mxu0 %v9224
    %10004 = vmatprep.subr.bf16.mxu0 %v9229
    %10005 = vmatpush1.bf16.msra.mxu0 %v9228
    %10006 = vmatprep.subr.bf16.mxu0 %v9233
    %10007 = vmatpush1.bf16.msra.mxu0 %v9232
    %10008 = vmatprep.subr.bf16.mxu0 %v9237
    %10009 = vmatpush1.bf16.msra.mxu0 %v9236
    %10010 = vmatprep.subr.bf16.mxu0 %v9241
    %10011 = vmatpush1.bf16.msra.mxu0 %v9240
    %10012 = vmatprep.subr.bf16.mxu0 %v9245
    %10013 = vmatpush1.bf16.msra.mxu0 %v9244
    %10014 = vmatprep.subr.bf16.mxu0 %v9249
    %10015 = vmatpush1.bf16.msra.mxu0 %v9248
    %10016 = vmatprep.subr.bf16.mxu0 %v9253
    %10017 = vmatpush1.bf16.msra.mxu0 %v9252
    %10018 = vmatprep.mubr.bf16.mxu0 %v8519
    %10019 = vmatmul.mubr.bf16.gmra.mrb[0].mxu0 %v8518
    %v10020 = vpop.f32.mrb[0].mxu0
    %v10021 = vadd.f32 %v9980, %v10020
    %v10022 = vpop.f32.mrb[0].mxu0
    %v10023 = vadd.f32 %v9982, %v10022
    %v10024 = vpop.f32.mrb[0].mxu0
    %v10025 = vpop.f32.mrb[0].mxu0
    %10026 = vdwg.mxu0
    %10027 = vmatprep.subr.bf16.mxu0 %v9257
    %10028 = vmatpush1.bf16.msra.mxu0 %v9256
    %10029 = vmatprep.subr.bf16.mxu0 %v9261
    %10030 = vmatpush1.bf16.msra.mxu0 %v9260
    %10031 = vmatprep.subr.bf16.mxu0 %v9265
    %10032 = vmatpush1.bf16.msra.mxu0 %v9264
    %10033 = vmatprep.subr.bf16.mxu0 %v9269
    %10034 = vmatpush1.bf16.msra.mxu0 %v9268
    %10035 = vmatprep.subr.bf16.mxu0 %v9273
    %10036 = vmatpush1.bf16.msra.mxu0 %v9272
    %10037 = vmatprep.subr.bf16.mxu0 %v9277
    %10038 = vmatpush1.bf16.msra.mxu0 %v9276
    %10039 = vmatprep.subr.bf16.mxu0 %v9281
    %10040 = vmatpush1.bf16.msra.mxu0 %v9280
    %10041 = vmatprep.subr.bf16.mxu0 %v9285
    %10042 = vmatpush1.bf16.msra.mxu0 %v9284
    %10043 = vmatprep.subr.bf16.mxu0 %v9289
    %10044 = vmatpush1.bf16.msra.mxu0 %v9288
    %10045 = vmatprep.subr.bf16.mxu0 %v9293
    %10046 = vmatpush1.bf16.msra.mxu0 %v9292
    %10047 = vmatprep.subr.bf16.mxu0 %v9297
    %10048 = vmatpush1.bf16.msra.mxu0 %v9296
    %10049 = vmatprep.subr.bf16.mxu0 %v9301
    %10050 = vmatpush1.bf16.msra.mxu0 %v9300
    %10051 = vmatprep.subr.bf16.mxu0 %v9305
    %10052 = vmatpush1.bf16.msra.mxu0 %v9304
    %10053 = vmatprep.subr.bf16.mxu0 %v9309
    %10054 = vmatpush1.bf16.msra.mxu0 %v9308
    %10055 = vmatprep.subr.bf16.mxu0 %v9313
    %10056 = vmatpush1.bf16.msra.mxu0 %v9312
    %10057 = vmatprep.subr.bf16.mxu0 %v9317
    %10058 = vmatpush1.bf16.msra.mxu0 %v9316
    %10059 = vmatprep.mubr.bf16.mxu0 %v8525
    %10060 = vmatmul.mubr.bf16.gmra.mrb[0].mxu0 %v8524
    %v10061 = vpop.f32.mrb[0].mxu0
    %v10062 = vadd.f32 %v10021, %v10061
    %v10063 = vpop.f32.mrb[0].mxu0
    %v10064 = vadd.f32 %v10023, %v10063
    %v10065 = vpop.f32.mrb[0].mxu0
    %v10066 = vpop.f32.mrb[0].mxu0
    %10067 = vdwg.mxu0
    %10068 = vmatprep.subr.bf16.mxu0 %v9321
    %10069 = vmatpush1.bf16.msra.mxu0 %v9320
    %10070 = vmatprep.subr.bf16.mxu0 %v9325
    %10071 = vmatpush1.bf16.msra.mxu0 %v9324
    %10072 = vmatprep.subr.bf16.mxu0 %v9329
    %10073 = vmatpush1.bf16.msra.mxu0 %v9328
    %10074 = vmatprep.subr.bf16.mxu0 %v9333
    %10075 = vmatpush1.bf16.msra.mxu0 %v9332
    %10076 = vmatprep.subr.bf16.mxu0 %v9337
    %10077 = vmatpush1.bf16.msra.mxu0 %v9336
    %10078 = vmatprep.subr.bf16.mxu0 %v9341
    %10079 = vmatpush1.bf16.msra.mxu0 %v9340
    %10080 = vmatprep.subr.bf16.mxu0 %v9345
    %10081 = vmatpush1.bf16.msra.mxu0 %v9344
    %10082 = vmatprep.subr.bf16.mxu0 %v9349
    %10083 = vmatpush1.bf16.msra.mxu0 %v9348
    %10084 = vmatprep.subr.bf16.mxu0 %v9353
    %10085 = vmatpush1.bf16.msra.mxu0 %v9352
    %10086 = vmatprep.subr.bf16.mxu0 %v9357
    %10087 = vmatpush1.bf16.msra.mxu0 %v9356
    %10088 = vmatprep.subr.bf16.mxu0 %v9361
    %10089 = vmatpush1.bf16.msra.mxu0 %v9360
    %10090 = vmatprep.subr.bf16.mxu0 %v9365
    %10091 = vmatpush1.bf16.msra.mxu0 %v9364
    %10092 = vmatprep.subr.bf16.mxu0 %v9369
    %10093 = vmatpush1.bf16.msra.mxu0 %v9368
    %10094 = vmatprep.subr.bf16.mxu0 %v9373
    %10095 = vmatpush1.bf16.msra.mxu0 %v9372
    %10096 = vmatprep.subr.bf16.mxu0 %v9377
    %10097 = vmatpush1.bf16.msra.mxu0 %v9376
    %10098 = vmatprep.subr.bf16.mxu0 %v9381
    %10099 = vmatpush1.bf16.msra.mxu0 %v9380
    %10100 = vmatprep.mubr.bf16.mxu0 %v8531
    %10101 = vmatmul.mubr.bf16.gmra.mrb[0].mxu0 %v8530
    %v10102 = vpop.f32.mrb[0].mxu0
    %v10103 = vadd.f32 %v10062, %v10102
    %v10104 = vpop.f32.mrb[0].mxu0
    %v10105 = vadd.f32 %v10064, %v10104
    %v10106 = vpop.f32.mrb[0].mxu0
    %v10107 = vpop.f32.mrb[0].mxu0
    %10108 = vdwg.mxu0
    %10109 = vmatprep.subr.bf16.mxu0 %v9385
    %10110 = vmatpush1.bf16.msra.mxu0 %v9384
    %10111 = vmatprep.subr.bf16.mxu0 %v9389
    %10112 = vmatpush1.bf16.msra.mxu0 %v9388
    %10113 = vmatprep.subr.bf16.mxu0 %v9393
    %10114 = vmatpush1.bf16.msra.mxu0 %v9392
    %10115 = vmatprep.subr.bf16.mxu0 %v9397
    %10116 = vmatpush1.bf16.msra.mxu0 %v9396
    %10117 = vmatprep.subr.bf16.mxu0 %v9401
    %10118 = vmatpush1.bf16.msra.mxu0 %v9400
    %10119 = vmatprep.subr.bf16.mxu0 %v9405
    %10120 = vmatpush1.bf16.msra.mxu0 %v9404
    %10121 = vmatprep.subr.bf16.mxu0 %v9409
    %10122 = vmatpush1.bf16.msra.mxu0 %v9408
    %10123 = vmatprep.subr.bf16.mxu0 %v9413
    %10124 = vmatpush1.bf16.msra.mxu0 %v9412
    %10125 = vmatprep.subr.bf16.mxu0 %v9417
    %10126 = vmatpush1.bf16.msra.mxu0 %v9416
    %10127 = vmatprep.subr.bf16.mxu0 %v9421
    %10128 = vmatpush1.bf16.msra.mxu0 %v9420
    %10129 = vmatprep.subr.bf16.mxu0 %v9425
    %10130 = vmatpush1.bf16.msra.mxu0 %v9424
    %10131 = vmatprep.subr.bf16.mxu0 %v9429
    %10132 = vmatpush1.bf16.msra.mxu0 %v9428
    %10133 = vmatprep.subr.bf16.mxu0 %v9433
    %10134 = vmatpush1.bf16.msra.mxu0 %v9432
    %10135 = vmatprep.subr.bf16.mxu0 %v9437
    %10136 = vmatpush1.bf16.msra.mxu0 %v9436
    %10137 = vmatprep.subr.bf16.mxu0 %v9441
    %10138 = vmatpush1.bf16.msra.mxu0 %v9440
    %10139 = vmatprep.subr.bf16.mxu0 %v9445
    %10140 = vmatpush1.bf16.msra.mxu0 %v9444
    %10141 = vmatprep.mubr.bf16.mxu0 %v8537
    %10142 = vmatmul.mubr.bf16.gmra.mrb[0].mxu0 %v8536
    %v10143 = vpop.f32.mrb[0].mxu0
    %v10144 = vadd.f32 %v10103, %v10143
    %v10145 = vpop.f32.mrb[0].mxu0
    %v10146 = vadd.f32 %v10105, %v10145
    %v10147 = vpop.f32.mrb[0].mxu0
    %v10148 = vpop.f32.mrb[0].mxu0
    %10149 = vdwg.mxu0
    %10150 = vmatprep.subr.bf16.mxu0 %v9449
    %10151 = vmatpush1.bf16.msra.mxu0 %v9448
    %10152 = vmatprep.subr.bf16.mxu0 %v9453
    %10153 = vmatpush1.bf16.msra.mxu0 %v9452
    %10154 = vmatprep.subr.bf16.mxu0 %v9457
    %10155 = vmatpush1.bf16.msra.mxu0 %v9456
    %10156 = vmatprep.subr.bf16.mxu0 %v9461
    %10157 = vmatpush1.bf16.msra.mxu0 %v9460
    %10158 = vmatprep.subr.bf16.mxu0 %v9465
    %10159 = vmatpush1.bf16.msra.mxu0 %v9464
    %10160 = vmatprep.subr.bf16.mxu0 %v9469
    %10161 = vmatpush1.bf16.msra.mxu0 %v9468
    %10162 = vmatprep.subr.bf16.mxu0 %v9473
    %10163 = vmatpush1.bf16.msra.mxu0 %v9472
    %10164 = vmatprep.subr.bf16.mxu0 %v9477
    %10165 = vmatpush1.bf16.msra.mxu0 %v9476
    %10166 = vmatprep.subr.bf16.mxu0 %v9481
    %10167 = vmatpush1.bf16.msra.mxu0 %v9480
    %10168 = vmatprep.subr.bf16.mxu0 %v9485
    %10169 = vmatpush1.bf16.msra.mxu0 %v9484
    %10170 = vmatprep.subr.bf16.mxu0 %v9489
    %10171 = vmatpush1.bf16.msra.mxu0 %v9488
    %10172 = vmatprep.subr.bf16.mxu0 %v9493
    %10173 = vmatpush1.bf16.msra.mxu0 %v9492
    %10174 = vmatprep.subr.bf16.mxu0 %v9497
    %10175 = vmatpush1.bf16.msra.mxu0 %v9496
    %10176 = vmatprep.subr.bf16.mxu0 %v9501
    %10177 = vmatpush1.bf16.msra.mxu0 %v9500
    %10178 = vmatprep.subr.bf16.mxu0 %v9505
    %10179 = vmatpush1.bf16.msra.mxu0 %v9504
    %10180 = vmatprep.subr.bf16.mxu0 %v9509
    %10181 = vmatpush1.bf16.msra.mxu0 %v9508
    %10182 = vmatprep.mubr.bf16.mxu0 %v8543
    %10183 = vmatmul.mubr.bf16.gmra.mrb[0].mxu0 %v8542
    %v10184 = vpop.f32.mrb[0].mxu0
    %v10185 = vadd.f32 %v10144, %v10184
    %v10186 = vpop.f32.mrb[0].mxu0
    %v10187 = vadd.f32 %v10146, %v10186
    %v10188 = vpop.f32.mrb[0].mxu0
    %v10189 = vpop.f32.mrb[0].mxu0
    %10190 = vdwg.mxu0
    %10191 = vmatprep.subr.bf16.mxu0 %v9513
    %10192 = vmatpush1.bf16.msra.mxu0 %v9512
    %10193 = vmatprep.subr.bf16.mxu0 %v9517
    %10194 = vmatpush1.bf16.msra.mxu0 %v9516
    %10195 = vmatprep.subr.bf16.mxu0 %v9521
    %10196 = vmatpush1.bf16.msra.mxu0 %v9520
    %10197 = vmatprep.subr.bf16.mxu0 %v9525
    %10198 = vmatpush1.bf16.msra.mxu0 %v9524
    %10199 = vmatprep.subr.bf16.mxu0 %v9529
    %10200 = vmatpush1.bf16.msra.mxu0 %v9528
    %10201 = vmatprep.subr.bf16.mxu0 %v9533
    %10202 = vmatpush1.bf16.msra.mxu0 %v9532
    %10203 = vmatprep.subr.bf16.mxu0 %v9537
    %10204 = vmatpush1.bf16.msra.mxu0 %v9536
    %10205 = vmatprep.subr.bf16.mxu0 %v9541
    %10206 = vmatpush1.bf16.msra.mxu0 %v9540
    %10207 = vmatprep.subr.bf16.mxu0 %v9545
    %10208 = vmatpush1.bf16.msra.mxu0 %v9544
    %10209 = vmatprep.subr.bf16.mxu0 %v9549
    %10210 = vmatpush1.bf16.msra.mxu0 %v9548
    %10211 = vmatprep.subr.bf16.mxu0 %v9553
    %10212 = vmatpush1.bf16.msra.mxu0 %v9552
    %10213 = vmatprep.subr.bf16.mxu0 %v9557
    %10214 = vmatpush1.bf16.msra.mxu0 %v9556
    %10215 = vmatprep.subr.bf16.mxu0 %v9561
    %10216 = vmatpush1.bf16.msra.mxu0 %v9560
    %10217 = vmatprep.subr.bf16.mxu0 %v9565
    %10218 = vmatpush1.bf16.msra.mxu0 %v9564
    %10219 = vmatprep.subr.bf16.mxu0 %v9569
    %10220 = vmatpush1.bf16.msra.mxu0 %v9568
    %10221 = vmatprep.subr.bf16.mxu0 %v9573
    %10222 = vmatpush1.bf16.msra.mxu0 %v9572
    %10223 = vmatprep.mubr.bf16.mxu0 %v8549
    %10224 = vmatmul.mubr.bf16.gmra.mrb[0].mxu0 %v8548
    %v10225 = vpop.f32.mrb[0].mxu0
    %v10226 = vadd.f32 %v10185, %v10225
    %v10227 = vpop.f32.mrb[0].mxu0
    %v10228 = vadd.f32 %v10187, %v10227
    %v10229 = vpop.f32.mrb[0].mxu0
    %v10230 = vpop.f32.mrb[0].mxu0
    %10231 = vdwg.mxu0
    %10232 = vmatprep.subr.bf16.mxu0 %v8555
    %10233 = vmatpush1.bf16.msra.mxu0 %v8554
    %10234 = vmatprep.subr.bf16.mxu0 %v8559
    %10235 = vmatpush1.bf16.msra.mxu0 %v8558
    %10236 = vmatprep.subr.bf16.mxu0 %v8563
    %10237 = vmatpush1.bf16.msra.mxu0 %v8562
    %10238 = vmatprep.subr.bf16.mxu0 %v8567
    %10239 = vmatpush1.bf16.msra.mxu0 %v8566
    %10240 = vmatprep.subr.bf16.mxu0 %v8571
    %10241 = vmatpush1.bf16.msra.mxu0 %v8570
    %10242 = vmatprep.subr.bf16.mxu0 %v8575
    %10243 = vmatpush1.bf16.msra.mxu0 %v8574
    %10244 = vmatprep.subr.bf16.mxu0 %v8579
    %10245 = vmatpush1.bf16.msra.mxu0 %v8578
    %10246 = vmatprep.subr.bf16.mxu0 %v8583
    %10247 = vmatpush1.bf16.msra.mxu0 %v8582
    %10248 = vmatprep.subr.bf16.mxu0 %v8587
    %10249 = vmatpush1.bf16.msra.mxu0 %v8586
    %10250 = vmatprep.subr.bf16.mxu0 %v8591
    %10251 = vmatpush1.bf16.msra.mxu0 %v8590
    %10252 = vmatprep.subr.bf16.mxu0 %v8595
    %10253 = vmatpush1.bf16.msra.mxu0 %v8594
    %10254 = vmatprep.subr.bf16.mxu0 %v8599
    %10255 = vmatpush1.bf16.msra.mxu0 %v8598
    %10256 = vmatprep.subr.bf16.mxu0 %v8603
    %10257 = vmatpush1.bf16.msra.mxu0 %v8602
    %10258 = vmatprep.subr.bf16.mxu0 %v8607
    %10259 = vmatpush1.bf16.msra.mxu0 %v8606
    %10260 = vmatprep.subr.bf16.mxu0 %v8611
    %10261 = vmatpush1.bf16.msra.mxu0 %v8610
    %10262 = vmatprep.subr.bf16.mxu0 %v8615
    %10263 = vmatpush1.bf16.msra.mxu0 %v8614
    %10264 = vmatprep.mubr.bf16.mxu0 %v8437
    %10265 = vmatmul.mubr.bf16.gmra.mrb[0].mxu0 %v8436
    %v10266 = vpop.f32.mrb[0].mxu0
    %v10267 = vadd.f32 0.0, %v10266
    %v10268 = vpop.f32.mrb[0].mxu0
    %v10269 = vadd.f32 0.0, %v10268
    %v10270 = vpop.f32.mrb[0].mxu0
    %v10271 = vpop.f32.mrb[0].mxu0
    %10272 = vdwg.mxu0
    %10273 = vmatprep.subr.bf16.mxu0 %v8619
    %10274 = vmatpush1.bf16.msra.mxu0 %v8618
    %10275 = vmatprep.subr.bf16.mxu0 %v8623
    %10276 = vmatpush1.bf16.msra.mxu0 %v8622
    %10277 = vmatprep.subr.bf16.mxu0 %v8627
    %10278 = vmatpush1.bf16.msra.mxu0 %v8626
    %10279 = vmatprep.subr.bf16.mxu0 %v8631
    %10280 = vmatpush1.bf16.msra.mxu0 %v8630
    %10281 = vmatprep.subr.bf16.mxu0 %v8635
    %10282 = vmatpush1.bf16.msra.mxu0 %v8634
    %10283 = vmatprep.subr.bf16.mxu0 %v8639
    %10284 = vmatpush1.bf16.msra.mxu0 %v8638
    %10285 = vmatprep.subr.bf16.mxu0 %v8643
    %10286 = vmatpush1.bf16.msra.mxu0 %v8642
    %10287 = vmatprep.subr.bf16.mxu0 %v8647
    %10288 = vmatpush1.bf16.msra.mxu0 %v8646
    %10289 = vmatprep.subr.bf16.mxu0 %v8651
    %10290 = vmatpush1.bf16.msra.mxu0 %v8650
    %10291 = vmatprep.subr.bf16.mxu0 %v8655
    %10292 = vmatpush1.bf16.msra.mxu0 %v8654
    %10293 = vmatprep.subr.bf16.mxu0 %v8659
    %10294 = vmatpush1.bf16.msra.mxu0 %v8658
    %10295 = vmatprep.subr.bf16.mxu0 %v8663
    %10296 = vmatpush1.bf16.msra.mxu0 %v8662
    %10297 = vmatprep.subr.bf16.mxu0 %v8667
    %10298 = vmatpush1.bf16.msra.mxu0 %v8666
    %10299 = vmatprep.subr.bf16.mxu0 %v8671
    %10300 = vmatpush1.bf16.msra.mxu0 %v8670
    %10301 = vmatprep.subr.bf16.mxu0 %v8675
    %10302 = vmatpush1.bf16.msra.mxu0 %v8674
    %10303 = vmatprep.subr.bf16.mxu0 %v8679
    %10304 = vmatpush1.bf16.msra.mxu0 %v8678
    %10305 = vmatprep.mubr.bf16.mxu0 %v8471
    %10306 = vmatmul.mubr.bf16.gmra.mrb[0].mxu0 %v8470
    %v10307 = vpop.f32.mrb[0].mxu0
    %v10308 = vadd.f32 %v10267, %v10307
    %v10309 = vpop.f32.mrb[0].mxu0
    %v10310 = vadd.f32 %v10269, %v10309
    %v10311 = vpop.f32.mrb[0].mxu0
    %v10312 = vpop.f32.mrb[0].mxu0
    %10313 = vdwg.mxu0
    %10314 = vmatprep.subr.bf16.mxu0 %v8683
    %10315 = vmatpush1.bf16.msra.mxu0 %v8682
    %10316 = vmatprep.subr.bf16.mxu0 %v8687
    %10317 = vmatpush1.bf16.msra.mxu0 %v8686
    %10318 = vmatprep.subr.bf16.mxu0 %v8691
    %10319 = vmatpush1.bf16.msra.mxu0 %v8690
    %10320 = vmatprep.subr.bf16.mxu0 %v8695
    %10321 = vmatpush1.bf16.msra.mxu0 %v8694
    %10322 = vmatprep.subr.bf16.mxu0 %v8699
    %10323 = vmatpush1.bf16.msra.mxu0 %v8698
    %10324 = vmatprep.subr.bf16.mxu0 %v8703
    %10325 = vmatpush1.bf16.msra.mxu0 %v8702
    %10326 = vmatprep.subr.bf16.mxu0 %v8707
    %10327 = vmatpush1.bf16.msra.mxu0 %v8706
    %10328 = vmatprep.subr.bf16.mxu0 %v8711
    %10329 = vmatpush1.bf16.msra.mxu0 %v8710
    %10330 = vmatprep.subr.bf16.mxu0 %v8715
    %10331 = vmatpush1.bf16.msra.mxu0 %v8714
    %10332 = vmatprep.subr.bf16.mxu0 %v8719
    %10333 = vmatpush1.bf16.msra.mxu0 %v8718
    %10334 = vmatprep.subr.bf16.mxu0 %v8723
    %10335 = vmatpush1.bf16.msra.mxu0 %v8722
    %10336 = vmatprep.subr.bf16.mxu0 %v8727
    %10337 = vmatpush1.bf16.msra.mxu0 %v8726
    %10338 = vmatprep.subr.bf16.mxu0 %v8731
    %10339 = vmatpush1.bf16.msra.mxu0 %v8730
    %10340 = vmatprep.subr.bf16.mxu0 %v8735
    %10341 = vmatpush1.bf16.msra.mxu0 %v8734
    %10342 = vmatprep.subr.bf16.mxu0 %v8739
    %10343 = vmatpush1.bf16.msra.mxu0 %v8738
    %10344 = vmatprep.subr.bf16.mxu0 %v8743
    %10345 = vmatpush1.bf16.msra.mxu0 %v8742
    %10346 = vmatprep.mubr.bf16.mxu0 %v8477
    %10347 = vmatmul.mubr.bf16.gmra.mrb[0].mxu0 %v8476
    %v10348 = vpop.f32.mrb[0].mxu0
    %v10349 = vadd.f32 %v10308, %v10348
    %v10350 = vpop.f32.mrb[0].mxu0
    %v10351 = vadd.f32 %v10310, %v10350
    %v10352 = vpop.f32.mrb[0].mxu0
    %v10353 = vpop.f32.mrb[0].mxu0
    %10354 = vdwg.mxu0
    %10355 = vmatprep.subr.bf16.mxu0 %v8747
    %10356 = vmatpush1.bf16.msra.mxu0 %v8746
    %10357 = vmatprep.subr.bf16.mxu0 %v8751
    %10358 = vmatpush1.bf16.msra.mxu0 %v8750
    %10359 = vmatprep.subr.bf16.mxu0 %v8755
    %10360 = vmatpush1.bf16.msra.mxu0 %v8754
    %10361 = vmatprep.subr.bf16.mxu0 %v8759
    %10362 = vmatpush1.bf16.msra.mxu0 %v8758
    %10363 = vmatprep.subr.bf16.mxu0 %v8763
    %10364 = vmatpush1.bf16.msra.mxu0 %v8762
    %10365 = vmatprep.subr.bf16.mxu0 %v8767
    %10366 = vmatpush1.bf16.msra.mxu0 %v8766
    %10367 = vmatprep.subr.bf16.mxu0 %v8771
    %10368 = vmatpush1.bf16.msra.mxu0 %v8770
    %10369 = vmatprep.subr.bf16.mxu0 %v8775
    %10370 = vmatpush1.bf16.msra.mxu0 %v8774
    %10371 = vmatprep.subr.bf16.mxu0 %v8779
    %10372 = vmatpush1.bf16.msra.mxu0 %v8778
    %10373 = vmatprep.subr.bf16.mxu0 %v8783
    %10374 = vmatpush1.bf16.msra.mxu0 %v8782
    %10375 = vmatprep.subr.bf16.mxu0 %v8787
    %10376 = vmatpush1.bf16.msra.mxu0 %v8786
    %10377 = vmatprep.subr.bf16.mxu0 %v8791
    %10378 = vmatpush1.bf16.msra.mxu0 %v8790
    %10379 = vmatprep.subr.bf16.mxu0 %v8795
    %10380 = vmatpush1.bf16.msra.mxu0 %v8794
    %10381 = vmatprep.subr.bf16.mxu0 %v8799
    %10382 = vmatpush1.bf16.msra.mxu0 %v8798
    %10383 = vmatprep.subr.bf16.mxu0 %v8803
    %10384 = vmatpush1.bf16.msra.mxu0 %v8802
    %10385 = vmatprep.subr.bf16.mxu0 %v8807
    %10386 = vmatpush1.bf16.msra.mxu0 %v8806
    %10387 = vmatprep.mubr.bf16.mxu0 %v8483
    %10388 = vmatmul.mubr.bf16.gmra.mrb[0].mxu0 %v8482
    %v10389 = vpop.f32.mrb[0].mxu0
    %v10390 = vadd.f32 %v10349, %v10389
    %v10391 = vpop.f32.mrb[0].mxu0
    %v10392 = vadd.f32 %v10351, %v10391
    %v10393 = vpop.f32.mrb[0].mxu0
    %v10394 = vpop.f32.mrb[0].mxu0
    %10395 = vdwg.mxu0
    %10396 = vmatprep.subr.bf16.mxu0 %v8811
    %10397 = vmatpush1.bf16.msra.mxu0 %v8810
    %10398 = vmatprep.subr.bf16.mxu0 %v8815
    %10399 = vmatpush1.bf16.msra.mxu0 %v8814
    %10400 = vmatprep.subr.bf16.mxu0 %v8819
    %10401 = vmatpush1.bf16.msra.mxu0 %v8818
    %10402 = vmatprep.subr.bf16.mxu0 %v8823
    %10403 = vmatpush1.bf16.msra.mxu0 %v8822
    %10404 = vmatprep.subr.bf16.mxu0 %v8827
    %10405 = vmatpush1.bf16.msra.mxu0 %v8826
    %10406 = vmatprep.subr.bf16.mxu0 %v8831
    %10407 = vmatpush1.bf16.msra.mxu0 %v8830
    %10408 = vmatprep.subr.bf16.mxu0 %v8835
    %10409 = vmatpush1.bf16.msra.mxu0 %v8834
    %10410 = vmatprep.subr.bf16.mxu0 %v8839
    %10411 = vmatpush1.bf16.msra.mxu0 %v8838
    %10412 = vmatprep.subr.bf16.mxu0 %v8843
    %10413 = vmatpush1.bf16.msra.mxu0 %v8842
    %10414 = vmatprep.subr.bf16.mxu0 %v8847
    %10415 = vmatpush1.bf16.msra.mxu0 %v8846
    %10416 = vmatprep.subr.bf16.mxu0 %v8851
    %10417 = vmatpush1.bf16.msra.mxu0 %v8850
    %10418 = vmatprep.subr.bf16.mxu0 %v8855
    %10419 = vmatpush1.bf16.msra.mxu0 %v8854
    %10420 = vmatprep.subr.bf16.mxu0 %v8859
    %10421 = vmatpush1.bf16.msra.mxu0 %v8858
    %10422 = vmatprep.subr.bf16.mxu0 %v8863
    %10423 = vmatpush1.bf16.msra.mxu0 %v8862
    %10424 = vmatprep.subr.bf16.mxu0 %v8867
    %10425 = vmatpush1.bf16.msra.mxu0 %v8866
    %10426 = vmatprep.subr.bf16.mxu0 %v8871
    %10427 = vmatpush1.bf16.msra.mxu0 %v8870
    %10428 = vmatprep.mubr.bf16.mxu0 %v8489
    %10429 = vmatmul.mubr.bf16.gmra.mrb[0].mxu0 %v8488
    %v10430 = vpop.f32.mrb[0].mxu0
    %v10431 = vadd.f32 %v10390, %v10430
    %v10432 = vpop.f32.mrb[0].mxu0
    %v10433 = vadd.f32 %v10392, %v10432
    %v10434 = vpop.f32.mrb[0].mxu0
    %v10435 = vpop.f32.mrb[0].mxu0
    %10436 = vdwg.mxu0
    %10437 = vmatprep.subr.bf16.mxu0 %v8875
    %10438 = vmatpush1.bf16.msra.mxu0 %v8874
    %10439 = vmatprep.subr.bf16.mxu0 %v8879
    %10440 = vmatpush1.bf16.msra.mxu0 %v8878
    %10441 = vmatprep.subr.bf16.mxu0 %v8883
    %10442 = vmatpush1.bf16.msra.mxu0 %v8882
    %10443 = vmatprep.subr.bf16.mxu0 %v8887
    %10444 = vmatpush1.bf16.msra.mxu0 %v8886
    %10445 = vmatprep.subr.bf16.mxu0 %v8891
    %10446 = vmatpush1.bf16.msra.mxu0 %v8890
    %10447 = vmatprep.subr.bf16.mxu0 %v8895
    %10448 = vmatpush1.bf16.msra.mxu0 %v8894
    %10449 = vmatprep.subr.bf16.mxu0 %v8899
    %10450 = vmatpush1.bf16.msra.mxu0 %v8898
    %10451 = vmatprep.subr.bf16.mxu0 %v8903
    %10452 = vmatpush1.bf16.msra.mxu0 %v8902
    %10453 = vmatprep.subr.bf16.mxu0 %v8907
    %10454 = vmatpush1.bf16.msra.mxu0 %v8906
    %10455 = vmatprep.subr.bf16.mxu0 %v8911
    %10456 = vmatpush1.bf16.msra.mxu0 %v8910
    %10457 = vmatprep.subr.bf16.mxu0 %v8915
    %10458 = vmatpush1.bf16.msra.mxu0 %v8914
    %10459 = vmatprep.subr.bf16.mxu0 %v8919
    %10460 = vmatpush1.bf16.msra.mxu0 %v8918
    %10461 = vmatprep.subr.bf16.mxu0 %v8923
    %10462 = vmatpush1.bf16.msra.mxu0 %v8922
    %10463 = vmatprep.subr.bf16.mxu0 %v8927
    %10464 = vmatpush1.bf16.msra.mxu0 %v8926
    %10465 = vmatprep.subr.bf16.mxu0 %v8931
    %10466 = vmatpush1.bf16.msra.mxu0 %v8930
    %10467 = vmatprep.subr.bf16.mxu0 %v8935
    %10468 = vmatpush1.bf16.msra.mxu0 %v8934
    %10469 = vmatprep.mubr.bf16.mxu0 %v8495
    %10470 = vmatmul.mubr.bf16.gmra.mrb[0].mxu0 %v8494
    %v10471 = vpop.f32.mrb[0].mxu0
    %v10472 = vadd.f32 %v10431, %v10471
    %v10473 = vpop.f32.mrb[0].mxu0
    %v10474 = vadd.f32 %v10433, %v10473
    %v10475 = vpop.f32.mrb[0].mxu0
    %v10476 = vpop.f32.mrb[0].mxu0
    %10477 = vdwg.mxu0
    %10478 = vmatprep.subr.bf16.mxu0 %v8939
    %10479 = vmatpush1.bf16.msra.mxu0 %v8938
    %10480 = vmatprep.subr.bf16.mxu0 %v8943
    %10481 = vmatpush1.bf16.msra.mxu0 %v8942
    %10482 = vmatprep.subr.bf16.mxu0 %v8947
    %10483 = vmatpush1.bf16.msra.mxu0 %v8946
    %10484 = vmatprep.subr.bf16.mxu0 %v8951
    %10485 = vmatpush1.bf16.msra.mxu0 %v8950
    %10486 = vmatprep.subr.bf16.mxu0 %v8955
    %10487 = vmatpush1.bf16.msra.mxu0 %v8954
    %10488 = vmatprep.subr.bf16.mxu0 %v8959
    %10489 = vmatpush1.bf16.msra.mxu0 %v8958
    %10490 = vmatprep.subr.bf16.mxu0 %v8963
    %10491 = vmatpush1.bf16.msra.mxu0 %v8962
    %10492 = vmatprep.subr.bf16.mxu0 %v8967
    %10493 = vmatpush1.bf16.msra.mxu0 %v8966
    %10494 = vmatprep.subr.bf16.mxu0 %v8971
    %10495 = vmatpush1.bf16.msra.mxu0 %v8970
    %10496 = vmatprep.subr.bf16.mxu0 %v8975
    %10497 = vmatpush1.bf16.msra.mxu0 %v8974
    %10498 = vmatprep.subr.bf16.mxu0 %v8979
    %10499 = vmatpush1.bf16.msra.mxu0 %v8978
    %10500 = vmatprep.subr.bf16.mxu0 %v8983
    %10501 = vmatpush1.bf16.msra.mxu0 %v8982
    %10502 = vmatprep.subr.bf16.mxu0 %v8987
    %10503 = vmatpush1.bf16.msra.mxu0 %v8986
    %10504 = vmatprep.subr.bf16.mxu0 %v8991
    %10505 = vmatpush1.bf16.msra.mxu0 %v8990
    %10506 = vmatprep.subr.bf16.mxu0 %v8995
    %10507 = vmatpush1.bf16.msra.mxu0 %v8994
    %10508 = vmatprep.subr.bf16.mxu0 %v8999
    %10509 = vmatpush1.bf16.msra.mxu0 %v8998
    %10510 = vmatprep.mubr.bf16.mxu0 %v8501
    %10511 = vmatmul.mubr.bf16.gmra.mrb[0].mxu0 %v8500
    %v10512 = vpop.f32.mrb[0].mxu0
    %v10513 = vadd.f32 %v10472, %v10512
    %v10514 = vpop.f32.mrb[0].mxu0
    %v10515 = vadd.f32 %v10474, %v10514
    %v10516 = vpop.f32.mrb[0].mxu0
    %v10517 = vpop.f32.mrb[0].mxu0
    %10518 = vdwg.mxu0
    %10519 = vmatprep.subr.bf16.mxu0 %v9003
    %10520 = vmatpush1.bf16.msra.mxu0 %v9002
    %10521 = vmatprep.subr.bf16.mxu0 %v9007
    %10522 = vmatpush1.bf16.msra.mxu0 %v9006
    %10523 = vmatprep.subr.bf16.mxu0 %v9011
    %10524 = vmatpush1.bf16.msra.mxu0 %v9010
    %10525 = vmatprep.subr.bf16.mxu0 %v9015
    %10526 = vmatpush1.bf16.msra.mxu0 %v9014
    %10527 = vmatprep.subr.bf16.mxu0 %v9019
    %10528 = vmatpush1.bf16.msra.mxu0 %v9018
    %10529 = vmatprep.subr.bf16.mxu0 %v9023
    %10530 = vmatpush1.bf16.msra.mxu0 %v9022
    %10531 = vmatprep.subr.bf16.mxu0 %v9027
    %10532 = vmatpush1.bf16.msra.mxu0 %v9026
    %10533 = vmatprep.subr.bf16.mxu0 %v9031
    %10534 = vmatpush1.bf16.msra.mxu0 %v9030
    %10535 = vmatprep.subr.bf16.mxu0 %v9035
    %10536 = vmatpush1.bf16.msra.mxu0 %v9034
    %10537 = vmatprep.subr.bf16.mxu0 %v9039
    %10538 = vmatpush1.bf16.msra.mxu0 %v9038
    %10539 = vmatprep.subr.bf16.mxu0 %v9043
    %10540 = vmatpush1.bf16.msra.mxu0 %v9042
    %10541 = vmatprep.subr.bf16.mxu0 %v9047
    %10542 = vmatpush1.bf16.msra.mxu0 %v9046
    %10543 = vmatprep.subr.bf16.mxu0 %v9051
    %10544 = vmatpush1.bf16.msra.mxu0 %v9050
    %10545 = vmatprep.subr.bf16.mxu0 %v9055
    %10546 = vmatpush1.bf16.msra.mxu0 %v9054
    %10547 = vmatprep.subr.bf16.mxu0 %v9059
    %10548 = vmatpush1.bf16.msra.mxu0 %v9058
    %10549 = vmatprep.subr.bf16.mxu0 %v9063
    %10550 = vmatpush1.bf16.msra.mxu0 %v9062
    %10551 = vmatprep.mubr.bf16.mxu0 %v8507
    %10552 = vmatmul.mubr.bf16.gmra.mrb[0].mxu0 %v8506
    %v10553 = vpop.f32.mrb[0].mxu0
    %v10554 = vadd.f32 %v10513, %v10553
    %v10555 = vpop.f32.mrb[0].mxu0
    %v10556 = vadd.f32 %v10515, %v10555
    %v10557 = vpop.f32.mrb[0].mxu0
    %v10558 = vpop.f32.mrb[0].mxu0
    %10559 = vdwg.mxu0
    %10560 = vmatprep.subr.bf16.mxu0 %v9067
    %10561 = vmatpush1.bf16.msra.mxu0 %v9066
    %10562 = vmatprep.subr.bf16.mxu0 %v9071
    %10563 = vmatpush1.bf16.msra.mxu0 %v9070
    %10564 = vmatprep.subr.bf16.mxu0 %v9075
    %10565 = vmatpush1.bf16.msra.mxu0 %v9074
    %10566 = vmatprep.subr.bf16.mxu0 %v9079
    %10567 = vmatpush1.bf16.msra.mxu0 %v9078
    %10568 = vmatprep.subr.bf16.mxu0 %v9083
    %10569 = vmatpush1.bf16.msra.mxu0 %v9082
    %10570 = vmatprep.subr.bf16.mxu0 %v9087
    %10571 = vmatpush1.bf16.msra.mxu0 %v9086
    %10572 = vmatprep.subr.bf16.mxu0 %v9091
    %10573 = vmatpush1.bf16.msra.mxu0 %v9090
    %10574 = vmatprep.subr.bf16.mxu0 %v9095
    %10575 = vmatpush1.bf16.msra.mxu0 %v9094
    %10576 = vmatprep.subr.bf16.mxu0 %v9099
    %10577 = vmatpush1.bf16.msra.mxu0 %v9098
    %10578 = vmatprep.subr.bf16.mxu0 %v9103
    %10579 = vmatpush1.bf16.msra.mxu0 %v9102
    %10580 = vmatprep.subr.bf16.mxu0 %v9107
    %10581 = vmatpush1.bf16.msra.mxu0 %v9106
    %10582 = vmatprep.subr.bf16.mxu0 %v9111
    %10583 = vmatpush1.bf16.msra.mxu0 %v9110
    %10584 = vmatprep.subr.bf16.mxu0 %v9115
    %10585 = vmatpush1.bf16.msra.mxu0 %v9114
    %10586 = vmatprep.subr.bf16.mxu0 %v9119
    %10587 = vmatpush1.bf16.msra.mxu0 %v9118
    %10588 = vmatprep.subr.bf16.mxu0 %v9123
    %10589 = vmatpush1.bf16.msra.mxu0 %v9122
    %10590 = vmatprep.subr.bf16.mxu0 %v9127
    %10591 = vmatpush1.bf16.msra.mxu0 %v9126
    %10592 = vmatprep.mubr.bf16.mxu0 %v8453
    %10593 = vmatmul.mubr.bf16.gmra.mrb[0].mxu0 %v8452
    %v10594 = vpop.f32.mrb[0].mxu0
    %v10595 = vadd.f32 %v10554, %v10594
    %v10596 = vpop.f32.mrb[0].mxu0
    %v10597 = vadd.f32 %v10556, %v10596
    %v10598 = vpop.f32.mrb[0].mxu0
    %v10599 = vpop.f32.mrb[0].mxu0
    %10600 = vdwg.mxu0
    %10601 = vmatprep.subr.bf16.mxu0 %v9131
    %10602 = vmatpush1.bf16.msra.mxu0 %v9130
    %10603 = vmatprep.subr.bf16.mxu0 %v9135
    %10604 = vmatpush1.bf16.msra.mxu0 %v9134
    %10605 = vmatprep.subr.bf16.mxu0 %v9139
    %10606 = vmatpush1.bf16.msra.mxu0 %v9138
    %10607 = vmatprep.subr.bf16.mxu0 %v9143
    %10608 = vmatpush1.bf16.msra.mxu0 %v9142
    %10609 = vmatprep.subr.bf16.mxu0 %v9147
    %10610 = vmatpush1.bf16.msra.mxu0 %v9146
    %10611 = vmatprep.subr.bf16.mxu0 %v9151
    %10612 = vmatpush1.bf16.msra.mxu0 %v9150
    %10613 = vmatprep.subr.bf16.mxu0 %v9155
    %10614 = vmatpush1.bf16.msra.mxu0 %v9154
    %10615 = vmatprep.subr.bf16.mxu0 %v9159
    %10616 = vmatpush1.bf16.msra.mxu0 %v9158
    %10617 = vmatprep.subr.bf16.mxu0 %v9163
    %10618 = vmatpush1.bf16.msra.mxu0 %v9162
    %10619 = vmatprep.subr.bf16.mxu0 %v9167
    %10620 = vmatpush1.bf16.msra.mxu0 %v9166
    %10621 = vmatprep.subr.bf16.mxu0 %v9171
    %10622 = vmatpush1.bf16.msra.mxu0 %v9170
    %10623 = vmatprep.subr.bf16.mxu0 %v9175
    %10624 = vmatpush1.bf16.msra.mxu0 %v9174
    %10625 = vmatprep.subr.bf16.mxu0 %v9179
    %10626 = vmatpush1.bf16.msra.mxu0 %v9178
    %10627 = vmatprep.subr.bf16.mxu0 %v9183
    %10628 = vmatpush1.bf16.msra.mxu0 %v9182
    %10629 = vmatprep.subr.bf16.mxu0 %v9187
    %10630 = vmatpush1.bf16.msra.mxu0 %v9186
    %10631 = vmatprep.subr.bf16.mxu0 %v9191
    %10632 = vmatpush1.bf16.msra.mxu0 %v9190
    %10633 = vmatprep.mubr.bf16.mxu0 %v8513
    %10634 = vmatmul.mubr.bf16.gmra.mrb[0].mxu0 %v8512
    %v10635 = vpop.f32.mrb[0].mxu0
    %v10636 = vadd.f32 %v10595, %v10635
    %v10637 = vpop.f32.mrb[0].mxu0
    %v10638 = vadd.f32 %v10597, %v10637
    %v10639 = vpop.f32.mrb[0].mxu0
    %v10640 = vpop.f32.mrb[0].mxu0
    %10641 = vdwg.mxu0
    %10642 = vmatprep.subr.bf16.mxu0 %v9195
    %10643 = vmatpush1.bf16.msra.mxu0 %v9194
    %10644 = vmatprep.subr.bf16.mxu0 %v9199
    %10645 = vmatpush1.bf16.msra.mxu0 %v9198
    %10646 = vmatprep.subr.bf16.mxu0 %v9203
    %10647 = vmatpush1.bf16.msra.mxu0 %v9202
    %10648 = vmatprep.subr.bf16.mxu0 %v9207
    %10649 = vmatpush1.bf16.msra.mxu0 %v9206
    %10650 = vmatprep.subr.bf16.mxu0 %v9211
    %10651 = vmatpush1.bf16.msra.mxu0 %v9210
    %10652 = vmatprep.subr.bf16.mxu0 %v9215
    %10653 = vmatpush1.bf16.msra.mxu0 %v9214
    %10654 = vmatprep.subr.bf16.mxu0 %v9219
    %10655 = vmatpush1.bf16.msra.mxu0 %v9218
    %10656 = vmatprep.subr.bf16.mxu0 %v9223
    %10657 = vmatpush1.bf16.msra.mxu0 %v9222
    %10658 = vmatprep.subr.bf16.mxu0 %v9227
    %10659 = vmatpush1.bf16.msra.mxu0 %v9226
    %10660 = vmatprep.subr.bf16.mxu0 %v9231
    %10661 = vmatpush1.bf16.msra.mxu0 %v9230
    %10662 = vmatprep.subr.bf16.mxu0 %v9235
    %10663 = vmatpush1.bf16.msra.mxu0 %v9234
    %10664 = vmatprep.subr.bf16.mxu0 %v9239
    %10665 = vmatpush1.bf16.msra.mxu0 %v9238
    %10666 = vmatprep.subr.bf16.mxu0 %v9243
    %10667 = vmatpush1.bf16.msra.mxu0 %v9242
    %10668 = vmatprep.subr.bf16.mxu0 %v9247
    %10669 = vmatpush1.bf16.msra.mxu0 %v9246
    %10670 = vmatprep.subr.bf16.mxu0 %v9251
    %10671 = vmatpush1.bf16.msra.mxu0 %v9250
    %10672 = vmatprep.subr.bf16.mxu0 %v9255
    %10673 = vmatpush1.bf16.msra.mxu0 %v9254
    %10674 = vmatprep.mubr.bf16.mxu0 %v8519
    %10675 = vmatmul.mubr.bf16.gmra.mrb[0].mxu0 %v8518
    %v10676 = vpop.f32.mrb[0].mxu0
    %v10677 = vadd.f32 %v10636, %v10676
    %v10678 = vpop.f32.mrb[0].mxu0
    %v10679 = vadd.f32 %v10638, %v10678
    %v10680 = vpop.f32.mrb[0].mxu0
    %v10681 = vpop.f32.mrb[0].mxu0
    %10682 = vdwg.mxu0
    %10683 = vmatprep.subr.bf16.mxu0 %v9259
    %10684 = vmatpush1.bf16.msra.mxu0 %v9258
    %10685 = vmatprep.subr.bf16.mxu0 %v9263
    %10686 = vmatpush1.bf16.msra.mxu0 %v9262
    %10687 = vmatprep.subr.bf16.mxu0 %v9267
    %10688 = vmatpush1.bf16.msra.mxu0 %v9266
    %10689 = vmatprep.subr.bf16.mxu0 %v9271
    %10690 = vmatpush1.bf16.msra.mxu0 %v9270
    %10691 = vmatprep.subr.bf16.mxu0 %v9275
    %10692 = vmatpush1.bf16.msra.mxu0 %v9274
    %10693 = vmatprep.subr.bf16.mxu0 %v9279
    %10694 = vmatpush1.bf16.msra.mxu0 %v9278
    %10695 = vmatprep.subr.bf16.mxu0 %v9283
    %10696 = vmatpush1.bf16.msra.mxu0 %v9282
    %10697 = vmatprep.subr.bf16.mxu0 %v9287
    %10698 = vmatpush1.bf16.msra.mxu0 %v9286
    %10699 = vmatprep.subr.bf16.mxu0 %v9291
    %10700 = vmatpush1.bf16.msra.mxu0 %v9290
    %10701 = vmatprep.subr.bf16.mxu0 %v9295
    %10702 = vmatpush1.bf16.msra.mxu0 %v9294
    %10703 = vmatprep.subr.bf16.mxu0 %v9299
    %10704 = vmatpush1.bf16.msra.mxu0 %v9298
    %10705 = vmatprep.subr.bf16.mxu0 %v9303
    %10706 = vmatpush1.bf16.msra.mxu0 %v9302
    %10707 = vmatprep.subr.bf16.mxu0 %v9307
    %10708 = vmatpush1.bf16.msra.mxu0 %v9306
    %10709 = vmatprep.subr.bf16.mxu0 %v9311
    %10710 = vmatpush1.bf16.msra.mxu0 %v9310
    %10711 = vmatprep.subr.bf16.mxu0 %v9315
    %10712 = vmatpush1.bf16.msra.mxu0 %v9314
    %10713 = vmatprep.subr.bf16.mxu0 %v9319
    %10714 = vmatpush1.bf16.msra.mxu0 %v9318
    %10715 = vmatprep.mubr.bf16.mxu0 %v8525
    %10716 = vmatmul.mubr.bf16.gmra.mrb[0].mxu0 %v8524
    %v10717 = vpop.f32.mrb[0].mxu0
    %v10718 = vadd.f32 %v10677, %v10717
    %v10719 = vpop.f32.mrb[0].mxu0
    %v10720 = vadd.f32 %v10679, %v10719
    %v10721 = vpop.f32.mrb[0].mxu0
    %v10722 = vpop.f32.mrb[0].mxu0
    %10723 = vdwg.mxu0
    %10724 = vmatprep.subr.bf16.mxu0 %v9323
    %10725 = vmatpush1.bf16.msra.mxu0 %v9322
    %10726 = vmatprep.subr.bf16.mxu0 %v9327
    %10727 = vmatpush1.bf16.msra.mxu0 %v9326
    %10728 = vmatprep.subr.bf16.mxu0 %v9331
    %10729 = vmatpush1.bf16.msra.mxu0 %v9330
    %10730 = vmatprep.subr.bf16.mxu0 %v9335
    %10731 = vmatpush1.bf16.msra.mxu0 %v9334
    %10732 = vmatprep.subr.bf16.mxu0 %v9339
    %10733 = vmatpush1.bf16.msra.mxu0 %v9338
    %10734 = vmatprep.subr.bf16.mxu0 %v9343
    %10735 = vmatpush1.bf16.msra.mxu0 %v9342
    %10736 = vmatprep.subr.bf16.mxu0 %v9347
    %10737 = vmatpush1.bf16.msra.mxu0 %v9346
    %10738 = vmatprep.subr.bf16.mxu0 %v9351
    %10739 = vmatpush1.bf16.msra.mxu0 %v9350
    %10740 = vmatprep.subr.bf16.mxu0 %v9355
    %10741 = vmatpush1.bf16.msra.mxu0 %v9354
    %10742 = vmatprep.subr.bf16.mxu0 %v9359
    %10743 = vmatpush1.bf16.msra.mxu0 %v9358
    %10744 = vmatprep.subr.bf16.mxu0 %v9363
    %10745 = vmatpush1.bf16.msra.mxu0 %v9362
    %10746 = vmatprep.subr.bf16.mxu0 %v9367
    %10747 = vmatpush1.bf16.msra.mxu0 %v9366
    %10748 = vmatprep.subr.bf16.mxu0 %v9371
    %10749 = vmatpush1.bf16.msra.mxu0 %v9370
    %10750 = vmatprep.subr.bf16.mxu0 %v9375
    %10751 = vmatpush1.bf16.msra.mxu0 %v9374
    %10752 = vmatprep.subr.bf16.mxu0 %v9379
    %10753 = vmatpush1.bf16.msra.mxu0 %v9378
    %10754 = vmatprep.subr.bf16.mxu0 %v9383
    %10755 = vmatpush1.bf16.msra.mxu0 %v9382
    %10756 = vmatprep.mubr.bf16.mxu0 %v8531
    %10757 = vmatmul.mubr.bf16.gmra.mrb[0].mxu0 %v8530
    %v10758 = vpop.f32.mrb[0].mxu0
    %v10759 = vadd.f32 %v10718, %v10758
    %v10760 = vpop.f32.mrb[0].mxu0
    %v10761 = vadd.f32 %v10720, %v10760
    %v10762 = vpop.f32.mrb[0].mxu0
    %v10763 = vpop.f32.mrb[0].mxu0
    %10764 = vdwg.mxu0
    %10765 = vmatprep.subr.bf16.mxu0 %v9387
    %10766 = vmatpush1.bf16.msra.mxu0 %v9386
    %10767 = vmatprep.subr.bf16.mxu0 %v9391
    %10768 = vmatpush1.bf16.msra.mxu0 %v9390
    %10769 = vmatprep.subr.bf16.mxu0 %v9395
    %10770 = vmatpush1.bf16.msra.mxu0 %v9394
    %10771 = vmatprep.subr.bf16.mxu0 %v9399
    %10772 = vmatpush1.bf16.msra.mxu0 %v9398
    %10773 = vmatprep.subr.bf16.mxu0 %v9403
    %10774 = vmatpush1.bf16.msra.mxu0 %v9402
    %10775 = vmatprep.subr.bf16.mxu0 %v9407
    %10776 = vmatpush1.bf16.msra.mxu0 %v9406
    %10777 = vmatprep.subr.bf16.mxu0 %v9411
    %10778 = vmatpush1.bf16.msra.mxu0 %v9410
    %10779 = vmatprep.subr.bf16.mxu0 %v9415
    %10780 = vmatpush1.bf16.msra.mxu0 %v9414
    %10781 = vmatprep.subr.bf16.mxu0 %v9419
    %10782 = vmatpush1.bf16.msra.mxu0 %v9418
    %10783 = vmatprep.subr.bf16.mxu0 %v9423
    %10784 = vmatpush1.bf16.msra.mxu0 %v9422
    %10785 = vmatprep.subr.bf16.mxu0 %v9427
    %10786 = vmatpush1.bf16.msra.mxu0 %v9426
    %10787 = vmatprep.subr.bf16.mxu0 %v9431
    %10788 = vmatpush1.bf16.msra.mxu0 %v9430
    %10789 = vmatprep.subr.bf16.mxu0 %v9435
    %10790 = vmatpush1.bf16.msra.mxu0 %v9434
    %10791 = vmatprep.subr.bf16.mxu0 %v9439
    %10792 = vmatpush1.bf16.msra.mxu0 %v9438
    %10793 = vmatprep.subr.bf16.mxu0 %v9443
    %10794 = vmatpush1.bf16.msra.mxu0 %v9442
    %10795 = vmatprep.subr.bf16.mxu0 %v9447
    %10796 = vmatpush1.bf16.msra.mxu0 %v9446
    %10797 = vmatprep.mubr.bf16.mxu0 %v8537
    %10798 = vmatmul.mubr.bf16.gmra.mrb[0].mxu0 %v8536
    %v10799 = vpop.f32.mrb[0].mxu0
    %v10800 = vadd.f32 %v10759, %v10799
    %v10801 = vpop.f32.mrb[0].mxu0
    %v10802 = vadd.f32 %v10761, %v10801
    %v10803 = vpop.f32.mrb[0].mxu0
    %v10804 = vpop.f32.mrb[0].mxu0
    %10805 = vdwg.mxu0
    %10806 = vmatprep.subr.bf16.mxu0 %v9451
    %10807 = vmatpush1.bf16.msra.mxu0 %v9450
    %10808 = vmatprep.subr.bf16.mxu0 %v9455
    %10809 = vmatpush1.bf16.msra.mxu0 %v9454
    %10810 = vmatprep.subr.bf16.mxu0 %v9459
    %10811 = vmatpush1.bf16.msra.mxu0 %v9458
    %10812 = vmatprep.subr.bf16.mxu0 %v9463
    %10813 = vmatpush1.bf16.msra.mxu0 %v9462
    %10814 = vmatprep.subr.bf16.mxu0 %v9467
    %10815 = vmatpush1.bf16.msra.mxu0 %v9466
    %10816 = vmatprep.subr.bf16.mxu0 %v9471
    %10817 = vmatpush1.bf16.msra.mxu0 %v9470
    %10818 = vmatprep.subr.bf16.mxu0 %v9475
    %10819 = vmatpush1.bf16.msra.mxu0 %v9474
    %10820 = vmatprep.subr.bf16.mxu0 %v9479
    %10821 = vmatpush1.bf16.msra.mxu0 %v9478
    %10822 = vmatprep.subr.bf16.mxu0 %v9483
    %10823 = vmatpush1.bf16.msra.mxu0 %v9482
    %10824 = vmatprep.subr.bf16.mxu0 %v9487
    %10825 = vmatpush1.bf16.msra.mxu0 %v9486
    %10826 = vmatprep.subr.bf16.mxu0 %v9491
    %10827 = vmatpush1.bf16.msra.mxu0 %v9490
    %10828 = vmatprep.subr.bf16.mxu0 %v9495
    %10829 = vmatpush1.bf16.msra.mxu0 %v9494
    %10830 = vmatprep.subr.bf16.mxu0 %v9499
    %10831 = vmatpush1.bf16.msra.mxu0 %v9498
    %10832 = vmatprep.subr.bf16.mxu0 %v9503
    %10833 = vmatpush1.bf16.msra.mxu0 %v9502
    %10834 = vmatprep.subr.bf16.mxu0 %v9507
    %10835 = vmatpush1.bf16.msra.mxu0 %v9506
    %10836 = vmatprep.subr.bf16.mxu0 %v9511
    %10837 = vmatpush1.bf16.msra.mxu0 %v9510
    %10838 = vmatprep.mubr.bf16.mxu0 %v8543
    %10839 = vmatmul.mubr.bf16.gmra.mrb[0].mxu0 %v8542
    %v10840 = vpop.f32.mrb[0].mxu0
    %v10841 = vadd.f32 %v10800, %v10840
    %v10842 = vpop.f32.mrb[0].mxu0
    %v10843 = vadd.f32 %v10802, %v10842
    %v10844 = vpop.f32.mrb[0].mxu0
    %v10845 = vpop.f32.mrb[0].mxu0
    %10846 = vdwg.mxu0
    %10847 = vmatprep.subr.bf16.mxu0 %v9515
    %10848 = vmatpush1.bf16.msra.mxu0 %v9514
    %10849 = vmatprep.subr.bf16.mxu0 %v9519
    %10850 = vmatpush1.bf16.msra.mxu0 %v9518
    %10851 = vmatprep.subr.bf16.mxu0 %v9523
    %10852 = vmatpush1.bf16.msra.mxu0 %v9522
    %10853 = vmatprep.subr.bf16.mxu0 %v9527
    %10854 = vmatpush1.bf16.msra.mxu0 %v9526
    %10855 = vmatprep.subr.bf16.mxu0 %v9531
    %10856 = vmatpush1.bf16.msra.mxu0 %v9530
    %10857 = vmatprep.subr.bf16.mxu0 %v9535
    %10858 = vmatpush1.bf16.msra.mxu0 %v9534
    %10859 = vmatprep.subr.bf16.mxu0 %v9539
    %10860 = vmatpush1.bf16.msra.mxu0 %v9538
    %10861 = vmatprep.subr.bf16.mxu0 %v9543
    %10862 = vmatpush1.bf16.msra.mxu0 %v9542
    %10863 = vmatprep.subr.bf16.mxu0 %v9547
    %10864 = vmatpush1.bf16.msra.mxu0 %v9546
    %10865 = vmatprep.subr.bf16.mxu0 %v9551
    %10866 = vmatpush1.bf16.msra.mxu0 %v9550
    %10867 = vmatprep.subr.bf16.mxu0 %v9555
    %10868 = vmatpush1.bf16.msra.mxu0 %v9554
    %10869 = vmatprep.subr.bf16.mxu0 %v9559
    %10870 = vmatpush1.bf16.msra.mxu0 %v9558
    %10871 = vmatprep.subr.bf16.mxu0 %v9563
    %10872 = vmatpush1.bf16.msra.mxu0 %v9562
    %10873 = vmatprep.subr.bf16.mxu0 %v9567
    %10874 = vmatpush1.bf16.msra.mxu0 %v9566
    %10875 = vmatprep.subr.bf16.mxu0 %v9571
    %10876 = vmatpush1.bf16.msra.mxu0 %v9570
    %10877 = vmatprep.subr.bf16.mxu0 %v9575
    %10878 = vmatpush1.bf16.msra.mxu0 %v9574
    %10879 = vmatprep.mubr.bf16.mxu0 %v8549
    %10880 = vmatmul.mubr.bf16.gmra.mrb[0].mxu0 %v8548
    %v10881 = vpop.f32.mrb[0].mxu0
    %v10882 = vadd.f32 %v10841, %v10881
    %v10883 = vpop.f32.mrb[0].mxu0
    %v10884 = vadd.f32 %v10843, %v10883
    %v10885 = vpop.f32.mrb[0].mxu0
    %v10886 = vpop.f32.mrb[0].mxu0
    %10887 = vdwg.mxu0
    %vm10888 = vcmp.ge.f32.partialorder %v10226, 0.0
    %vm10889 = vcmp.ge.f32.partialorder %v10228, 0.0
    %vm10890 = vcmp.ge.f32.partialorder %v10882, 0.0
    %vm10891 = vcmp.ge.f32.partialorder %v10884, 0.0
    %v10892 = vmul.f32 %v10226, 0.2
    %v10893 = vmul.f32 %v10228, 0.2
    %v10894 = vmul.f32 %v10882, 0.2
    %v10895 = vmul.f32 %v10884, 0.2
    %v10896 = vsel %vm10888, %v10226, %v10892
    %v10897 = vsel %vm10889, %v10228, %v10893
    %v10898 = vsel %vm10890, %v10882, %v10894
    %v10899 = vsel %vm10891, %v10884, %v10895
    %v10900 = vld [vmem:[#allocation19] sm:$0xf]
    %v10902 = vlaneseq
    %v10903 = vshrl.u32 %v10902, 7
    %v10904 = vsub.s32 0, %v10903
    %v10905 = vrot.slane %v10900, %v10904
    %v10906 = vlaneseq
    %v10907 = vshrl.u32 %v10906, 7
    %v10908 = vsub.s32 1, %v10907
    %v10909 = vrot.slane %v10900, %v10908
    %v10910 = vlaneseq
    %v10911 = vshrl.u32 %v10910, 7
    %v10912 = vsub.s32 2, %v10911
    %v10913 = vrot.slane %v10900, %v10912
    %v10914 = vlaneseq
    %v10915 = vshrl.u32 %v10914, 7
    %v10916 = vsub.s32 3, %v10915
    %v10917 = vrot.slane %v10900, %v10916
    %v10922 = vmul.f32 %v10896, %v10905
    %v10923 = vmul.f32 %v10897, %v10909
    %v10924 = vmul.f32 %v10898, %v10913
    %v10925 = vmul.f32 %v10899, %v10917
    %v10926 = vld [vmem:[#allocation20] sm:$0xf]
    %v10928 = vlaneseq
    %v10929 = vshrl.u32 %v10928, 7
    %v10930 = vsub.s32 0, %v10929
    %v10931 = vrot.slane %v10926, %v10930
    %v10932 = vlaneseq
    %v10933 = vshrl.u32 %v10932, 7
    %v10934 = vsub.s32 1, %v10933
    %v10935 = vrot.slane %v10926, %v10934
    %v10936 = vlaneseq
    %v10937 = vshrl.u32 %v10936, 7
    %v10938 = vsub.s32 2, %v10937
    %v10939 = vrot.slane %v10926, %v10938
    %v10940 = vlaneseq
    %v10941 = vshrl.u32 %v10940, 7
    %v10942 = vsub.s32 3, %v10941
    %v10943 = vrot.slane %v10926, %v10942
    %v10948 = vadd.f32 %v10922, %v10931
    %v10949 = vadd.f32 %v10923, %v10935
    %v10950 = vadd.f32 %v10924, %v10939
    %v10951 = vadd.f32 %v10925, %v10943
    %v10952 = vld [vmem:[#allocation22] sm:$0xf]
    %v10954 = vlaneseq
    %v10955 = vshrl.u32 %v10954, 7
    %v10956 = vsub.s32 0, %v10955
    %v10957 = vrot.slane %v10952, %v10956
    %v10958 = vlaneseq
    %v10959 = vshrl.u32 %v10958, 7
    %v10960 = vsub.s32 1, %v10959
    %v10961 = vrot.slane %v10952, %v10960
    %v10962 = vlaneseq
    %v10963 = vshrl.u32 %v10962, 7
    %v10964 = vsub.s32 2, %v10963
    %v10965 = vrot.slane %v10952, %v10964
    %v10966 = vlaneseq
    %v10967 = vshrl.u32 %v10966, 7
    %v10968 = vsub.s32 3, %v10967
    %v10969 = vrot.slane %v10952, %v10968
    %v10974 = vmul.f32 %v10948, %v10957
    %v10975 = vmul.f32 %v10949, %v10961
    %v10976 = vmul.f32 %v10950, %v10965
    %v10977 = vmul.f32 %v10951, %v10969
    %vm10978 = vcmask 1041408
    %v10979 = vsel %vm10978, %v10974, 0.0
    %v10980 = vsel %vm10978, %v10975, 0.0
    %v10981 = vadd.f32 %v10979, %v10980
    %v10982 = vsel %vm10978, %v10976, 0.0
    %v10983 = vadd.f32 %v10981, %v10982
    %v10984 = vsel %vm10978, %v10977, 0.0
    %v10985 = vadd.f32 %v10983, %v10984
    %10986 = vadd.xlane.f32.xlu0 %v10985
    %v10987 = vpop.xlane.xlu0 %10986
    %v10988 = vld [vmem:[#allocation8] sm:$0x1]
    %v10990 = vlaneseq
    %v10991 = vshrl.u32 %v10990, 7
    %v10992 = vsub.s32 0, %v10991
    %v10993 = vrot.slane %v10988, %v10992
    %v10995 = vadd.f32 %v10987, %v10993
    %v10996 = vsub.f32 0.0, %v10995
    %v10997 = vmul.f32 %v10996, 1.442695
    %v10998 = vpow.pop %v10997
    %v10999 = vadd.f32 %v10998, 1.0
    %v11000 = vrcp.pop %v10999
    %v11001 = vmul.f32 1.0, %v11000
    %vm11002 = vcmask 1024
    %11003 = vst.msk [vmem:[%s13] sm:$0x3] %vm11002, %v11001
    // Predicated region
    $region82: #{discriminator_forward.1} parent=1 // pred_check
      _
    $region83: #{discriminator_forward.1} parent=1 // pred_check_branch
      %11005 = sbr.rel (0) target = $region85
    $region84: #{discriminator_forward.1} parent=1 // pred_region
      _
    $region85: #{discriminator_forward.1} parent=1 // pred_fallthru
      _
    // Predicated region
    $region86: #{discriminator_forward.1} parent=1 // pred_check
      _
    $region87: #{discriminator_forward.1} parent=1 // pred_check_branch
      %11007 = sbr.rel (0) target = $region89
    $region88: #{discriminator_forward.1} parent=1 // pred_region
      _
    $region89: #{discriminator_forward.1} parent=1 // pred_fallthru
      _
    %11008 = vsyncpa [#allocation10], 1
    %11009 = vsyncpa [#allocation12], 1
    %11010 = vsyncpa [#allocation15], 1
    %11011 = vsyncpa [#allocation18], 1
    %11012 = vsyncpa [#allocation21], 1
  %11013 = vsyncmov [#allocation7]
  %s11014 = vpop.sfrf %11013
  %p11015 = scmp.eq.s32.totalorder %s11014, 0
  %p11016 = pneg %p11015
  %11018 = shalt.err (%p11016)
  %s11019 = scalar_lea.sflag [#allocation7], 1
  %11020 = vsyncmov %s11019
  %s11021 = vpop.sfrf %11020
  %p11022 = scmp.eq.s32.totalorder %s11021, 0
  %p11023 = pneg %p11022
  %11025 = shalt.err (%p11023)

</llo_original>
